<compile_context>
chip_gen: v7x
topology: tpu7x:2x2x1
jax: 0.10.0
libtpu: 0.0.40
codegen_flags: <defaults>
</compile_context>

<pallas_src>
import functools
import math

import jax
import jax.numpy as jnp
import numpy as np
from jax.experimental import pallas as pl
from jax.experimental.pallas import tpu as pltpu

# ------------------------------------------------------------ tuning knobs
_TARGET_TILE_BYTES = 8 << 20     # ~8 MiB of input per grid step
_ROW_CAP = 2048                  # max rows per tile
_TARGET_OUT_LANES = 512          # fold rows until output row is ~this wide
_MAX_FOLD_LANES = 4096           # cap on folded output-row width
_VMEM_LIMIT_CAP = 48 << 20       # keep pipeline footprint safe on v7x (64 MiB VMEM)


# ------------------------------------------------------------ kernel bodies
def _body_strided(x_ref, o_ref, *, pool_size):
    """Max over pool members via lane-strided ref views (no relayout, pure VPU)."""
    l_out = o_ref.shape[-1]
    acc = x_ref[:, pl.ds(0, l_out, stride=pool_size)]
    for k in range(1, pool_size):
        acc = jnp.maximum(acc, x_ref[:, pl.ds(k, l_out, stride=pool_size)])
    o_ref[...] = acc


def _body_transpose(x_ref, o_ref, *, pool_size):
    """Pool members -> sublane axis, reduce there, transpose back (XLU-heavy)."""
    x = x_ref[...]                              # (tm, tcol)
    tm, l_in = x.shape
    l_out = l_in // pool_size
    xt = x.T.reshape(l_out, pool_size, tm)      # split only the leading dim
    o_ref[...] = jnp.max(xt, axis=1).T          # (tm, l_out)


def _body_reshape(x_ref, o_ref, *, pool_size):
    """Guaranteed-lowering fallback: reshape + reduce over the small minor dim."""
    x = x_ref[...]
    tm, l_in = x.shape
    o_ref[...] = jnp.max(x.reshape(tm, l_in // pool_size, pool_size), axis=-1)


_BODIES = {"strided": _body_strided,
           "transpose": _body_transpose,
           "reshape": _body_reshape}


# ------------------------------------------------------------ helpers
def _sublane(dtype):
    # rows per sublane tile: 8 for 4-byte, 16 for 2-byte, 32 for 1-byte dtypes
    return {4: 8, 2: 16, 1: 32}.get(np.dtype(dtype).itemsize, 8)


def _pick_fold(m, out_l):
    """Fold factor g (must divide m -> free reshape) making g*out_l lane-dense."""
    if out_l >= 128 or m <= 1:
        return 1
    g_cap = max(1, _MAX_FOLD_LANES // out_l)
    g_min = pl.cdiv(128, out_l)
    g_ideal = pl.cdiv(_TARGET_OUT_LANES, out_l)
    divisors = [g for g in range(1, min(g_cap, m) + 1) if m % g == 0]
    dense = [g for g in divisors if g >= g_min]
    if dense:
        return min(dense, key=lambda g: (abs(g - g_ideal), g))
    return divisors[-1]          # best effort; correct even if lane-sparse


def _pick_tm(rows, tcol, itemsize, sub, target_tile_bytes):
    """Rows per grid step: ~target bytes of input, sublane-aligned, and >= 2
    (ideally ~4) grid steps along rows whenever the row count allows it."""
    row_bytes = max(1, tcol * itemsize)
    tm = max(1, target_tile_bytes // row_bytes)
    tm = min(tm, _ROW_CAP)
    if rows >= 8 * sub:
        tm = min(tm, pl.cdiv(rows, 4))      # >= ~4 steps: pipelining + megacore
    elif rows >= 2 * sub:
        tm = min(tm, pl.cdiv(rows, 2))      # >= 2 steps
    if tm >= rows:
        return int(rows)                    # single block == full dim (always legal)
    if rows <= sub:
        return int(rows)
    return int(max(sub, (tm // sub) * sub))  # sublane multiple only (never 128)


@functools.lru_cache(maxsize=None)
def _get_kernel(body_name, rows, cols, tm, tcol, pool_size, dtype):
    """Build (and cache) the jitted pallas_call for one configuration."""
    itemsize = np.dtype(dtype).itemsize
    l_out = cols // pool_size
    tcol_out = tcol // pool_size
    grid = (pl.cdiv(rows, tm), pl.cdiv(cols, tcol))
    kernel = functools.partial(_BODIES[body_name], pool_size=pool_size)

    in_block = tm * tcol * itemsize
    out_block = tm * tcol_out * itemsize
    vmem_limit = int(2.5 * (in_block + out_block)) + (2 << 20)
    vmem_limit = max(16 << 20, min(vmem_limit, _VMEM_LIMIT_CAP))

    call = pl.pallas_call(
        kernel,
        out_shape=jax.ShapeDtypeStruct((rows, l_out), dtype),
        grid=grid,
        in_specs=[pl.BlockSpec((tm, tcol), lambda i, j: (i, j))],
        out_specs=pl.BlockSpec((tm, tcol_out), lambda i, j: (i, j)),
        compiler_params=pltpu.CompilerParams(
            dimension_semantics=("parallel", "parallel"),
            vmem_limit_bytes=vmem_limit,
        ),
        cost_estimate=pl.CostEstimate(
            flops=rows * cols,
            transcendentals=0,
            bytes_accessed=(rows * cols + rows * l_out) * itemsize,
        ),
    )
    return jax.jit(call)


@functools.lru_cache(maxsize=None)
def _select_body(dtype, pool_size, tm, tcol):
    """Compile-only probe (no execution) in preference order.  'reshape' is the
    guaranteed fallback, so the kernel always has a working lowering."""
    spec = jax.ShapeDtypeStruct((tm, tcol), dtype)
    candidates = ("strided", "transpose") if pool_size <= 64 else ("transpose",)
    for name in candidates:
        try:
            fn = _get_kernel(name, tm, tcol, tm, tcol, pool_size, dtype)
            fn.lower(spec).compile()
            return name
        except Exception:          # probe only; guaranteed fallback below
            continue
    return "reshape"


# ------------------------------------------------------------ public API
def maxout(x, pool_size, *, target_tile_bytes=_TARGET_TILE_BYTES):
    """Pallas maxout over the last dim.  Output shape: (..., last // pool_size)."""
    if pool_size < 1:
        raise ValueError("pool_size must be >= 1")
    *lead, last = x.shape
    if last % pool_size != 0:
        raise ValueError("last dim must be divisible by pool_size")
    if pool_size == 1:
        return x

    out_l = last // pool_size
    m = math.prod(lead)
    dtype = np.dtype(x.dtype)
    if m == 0 or out_l == 0:
        return jnp.zeros((*lead, out_l), dtype)

    itemsize = dtype.itemsize
    sub = _sublane(dtype)

    # 1) free row fold so the output row is lane-dense; g divides m exactly.
    g = _pick_fold(m, out_l)
    rows = m // g
    cols = g * last
    x2 = x.reshape(rows, cols)                      # pure metadata reshape

    # 2) column tiling only when even a minimal (sub rows) slab of full rows
    #    blows the per-step byte budget; column blocks stay pool-aligned.
    unit = 128 * pool_size
    if sub * cols * itemsize > target_tile_bytes and cols > unit:
        tcol = max(unit, (target_tile_bytes // (sub * itemsize) // unit) * unit)
        tcol = min(tcol, cols)
    else:
        tcol = cols

    # 3) row tile (sublane-aligned, multi-step grid when rows allow).
    tm = _pick_tm(rows, tcol, itemsize, sub, target_tile_bytes)

    # 4) kernel body (cached compile-only probe); shrink tiles for the
    #    reshape fallback to bound its in-VMEM relayout cost.
    body = _select_body(dtype, int(pool_size), int(tm), int(tcol))
    if body == "reshape":
        tm = _pick_tm(rows, tcol, itemsize, sub, min(target_tile_bytes, 1 << 20))

    fn = _get_kernel(body, int(rows), int(cols), int(tm), int(tcol),
                     int(pool_size), dtype)
    out2 = fn(x2)                                   # (rows, cols // pool_size)
    return out2.reshape(*lead, out_l)               # free reshape back


class Maxout:
    """Functional stand-in for the PyTorch Maxout module."""

    def __init__(self, pool_size):
        self.pool_size = pool_size

    def __call__(self, x):
        return maxout(x, self.pool_size)


# ------------------------------------------------------------ self-test
if __name__ == "__main__":
    key = jax.random.PRNGKey(0)
    k1, k2, k3, k4 = jax.random.split(key, 4)

    def ref_maxout(x, p):
        *s, last = x.shape
        return jnp.max(x.reshape(*s, last // p, p), axis=-1)

    # Case 1: module-spec shape; out_l < 128 -> divisor row folding, no pad.
    x = jax.random.normal(k1, (2, 4, 16, 16), dtype=jnp.float32)
    out = jax.block_until_ready(Maxout(4)(x))
    assert out.shape == (2, 4, 16, 4), out.shape
    np.testing.assert_array_equal(np.asarray(out), np.asarray(ref_maxout(x, 4)))

    # Case 2: lane-dense output, multi-step row grid with a partial last block.
    y = jax.random.normal(k2, (5, 8, 256), dtype=jnp.float32)
    out_y = jax.block_until_ready(maxout(y, 2))
    assert out_y.shape == (5, 8, 128), out_y.shape
    np.testing.assert_array_equal(np.asarray(out_y), np.asarray(ref_maxout(y, 2)))

    # Case 3: bf16, small awkward fold (g = 12 divides m = 12).
    z = jax.random.normal(k3, (3, 4, 64), dtype=jnp.bfloat16)
    out_z = jax.block_until_ready(maxout(z, 4))
    assert out_z.shape == (3, 4, 16), out_z.shape
    np.testing.assert_array_equal(np.asarray(out_z), np.asarray(ref_maxout(z, 4)))

    # Case 4: tiny tile budget to exercise the column-tiled path (grid_c > 1)
    # plus a partial last row block.
    w = jax.random.normal(k4, (20, 2048), dtype=jnp.float32)
    out_w = jax.block_until_ready(maxout(w, 2, target_tile_bytes=4096))
    assert out_w.shape == (20, 1024), out_w.shape
    np.testing.assert_array_equal(np.asarray(out_w), np.asarray(ref_maxout(w, 2)))

    print("KERNEL_OK")
</pallas_src>

<mosaic_0001>
module attributes {stable_mosaic.version = 11 : i64} {
  func.func @_body_reshape(%arg0: i32, %arg1: i32, %arg2: memref<1x2048xf32, #tpu.memory_space<vmem>>, %arg3: memref<1x512xf32, #tpu.memory_space<vmem>>) attributes {dimension_semantics = [#tpu.dimension_semantics<parallel>, #tpu.dimension_semantics<parallel>], iteration_bounds = array<i64: 1, 1>, scalar_prefetch = 0 : i64, scratch_operands = 0 : i64, tpu.core_type = #tpu.core_type<tc>, window_params = [{transform_indices = @transform_0, window_bounds = array<i64: 1, 2048>}, {transform_indices = @transform_1, window_bounds = array<i64: 1, 512>}]} {
    %c0 = arith.constant 0 : index
    %c0_0 = arith.constant 0 : index
    %0 = vector.load %arg2[%c0, %c0_0] : memref<1x2048xf32, #tpu.memory_space<vmem>>, vector<1x2048xf32>
    %1 = vector.shape_cast %0 : vector<1x2048xf32> to vector<1x512x4xf32>
    %cst = arith.constant dense<0xFF800000> : vector<1x512xf32>
    %2 = vector.multi_reduction <maximumf>, %1, %cst [2] : vector<1x512x4xf32> to vector<1x512xf32>
    %c0_1 = arith.constant 0 : index
    %c0_2 = arith.constant 0 : index
    %3 = vector.load %arg3[%c0_1, %c0_2] : memref<1x512xf32, #tpu.memory_space<vmem>>, vector<1x512xf32>
    tpu.vector_store %arg3[%c0_1, %c0_2], %2 {strides = array<i32>} : memref<1x512xf32, #tpu.memory_space<vmem>>, vector<1x512xf32>,
    return
  }
  func.func @transform_0(%arg0: i32, %arg1: i32) -> (i32, i32) {
    %c0_i32 = arith.constant 0 : i32
    return %arg0, %arg1 : i32, i32
  }
  func.func @transform_1(%arg0: i32, %arg1: i32) -> (i32, i32) {
    %c0_i32 = arith.constant 0 : i32
    return %arg0, %arg1 : i32, i32
  }
}

</mosaic_0001>

<llo_original>
// kernel: tpu_custom_call.1
$region0: #{tpu_custom_call.1}
  #allocation0 [shape = 'u32[]', space=smem, size = 0x4, offset = 0x4, fixed_abs, tag = 'smem constant byte address 0x4 - core index']
  #allocation1 [shape = 'u32[144,128]{1,0:T(1,128)}', space=vmem, size = 0x12000, scoped, tag = 'internal scratch']
  %s0 = inlined_call_operand.hbm [shape: f32[1,2048], index: 0, kind: input, shape index: {}]
  %s1 = inlined_call_operand.hbm [shape: f32[1,512], index: 1, kind: output, shape index: {}]
  %s2 = sld [smem:[#allocation0]]
  $region18: #{tpu_custom_call.1} parent=0
    _
  %s4 = ssub.s32 1, %s2
  %s5 = scalar_select 0, %s4, %s2
  $region1: #{tpu_custom_call.1} parent=0
    #allocation2 [shape = 'u8[8192]{0}', space=vmem, size = 0x2000, scoped, tag = 'input window, operand 0, single buffered']
    #allocation3 [shape = 's32[1]{0}', space=sflag, size = 0x4, scoped, tag = 'scoped memory for tpu_custom_call.1']
    #allocation4 [shape = 's32[1]{0}', space=sflag, size = 0x4, scoped, tag = 'scoped memory for tpu_custom_call.1']
    #allocation5 [shape = 'u8[2048]{0}', space=vmem, size = 0x800, scoped, tag = 'output window, operand 0, single buffered']
    %6 = vsyncpa [#allocation3], 0
    %7 = vsyncpa [#allocation4], 0
    // Predicated region
    $region2: #{tpu_custom_call.1} parent=1 // pred_check
      _
    $region3: #{tpu_custom_call.1} parent=1 // pred_check_branch
      %9 = sbr.rel (0) target = $region5
    $region4: #{tpu_custom_call.1} parent=1 // pred_region
      %s11 = ssub.s32 256, 256
      %12 = vsyncadd [#allocation3], %s11
      %s14 = sshll.u32 [#allocation2], 4
      %s15 = int_to_ptr.vmem [resolvable:$true] %s14
      %17 = dma.hbm_to_vmem [thread:$0]  %s0, 256, %s15, [#allocation3]
    $region5: #{tpu_custom_call.1} parent=1 // pred_fallthru
      _
    // Predicated region
    $region6: #{tpu_custom_call.1} parent=1 // pred_check
      _
    $region7: #{tpu_custom_call.1} parent=1 // pred_check_branch
      %19 = sbr.rel (0) target = $region9
    $region8: #{tpu_custom_call.1} parent=1 // pred_region
      %20 = dma.done [#allocation3], 256
    $region9: #{tpu_custom_call.1} parent=1 // pred_fallthru
      _
    %v21 = vld [vmem:[#allocation2] sm:$0xff]
    %v22 = vld [vmem:[#allocation2 + $0x8] sm:$0xff]
    %v24 = vrot.slane %v21, 1
    %25 = vrot.lane.b32.xlu0 %v21, 124
    %v26 = vpop.permute.xlu0 %25
    %v27 = vrot.slane %v26, 1
    %28 = vrot.lane.b32.xlu0 %v21, 120
    %v29 = vpop.permute.xlu0 %28
    %v30 = vrot.slane %v29, 1
    %31 = vrot.lane.b32.xlu0 %v21, 116
    %v32 = vpop.permute.xlu0 %31
    %v33 = vrot.slane %v32, 1
    %34 = vrot.lane.b32.xlu0 %v21, 112
    %v35 = vpop.permute.xlu0 %34
    %v36 = vrot.slane %v35, 1
    %37 = vrot.lane.b32.xlu0 %v21, 108
    %v38 = vpop.permute.xlu0 %37
    %v39 = vrot.slane %v38, 1
    %40 = vrot.lane.b32.xlu0 %v21, 104
    %v41 = vpop.permute.xlu0 %40
    %v42 = vrot.slane %v41, 1
    %43 = vrot.lane.b32.xlu0 %v21, 100
    %v44 = vpop.permute.xlu0 %43
    %v45 = vrot.slane %v44, 1
    %46 = vrot.lane.b32.xlu0 %v21, 96
    %v47 = vpop.permute.xlu0 %46
    %v48 = vrot.slane %v47, 1
    %49 = vrot.lane.b32.xlu0 %v21, 92
    %v50 = vpop.permute.xlu0 %49
    %v51 = vrot.slane %v50, 1
    %52 = vrot.lane.b32.xlu0 %v21, 88
    %v53 = vpop.permute.xlu0 %52
    %v54 = vrot.slane %v53, 1
    %55 = vrot.lane.b32.xlu0 %v21, 84
    %v56 = vpop.permute.xlu0 %55
    %v57 = vrot.slane %v56, 1
    %58 = vrot.lane.b32.xlu0 %v21, 80
    %v59 = vpop.permute.xlu0 %58
    %v60 = vrot.slane %v59, 1
    %61 = vrot.lane.b32.xlu0 %v21, 76
    %v62 = vpop.permute.xlu0 %61
    %v63 = vrot.slane %v62, 1
    %64 = vrot.lane.b32.xlu0 %v21, 72
    %v65 = vpop.permute.xlu0 %64
    %v66 = vrot.slane %v65, 1
    %67 = vrot.lane.b32.xlu0 %v21, 68
    %v68 = vpop.permute.xlu0 %67
    %v69 = vrot.slane %v68, 1
    %70 = vrot.lane.b32.xlu0 %v21, 64
    %v71 = vpop.permute.xlu0 %70
    %v72 = vrot.slane %v71, 1
    %73 = vrot.lane.b32.xlu0 %v21, 60
    %v74 = vpop.permute.xlu0 %73
    %v75 = vrot.slane %v74, 1
    %76 = vrot.lane.b32.xlu0 %v21, 56
    %v77 = vpop.permute.xlu0 %76
    %v78 = vrot.slane %v77, 1
    %79 = vrot.lane.b32.xlu0 %v21, 52
    %v80 = vpop.permute.xlu0 %79
    %v81 = vrot.slane %v80, 1
    %82 = vrot.lane.b32.xlu0 %v21, 48
    %v83 = vpop.permute.xlu0 %82
    %v84 = vrot.slane %v83, 1
    %85 = vrot.lane.b32.xlu0 %v21, 44
    %v86 = vpop.permute.xlu0 %85
    %v87 = vrot.slane %v86, 1
    %88 = vrot.lane.b32.xlu0 %v21, 40
    %v89 = vpop.permute.xlu0 %88
    %v90 = vrot.slane %v89, 1
    %91 = vrot.lane.b32.xlu0 %v21, 36
    %v92 = vpop.permute.xlu0 %91
    %v93 = vrot.slane %v92, 1
    %94 = vrot.lane.b32.xlu0 %v21, 32
    %v95 = vpop.permute.xlu0 %94
    %v96 = vrot.slane %v95, 1
    %97 = vrot.lane.b32.xlu0 %v21, 28
    %v98 = vpop.permute.xlu0 %97
    %v99 = vrot.slane %v98, 1
    %100 = vrot.lane.b32.xlu0 %v21, 24
    %v101 = vpop.permute.xlu0 %100
    %v102 = vrot.slane %v101, 1
    %103 = vrot.lane.b32.xlu0 %v21, 20
    %v104 = vpop.permute.xlu0 %103
    %v105 = vrot.slane %v104, 1
    %106 = vrot.lane.b32.xlu0 %v21, 16
    %v107 = vpop.permute.xlu0 %106
    %v108 = vrot.slane %v107, 1
    %109 = vrot.lane.b32.xlu0 %v21, 12
    %v110 = vpop.permute.xlu0 %109
    %v111 = vrot.slane %v110, 1
    %112 = vrot.lane.b32.xlu0 %v21, 8
    %v113 = vpop.permute.xlu0 %112
    %v114 = vrot.slane %v113, 1
    %115 = vrot.lane.b32.xlu0 %v21, 4
    %v116 = vpop.permute.xlu0 %115
    %v117 = vrot.slane %v116, 1
    %v118 = vrot.slane %v21, 2
    %v119 = vrot.slane %v26, 2
    %v120 = vrot.slane %v29, 2
    %v121 = vrot.slane %v32, 2
    %v122 = vrot.slane %v35, 2
    %v123 = vrot.slane %v38, 2
    %v124 = vrot.slane %v41, 2
    %v125 = vrot.slane %v44, 2
    %v126 = vrot.slane %v47, 2
    %v127 = vrot.slane %v50, 2
    %v128 = vrot.slane %v53, 2
    %v129 = vrot.slane %v56, 2
    %v130 = vrot.slane %v59, 2
    %v131 = vrot.slane %v62, 2
    %v132 = vrot.slane %v65, 2
    %v133 = vrot.slane %v68, 2
    %v134 = vrot.slane %v71, 2
    %v135 = vrot.slane %v74, 2
    %v136 = vrot.slane %v77, 2
    %v137 = vrot.slane %v80, 2
    %v138 = vrot.slane %v83, 2
    %v139 = vrot.slane %v86, 2
    %v140 = vrot.slane %v89, 2
    %v141 = vrot.slane %v92, 2
    %v142 = vrot.slane %v95, 2
    %v143 = vrot.slane %v98, 2
    %v144 = vrot.slane %v101, 2
    %v145 = vrot.slane %v104, 2
    %v146 = vrot.slane %v107, 2
    %v147 = vrot.slane %v110, 2
    %v148 = vrot.slane %v113, 2
    %v149 = vrot.slane %v116, 2
    %v150 = vrot.slane %v21, 3
    %v151 = vrot.slane %v26, 3
    %v152 = vrot.slane %v29, 3
    %v153 = vrot.slane %v32, 3
    %v154 = vrot.slane %v35, 3
    %v155 = vrot.slane %v38, 3
    %v156 = vrot.slane %v41, 3
    %v157 = vrot.slane %v44, 3
    %v158 = vrot.slane %v47, 3
    %v159 = vrot.slane %v50, 3
    %v160 = vrot.slane %v53, 3
    %v161 = vrot.slane %v56, 3
    %v162 = vrot.slane %v59, 3
    %v163 = vrot.slane %v62, 3
    %v164 = vrot.slane %v65, 3
    %v165 = vrot.slane %v68, 3
    %v166 = vrot.slane %v71, 3
    %v167 = vrot.slane %v74, 3
    %v168 = vrot.slane %v77, 3
    %v169 = vrot.slane %v80, 3
    %v170 = vrot.slane %v83, 3
    %v171 = vrot.slane %v86, 3
    %v172 = vrot.slane %v89, 3
    %v173 = vrot.slane %v92, 3
    %v174 = vrot.slane %v95, 3
    %v175 = vrot.slane %v98, 3
    %v176 = vrot.slane %v101, 3
    %v177 = vrot.slane %v104, 3
    %v178 = vrot.slane %v107, 3
    %v179 = vrot.slane %v110, 3
    %v180 = vrot.slane %v113, 3
    %v181 = vrot.slane %v116, 3
    %v182 = vrot.slane %v21, 4
    %v183 = vrot.slane %v26, 4
    %v184 = vrot.slane %v29, 4
    %v185 = vrot.slane %v32, 4
    %v186 = vrot.slane %v35, 4
    %v187 = vrot.slane %v38, 4
    %v188 = vrot.slane %v41, 4
    %v189 = vrot.slane %v44, 4
    %v190 = vrot.slane %v47, 4
    %v191 = vrot.slane %v50, 4
    %v192 = vrot.slane %v53, 4
    %v193 = vrot.slane %v56, 4
    %v194 = vrot.slane %v59, 4
    %v195 = vrot.slane %v62, 4
    %v196 = vrot.slane %v65, 4
    %v197 = vrot.slane %v68, 4
    %v198 = vrot.slane %v71, 4
    %v199 = vrot.slane %v74, 4
    %v200 = vrot.slane %v77, 4
    %v201 = vrot.slane %v80, 4
    %v202 = vrot.slane %v83, 4
    %v203 = vrot.slane %v86, 4
    %v204 = vrot.slane %v89, 4
    %v205 = vrot.slane %v92, 4
    %v206 = vrot.slane %v95, 4
    %v207 = vrot.slane %v98, 4
    %v208 = vrot.slane %v101, 4
    %v209 = vrot.slane %v104, 4
    %v210 = vrot.slane %v107, 4
    %v211 = vrot.slane %v110, 4
    %v212 = vrot.slane %v113, 4
    %v213 = vrot.slane %v116, 4
    %v214 = vrot.slane %v21, 5
    %v215 = vrot.slane %v26, 5
    %v216 = vrot.slane %v29, 5
    %v217 = vrot.slane %v32, 5
    %v218 = vrot.slane %v35, 5
    %v219 = vrot.slane %v38, 5
    %v220 = vrot.slane %v41, 5
    %v221 = vrot.slane %v44, 5
    %v222 = vrot.slane %v47, 5
    %v223 = vrot.slane %v50, 5
    %v224 = vrot.slane %v53, 5
    %v225 = vrot.slane %v56, 5
    %v226 = vrot.slane %v59, 5
    %v227 = vrot.slane %v62, 5
    %v228 = vrot.slane %v65, 5
    %v229 = vrot.slane %v68, 5
    %v230 = vrot.slane %v71, 5
    %v231 = vrot.slane %v74, 5
    %v232 = vrot.slane %v77, 5
    %v233 = vrot.slane %v80, 5
    %v234 = vrot.slane %v83, 5
    %v235 = vrot.slane %v86, 5
    %v236 = vrot.slane %v89, 5
    %v237 = vrot.slane %v92, 5
    %v238 = vrot.slane %v95, 5
    %v239 = vrot.slane %v98, 5
    %v240 = vrot.slane %v101, 5
    %v241 = vrot.slane %v104, 5
    %v242 = vrot.slane %v107, 5
    %v243 = vrot.slane %v110, 5
    %v244 = vrot.slane %v113, 5
    %v245 = vrot.slane %v116, 5
    %v246 = vrot.slane %v21, 6
    %v247 = vrot.slane %v26, 6
    %v248 = vrot.slane %v29, 6
    %v249 = vrot.slane %v32, 6
    %v250 = vrot.slane %v35, 6
    %v251 = vrot.slane %v38, 6
    %v252 = vrot.slane %v41, 6
    %v253 = vrot.slane %v44, 6
    %v254 = vrot.slane %v47, 6
    %v255 = vrot.slane %v50, 6
    %v256 = vrot.slane %v53, 6
    %v257 = vrot.slane %v56, 6
    %v258 = vrot.slane %v59, 6
    %v259 = vrot.slane %v62, 6
    %v260 = vrot.slane %v65, 6
    %v261 = vrot.slane %v68, 6
    %v262 = vrot.slane %v71, 6
    %v263 = vrot.slane %v74, 6
    %v264 = vrot.slane %v77, 6
    %v265 = vrot.slane %v80, 6
    %v266 = vrot.slane %v83, 6
    %v267 = vrot.slane %v86, 6
    %v268 = vrot.slane %v89, 6
    %v269 = vrot.slane %v92, 6
    %v270 = vrot.slane %v95, 6
    %v271 = vrot.slane %v98, 6
    %v272 = vrot.slane %v101, 6
    %v273 = vrot.slane %v104, 6
    %v274 = vrot.slane %v107, 6
    %v275 = vrot.slane %v110, 6
    %v276 = vrot.slane %v113, 6
    %v277 = vrot.slane %v116, 6
    %v278 = vrot.slane %v21, 7
    %v279 = vrot.slane %v26, 7
    %v280 = vrot.slane %v29, 7
    %v281 = vrot.slane %v32, 7
    %v282 = vrot.slane %v35, 7
    %v283 = vrot.slane %v38, 7
    %v284 = vrot.slane %v41, 7
    %v285 = vrot.slane %v44, 7
    %v286 = vrot.slane %v47, 7
    %v287 = vrot.slane %v50, 7
    %v288 = vrot.slane %v53, 7
    %v289 = vrot.slane %v56, 7
    %v290 = vrot.slane %v59, 7
    %v291 = vrot.slane %v62, 7
    %v292 = vrot.slane %v65, 7
    %v293 = vrot.slane %v68, 7
    %v294 = vrot.slane %v71, 7
    %v295 = vrot.slane %v74, 7
    %v296 = vrot.slane %v77, 7
    %v297 = vrot.slane %v80, 7
    %v298 = vrot.slane %v83, 7
    %v299 = vrot.slane %v86, 7
    %v300 = vrot.slane %v89, 7
    %v301 = vrot.slane %v92, 7
    %v302 = vrot.slane %v95, 7
    %v303 = vrot.slane %v98, 7
    %v304 = vrot.slane %v101, 7
    %v305 = vrot.slane %v104, 7
    %v306 = vrot.slane %v107, 7
    %v307 = vrot.slane %v110, 7
    %v308 = vrot.slane %v113, 7
    %v309 = vrot.slane %v116, 7
    %v311 = vrot.slane %v22, 1
    %312 = vrot.lane.b32.xlu0 %v22, 124
    %v313 = vpop.permute.xlu0 %312
    %v314 = vrot.slane %v313, 1
    %315 = vrot.lane.b32.xlu0 %v22, 120
    %v316 = vpop.permute.xlu0 %315
    %v317 = vrot.slane %v316, 1
    %318 = vrot.lane.b32.xlu0 %v22, 116
    %v319 = vpop.permute.xlu0 %318
    %v320 = vrot.slane %v319, 1
    %321 = vrot.lane.b32.xlu0 %v22, 112
    %v322 = vpop.permute.xlu0 %321
    %v323 = vrot.slane %v322, 1
    %324 = vrot.lane.b32.xlu0 %v22, 108
    %v325 = vpop.permute.xlu0 %324
    %v326 = vrot.slane %v325, 1
    %327 = vrot.lane.b32.xlu0 %v22, 104
    %v328 = vpop.permute.xlu0 %327
    %v329 = vrot.slane %v328, 1
    %330 = vrot.lane.b32.xlu0 %v22, 100
    %v331 = vpop.permute.xlu0 %330
    %v332 = vrot.slane %v331, 1
    %333 = vrot.lane.b32.xlu0 %v22, 96
    %v334 = vpop.permute.xlu0 %333
    %v335 = vrot.slane %v334, 1
    %336 = vrot.lane.b32.xlu0 %v22, 92
    %v337 = vpop.permute.xlu0 %336
    %v338 = vrot.slane %v337, 1
    %339 = vrot.lane.b32.xlu0 %v22, 88
    %v340 = vpop.permute.xlu0 %339
    %v341 = vrot.slane %v340, 1
    %342 = vrot.lane.b32.xlu0 %v22, 84
    %v343 = vpop.permute.xlu0 %342
    %v344 = vrot.slane %v343, 1
    %345 = vrot.lane.b32.xlu0 %v22, 80
    %v346 = vpop.permute.xlu0 %345
    %v347 = vrot.slane %v346, 1
    %348 = vrot.lane.b32.xlu0 %v22, 76
    %v349 = vpop.permute.xlu0 %348
    %v350 = vrot.slane %v349, 1
    %351 = vrot.lane.b32.xlu0 %v22, 72
    %v352 = vpop.permute.xlu0 %351
    %v353 = vrot.slane %v352, 1
    %354 = vrot.lane.b32.xlu0 %v22, 68
    %v355 = vpop.permute.xlu0 %354
    %v356 = vrot.slane %v355, 1
    %357 = vrot.lane.b32.xlu0 %v22, 64
    %v358 = vpop.permute.xlu0 %357
    %v359 = vrot.slane %v358, 1
    %360 = vrot.lane.b32.xlu0 %v22, 60
    %v361 = vpop.permute.xlu0 %360
    %v362 = vrot.slane %v361, 1
    %363 = vrot.lane.b32.xlu0 %v22, 56
    %v364 = vpop.permute.xlu0 %363
    %v365 = vrot.slane %v364, 1
    %366 = vrot.lane.b32.xlu0 %v22, 52
    %v367 = vpop.permute.xlu0 %366
    %v368 = vrot.slane %v367, 1
    %369 = vrot.lane.b32.xlu0 %v22, 48
    %v370 = vpop.permute.xlu0 %369
    %v371 = vrot.slane %v370, 1
    %372 = vrot.lane.b32.xlu0 %v22, 44
    %v373 = vpop.permute.xlu0 %372
    %v374 = vrot.slane %v373, 1
    %375 = vrot.lane.b32.xlu0 %v22, 40
    %v376 = vpop.permute.xlu0 %375
    %v377 = vrot.slane %v376, 1
    %378 = vrot.lane.b32.xlu0 %v22, 36
    %v379 = vpop.permute.xlu0 %378
    %v380 = vrot.slane %v379, 1
    %381 = vrot.lane.b32.xlu0 %v22, 32
    %v382 = vpop.permute.xlu0 %381
    %v383 = vrot.slane %v382, 1
    %384 = vrot.lane.b32.xlu0 %v22, 28
    %v385 = vpop.permute.xlu0 %384
    %v386 = vrot.slane %v385, 1
    %387 = vrot.lane.b32.xlu0 %v22, 24
    %v388 = vpop.permute.xlu0 %387
    %v389 = vrot.slane %v388, 1
    %390 = vrot.lane.b32.xlu0 %v22, 20
    %v391 = vpop.permute.xlu0 %390
    %v392 = vrot.slane %v391, 1
    %393 = vrot.lane.b32.xlu0 %v22, 16
    %v394 = vpop.permute.xlu0 %393
    %v395 = vrot.slane %v394, 1
    %396 = vrot.lane.b32.xlu0 %v22, 12
    %v397 = vpop.permute.xlu0 %396
    %v398 = vrot.slane %v397, 1
    %399 = vrot.lane.b32.xlu0 %v22, 8
    %v400 = vpop.permute.xlu0 %399
    %v401 = vrot.slane %v400, 1
    %402 = vrot.lane.b32.xlu0 %v22, 4
    %v403 = vpop.permute.xlu0 %402
    %v404 = vrot.slane %v403, 1
    %v405 = vrot.slane %v22, 2
    %v406 = vrot.slane %v313, 2
    %v407 = vrot.slane %v316, 2
    %v408 = vrot.slane %v319, 2
    %v409 = vrot.slane %v322, 2
    %v410 = vrot.slane %v325, 2
    %v411 = vrot.slane %v328, 2
    %v412 = vrot.slane %v331, 2
    %v413 = vrot.slane %v334, 2
    %v414 = vrot.slane %v337, 2
    %v415 = vrot.slane %v340, 2
    %v416 = vrot.slane %v343, 2
    %v417 = vrot.slane %v346, 2
    %v418 = vrot.slane %v349, 2
    %v419 = vrot.slane %v352, 2
    %v420 = vrot.slane %v355, 2
    %v421 = vrot.slane %v358, 2
    %v422 = vrot.slane %v361, 2
    %v423 = vrot.slane %v364, 2
    %v424 = vrot.slane %v367, 2
    %v425 = vrot.slane %v370, 2
    %v426 = vrot.slane %v373, 2
    %v427 = vrot.slane %v376, 2
    %v428 = vrot.slane %v379, 2
    %v429 = vrot.slane %v382, 2
    %v430 = vrot.slane %v385, 2
    %v431 = vrot.slane %v388, 2
    %v432 = vrot.slane %v391, 2
    %v433 = vrot.slane %v394, 2
    %v434 = vrot.slane %v397, 2
    %v435 = vrot.slane %v400, 2
    %v436 = vrot.slane %v403, 2
    %v437 = vrot.slane %v22, 3
    %v438 = vrot.slane %v313, 3
    %v439 = vrot.slane %v316, 3
    %v440 = vrot.slane %v319, 3
    %v441 = vrot.slane %v322, 3
    %v442 = vrot.slane %v325, 3
    %v443 = vrot.slane %v328, 3
    %v444 = vrot.slane %v331, 3
    %v445 = vrot.slane %v334, 3
    %v446 = vrot.slane %v337, 3
    %v447 = vrot.slane %v340, 3
    %v448 = vrot.slane %v343, 3
    %v449 = vrot.slane %v346, 3
    %v450 = vrot.slane %v349, 3
    %v451 = vrot.slane %v352, 3
    %v452 = vrot.slane %v355, 3
    %v453 = vrot.slane %v358, 3
    %v454 = vrot.slane %v361, 3
    %v455 = vrot.slane %v364, 3
    %v456 = vrot.slane %v367, 3
    %v457 = vrot.slane %v370, 3
    %v458 = vrot.slane %v373, 3
    %v459 = vrot.slane %v376, 3
    %v460 = vrot.slane %v379, 3
    %v461 = vrot.slane %v382, 3
    %v462 = vrot.slane %v385, 3
    %v463 = vrot.slane %v388, 3
    %v464 = vrot.slane %v391, 3
    %v465 = vrot.slane %v394, 3
    %v466 = vrot.slane %v397, 3
    %v467 = vrot.slane %v400, 3
    %v468 = vrot.slane %v403, 3
    %v469 = vrot.slane %v22, 4
    %v470 = vrot.slane %v313, 4
    %v471 = vrot.slane %v316, 4
    %v472 = vrot.slane %v319, 4
    %v473 = vrot.slane %v322, 4
    %v474 = vrot.slane %v325, 4
    %v475 = vrot.slane %v328, 4
    %v476 = vrot.slane %v331, 4
    %v477 = vrot.slane %v334, 4
    %v478 = vrot.slane %v337, 4
    %v479 = vrot.slane %v340, 4
    %v480 = vrot.slane %v343, 4
    %v481 = vrot.slane %v346, 4
    %v482 = vrot.slane %v349, 4
    %v483 = vrot.slane %v352, 4
    %v484 = vrot.slane %v355, 4
    %v485 = vrot.slane %v358, 4
    %v486 = vrot.slane %v361, 4
    %v487 = vrot.slane %v364, 4
    %v488 = vrot.slane %v367, 4
    %v489 = vrot.slane %v370, 4
    %v490 = vrot.slane %v373, 4
    %v491 = vrot.slane %v376, 4
    %v492 = vrot.slane %v379, 4
    %v493 = vrot.slane %v382, 4
    %v494 = vrot.slane %v385, 4
    %v495 = vrot.slane %v388, 4
    %v496 = vrot.slane %v391, 4
    %v497 = vrot.slane %v394, 4
    %v498 = vrot.slane %v397, 4
    %v499 = vrot.slane %v400, 4
    %v500 = vrot.slane %v403, 4
    %v501 = vrot.slane %v22, 5
    %v502 = vrot.slane %v313, 5
    %v503 = vrot.slane %v316, 5
    %v504 = vrot.slane %v319, 5
    %v505 = vrot.slane %v322, 5
    %v506 = vrot.slane %v325, 5
    %v507 = vrot.slane %v328, 5
    %v508 = vrot.slane %v331, 5
    %v509 = vrot.slane %v334, 5
    %v510 = vrot.slane %v337, 5
    %v511 = vrot.slane %v340, 5
    %v512 = vrot.slane %v343, 5
    %v513 = vrot.slane %v346, 5
    %v514 = vrot.slane %v349, 5
    %v515 = vrot.slane %v352, 5
    %v516 = vrot.slane %v355, 5
    %v517 = vrot.slane %v358, 5
    %v518 = vrot.slane %v361, 5
    %v519 = vrot.slane %v364, 5
    %v520 = vrot.slane %v367, 5
    %v521 = vrot.slane %v370, 5
    %v522 = vrot.slane %v373, 5
    %v523 = vrot.slane %v376, 5
    %v524 = vrot.slane %v379, 5
    %v525 = vrot.slane %v382, 5
    %v526 = vrot.slane %v385, 5
    %v527 = vrot.slane %v388, 5
    %v528 = vrot.slane %v391, 5
    %v529 = vrot.slane %v394, 5
    %v530 = vrot.slane %v397, 5
    %v531 = vrot.slane %v400, 5
    %v532 = vrot.slane %v403, 5
    %v533 = vrot.slane %v22, 6
    %v534 = vrot.slane %v313, 6
    %v535 = vrot.slane %v316, 6
    %v536 = vrot.slane %v319, 6
    %v537 = vrot.slane %v322, 6
    %v538 = vrot.slane %v325, 6
    %v539 = vrot.slane %v328, 6
    %v540 = vrot.slane %v331, 6
    %v541 = vrot.slane %v334, 6
    %v542 = vrot.slane %v337, 6
    %v543 = vrot.slane %v340, 6
    %v544 = vrot.slane %v343, 6
    %v545 = vrot.slane %v346, 6
    %v546 = vrot.slane %v349, 6
    %v547 = vrot.slane %v352, 6
    %v548 = vrot.slane %v355, 6
    %v549 = vrot.slane %v358, 6
    %v550 = vrot.slane %v361, 6
    %v551 = vrot.slane %v364, 6
    %v552 = vrot.slane %v367, 6
    %v553 = vrot.slane %v370, 6
    %v554 = vrot.slane %v373, 6
    %v555 = vrot.slane %v376, 6
    %v556 = vrot.slane %v379, 6
    %v557 = vrot.slane %v382, 6
    %v558 = vrot.slane %v385, 6
    %v559 = vrot.slane %v388, 6
    %v560 = vrot.slane %v391, 6
    %v561 = vrot.slane %v394, 6
    %v562 = vrot.slane %v397, 6
    %v563 = vrot.slane %v400, 6
    %v564 = vrot.slane %v403, 6
    %v565 = vrot.slane %v22, 7
    %v566 = vrot.slane %v313, 7
    %v567 = vrot.slane %v316, 7
    %v568 = vrot.slane %v319, 7
    %v569 = vrot.slane %v322, 7
    %v570 = vrot.slane %v325, 7
    %v571 = vrot.slane %v328, 7
    %v572 = vrot.slane %v331, 7
    %v573 = vrot.slane %v334, 7
    %v574 = vrot.slane %v337, 7
    %v575 = vrot.slane %v340, 7
    %v576 = vrot.slane %v343, 7
    %v577 = vrot.slane %v346, 7
    %v578 = vrot.slane %v349, 7
    %v579 = vrot.slane %v352, 7
    %v580 = vrot.slane %v355, 7
    %v581 = vrot.slane %v358, 7
    %v582 = vrot.slane %v361, 7
    %v583 = vrot.slane %v364, 7
    %v584 = vrot.slane %v367, 7
    %v585 = vrot.slane %v370, 7
    %v586 = vrot.slane %v373, 7
    %v587 = vrot.slane %v376, 7
    %v588 = vrot.slane %v379, 7
    %v589 = vrot.slane %v382, 7
    %v590 = vrot.slane %v385, 7
    %v591 = vrot.slane %v388, 7
    %v592 = vrot.slane %v391, 7
    %v593 = vrot.slane %v394, 7
    %v594 = vrot.slane %v397, 7
    %v595 = vrot.slane %v400, 7
    %v596 = vrot.slane %v403, 7
    %v597 = vcombine.low %v21, %v26
    %v598 = vcombine.low %v29, %v32
    %v599 = vcombine.low %v35, %v38
    %v600 = vcombine.low %v41, %v44
    %v602 = vunpack.c.l.s4 1966171168
    %v603 = vunpack.c.0.s8 %v602
    %v604 = vlaneseq
    %v605 = vshrl.u32 %v604, 7
    %v606 = vsub.s32 %v603, %v605
    %v607 = vrot.slane %v597, %v606
    %v609 = vunpack.c.l.s4 1966171168
    %v610 = vunpack.c.0.s8 %v609
    %v611 = vlaneseq
    %v612 = vshrl.u32 %v611, 7
    %v613 = vsub.s32 %v610, %v612
    %v614 = vrot.slane %v598, %v613
    %v616 = vunpack.c.l.s4 1966171168
    %v617 = vunpack.c.0.s8 %v616
    %v618 = vlaneseq
    %v619 = vshrl.u32 %v618, 7
    %v620 = vsub.s32 %v617, %v619
    %v621 = vrot.slane %v599, %v620
    %v623 = vunpack.c.l.s4 1966171168
    %v624 = vunpack.c.0.s8 %v623
    %v625 = vlaneseq
    %v626 = vshrl.u32 %v625, 7
    %v627 = vsub.s32 %v624, %v626
    %v628 = vrot.slane %v600, %v627
    %v629 = vcombine.low %v607, %v614
    %v630 = vcombine.low %v621, %v628
    %v632 = vunpack.c.l.s4 1966171168
    %v633 = vunpack.c.0.s8 %v632
    %v634 = vlaneseq
    %v635 = vshrl.u32 %v634, 7
    %v636 = vsub.s32 %v633, %v635
    %v637 = vrot.slane %v629, %v636
    %v639 = vunpack.c.l.s4 1966171168
    %v640 = vunpack.c.0.s8 %v639
    %v641 = vlaneseq
    %v642 = vshrl.u32 %v641, 7
    %v643 = vsub.s32 %v640, %v642
    %v644 = vrot.slane %v630, %v643
    %v645 = vcombine.low %v637, %v644
    %v646 = vcombine.low %v47, %v50
    %v647 = vcombine.low %v53, %v56
    %v648 = vcombine.low %v59, %v62
    %v649 = vcombine.low %v65, %v68
    %v651 = vunpack.c.l.s4 1966171168
    %v652 = vunpack.c.0.s8 %v651
    %v653 = vlaneseq
    %v654 = vshrl.u32 %v653, 7
    %v655 = vsub.s32 %v652, %v654
    %v656 = vrot.slane %v646, %v655
    %v658 = vunpack.c.l.s4 1966171168
    %v659 = vunpack.c.0.s8 %v658
    %v660 = vlaneseq
    %v661 = vshrl.u32 %v660, 7
    %v662 = vsub.s32 %v659, %v661
    %v663 = vrot.slane %v647, %v662
    %v665 = vunpack.c.l.s4 1966171168
    %v666 = vunpack.c.0.s8 %v665
    %v667 = vlaneseq
    %v668 = vshrl.u32 %v667, 7
    %v669 = vsub.s32 %v666, %v668
    %v670 = vrot.slane %v648, %v669
    %v672 = vunpack.c.l.s4 1966171168
    %v673 = vunpack.c.0.s8 %v672
    %v674 = vlaneseq
    %v675 = vshrl.u32 %v674, 7
    %v676 = vsub.s32 %v673, %v675
    %v677 = vrot.slane %v649, %v676
    %v678 = vcombine.low %v656, %v663
    %v679 = vcombine.low %v670, %v677
    %v681 = vunpack.c.l.s4 1966171168
    %v682 = vunpack.c.0.s8 %v681
    %v683 = vlaneseq
    %v684 = vshrl.u32 %v683, 7
    %v685 = vsub.s32 %v682, %v684
    %v686 = vrot.slane %v678, %v685
    %v688 = vunpack.c.l.s4 1966171168
    %v689 = vunpack.c.0.s8 %v688
    %v690 = vlaneseq
    %v691 = vshrl.u32 %v690, 7
    %v692 = vsub.s32 %v689, %v691
    %v693 = vrot.slane %v679, %v692
    %v694 = vcombine.low %v686, %v693
    %v695 = vcombine.low %v71, %v74
    %v696 = vcombine.low %v77, %v80
    %v697 = vcombine.low %v83, %v86
    %v698 = vcombine.low %v89, %v92
    %v700 = vunpack.c.l.s4 1966171168
    %v701 = vunpack.c.0.s8 %v700
    %v702 = vlaneseq
    %v703 = vshrl.u32 %v702, 7
    %v704 = vsub.s32 %v701, %v703
    %v705 = vrot.slane %v695, %v704
    %v707 = vunpack.c.l.s4 1966171168
    %v708 = vunpack.c.0.s8 %v707
    %v709 = vlaneseq
    %v710 = vshrl.u32 %v709, 7
    %v711 = vsub.s32 %v708, %v710
    %v712 = vrot.slane %v696, %v711
    %v714 = vunpack.c.l.s4 1966171168
    %v715 = vunpack.c.0.s8 %v714
    %v716 = vlaneseq
    %v717 = vshrl.u32 %v716, 7
    %v718 = vsub.s32 %v715, %v717
    %v719 = vrot.slane %v697, %v718
    %v721 = vunpack.c.l.s4 1966171168
    %v722 = vunpack.c.0.s8 %v721
    %v723 = vlaneseq
    %v724 = vshrl.u32 %v723, 7
    %v725 = vsub.s32 %v722, %v724
    %v726 = vrot.slane %v698, %v725
    %v727 = vcombine.low %v705, %v712
    %v728 = vcombine.low %v719, %v726
    %v730 = vunpack.c.l.s4 1966171168
    %v731 = vunpack.c.0.s8 %v730
    %v732 = vlaneseq
    %v733 = vshrl.u32 %v732, 7
    %v734 = vsub.s32 %v731, %v733
    %v735 = vrot.slane %v727, %v734
    %v737 = vunpack.c.l.s4 1966171168
    %v738 = vunpack.c.0.s8 %v737
    %v739 = vlaneseq
    %v740 = vshrl.u32 %v739, 7
    %v741 = vsub.s32 %v738, %v740
    %v742 = vrot.slane %v728, %v741
    %v743 = vcombine.low %v735, %v742
    %v744 = vcombine.low %v95, %v98
    %v745 = vcombine.low %v101, %v104
    %v746 = vcombine.low %v107, %v110
    %v747 = vcombine.low %v113, %v116
    %v749 = vunpack.c.l.s4 1966171168
    %v750 = vunpack.c.0.s8 %v749
    %v751 = vlaneseq
    %v752 = vshrl.u32 %v751, 7
    %v753 = vsub.s32 %v750, %v752
    %v754 = vrot.slane %v744, %v753
    %v756 = vunpack.c.l.s4 1966171168
    %v757 = vunpack.c.0.s8 %v756
    %v758 = vlaneseq
    %v759 = vshrl.u32 %v758, 7
    %v760 = vsub.s32 %v757, %v759
    %v761 = vrot.slane %v745, %v760
    %v763 = vunpack.c.l.s4 1966171168
    %v764 = vunpack.c.0.s8 %v763
    %v765 = vlaneseq
    %v766 = vshrl.u32 %v765, 7
    %v767 = vsub.s32 %v764, %v766
    %v768 = vrot.slane %v746, %v767
    %v770 = vunpack.c.l.s4 1966171168
    %v771 = vunpack.c.0.s8 %v770
    %v772 = vlaneseq
    %v773 = vshrl.u32 %v772, 7
    %v774 = vsub.s32 %v771, %v773
    %v775 = vrot.slane %v747, %v774
    %v776 = vcombine.low %v754, %v761
    %v777 = vcombine.low %v768, %v775
    %v779 = vunpack.c.l.s4 1966171168
    %v780 = vunpack.c.0.s8 %v779
    %v781 = vlaneseq
    %v782 = vshrl.u32 %v781, 7
    %v783 = vsub.s32 %v780, %v782
    %v784 = vrot.slane %v776, %v783
    %v786 = vunpack.c.l.s4 1966171168
    %v787 = vunpack.c.0.s8 %v786
    %v788 = vlaneseq
    %v789 = vshrl.u32 %v788, 7
    %v790 = vsub.s32 %v787, %v789
    %v791 = vrot.slane %v777, %v790
    %v792 = vcombine.low %v784, %v791
    %v793 = vcombine.low %v24, %v27
    %v794 = vcombine.low %v30, %v33
    %v795 = vcombine.low %v36, %v39
    %v796 = vcombine.low %v42, %v45
    %v798 = vunpack.c.l.s4 1966171168
    %v799 = vunpack.c.0.s8 %v798
    %v800 = vlaneseq
    %v801 = vshrl.u32 %v800, 7
    %v802 = vsub.s32 %v799, %v801
    %v803 = vrot.slane %v793, %v802
    %v805 = vunpack.c.l.s4 1966171168
    %v806 = vunpack.c.0.s8 %v805
    %v807 = vlaneseq
    %v808 = vshrl.u32 %v807, 7
    %v809 = vsub.s32 %v806, %v808
    %v810 = vrot.slane %v794, %v809
    %v812 = vunpack.c.l.s4 1966171168
    %v813 = vunpack.c.0.s8 %v812
    %v814 = vlaneseq
    %v815 = vshrl.u32 %v814, 7
    %v816 = vsub.s32 %v813, %v815
    %v817 = vrot.slane %v795, %v816
    %v819 = vunpack.c.l.s4 1966171168
    %v820 = vunpack.c.0.s8 %v819
    %v821 = vlaneseq
    %v822 = vshrl.u32 %v821, 7
    %v823 = vsub.s32 %v820, %v822
    %v824 = vrot.slane %v796, %v823
    %v825 = vcombine.low %v803, %v810
    %v826 = vcombine.low %v817, %v824
    %v828 = vunpack.c.l.s4 1966171168
    %v829 = vunpack.c.0.s8 %v828
    %v830 = vlaneseq
    %v831 = vshrl.u32 %v830, 7
    %v832 = vsub.s32 %v829, %v831
    %v833 = vrot.slane %v825, %v832
    %v835 = vunpack.c.l.s4 1966171168
    %v836 = vunpack.c.0.s8 %v835
    %v837 = vlaneseq
    %v838 = vshrl.u32 %v837, 7
    %v839 = vsub.s32 %v836, %v838
    %v840 = vrot.slane %v826, %v839
    %v841 = vcombine.low %v833, %v840
    %v842 = vcombine.low %v48, %v51
    %v843 = vcombine.low %v54, %v57
    %v844 = vcombine.low %v60, %v63
    %v845 = vcombine.low %v66, %v69
    %v847 = vunpack.c.l.s4 1966171168
    %v848 = vunpack.c.0.s8 %v847
    %v849 = vlaneseq
    %v850 = vshrl.u32 %v849, 7
    %v851 = vsub.s32 %v848, %v850
    %v852 = vrot.slane %v842, %v851
    %v854 = vunpack.c.l.s4 1966171168
    %v855 = vunpack.c.0.s8 %v854
    %v856 = vlaneseq
    %v857 = vshrl.u32 %v856, 7
    %v858 = vsub.s32 %v855, %v857
    %v859 = vrot.slane %v843, %v858
    %v861 = vunpack.c.l.s4 1966171168
    %v862 = vunpack.c.0.s8 %v861
    %v863 = vlaneseq
    %v864 = vshrl.u32 %v863, 7
    %v865 = vsub.s32 %v862, %v864
    %v866 = vrot.slane %v844, %v865
    %v868 = vunpack.c.l.s4 1966171168
    %v869 = vunpack.c.0.s8 %v868
    %v870 = vlaneseq
    %v871 = vshrl.u32 %v870, 7
    %v872 = vsub.s32 %v869, %v871
    %v873 = vrot.slane %v845, %v872
    %v874 = vcombine.low %v852, %v859
    %v875 = vcombine.low %v866, %v873
    %v877 = vunpack.c.l.s4 1966171168
    %v878 = vunpack.c.0.s8 %v877
    %v879 = vlaneseq
    %v880 = vshrl.u32 %v879, 7
    %v881 = vsub.s32 %v878, %v880
    %v882 = vrot.slane %v874, %v881
    %v884 = vunpack.c.l.s4 1966171168
    %v885 = vunpack.c.0.s8 %v884
    %v886 = vlaneseq
    %v887 = vshrl.u32 %v886, 7
    %v888 = vsub.s32 %v885, %v887
    %v889 = vrot.slane %v875, %v888
    %v890 = vcombine.low %v882, %v889
    %v891 = vcombine.low %v72, %v75
    %v892 = vcombine.low %v78, %v81
    %v893 = vcombine.low %v84, %v87
    %v894 = vcombine.low %v90, %v93
    %v896 = vunpack.c.l.s4 1966171168
    %v897 = vunpack.c.0.s8 %v896
    %v898 = vlaneseq
    %v899 = vshrl.u32 %v898, 7
    %v900 = vsub.s32 %v897, %v899
    %v901 = vrot.slane %v891, %v900
    %v903 = vunpack.c.l.s4 1966171168
    %v904 = vunpack.c.0.s8 %v903
    %v905 = vlaneseq
    %v906 = vshrl.u32 %v905, 7
    %v907 = vsub.s32 %v904, %v906
    %v908 = vrot.slane %v892, %v907
    %v910 = vunpack.c.l.s4 1966171168
    %v911 = vunpack.c.0.s8 %v910
    %v912 = vlaneseq
    %v913 = vshrl.u32 %v912, 7
    %v914 = vsub.s32 %v911, %v913
    %v915 = vrot.slane %v893, %v914
    %v917 = vunpack.c.l.s4 1966171168
    %v918 = vunpack.c.0.s8 %v917
    %v919 = vlaneseq
    %v920 = vshrl.u32 %v919, 7
    %v921 = vsub.s32 %v918, %v920
    %v922 = vrot.slane %v894, %v921
    %v923 = vcombine.low %v901, %v908
    %v924 = vcombine.low %v915, %v922
    %v926 = vunpack.c.l.s4 1966171168
    %v927 = vunpack.c.0.s8 %v926
    %v928 = vlaneseq
    %v929 = vshrl.u32 %v928, 7
    %v930 = vsub.s32 %v927, %v929
    %v931 = vrot.slane %v923, %v930
    %v933 = vunpack.c.l.s4 1966171168
    %v934 = vunpack.c.0.s8 %v933
    %v935 = vlaneseq
    %v936 = vshrl.u32 %v935, 7
    %v937 = vsub.s32 %v934, %v936
    %v938 = vrot.slane %v924, %v937
    %v939 = vcombine.low %v931, %v938
    %v940 = vcombine.low %v96, %v99
    %v941 = vcombine.low %v102, %v105
    %v942 = vcombine.low %v108, %v111
    %v943 = vcombine.low %v114, %v117
    %v945 = vunpack.c.l.s4 1966171168
    %v946 = vunpack.c.0.s8 %v945
    %v947 = vlaneseq
    %v948 = vshrl.u32 %v947, 7
    %v949 = vsub.s32 %v946, %v948
    %v950 = vrot.slane %v940, %v949
    %v952 = vunpack.c.l.s4 1966171168
    %v953 = vunpack.c.0.s8 %v952
    %v954 = vlaneseq
    %v955 = vshrl.u32 %v954, 7
    %v956 = vsub.s32 %v953, %v955
    %v957 = vrot.slane %v941, %v956
    %v959 = vunpack.c.l.s4 1966171168
    %v960 = vunpack.c.0.s8 %v959
    %v961 = vlaneseq
    %v962 = vshrl.u32 %v961, 7
    %v963 = vsub.s32 %v960, %v962
    %v964 = vrot.slane %v942, %v963
    %v966 = vunpack.c.l.s4 1966171168
    %v967 = vunpack.c.0.s8 %v966
    %v968 = vlaneseq
    %v969 = vshrl.u32 %v968, 7
    %v970 = vsub.s32 %v967, %v969
    %v971 = vrot.slane %v943, %v970
    %v972 = vcombine.low %v950, %v957
    %v973 = vcombine.low %v964, %v971
    %v975 = vunpack.c.l.s4 1966171168
    %v976 = vunpack.c.0.s8 %v975
    %v977 = vlaneseq
    %v978 = vshrl.u32 %v977, 7
    %v979 = vsub.s32 %v976, %v978
    %v980 = vrot.slane %v972, %v979
    %v982 = vunpack.c.l.s4 1966171168
    %v983 = vunpack.c.0.s8 %v982
    %v984 = vlaneseq
    %v985 = vshrl.u32 %v984, 7
    %v986 = vsub.s32 %v983, %v985
    %v987 = vrot.slane %v973, %v986
    %v988 = vcombine.low %v980, %v987
    %v989 = vcombine.low %v118, %v119
    %v990 = vcombine.low %v120, %v121
    %v991 = vcombine.low %v122, %v123
    %v992 = vcombine.low %v124, %v125
    %v994 = vunpack.c.l.s4 1966171168
    %v995 = vunpack.c.0.s8 %v994
    %v996 = vlaneseq
    %v997 = vshrl.u32 %v996, 7
    %v998 = vsub.s32 %v995, %v997
    %v999 = vrot.slane %v989, %v998
    %v1001 = vunpack.c.l.s4 1966171168
    %v1002 = vunpack.c.0.s8 %v1001
    %v1003 = vlaneseq
    %v1004 = vshrl.u32 %v1003, 7
    %v1005 = vsub.s32 %v1002, %v1004
    %v1006 = vrot.slane %v990, %v1005
    %v1008 = vunpack.c.l.s4 1966171168
    %v1009 = vunpack.c.0.s8 %v1008
    %v1010 = vlaneseq
    %v1011 = vshrl.u32 %v1010, 7
    %v1012 = vsub.s32 %v1009, %v1011
    %v1013 = vrot.slane %v991, %v1012
    %v1015 = vunpack.c.l.s4 1966171168
    %v1016 = vunpack.c.0.s8 %v1015
    %v1017 = vlaneseq
    %v1018 = vshrl.u32 %v1017, 7
    %v1019 = vsub.s32 %v1016, %v1018
    %v1020 = vrot.slane %v992, %v1019
    %v1021 = vcombine.low %v999, %v1006
    %v1022 = vcombine.low %v1013, %v1020
    %v1024 = vunpack.c.l.s4 1966171168
    %v1025 = vunpack.c.0.s8 %v1024
    %v1026 = vlaneseq
    %v1027 = vshrl.u32 %v1026, 7
    %v1028 = vsub.s32 %v1025, %v1027
    %v1029 = vrot.slane %v1021, %v1028
    %v1031 = vunpack.c.l.s4 1966171168
    %v1032 = vunpack.c.0.s8 %v1031
    %v1033 = vlaneseq
    %v1034 = vshrl.u32 %v1033, 7
    %v1035 = vsub.s32 %v1032, %v1034
    %v1036 = vrot.slane %v1022, %v1035
    %v1037 = vcombine.low %v1029, %v1036
    %v1038 = vcombine.low %v126, %v127
    %v1039 = vcombine.low %v128, %v129
    %v1040 = vcombine.low %v130, %v131
    %v1041 = vcombine.low %v132, %v133
    %v1043 = vunpack.c.l.s4 1966171168
    %v1044 = vunpack.c.0.s8 %v1043
    %v1045 = vlaneseq
    %v1046 = vshrl.u32 %v1045, 7
    %v1047 = vsub.s32 %v1044, %v1046
    %v1048 = vrot.slane %v1038, %v1047
    %v1050 = vunpack.c.l.s4 1966171168
    %v1051 = vunpack.c.0.s8 %v1050
    %v1052 = vlaneseq
    %v1053 = vshrl.u32 %v1052, 7
    %v1054 = vsub.s32 %v1051, %v1053
    %v1055 = vrot.slane %v1039, %v1054
    %v1057 = vunpack.c.l.s4 1966171168
    %v1058 = vunpack.c.0.s8 %v1057
    %v1059 = vlaneseq
    %v1060 = vshrl.u32 %v1059, 7
    %v1061 = vsub.s32 %v1058, %v1060
    %v1062 = vrot.slane %v1040, %v1061
    %v1064 = vunpack.c.l.s4 1966171168
    %v1065 = vunpack.c.0.s8 %v1064
    %v1066 = vlaneseq
    %v1067 = vshrl.u32 %v1066, 7
    %v1068 = vsub.s32 %v1065, %v1067
    %v1069 = vrot.slane %v1041, %v1068
    %v1070 = vcombine.low %v1048, %v1055
    %v1071 = vcombine.low %v1062, %v1069
    %v1073 = vunpack.c.l.s4 1966171168
    %v1074 = vunpack.c.0.s8 %v1073
    %v1075 = vlaneseq
    %v1076 = vshrl.u32 %v1075, 7
    %v1077 = vsub.s32 %v1074, %v1076
    %v1078 = vrot.slane %v1070, %v1077
    %v1080 = vunpack.c.l.s4 1966171168
    %v1081 = vunpack.c.0.s8 %v1080
    %v1082 = vlaneseq
    %v1083 = vshrl.u32 %v1082, 7
    %v1084 = vsub.s32 %v1081, %v1083
    %v1085 = vrot.slane %v1071, %v1084
    %v1086 = vcombine.low %v1078, %v1085
    %v1087 = vcombine.low %v134, %v135
    %v1088 = vcombine.low %v136, %v137
    %v1089 = vcombine.low %v138, %v139
    %v1090 = vcombine.low %v140, %v141
    %v1092 = vunpack.c.l.s4 1966171168
    %v1093 = vunpack.c.0.s8 %v1092
    %v1094 = vlaneseq
    %v1095 = vshrl.u32 %v1094, 7
    %v1096 = vsub.s32 %v1093, %v1095
    %v1097 = vrot.slane %v1087, %v1096
    %v1099 = vunpack.c.l.s4 1966171168
    %v1100 = vunpack.c.0.s8 %v1099
    %v1101 = vlaneseq
    %v1102 = vshrl.u32 %v1101, 7
    %v1103 = vsub.s32 %v1100, %v1102
    %v1104 = vrot.slane %v1088, %v1103
    %v1106 = vunpack.c.l.s4 1966171168
    %v1107 = vunpack.c.0.s8 %v1106
    %v1108 = vlaneseq
    %v1109 = vshrl.u32 %v1108, 7
    %v1110 = vsub.s32 %v1107, %v1109
    %v1111 = vrot.slane %v1089, %v1110
    %v1113 = vunpack.c.l.s4 1966171168
    %v1114 = vunpack.c.0.s8 %v1113
    %v1115 = vlaneseq
    %v1116 = vshrl.u32 %v1115, 7
    %v1117 = vsub.s32 %v1114, %v1116
    %v1118 = vrot.slane %v1090, %v1117
    %v1119 = vcombine.low %v1097, %v1104
    %v1120 = vcombine.low %v1111, %v1118
    %v1122 = vunpack.c.l.s4 1966171168
    %v1123 = vunpack.c.0.s8 %v1122
    %v1124 = vlaneseq
    %v1125 = vshrl.u32 %v1124, 7
    %v1126 = vsub.s32 %v1123, %v1125
    %v1127 = vrot.slane %v1119, %v1126
    %v1129 = vunpack.c.l.s4 1966171168
    %v1130 = vunpack.c.0.s8 %v1129
    %v1131 = vlaneseq
    %v1132 = vshrl.u32 %v1131, 7
    %v1133 = vsub.s32 %v1130, %v1132
    %v1134 = vrot.slane %v1120, %v1133
    %v1135 = vcombine.low %v1127, %v1134
    %v1136 = vcombine.low %v142, %v143
    %v1137 = vcombine.low %v144, %v145
    %v1138 = vcombine.low %v146, %v147
    %v1139 = vcombine.low %v148, %v149
    %v1141 = vunpack.c.l.s4 1966171168
    %v1142 = vunpack.c.0.s8 %v1141
    %v1143 = vlaneseq
    %v1144 = vshrl.u32 %v1143, 7
    %v1145 = vsub.s32 %v1142, %v1144
    %v1146 = vrot.slane %v1136, %v1145
    %v1148 = vunpack.c.l.s4 1966171168
    %v1149 = vunpack.c.0.s8 %v1148
    %v1150 = vlaneseq
    %v1151 = vshrl.u32 %v1150, 7
    %v1152 = vsub.s32 %v1149, %v1151
    %v1153 = vrot.slane %v1137, %v1152
    %v1155 = vunpack.c.l.s4 1966171168
    %v1156 = vunpack.c.0.s8 %v1155
    %v1157 = vlaneseq
    %v1158 = vshrl.u32 %v1157, 7
    %v1159 = vsub.s32 %v1156, %v1158
    %v1160 = vrot.slane %v1138, %v1159
    %v1162 = vunpack.c.l.s4 1966171168
    %v1163 = vunpack.c.0.s8 %v1162
    %v1164 = vlaneseq
    %v1165 = vshrl.u32 %v1164, 7
    %v1166 = vsub.s32 %v1163, %v1165
    %v1167 = vrot.slane %v1139, %v1166
    %v1168 = vcombine.low %v1146, %v1153
    %v1169 = vcombine.low %v1160, %v1167
    %v1171 = vunpack.c.l.s4 1966171168
    %v1172 = vunpack.c.0.s8 %v1171
    %v1173 = vlaneseq
    %v1174 = vshrl.u32 %v1173, 7
    %v1175 = vsub.s32 %v1172, %v1174
    %v1176 = vrot.slane %v1168, %v1175
    %v1178 = vunpack.c.l.s4 1966171168
    %v1179 = vunpack.c.0.s8 %v1178
    %v1180 = vlaneseq
    %v1181 = vshrl.u32 %v1180, 7
    %v1182 = vsub.s32 %v1179, %v1181
    %v1183 = vrot.slane %v1169, %v1182
    %v1184 = vcombine.low %v1176, %v1183
    %v1185 = vcombine.low %v150, %v151
    %v1186 = vcombine.low %v152, %v153
    %v1187 = vcombine.low %v154, %v155
    %v1188 = vcombine.low %v156, %v157
    %v1190 = vunpack.c.l.s4 1966171168
    %v1191 = vunpack.c.0.s8 %v1190
    %v1192 = vlaneseq
    %v1193 = vshrl.u32 %v1192, 7
    %v1194 = vsub.s32 %v1191, %v1193
    %v1195 = vrot.slane %v1185, %v1194
    %v1197 = vunpack.c.l.s4 1966171168
    %v1198 = vunpack.c.0.s8 %v1197
    %v1199 = vlaneseq
    %v1200 = vshrl.u32 %v1199, 7
    %v1201 = vsub.s32 %v1198, %v1200
    %v1202 = vrot.slane %v1186, %v1201
    %v1204 = vunpack.c.l.s4 1966171168
    %v1205 = vunpack.c.0.s8 %v1204
    %v1206 = vlaneseq
    %v1207 = vshrl.u32 %v1206, 7
    %v1208 = vsub.s32 %v1205, %v1207
    %v1209 = vrot.slane %v1187, %v1208
    %v1211 = vunpack.c.l.s4 1966171168
    %v1212 = vunpack.c.0.s8 %v1211
    %v1213 = vlaneseq
    %v1214 = vshrl.u32 %v1213, 7
    %v1215 = vsub.s32 %v1212, %v1214
    %v1216 = vrot.slane %v1188, %v1215
    %v1217 = vcombine.low %v1195, %v1202
    %v1218 = vcombine.low %v1209, %v1216
    %v1220 = vunpack.c.l.s4 1966171168
    %v1221 = vunpack.c.0.s8 %v1220
    %v1222 = vlaneseq
    %v1223 = vshrl.u32 %v1222, 7
    %v1224 = vsub.s32 %v1221, %v1223
    %v1225 = vrot.slane %v1217, %v1224
    %v1227 = vunpack.c.l.s4 1966171168
    %v1228 = vunpack.c.0.s8 %v1227
    %v1229 = vlaneseq
    %v1230 = vshrl.u32 %v1229, 7
    %v1231 = vsub.s32 %v1228, %v1230
    %v1232 = vrot.slane %v1218, %v1231
    %v1233 = vcombine.low %v1225, %v1232
    %v1234 = vcombine.low %v158, %v159
    %v1235 = vcombine.low %v160, %v161
    %v1236 = vcombine.low %v162, %v163
    %v1237 = vcombine.low %v164, %v165
    %v1239 = vunpack.c.l.s4 1966171168
    %v1240 = vunpack.c.0.s8 %v1239
    %v1241 = vlaneseq
    %v1242 = vshrl.u32 %v1241, 7
    %v1243 = vsub.s32 %v1240, %v1242
    %v1244 = vrot.slane %v1234, %v1243
    %v1246 = vunpack.c.l.s4 1966171168
    %v1247 = vunpack.c.0.s8 %v1246
    %v1248 = vlaneseq
    %v1249 = vshrl.u32 %v1248, 7
    %v1250 = vsub.s32 %v1247, %v1249
    %v1251 = vrot.slane %v1235, %v1250
    %v1253 = vunpack.c.l.s4 1966171168
    %v1254 = vunpack.c.0.s8 %v1253
    %v1255 = vlaneseq
    %v1256 = vshrl.u32 %v1255, 7
    %v1257 = vsub.s32 %v1254, %v1256
    %v1258 = vrot.slane %v1236, %v1257
    %v1260 = vunpack.c.l.s4 1966171168
    %v1261 = vunpack.c.0.s8 %v1260
    %v1262 = vlaneseq
    %v1263 = vshrl.u32 %v1262, 7
    %v1264 = vsub.s32 %v1261, %v1263
    %v1265 = vrot.slane %v1237, %v1264
    %v1266 = vcombine.low %v1244, %v1251
    %v1267 = vcombine.low %v1258, %v1265
    %v1269 = vunpack.c.l.s4 1966171168
    %v1270 = vunpack.c.0.s8 %v1269
    %v1271 = vlaneseq
    %v1272 = vshrl.u32 %v1271, 7
    %v1273 = vsub.s32 %v1270, %v1272
    %v1274 = vrot.slane %v1266, %v1273
    %v1276 = vunpack.c.l.s4 1966171168
    %v1277 = vunpack.c.0.s8 %v1276
    %v1278 = vlaneseq
    %v1279 = vshrl.u32 %v1278, 7
    %v1280 = vsub.s32 %v1277, %v1279
    %v1281 = vrot.slane %v1267, %v1280
    %v1282 = vcombine.low %v1274, %v1281
    %v1283 = vcombine.low %v166, %v167
    %v1284 = vcombine.low %v168, %v169
    %v1285 = vcombine.low %v170, %v171
    %v1286 = vcombine.low %v172, %v173
    %v1288 = vunpack.c.l.s4 1966171168
    %v1289 = vunpack.c.0.s8 %v1288
    %v1290 = vlaneseq
    %v1291 = vshrl.u32 %v1290, 7
    %v1292 = vsub.s32 %v1289, %v1291
    %v1293 = vrot.slane %v1283, %v1292
    %v1295 = vunpack.c.l.s4 1966171168
    %v1296 = vunpack.c.0.s8 %v1295
    %v1297 = vlaneseq
    %v1298 = vshrl.u32 %v1297, 7
    %v1299 = vsub.s32 %v1296, %v1298
    %v1300 = vrot.slane %v1284, %v1299
    %v1302 = vunpack.c.l.s4 1966171168
    %v1303 = vunpack.c.0.s8 %v1302
    %v1304 = vlaneseq
    %v1305 = vshrl.u32 %v1304, 7
    %v1306 = vsub.s32 %v1303, %v1305
    %v1307 = vrot.slane %v1285, %v1306
    %v1309 = vunpack.c.l.s4 1966171168
    %v1310 = vunpack.c.0.s8 %v1309
    %v1311 = vlaneseq
    %v1312 = vshrl.u32 %v1311, 7
    %v1313 = vsub.s32 %v1310, %v1312
    %v1314 = vrot.slane %v1286, %v1313
    %v1315 = vcombine.low %v1293, %v1300
    %v1316 = vcombine.low %v1307, %v1314
    %v1318 = vunpack.c.l.s4 1966171168
    %v1319 = vunpack.c.0.s8 %v1318
    %v1320 = vlaneseq
    %v1321 = vshrl.u32 %v1320, 7
    %v1322 = vsub.s32 %v1319, %v1321
    %v1323 = vrot.slane %v1315, %v1322
    %v1325 = vunpack.c.l.s4 1966171168
    %v1326 = vunpack.c.0.s8 %v1325
    %v1327 = vlaneseq
    %v1328 = vshrl.u32 %v1327, 7
    %v1329 = vsub.s32 %v1326, %v1328
    %v1330 = vrot.slane %v1316, %v1329
    %v1331 = vcombine.low %v1323, %v1330
    %v1332 = vcombine.low %v174, %v175
    %v1333 = vcombine.low %v176, %v177
    %v1334 = vcombine.low %v178, %v179
    %v1335 = vcombine.low %v180, %v181
    %v1337 = vunpack.c.l.s4 1966171168
    %v1338 = vunpack.c.0.s8 %v1337
    %v1339 = vlaneseq
    %v1340 = vshrl.u32 %v1339, 7
    %v1341 = vsub.s32 %v1338, %v1340
    %v1342 = vrot.slane %v1332, %v1341
    %v1344 = vunpack.c.l.s4 1966171168
    %v1345 = vunpack.c.0.s8 %v1344
    %v1346 = vlaneseq
    %v1347 = vshrl.u32 %v1346, 7
    %v1348 = vsub.s32 %v1345, %v1347
    %v1349 = vrot.slane %v1333, %v1348
    %v1351 = vunpack.c.l.s4 1966171168
    %v1352 = vunpack.c.0.s8 %v1351
    %v1353 = vlaneseq
    %v1354 = vshrl.u32 %v1353, 7
    %v1355 = vsub.s32 %v1352, %v1354
    %v1356 = vrot.slane %v1334, %v1355
    %v1358 = vunpack.c.l.s4 1966171168
    %v1359 = vunpack.c.0.s8 %v1358
    %v1360 = vlaneseq
    %v1361 = vshrl.u32 %v1360, 7
    %v1362 = vsub.s32 %v1359, %v1361
    %v1363 = vrot.slane %v1335, %v1362
    %v1364 = vcombine.low %v1342, %v1349
    %v1365 = vcombine.low %v1356, %v1363
    %v1367 = vunpack.c.l.s4 1966171168
    %v1368 = vunpack.c.0.s8 %v1367
    %v1369 = vlaneseq
    %v1370 = vshrl.u32 %v1369, 7
    %v1371 = vsub.s32 %v1368, %v1370
    %v1372 = vrot.slane %v1364, %v1371
    %v1374 = vunpack.c.l.s4 1966171168
    %v1375 = vunpack.c.0.s8 %v1374
    %v1376 = vlaneseq
    %v1377 = vshrl.u32 %v1376, 7
    %v1378 = vsub.s32 %v1375, %v1377
    %v1379 = vrot.slane %v1365, %v1378
    %v1380 = vcombine.low %v1372, %v1379
    %v1381 = vcombine.low %v182, %v183
    %v1382 = vcombine.low %v184, %v185
    %v1383 = vcombine.low %v186, %v187
    %v1384 = vcombine.low %v188, %v189
    %v1386 = vunpack.c.l.s4 1966171168
    %v1387 = vunpack.c.0.s8 %v1386
    %v1388 = vlaneseq
    %v1389 = vshrl.u32 %v1388, 7
    %v1390 = vsub.s32 %v1387, %v1389
    %v1391 = vrot.slane %v1381, %v1390
    %v1393 = vunpack.c.l.s4 1966171168
    %v1394 = vunpack.c.0.s8 %v1393
    %v1395 = vlaneseq
    %v1396 = vshrl.u32 %v1395, 7
    %v1397 = vsub.s32 %v1394, %v1396
    %v1398 = vrot.slane %v1382, %v1397
    %v1400 = vunpack.c.l.s4 1966171168
    %v1401 = vunpack.c.0.s8 %v1400
    %v1402 = vlaneseq
    %v1403 = vshrl.u32 %v1402, 7
    %v1404 = vsub.s32 %v1401, %v1403
    %v1405 = vrot.slane %v1383, %v1404
    %v1407 = vunpack.c.l.s4 1966171168
    %v1408 = vunpack.c.0.s8 %v1407
    %v1409 = vlaneseq
    %v1410 = vshrl.u32 %v1409, 7
    %v1411 = vsub.s32 %v1408, %v1410
    %v1412 = vrot.slane %v1384, %v1411
    %v1413 = vcombine.low %v1391, %v1398
    %v1414 = vcombine.low %v1405, %v1412
    %v1416 = vunpack.c.l.s4 1966171168
    %v1417 = vunpack.c.0.s8 %v1416
    %v1418 = vlaneseq
    %v1419 = vshrl.u32 %v1418, 7
    %v1420 = vsub.s32 %v1417, %v1419
    %v1421 = vrot.slane %v1413, %v1420
    %v1423 = vunpack.c.l.s4 1966171168
    %v1424 = vunpack.c.0.s8 %v1423
    %v1425 = vlaneseq
    %v1426 = vshrl.u32 %v1425, 7
    %v1427 = vsub.s32 %v1424, %v1426
    %v1428 = vrot.slane %v1414, %v1427
    %v1429 = vcombine.low %v1421, %v1428
    %v1430 = vcombine.low %v190, %v191
    %v1431 = vcombine.low %v192, %v193
    %v1432 = vcombine.low %v194, %v195
    %v1433 = vcombine.low %v196, %v197
    %v1435 = vunpack.c.l.s4 1966171168
    %v1436 = vunpack.c.0.s8 %v1435
    %v1437 = vlaneseq
    %v1438 = vshrl.u32 %v1437, 7
    %v1439 = vsub.s32 %v1436, %v1438
    %v1440 = vrot.slane %v1430, %v1439
    %v1442 = vunpack.c.l.s4 1966171168
    %v1443 = vunpack.c.0.s8 %v1442
    %v1444 = vlaneseq
    %v1445 = vshrl.u32 %v1444, 7
    %v1446 = vsub.s32 %v1443, %v1445
    %v1447 = vrot.slane %v1431, %v1446
    %v1449 = vunpack.c.l.s4 1966171168
    %v1450 = vunpack.c.0.s8 %v1449
    %v1451 = vlaneseq
    %v1452 = vshrl.u32 %v1451, 7
    %v1453 = vsub.s32 %v1450, %v1452
    %v1454 = vrot.slane %v1432, %v1453
    %v1456 = vunpack.c.l.s4 1966171168
    %v1457 = vunpack.c.0.s8 %v1456
    %v1458 = vlaneseq
    %v1459 = vshrl.u32 %v1458, 7
    %v1460 = vsub.s32 %v1457, %v1459
    %v1461 = vrot.slane %v1433, %v1460
    %v1462 = vcombine.low %v1440, %v1447
    %v1463 = vcombine.low %v1454, %v1461
    %v1465 = vunpack.c.l.s4 1966171168
    %v1466 = vunpack.c.0.s8 %v1465
    %v1467 = vlaneseq
    %v1468 = vshrl.u32 %v1467, 7
    %v1469 = vsub.s32 %v1466, %v1468
    %v1470 = vrot.slane %v1462, %v1469
    %v1472 = vunpack.c.l.s4 1966171168
    %v1473 = vunpack.c.0.s8 %v1472
    %v1474 = vlaneseq
    %v1475 = vshrl.u32 %v1474, 7
    %v1476 = vsub.s32 %v1473, %v1475
    %v1477 = vrot.slane %v1463, %v1476
    %v1478 = vcombine.low %v1470, %v1477
    %v1479 = vcombine.low %v198, %v199
    %v1480 = vcombine.low %v200, %v201
    %v1481 = vcombine.low %v202, %v203
    %v1482 = vcombine.low %v204, %v205
    %v1484 = vunpack.c.l.s4 1966171168
    %v1485 = vunpack.c.0.s8 %v1484
    %v1486 = vlaneseq
    %v1487 = vshrl.u32 %v1486, 7
    %v1488 = vsub.s32 %v1485, %v1487
    %v1489 = vrot.slane %v1479, %v1488
    %v1491 = vunpack.c.l.s4 1966171168
    %v1492 = vunpack.c.0.s8 %v1491
    %v1493 = vlaneseq
    %v1494 = vshrl.u32 %v1493, 7
    %v1495 = vsub.s32 %v1492, %v1494
    %v1496 = vrot.slane %v1480, %v1495
    %v1498 = vunpack.c.l.s4 1966171168
    %v1499 = vunpack.c.0.s8 %v1498
    %v1500 = vlaneseq
    %v1501 = vshrl.u32 %v1500, 7
    %v1502 = vsub.s32 %v1499, %v1501
    %v1503 = vrot.slane %v1481, %v1502
    %v1505 = vunpack.c.l.s4 1966171168
    %v1506 = vunpack.c.0.s8 %v1505
    %v1507 = vlaneseq
    %v1508 = vshrl.u32 %v1507, 7
    %v1509 = vsub.s32 %v1506, %v1508
    %v1510 = vrot.slane %v1482, %v1509
    %v1511 = vcombine.low %v1489, %v1496
    %v1512 = vcombine.low %v1503, %v1510
    %v1514 = vunpack.c.l.s4 1966171168
    %v1515 = vunpack.c.0.s8 %v1514
    %v1516 = vlaneseq
    %v1517 = vshrl.u32 %v1516, 7
    %v1518 = vsub.s32 %v1515, %v1517
    %v1519 = vrot.slane %v1511, %v1518
    %v1521 = vunpack.c.l.s4 1966171168
    %v1522 = vunpack.c.0.s8 %v1521
    %v1523 = vlaneseq
    %v1524 = vshrl.u32 %v1523, 7
    %v1525 = vsub.s32 %v1522, %v1524
    %v1526 = vrot.slane %v1512, %v1525
    %v1527 = vcombine.low %v1519, %v1526
    %v1528 = vcombine.low %v206, %v207
    %v1529 = vcombine.low %v208, %v209
    %v1530 = vcombine.low %v210, %v211
    %v1531 = vcombine.low %v212, %v213
    %v1533 = vunpack.c.l.s4 1966171168
    %v1534 = vunpack.c.0.s8 %v1533
    %v1535 = vlaneseq
    %v1536 = vshrl.u32 %v1535, 7
    %v1537 = vsub.s32 %v1534, %v1536
    %v1538 = vrot.slane %v1528, %v1537
    %v1540 = vunpack.c.l.s4 1966171168
    %v1541 = vunpack.c.0.s8 %v1540
    %v1542 = vlaneseq
    %v1543 = vshrl.u32 %v1542, 7
    %v1544 = vsub.s32 %v1541, %v1543
    %v1545 = vrot.slane %v1529, %v1544
    %v1547 = vunpack.c.l.s4 1966171168
    %v1548 = vunpack.c.0.s8 %v1547
    %v1549 = vlaneseq
    %v1550 = vshrl.u32 %v1549, 7
    %v1551 = vsub.s32 %v1548, %v1550
    %v1552 = vrot.slane %v1530, %v1551
    %v1554 = vunpack.c.l.s4 1966171168
    %v1555 = vunpack.c.0.s8 %v1554
    %v1556 = vlaneseq
    %v1557 = vshrl.u32 %v1556, 7
    %v1558 = vsub.s32 %v1555, %v1557
    %v1559 = vrot.slane %v1531, %v1558
    %v1560 = vcombine.low %v1538, %v1545
    %v1561 = vcombine.low %v1552, %v1559
    %v1563 = vunpack.c.l.s4 1966171168
    %v1564 = vunpack.c.0.s8 %v1563
    %v1565 = vlaneseq
    %v1566 = vshrl.u32 %v1565, 7
    %v1567 = vsub.s32 %v1564, %v1566
    %v1568 = vrot.slane %v1560, %v1567
    %v1570 = vunpack.c.l.s4 1966171168
    %v1571 = vunpack.c.0.s8 %v1570
    %v1572 = vlaneseq
    %v1573 = vshrl.u32 %v1572, 7
    %v1574 = vsub.s32 %v1571, %v1573
    %v1575 = vrot.slane %v1561, %v1574
    %v1576 = vcombine.low %v1568, %v1575
    %v1577 = vcombine.low %v214, %v215
    %v1578 = vcombine.low %v216, %v217
    %v1579 = vcombine.low %v218, %v219
    %v1580 = vcombine.low %v220, %v221
    %v1582 = vunpack.c.l.s4 1966171168
    %v1583 = vunpack.c.0.s8 %v1582
    %v1584 = vlaneseq
    %v1585 = vshrl.u32 %v1584, 7
    %v1586 = vsub.s32 %v1583, %v1585
    %v1587 = vrot.slane %v1577, %v1586
    %v1589 = vunpack.c.l.s4 1966171168
    %v1590 = vunpack.c.0.s8 %v1589
    %v1591 = vlaneseq
    %v1592 = vshrl.u32 %v1591, 7
    %v1593 = vsub.s32 %v1590, %v1592
    %v1594 = vrot.slane %v1578, %v1593
    %v1596 = vunpack.c.l.s4 1966171168
    %v1597 = vunpack.c.0.s8 %v1596
    %v1598 = vlaneseq
    %v1599 = vshrl.u32 %v1598, 7
    %v1600 = vsub.s32 %v1597, %v1599
    %v1601 = vrot.slane %v1579, %v1600
    %v1603 = vunpack.c.l.s4 1966171168
    %v1604 = vunpack.c.0.s8 %v1603
    %v1605 = vlaneseq
    %v1606 = vshrl.u32 %v1605, 7
    %v1607 = vsub.s32 %v1604, %v1606
    %v1608 = vrot.slane %v1580, %v1607
    %v1609 = vcombine.low %v1587, %v1594
    %v1610 = vcombine.low %v1601, %v1608
    %v1612 = vunpack.c.l.s4 1966171168
    %v1613 = vunpack.c.0.s8 %v1612
    %v1614 = vlaneseq
    %v1615 = vshrl.u32 %v1614, 7
    %v1616 = vsub.s32 %v1613, %v1615
    %v1617 = vrot.slane %v1609, %v1616
    %v1619 = vunpack.c.l.s4 1966171168
    %v1620 = vunpack.c.0.s8 %v1619
    %v1621 = vlaneseq
    %v1622 = vshrl.u32 %v1621, 7
    %v1623 = vsub.s32 %v1620, %v1622
    %v1624 = vrot.slane %v1610, %v1623
    %v1625 = vcombine.low %v1617, %v1624
    %v1626 = vcombine.low %v222, %v223
    %v1627 = vcombine.low %v224, %v225
    %v1628 = vcombine.low %v226, %v227
    %v1629 = vcombine.low %v228, %v229
    %v1631 = vunpack.c.l.s4 1966171168
    %v1632 = vunpack.c.0.s8 %v1631
    %v1633 = vlaneseq
    %v1634 = vshrl.u32 %v1633, 7
    %v1635 = vsub.s32 %v1632, %v1634
    %v1636 = vrot.slane %v1626, %v1635
    %v1638 = vunpack.c.l.s4 1966171168
    %v1639 = vunpack.c.0.s8 %v1638
    %v1640 = vlaneseq
    %v1641 = vshrl.u32 %v1640, 7
    %v1642 = vsub.s32 %v1639, %v1641
    %v1643 = vrot.slane %v1627, %v1642
    %v1645 = vunpack.c.l.s4 1966171168
    %v1646 = vunpack.c.0.s8 %v1645
    %v1647 = vlaneseq
    %v1648 = vshrl.u32 %v1647, 7
    %v1649 = vsub.s32 %v1646, %v1648
    %v1650 = vrot.slane %v1628, %v1649
    %v1652 = vunpack.c.l.s4 1966171168
    %v1653 = vunpack.c.0.s8 %v1652
    %v1654 = vlaneseq
    %v1655 = vshrl.u32 %v1654, 7
    %v1656 = vsub.s32 %v1653, %v1655
    %v1657 = vrot.slane %v1629, %v1656
    %v1658 = vcombine.low %v1636, %v1643
    %v1659 = vcombine.low %v1650, %v1657
    %v1661 = vunpack.c.l.s4 1966171168
    %v1662 = vunpack.c.0.s8 %v1661
    %v1663 = vlaneseq
    %v1664 = vshrl.u32 %v1663, 7
    %v1665 = vsub.s32 %v1662, %v1664
    %v1666 = vrot.slane %v1658, %v1665
    %v1668 = vunpack.c.l.s4 1966171168
    %v1669 = vunpack.c.0.s8 %v1668
    %v1670 = vlaneseq
    %v1671 = vshrl.u32 %v1670, 7
    %v1672 = vsub.s32 %v1669, %v1671
    %v1673 = vrot.slane %v1659, %v1672
    %v1674 = vcombine.low %v1666, %v1673
    %v1675 = vcombine.low %v230, %v231
    %v1676 = vcombine.low %v232, %v233
    %v1677 = vcombine.low %v234, %v235
    %v1678 = vcombine.low %v236, %v237
    %v1680 = vunpack.c.l.s4 1966171168
    %v1681 = vunpack.c.0.s8 %v1680
    %v1682 = vlaneseq
    %v1683 = vshrl.u32 %v1682, 7
    %v1684 = vsub.s32 %v1681, %v1683
    %v1685 = vrot.slane %v1675, %v1684
    %v1687 = vunpack.c.l.s4 1966171168
    %v1688 = vunpack.c.0.s8 %v1687
    %v1689 = vlaneseq
    %v1690 = vshrl.u32 %v1689, 7
    %v1691 = vsub.s32 %v1688, %v1690
    %v1692 = vrot.slane %v1676, %v1691
    %v1694 = vunpack.c.l.s4 1966171168
    %v1695 = vunpack.c.0.s8 %v1694
    %v1696 = vlaneseq
    %v1697 = vshrl.u32 %v1696, 7
    %v1698 = vsub.s32 %v1695, %v1697
    %v1699 = vrot.slane %v1677, %v1698
    %v1701 = vunpack.c.l.s4 1966171168
    %v1702 = vunpack.c.0.s8 %v1701
    %v1703 = vlaneseq
    %v1704 = vshrl.u32 %v1703, 7
    %v1705 = vsub.s32 %v1702, %v1704
    %v1706 = vrot.slane %v1678, %v1705
    %v1707 = vcombine.low %v1685, %v1692
    %v1708 = vcombine.low %v1699, %v1706
    %v1710 = vunpack.c.l.s4 1966171168
    %v1711 = vunpack.c.0.s8 %v1710
    %v1712 = vlaneseq
    %v1713 = vshrl.u32 %v1712, 7
    %v1714 = vsub.s32 %v1711, %v1713
    %v1715 = vrot.slane %v1707, %v1714
    %v1717 = vunpack.c.l.s4 1966171168
    %v1718 = vunpack.c.0.s8 %v1717
    %v1719 = vlaneseq
    %v1720 = vshrl.u32 %v1719, 7
    %v1721 = vsub.s32 %v1718, %v1720
    %v1722 = vrot.slane %v1708, %v1721
    %v1723 = vcombine.low %v1715, %v1722
    %v1724 = vcombine.low %v238, %v239
    %v1725 = vcombine.low %v240, %v241
    %v1726 = vcombine.low %v242, %v243
    %v1727 = vcombine.low %v244, %v245
    %v1729 = vunpack.c.l.s4 1966171168
    %v1730 = vunpack.c.0.s8 %v1729
    %v1731 = vlaneseq
    %v1732 = vshrl.u32 %v1731, 7
    %v1733 = vsub.s32 %v1730, %v1732
    %v1734 = vrot.slane %v1724, %v1733
    %v1736 = vunpack.c.l.s4 1966171168
    %v1737 = vunpack.c.0.s8 %v1736
    %v1738 = vlaneseq
    %v1739 = vshrl.u32 %v1738, 7
    %v1740 = vsub.s32 %v1737, %v1739
    %v1741 = vrot.slane %v1725, %v1740
    %v1743 = vunpack.c.l.s4 1966171168
    %v1744 = vunpack.c.0.s8 %v1743
    %v1745 = vlaneseq
    %v1746 = vshrl.u32 %v1745, 7
    %v1747 = vsub.s32 %v1744, %v1746
    %v1748 = vrot.slane %v1726, %v1747
    %v1750 = vunpack.c.l.s4 1966171168
    %v1751 = vunpack.c.0.s8 %v1750
    %v1752 = vlaneseq
    %v1753 = vshrl.u32 %v1752, 7
    %v1754 = vsub.s32 %v1751, %v1753
    %v1755 = vrot.slane %v1727, %v1754
    %v1756 = vcombine.low %v1734, %v1741
    %v1757 = vcombine.low %v1748, %v1755
    %v1759 = vunpack.c.l.s4 1966171168
    %v1760 = vunpack.c.0.s8 %v1759
    %v1761 = vlaneseq
    %v1762 = vshrl.u32 %v1761, 7
    %v1763 = vsub.s32 %v1760, %v1762
    %v1764 = vrot.slane %v1756, %v1763
    %v1766 = vunpack.c.l.s4 1966171168
    %v1767 = vunpack.c.0.s8 %v1766
    %v1768 = vlaneseq
    %v1769 = vshrl.u32 %v1768, 7
    %v1770 = vsub.s32 %v1767, %v1769
    %v1771 = vrot.slane %v1757, %v1770
    %v1772 = vcombine.low %v1764, %v1771
    %v1773 = vcombine.low %v246, %v247
    %v1774 = vcombine.low %v248, %v249
    %v1775 = vcombine.low %v250, %v251
    %v1776 = vcombine.low %v252, %v253
    %v1778 = vunpack.c.l.s4 1966171168
    %v1779 = vunpack.c.0.s8 %v1778
    %v1780 = vlaneseq
    %v1781 = vshrl.u32 %v1780, 7
    %v1782 = vsub.s32 %v1779, %v1781
    %v1783 = vrot.slane %v1773, %v1782
    %v1785 = vunpack.c.l.s4 1966171168
    %v1786 = vunpack.c.0.s8 %v1785
    %v1787 = vlaneseq
    %v1788 = vshrl.u32 %v1787, 7
    %v1789 = vsub.s32 %v1786, %v1788
    %v1790 = vrot.slane %v1774, %v1789
    %v1792 = vunpack.c.l.s4 1966171168
    %v1793 = vunpack.c.0.s8 %v1792
    %v1794 = vlaneseq
    %v1795 = vshrl.u32 %v1794, 7
    %v1796 = vsub.s32 %v1793, %v1795
    %v1797 = vrot.slane %v1775, %v1796
    %v1799 = vunpack.c.l.s4 1966171168
    %v1800 = vunpack.c.0.s8 %v1799
    %v1801 = vlaneseq
    %v1802 = vshrl.u32 %v1801, 7
    %v1803 = vsub.s32 %v1800, %v1802
    %v1804 = vrot.slane %v1776, %v1803
    %v1805 = vcombine.low %v1783, %v1790
    %v1806 = vcombine.low %v1797, %v1804
    %v1808 = vunpack.c.l.s4 1966171168
    %v1809 = vunpack.c.0.s8 %v1808
    %v1810 = vlaneseq
    %v1811 = vshrl.u32 %v1810, 7
    %v1812 = vsub.s32 %v1809, %v1811
    %v1813 = vrot.slane %v1805, %v1812
    %v1815 = vunpack.c.l.s4 1966171168
    %v1816 = vunpack.c.0.s8 %v1815
    %v1817 = vlaneseq
    %v1818 = vshrl.u32 %v1817, 7
    %v1819 = vsub.s32 %v1816, %v1818
    %v1820 = vrot.slane %v1806, %v1819
    %v1821 = vcombine.low %v1813, %v1820
    %v1822 = vcombine.low %v254, %v255
    %v1823 = vcombine.low %v256, %v257
    %v1824 = vcombine.low %v258, %v259
    %v1825 = vcombine.low %v260, %v261
    %v1827 = vunpack.c.l.s4 1966171168
    %v1828 = vunpack.c.0.s8 %v1827
    %v1829 = vlaneseq
    %v1830 = vshrl.u32 %v1829, 7
    %v1831 = vsub.s32 %v1828, %v1830
    %v1832 = vrot.slane %v1822, %v1831
    %v1834 = vunpack.c.l.s4 1966171168
    %v1835 = vunpack.c.0.s8 %v1834
    %v1836 = vlaneseq
    %v1837 = vshrl.u32 %v1836, 7
    %v1838 = vsub.s32 %v1835, %v1837
    %v1839 = vrot.slane %v1823, %v1838
    %v1841 = vunpack.c.l.s4 1966171168
    %v1842 = vunpack.c.0.s8 %v1841
    %v1843 = vlaneseq
    %v1844 = vshrl.u32 %v1843, 7
    %v1845 = vsub.s32 %v1842, %v1844
    %v1846 = vrot.slane %v1824, %v1845
    %v1848 = vunpack.c.l.s4 1966171168
    %v1849 = vunpack.c.0.s8 %v1848
    %v1850 = vlaneseq
    %v1851 = vshrl.u32 %v1850, 7
    %v1852 = vsub.s32 %v1849, %v1851
    %v1853 = vrot.slane %v1825, %v1852
    %v1854 = vcombine.low %v1832, %v1839
    %v1855 = vcombine.low %v1846, %v1853
    %v1857 = vunpack.c.l.s4 1966171168
    %v1858 = vunpack.c.0.s8 %v1857
    %v1859 = vlaneseq
    %v1860 = vshrl.u32 %v1859, 7
    %v1861 = vsub.s32 %v1858, %v1860
    %v1862 = vrot.slane %v1854, %v1861
    %v1864 = vunpack.c.l.s4 1966171168
    %v1865 = vunpack.c.0.s8 %v1864
    %v1866 = vlaneseq
    %v1867 = vshrl.u32 %v1866, 7
    %v1868 = vsub.s32 %v1865, %v1867
    %v1869 = vrot.slane %v1855, %v1868
    %v1870 = vcombine.low %v1862, %v1869
    %v1871 = vcombine.low %v262, %v263
    %v1872 = vcombine.low %v264, %v265
    %v1873 = vcombine.low %v266, %v267
    %v1874 = vcombine.low %v268, %v269
    %v1876 = vunpack.c.l.s4 1966171168
    %v1877 = vunpack.c.0.s8 %v1876
    %v1878 = vlaneseq
    %v1879 = vshrl.u32 %v1878, 7
    %v1880 = vsub.s32 %v1877, %v1879
    %v1881 = vrot.slane %v1871, %v1880
    %v1883 = vunpack.c.l.s4 1966171168
    %v1884 = vunpack.c.0.s8 %v1883
    %v1885 = vlaneseq
    %v1886 = vshrl.u32 %v1885, 7
    %v1887 = vsub.s32 %v1884, %v1886
    %v1888 = vrot.slane %v1872, %v1887
    %v1890 = vunpack.c.l.s4 1966171168
    %v1891 = vunpack.c.0.s8 %v1890
    %v1892 = vlaneseq
    %v1893 = vshrl.u32 %v1892, 7
    %v1894 = vsub.s32 %v1891, %v1893
    %v1895 = vrot.slane %v1873, %v1894
    %v1897 = vunpack.c.l.s4 1966171168
    %v1898 = vunpack.c.0.s8 %v1897
    %v1899 = vlaneseq
    %v1900 = vshrl.u32 %v1899, 7
    %v1901 = vsub.s32 %v1898, %v1900
    %v1902 = vrot.slane %v1874, %v1901
    %v1903 = vcombine.low %v1881, %v1888
    %v1904 = vcombine.low %v1895, %v1902
    %v1906 = vunpack.c.l.s4 1966171168
    %v1907 = vunpack.c.0.s8 %v1906
    %v1908 = vlaneseq
    %v1909 = vshrl.u32 %v1908, 7
    %v1910 = vsub.s32 %v1907, %v1909
    %v1911 = vrot.slane %v1903, %v1910
    %v1913 = vunpack.c.l.s4 1966171168
    %v1914 = vunpack.c.0.s8 %v1913
    %v1915 = vlaneseq
    %v1916 = vshrl.u32 %v1915, 7
    %v1917 = vsub.s32 %v1914, %v1916
    %v1918 = vrot.slane %v1904, %v1917
    %v1919 = vcombine.low %v1911, %v1918
    %v1920 = vcombine.low %v270, %v271
    %v1921 = vcombine.low %v272, %v273
    %v1922 = vcombine.low %v274, %v275
    %v1923 = vcombine.low %v276, %v277
    %v1925 = vunpack.c.l.s4 1966171168
    %v1926 = vunpack.c.0.s8 %v1925
    %v1927 = vlaneseq
    %v1928 = vshrl.u32 %v1927, 7
    %v1929 = vsub.s32 %v1926, %v1928
    %v1930 = vrot.slane %v1920, %v1929
    %v1932 = vunpack.c.l.s4 1966171168
    %v1933 = vunpack.c.0.s8 %v1932
    %v1934 = vlaneseq
    %v1935 = vshrl.u32 %v1934, 7
    %v1936 = vsub.s32 %v1933, %v1935
    %v1937 = vrot.slane %v1921, %v1936
    %v1939 = vunpack.c.l.s4 1966171168
    %v1940 = vunpack.c.0.s8 %v1939
    %v1941 = vlaneseq
    %v1942 = vshrl.u32 %v1941, 7
    %v1943 = vsub.s32 %v1940, %v1942
    %v1944 = vrot.slane %v1922, %v1943
    %v1946 = vunpack.c.l.s4 1966171168
    %v1947 = vunpack.c.0.s8 %v1946
    %v1948 = vlaneseq
    %v1949 = vshrl.u32 %v1948, 7
    %v1950 = vsub.s32 %v1947, %v1949
    %v1951 = vrot.slane %v1923, %v1950
    %v1952 = vcombine.low %v1930, %v1937
    %v1953 = vcombine.low %v1944, %v1951
    %v1955 = vunpack.c.l.s4 1966171168
    %v1956 = vunpack.c.0.s8 %v1955
    %v1957 = vlaneseq
    %v1958 = vshrl.u32 %v1957, 7
    %v1959 = vsub.s32 %v1956, %v1958
    %v1960 = vrot.slane %v1952, %v1959
    %v1962 = vunpack.c.l.s4 1966171168
    %v1963 = vunpack.c.0.s8 %v1962
    %v1964 = vlaneseq
    %v1965 = vshrl.u32 %v1964, 7
    %v1966 = vsub.s32 %v1963, %v1965
    %v1967 = vrot.slane %v1953, %v1966
    %v1968 = vcombine.low %v1960, %v1967
    %v1969 = vcombine.low %v278, %v279
    %v1970 = vcombine.low %v280, %v281
    %v1971 = vcombine.low %v282, %v283
    %v1972 = vcombine.low %v284, %v285
    %v1974 = vunpack.c.l.s4 1966171168
    %v1975 = vunpack.c.0.s8 %v1974
    %v1976 = vlaneseq
    %v1977 = vshrl.u32 %v1976, 7
    %v1978 = vsub.s32 %v1975, %v1977
    %v1979 = vrot.slane %v1969, %v1978
    %v1981 = vunpack.c.l.s4 1966171168
    %v1982 = vunpack.c.0.s8 %v1981
    %v1983 = vlaneseq
    %v1984 = vshrl.u32 %v1983, 7
    %v1985 = vsub.s32 %v1982, %v1984
    %v1986 = vrot.slane %v1970, %v1985
    %v1988 = vunpack.c.l.s4 1966171168
    %v1989 = vunpack.c.0.s8 %v1988
    %v1990 = vlaneseq
    %v1991 = vshrl.u32 %v1990, 7
    %v1992 = vsub.s32 %v1989, %v1991
    %v1993 = vrot.slane %v1971, %v1992
    %v1995 = vunpack.c.l.s4 1966171168
    %v1996 = vunpack.c.0.s8 %v1995
    %v1997 = vlaneseq
    %v1998 = vshrl.u32 %v1997, 7
    %v1999 = vsub.s32 %v1996, %v1998
    %v2000 = vrot.slane %v1972, %v1999
    %v2001 = vcombine.low %v1979, %v1986
    %v2002 = vcombine.low %v1993, %v2000
    %v2004 = vunpack.c.l.s4 1966171168
    %v2005 = vunpack.c.0.s8 %v2004
    %v2006 = vlaneseq
    %v2007 = vshrl.u32 %v2006, 7
    %v2008 = vsub.s32 %v2005, %v2007
    %v2009 = vrot.slane %v2001, %v2008
    %v2011 = vunpack.c.l.s4 1966171168
    %v2012 = vunpack.c.0.s8 %v2011
    %v2013 = vlaneseq
    %v2014 = vshrl.u32 %v2013, 7
    %v2015 = vsub.s32 %v2012, %v2014
    %v2016 = vrot.slane %v2002, %v2015
    %v2017 = vcombine.low %v2009, %v2016
    %v2018 = vcombine.low %v286, %v287
    %v2019 = vcombine.low %v288, %v289
    %v2020 = vcombine.low %v290, %v291
    %v2021 = vcombine.low %v292, %v293
    %v2023 = vunpack.c.l.s4 1966171168
    %v2024 = vunpack.c.0.s8 %v2023
    %v2025 = vlaneseq
    %v2026 = vshrl.u32 %v2025, 7
    %v2027 = vsub.s32 %v2024, %v2026
    %v2028 = vrot.slane %v2018, %v2027
    %v2030 = vunpack.c.l.s4 1966171168
    %v2031 = vunpack.c.0.s8 %v2030
    %v2032 = vlaneseq
    %v2033 = vshrl.u32 %v2032, 7
    %v2034 = vsub.s32 %v2031, %v2033
    %v2035 = vrot.slane %v2019, %v2034
    %v2037 = vunpack.c.l.s4 1966171168
    %v2038 = vunpack.c.0.s8 %v2037
    %v2039 = vlaneseq
    %v2040 = vshrl.u32 %v2039, 7
    %v2041 = vsub.s32 %v2038, %v2040
    %v2042 = vrot.slane %v2020, %v2041
    %v2044 = vunpack.c.l.s4 1966171168
    %v2045 = vunpack.c.0.s8 %v2044
    %v2046 = vlaneseq
    %v2047 = vshrl.u32 %v2046, 7
    %v2048 = vsub.s32 %v2045, %v2047
    %v2049 = vrot.slane %v2021, %v2048
    %v2050 = vcombine.low %v2028, %v2035
    %v2051 = vcombine.low %v2042, %v2049
    %v2053 = vunpack.c.l.s4 1966171168
    %v2054 = vunpack.c.0.s8 %v2053
    %v2055 = vlaneseq
    %v2056 = vshrl.u32 %v2055, 7
    %v2057 = vsub.s32 %v2054, %v2056
    %v2058 = vrot.slane %v2050, %v2057
    %v2060 = vunpack.c.l.s4 1966171168
    %v2061 = vunpack.c.0.s8 %v2060
    %v2062 = vlaneseq
    %v2063 = vshrl.u32 %v2062, 7
    %v2064 = vsub.s32 %v2061, %v2063
    %v2065 = vrot.slane %v2051, %v2064
    %v2066 = vcombine.low %v2058, %v2065
    %v2067 = vcombine.low %v294, %v295
    %v2068 = vcombine.low %v296, %v297
    %v2069 = vcombine.low %v298, %v299
    %v2070 = vcombine.low %v300, %v301
    %v2072 = vunpack.c.l.s4 1966171168
    %v2073 = vunpack.c.0.s8 %v2072
    %v2074 = vlaneseq
    %v2075 = vshrl.u32 %v2074, 7
    %v2076 = vsub.s32 %v2073, %v2075
    %v2077 = vrot.slane %v2067, %v2076
    %v2079 = vunpack.c.l.s4 1966171168
    %v2080 = vunpack.c.0.s8 %v2079
    %v2081 = vlaneseq
    %v2082 = vshrl.u32 %v2081, 7
    %v2083 = vsub.s32 %v2080, %v2082
    %v2084 = vrot.slane %v2068, %v2083
    %v2086 = vunpack.c.l.s4 1966171168
    %v2087 = vunpack.c.0.s8 %v2086
    %v2088 = vlaneseq
    %v2089 = vshrl.u32 %v2088, 7
    %v2090 = vsub.s32 %v2087, %v2089
    %v2091 = vrot.slane %v2069, %v2090
    %v2093 = vunpack.c.l.s4 1966171168
    %v2094 = vunpack.c.0.s8 %v2093
    %v2095 = vlaneseq
    %v2096 = vshrl.u32 %v2095, 7
    %v2097 = vsub.s32 %v2094, %v2096
    %v2098 = vrot.slane %v2070, %v2097
    %v2099 = vcombine.low %v2077, %v2084
    %v2100 = vcombine.low %v2091, %v2098
    %v2102 = vunpack.c.l.s4 1966171168
    %v2103 = vunpack.c.0.s8 %v2102
    %v2104 = vlaneseq
    %v2105 = vshrl.u32 %v2104, 7
    %v2106 = vsub.s32 %v2103, %v2105
    %v2107 = vrot.slane %v2099, %v2106
    %v2109 = vunpack.c.l.s4 1966171168
    %v2110 = vunpack.c.0.s8 %v2109
    %v2111 = vlaneseq
    %v2112 = vshrl.u32 %v2111, 7
    %v2113 = vsub.s32 %v2110, %v2112
    %v2114 = vrot.slane %v2100, %v2113
    %v2115 = vcombine.low %v2107, %v2114
    %v2116 = vcombine.low %v302, %v303
    %v2117 = vcombine.low %v304, %v305
    %v2118 = vcombine.low %v306, %v307
    %v2119 = vcombine.low %v308, %v309
    %v2121 = vunpack.c.l.s4 1966171168
    %v2122 = vunpack.c.0.s8 %v2121
    %v2123 = vlaneseq
    %v2124 = vshrl.u32 %v2123, 7
    %v2125 = vsub.s32 %v2122, %v2124
    %v2126 = vrot.slane %v2116, %v2125
    %v2128 = vunpack.c.l.s4 1966171168
    %v2129 = vunpack.c.0.s8 %v2128
    %v2130 = vlaneseq
    %v2131 = vshrl.u32 %v2130, 7
    %v2132 = vsub.s32 %v2129, %v2131
    %v2133 = vrot.slane %v2117, %v2132
    %v2135 = vunpack.c.l.s4 1966171168
    %v2136 = vunpack.c.0.s8 %v2135
    %v2137 = vlaneseq
    %v2138 = vshrl.u32 %v2137, 7
    %v2139 = vsub.s32 %v2136, %v2138
    %v2140 = vrot.slane %v2118, %v2139
    %v2142 = vunpack.c.l.s4 1966171168
    %v2143 = vunpack.c.0.s8 %v2142
    %v2144 = vlaneseq
    %v2145 = vshrl.u32 %v2144, 7
    %v2146 = vsub.s32 %v2143, %v2145
    %v2147 = vrot.slane %v2119, %v2146
    %v2148 = vcombine.low %v2126, %v2133
    %v2149 = vcombine.low %v2140, %v2147
    %v2151 = vunpack.c.l.s4 1966171168
    %v2152 = vunpack.c.0.s8 %v2151
    %v2153 = vlaneseq
    %v2154 = vshrl.u32 %v2153, 7
    %v2155 = vsub.s32 %v2152, %v2154
    %v2156 = vrot.slane %v2148, %v2155
    %v2158 = vunpack.c.l.s4 1966171168
    %v2159 = vunpack.c.0.s8 %v2158
    %v2160 = vlaneseq
    %v2161 = vshrl.u32 %v2160, 7
    %v2162 = vsub.s32 %v2159, %v2161
    %v2163 = vrot.slane %v2149, %v2162
    %v2164 = vcombine.low %v2156, %v2163
    %v2165 = vcombine.low %v22, %v313
    %v2166 = vcombine.low %v316, %v319
    %v2167 = vcombine.low %v322, %v325
    %v2168 = vcombine.low %v328, %v331
    %v2170 = vunpack.c.l.s4 1966171168
    %v2171 = vunpack.c.0.s8 %v2170
    %v2172 = vlaneseq
    %v2173 = vshrl.u32 %v2172, 7
    %v2174 = vsub.s32 %v2171, %v2173
    %v2175 = vrot.slane %v2165, %v2174
    %v2177 = vunpack.c.l.s4 1966171168
    %v2178 = vunpack.c.0.s8 %v2177
    %v2179 = vlaneseq
    %v2180 = vshrl.u32 %v2179, 7
    %v2181 = vsub.s32 %v2178, %v2180
    %v2182 = vrot.slane %v2166, %v2181
    %v2184 = vunpack.c.l.s4 1966171168
    %v2185 = vunpack.c.0.s8 %v2184
    %v2186 = vlaneseq
    %v2187 = vshrl.u32 %v2186, 7
    %v2188 = vsub.s32 %v2185, %v2187
    %v2189 = vrot.slane %v2167, %v2188
    %v2191 = vunpack.c.l.s4 1966171168
    %v2192 = vunpack.c.0.s8 %v2191
    %v2193 = vlaneseq
    %v2194 = vshrl.u32 %v2193, 7
    %v2195 = vsub.s32 %v2192, %v2194
    %v2196 = vrot.slane %v2168, %v2195
    %v2197 = vcombine.low %v2175, %v2182
    %v2198 = vcombine.low %v2189, %v2196
    %v2200 = vunpack.c.l.s4 1966171168
    %v2201 = vunpack.c.0.s8 %v2200
    %v2202 = vlaneseq
    %v2203 = vshrl.u32 %v2202, 7
    %v2204 = vsub.s32 %v2201, %v2203
    %v2205 = vrot.slane %v2197, %v2204
    %v2207 = vunpack.c.l.s4 1966171168
    %v2208 = vunpack.c.0.s8 %v2207
    %v2209 = vlaneseq
    %v2210 = vshrl.u32 %v2209, 7
    %v2211 = vsub.s32 %v2208, %v2210
    %v2212 = vrot.slane %v2198, %v2211
    %v2213 = vcombine.low %v2205, %v2212
    %v2214 = vcombine.low %v334, %v337
    %v2215 = vcombine.low %v340, %v343
    %v2216 = vcombine.low %v346, %v349
    %v2217 = vcombine.low %v352, %v355
    %v2219 = vunpack.c.l.s4 1966171168
    %v2220 = vunpack.c.0.s8 %v2219
    %v2221 = vlaneseq
    %v2222 = vshrl.u32 %v2221, 7
    %v2223 = vsub.s32 %v2220, %v2222
    %v2224 = vrot.slane %v2214, %v2223
    %v2226 = vunpack.c.l.s4 1966171168
    %v2227 = vunpack.c.0.s8 %v2226
    %v2228 = vlaneseq
    %v2229 = vshrl.u32 %v2228, 7
    %v2230 = vsub.s32 %v2227, %v2229
    %v2231 = vrot.slane %v2215, %v2230
    %v2233 = vunpack.c.l.s4 1966171168
    %v2234 = vunpack.c.0.s8 %v2233
    %v2235 = vlaneseq
    %v2236 = vshrl.u32 %v2235, 7
    %v2237 = vsub.s32 %v2234, %v2236
    %v2238 = vrot.slane %v2216, %v2237
    %v2240 = vunpack.c.l.s4 1966171168
    %v2241 = vunpack.c.0.s8 %v2240
    %v2242 = vlaneseq
    %v2243 = vshrl.u32 %v2242, 7
    %v2244 = vsub.s32 %v2241, %v2243
    %v2245 = vrot.slane %v2217, %v2244
    %v2246 = vcombine.low %v2224, %v2231
    %v2247 = vcombine.low %v2238, %v2245
    %v2249 = vunpack.c.l.s4 1966171168
    %v2250 = vunpack.c.0.s8 %v2249
    %v2251 = vlaneseq
    %v2252 = vshrl.u32 %v2251, 7
    %v2253 = vsub.s32 %v2250, %v2252
    %v2254 = vrot.slane %v2246, %v2253
    %v2256 = vunpack.c.l.s4 1966171168
    %v2257 = vunpack.c.0.s8 %v2256
    %v2258 = vlaneseq
    %v2259 = vshrl.u32 %v2258, 7
    %v2260 = vsub.s32 %v2257, %v2259
    %v2261 = vrot.slane %v2247, %v2260
    %v2262 = vcombine.low %v2254, %v2261
    %v2263 = vcombine.low %v358, %v361
    %v2264 = vcombine.low %v364, %v367
    %v2265 = vcombine.low %v370, %v373
    %v2266 = vcombine.low %v376, %v379
    %v2268 = vunpack.c.l.s4 1966171168
    %v2269 = vunpack.c.0.s8 %v2268
    %v2270 = vlaneseq
    %v2271 = vshrl.u32 %v2270, 7
    %v2272 = vsub.s32 %v2269, %v2271
    %v2273 = vrot.slane %v2263, %v2272
    %v2275 = vunpack.c.l.s4 1966171168
    %v2276 = vunpack.c.0.s8 %v2275
    %v2277 = vlaneseq
    %v2278 = vshrl.u32 %v2277, 7
    %v2279 = vsub.s32 %v2276, %v2278
    %v2280 = vrot.slane %v2264, %v2279
    %v2282 = vunpack.c.l.s4 1966171168
    %v2283 = vunpack.c.0.s8 %v2282
    %v2284 = vlaneseq
    %v2285 = vshrl.u32 %v2284, 7
    %v2286 = vsub.s32 %v2283, %v2285
    %v2287 = vrot.slane %v2265, %v2286
    %v2289 = vunpack.c.l.s4 1966171168
    %v2290 = vunpack.c.0.s8 %v2289
    %v2291 = vlaneseq
    %v2292 = vshrl.u32 %v2291, 7
    %v2293 = vsub.s32 %v2290, %v2292
    %v2294 = vrot.slane %v2266, %v2293
    %v2295 = vcombine.low %v2273, %v2280
    %v2296 = vcombine.low %v2287, %v2294
    %v2298 = vunpack.c.l.s4 1966171168
    %v2299 = vunpack.c.0.s8 %v2298
    %v2300 = vlaneseq
    %v2301 = vshrl.u32 %v2300, 7
    %v2302 = vsub.s32 %v2299, %v2301
    %v2303 = vrot.slane %v2295, %v2302
    %v2305 = vunpack.c.l.s4 1966171168
    %v2306 = vunpack.c.0.s8 %v2305
    %v2307 = vlaneseq
    %v2308 = vshrl.u32 %v2307, 7
    %v2309 = vsub.s32 %v2306, %v2308
    %v2310 = vrot.slane %v2296, %v2309
    %v2311 = vcombine.low %v2303, %v2310
    %v2312 = vcombine.low %v382, %v385
    %v2313 = vcombine.low %v388, %v391
    %v2314 = vcombine.low %v394, %v397
    %v2315 = vcombine.low %v400, %v403
    %v2317 = vunpack.c.l.s4 1966171168
    %v2318 = vunpack.c.0.s8 %v2317
    %v2319 = vlaneseq
    %v2320 = vshrl.u32 %v2319, 7
    %v2321 = vsub.s32 %v2318, %v2320
    %v2322 = vrot.slane %v2312, %v2321
    %v2324 = vunpack.c.l.s4 1966171168
    %v2325 = vunpack.c.0.s8 %v2324
    %v2326 = vlaneseq
    %v2327 = vshrl.u32 %v2326, 7
    %v2328 = vsub.s32 %v2325, %v2327
    %v2329 = vrot.slane %v2313, %v2328
    %v2331 = vunpack.c.l.s4 1966171168
    %v2332 = vunpack.c.0.s8 %v2331
    %v2333 = vlaneseq
    %v2334 = vshrl.u32 %v2333, 7
    %v2335 = vsub.s32 %v2332, %v2334
    %v2336 = vrot.slane %v2314, %v2335
    %v2338 = vunpack.c.l.s4 1966171168
    %v2339 = vunpack.c.0.s8 %v2338
    %v2340 = vlaneseq
    %v2341 = vshrl.u32 %v2340, 7
    %v2342 = vsub.s32 %v2339, %v2341
    %v2343 = vrot.slane %v2315, %v2342
    %v2344 = vcombine.low %v2322, %v2329
    %v2345 = vcombine.low %v2336, %v2343
    %v2347 = vunpack.c.l.s4 1966171168
    %v2348 = vunpack.c.0.s8 %v2347
    %v2349 = vlaneseq
    %v2350 = vshrl.u32 %v2349, 7
    %v2351 = vsub.s32 %v2348, %v2350
    %v2352 = vrot.slane %v2344, %v2351
    %v2354 = vunpack.c.l.s4 1966171168
    %v2355 = vunpack.c.0.s8 %v2354
    %v2356 = vlaneseq
    %v2357 = vshrl.u32 %v2356, 7
    %v2358 = vsub.s32 %v2355, %v2357
    %v2359 = vrot.slane %v2345, %v2358
    %v2360 = vcombine.low %v2352, %v2359
    %v2361 = vcombine.low %v311, %v314
    %v2362 = vcombine.low %v317, %v320
    %v2363 = vcombine.low %v323, %v326
    %v2364 = vcombine.low %v329, %v332
    %v2366 = vunpack.c.l.s4 1966171168
    %v2367 = vunpack.c.0.s8 %v2366
    %v2368 = vlaneseq
    %v2369 = vshrl.u32 %v2368, 7
    %v2370 = vsub.s32 %v2367, %v2369
    %v2371 = vrot.slane %v2361, %v2370
    %v2373 = vunpack.c.l.s4 1966171168
    %v2374 = vunpack.c.0.s8 %v2373
    %v2375 = vlaneseq
    %v2376 = vshrl.u32 %v2375, 7
    %v2377 = vsub.s32 %v2374, %v2376
    %v2378 = vrot.slane %v2362, %v2377
    %v2380 = vunpack.c.l.s4 1966171168
    %v2381 = vunpack.c.0.s8 %v2380
    %v2382 = vlaneseq
    %v2383 = vshrl.u32 %v2382, 7
    %v2384 = vsub.s32 %v2381, %v2383
    %v2385 = vrot.slane %v2363, %v2384
    %v2387 = vunpack.c.l.s4 1966171168
    %v2388 = vunpack.c.0.s8 %v2387
    %v2389 = vlaneseq
    %v2390 = vshrl.u32 %v2389, 7
    %v2391 = vsub.s32 %v2388, %v2390
    %v2392 = vrot.slane %v2364, %v2391
    %v2393 = vcombine.low %v2371, %v2378
    %v2394 = vcombine.low %v2385, %v2392
    %v2396 = vunpack.c.l.s4 1966171168
    %v2397 = vunpack.c.0.s8 %v2396
    %v2398 = vlaneseq
    %v2399 = vshrl.u32 %v2398, 7
    %v2400 = vsub.s32 %v2397, %v2399
    %v2401 = vrot.slane %v2393, %v2400
    %v2403 = vunpack.c.l.s4 1966171168
    %v2404 = vunpack.c.0.s8 %v2403
    %v2405 = vlaneseq
    %v2406 = vshrl.u32 %v2405, 7
    %v2407 = vsub.s32 %v2404, %v2406
    %v2408 = vrot.slane %v2394, %v2407
    %v2409 = vcombine.low %v2401, %v2408
    %v2410 = vcombine.low %v335, %v338
    %v2411 = vcombine.low %v341, %v344
    %v2412 = vcombine.low %v347, %v350
    %v2413 = vcombine.low %v353, %v356
    %v2415 = vunpack.c.l.s4 1966171168
    %v2416 = vunpack.c.0.s8 %v2415
    %v2417 = vlaneseq
    %v2418 = vshrl.u32 %v2417, 7
    %v2419 = vsub.s32 %v2416, %v2418
    %v2420 = vrot.slane %v2410, %v2419
    %v2422 = vunpack.c.l.s4 1966171168
    %v2423 = vunpack.c.0.s8 %v2422
    %v2424 = vlaneseq
    %v2425 = vshrl.u32 %v2424, 7
    %v2426 = vsub.s32 %v2423, %v2425
    %v2427 = vrot.slane %v2411, %v2426
    %v2429 = vunpack.c.l.s4 1966171168
    %v2430 = vunpack.c.0.s8 %v2429
    %v2431 = vlaneseq
    %v2432 = vshrl.u32 %v2431, 7
    %v2433 = vsub.s32 %v2430, %v2432
    %v2434 = vrot.slane %v2412, %v2433
    %v2436 = vunpack.c.l.s4 1966171168
    %v2437 = vunpack.c.0.s8 %v2436
    %v2438 = vlaneseq
    %v2439 = vshrl.u32 %v2438, 7
    %v2440 = vsub.s32 %v2437, %v2439
    %v2441 = vrot.slane %v2413, %v2440
    %v2442 = vcombine.low %v2420, %v2427
    %v2443 = vcombine.low %v2434, %v2441
    %v2445 = vunpack.c.l.s4 1966171168
    %v2446 = vunpack.c.0.s8 %v2445
    %v2447 = vlaneseq
    %v2448 = vshrl.u32 %v2447, 7
    %v2449 = vsub.s32 %v2446, %v2448
    %v2450 = vrot.slane %v2442, %v2449
    %v2452 = vunpack.c.l.s4 1966171168
    %v2453 = vunpack.c.0.s8 %v2452
    %v2454 = vlaneseq
    %v2455 = vshrl.u32 %v2454, 7
    %v2456 = vsub.s32 %v2453, %v2455
    %v2457 = vrot.slane %v2443, %v2456
    %v2458 = vcombine.low %v2450, %v2457
    %v2459 = vcombine.low %v359, %v362
    %v2460 = vcombine.low %v365, %v368
    %v2461 = vcombine.low %v371, %v374
    %v2462 = vcombine.low %v377, %v380
    %v2464 = vunpack.c.l.s4 1966171168
    %v2465 = vunpack.c.0.s8 %v2464
    %v2466 = vlaneseq
    %v2467 = vshrl.u32 %v2466, 7
    %v2468 = vsub.s32 %v2465, %v2467
    %v2469 = vrot.slane %v2459, %v2468
    %v2471 = vunpack.c.l.s4 1966171168
    %v2472 = vunpack.c.0.s8 %v2471
    %v2473 = vlaneseq
    %v2474 = vshrl.u32 %v2473, 7
    %v2475 = vsub.s32 %v2472, %v2474
    %v2476 = vrot.slane %v2460, %v2475
    %v2478 = vunpack.c.l.s4 1966171168
    %v2479 = vunpack.c.0.s8 %v2478
    %v2480 = vlaneseq
    %v2481 = vshrl.u32 %v2480, 7
    %v2482 = vsub.s32 %v2479, %v2481
    %v2483 = vrot.slane %v2461, %v2482
    %v2485 = vunpack.c.l.s4 1966171168
    %v2486 = vunpack.c.0.s8 %v2485
    %v2487 = vlaneseq
    %v2488 = vshrl.u32 %v2487, 7
    %v2489 = vsub.s32 %v2486, %v2488
    %v2490 = vrot.slane %v2462, %v2489
    %v2491 = vcombine.low %v2469, %v2476
    %v2492 = vcombine.low %v2483, %v2490
    %v2494 = vunpack.c.l.s4 1966171168
    %v2495 = vunpack.c.0.s8 %v2494
    %v2496 = vlaneseq
    %v2497 = vshrl.u32 %v2496, 7
    %v2498 = vsub.s32 %v2495, %v2497
    %v2499 = vrot.slane %v2491, %v2498
    %v2501 = vunpack.c.l.s4 1966171168
    %v2502 = vunpack.c.0.s8 %v2501
    %v2503 = vlaneseq
    %v2504 = vshrl.u32 %v2503, 7
    %v2505 = vsub.s32 %v2502, %v2504
    %v2506 = vrot.slane %v2492, %v2505
    %v2507 = vcombine.low %v2499, %v2506
    %v2508 = vcombine.low %v383, %v386
    %v2509 = vcombine.low %v389, %v392
    %v2510 = vcombine.low %v395, %v398
    %v2511 = vcombine.low %v401, %v404
    %v2513 = vunpack.c.l.s4 1966171168
    %v2514 = vunpack.c.0.s8 %v2513
    %v2515 = vlaneseq
    %v2516 = vshrl.u32 %v2515, 7
    %v2517 = vsub.s32 %v2514, %v2516
    %v2518 = vrot.slane %v2508, %v2517
    %v2520 = vunpack.c.l.s4 1966171168
    %v2521 = vunpack.c.0.s8 %v2520
    %v2522 = vlaneseq
    %v2523 = vshrl.u32 %v2522, 7
    %v2524 = vsub.s32 %v2521, %v2523
    %v2525 = vrot.slane %v2509, %v2524
    %v2527 = vunpack.c.l.s4 1966171168
    %v2528 = vunpack.c.0.s8 %v2527
    %v2529 = vlaneseq
    %v2530 = vshrl.u32 %v2529, 7
    %v2531 = vsub.s32 %v2528, %v2530
    %v2532 = vrot.slane %v2510, %v2531
    %v2534 = vunpack.c.l.s4 1966171168
    %v2535 = vunpack.c.0.s8 %v2534
    %v2536 = vlaneseq
    %v2537 = vshrl.u32 %v2536, 7
    %v2538 = vsub.s32 %v2535, %v2537
    %v2539 = vrot.slane %v2511, %v2538
    %v2540 = vcombine.low %v2518, %v2525
    %v2541 = vcombine.low %v2532, %v2539
    %v2543 = vunpack.c.l.s4 1966171168
    %v2544 = vunpack.c.0.s8 %v2543
    %v2545 = vlaneseq
    %v2546 = vshrl.u32 %v2545, 7
    %v2547 = vsub.s32 %v2544, %v2546
    %v2548 = vrot.slane %v2540, %v2547
    %v2550 = vunpack.c.l.s4 1966171168
    %v2551 = vunpack.c.0.s8 %v2550
    %v2552 = vlaneseq
    %v2553 = vshrl.u32 %v2552, 7
    %v2554 = vsub.s32 %v2551, %v2553
    %v2555 = vrot.slane %v2541, %v2554
    %v2556 = vcombine.low %v2548, %v2555
    %v2557 = vcombine.low %v405, %v406
    %v2558 = vcombine.low %v407, %v408
    %v2559 = vcombine.low %v409, %v410
    %v2560 = vcombine.low %v411, %v412
    %v2562 = vunpack.c.l.s4 1966171168
    %v2563 = vunpack.c.0.s8 %v2562
    %v2564 = vlaneseq
    %v2565 = vshrl.u32 %v2564, 7
    %v2566 = vsub.s32 %v2563, %v2565
    %v2567 = vrot.slane %v2557, %v2566
    %v2569 = vunpack.c.l.s4 1966171168
    %v2570 = vunpack.c.0.s8 %v2569
    %v2571 = vlaneseq
    %v2572 = vshrl.u32 %v2571, 7
    %v2573 = vsub.s32 %v2570, %v2572
    %v2574 = vrot.slane %v2558, %v2573
    %v2576 = vunpack.c.l.s4 1966171168
    %v2577 = vunpack.c.0.s8 %v2576
    %v2578 = vlaneseq
    %v2579 = vshrl.u32 %v2578, 7
    %v2580 = vsub.s32 %v2577, %v2579
    %v2581 = vrot.slane %v2559, %v2580
    %v2583 = vunpack.c.l.s4 1966171168
    %v2584 = vunpack.c.0.s8 %v2583
    %v2585 = vlaneseq
    %v2586 = vshrl.u32 %v2585, 7
    %v2587 = vsub.s32 %v2584, %v2586
    %v2588 = vrot.slane %v2560, %v2587
    %v2589 = vcombine.low %v2567, %v2574
    %v2590 = vcombine.low %v2581, %v2588
    %v2592 = vunpack.c.l.s4 1966171168
    %v2593 = vunpack.c.0.s8 %v2592
    %v2594 = vlaneseq
    %v2595 = vshrl.u32 %v2594, 7
    %v2596 = vsub.s32 %v2593, %v2595
    %v2597 = vrot.slane %v2589, %v2596
    %v2599 = vunpack.c.l.s4 1966171168
    %v2600 = vunpack.c.0.s8 %v2599
    %v2601 = vlaneseq
    %v2602 = vshrl.u32 %v2601, 7
    %v2603 = vsub.s32 %v2600, %v2602
    %v2604 = vrot.slane %v2590, %v2603
    %v2605 = vcombine.low %v2597, %v2604
    %v2606 = vcombine.low %v413, %v414
    %v2607 = vcombine.low %v415, %v416
    %v2608 = vcombine.low %v417, %v418
    %v2609 = vcombine.low %v419, %v420
    %v2611 = vunpack.c.l.s4 1966171168
    %v2612 = vunpack.c.0.s8 %v2611
    %v2613 = vlaneseq
    %v2614 = vshrl.u32 %v2613, 7
    %v2615 = vsub.s32 %v2612, %v2614
    %v2616 = vrot.slane %v2606, %v2615
    %v2618 = vunpack.c.l.s4 1966171168
    %v2619 = vunpack.c.0.s8 %v2618
    %v2620 = vlaneseq
    %v2621 = vshrl.u32 %v2620, 7
    %v2622 = vsub.s32 %v2619, %v2621
    %v2623 = vrot.slane %v2607, %v2622
    %v2625 = vunpack.c.l.s4 1966171168
    %v2626 = vunpack.c.0.s8 %v2625
    %v2627 = vlaneseq
    %v2628 = vshrl.u32 %v2627, 7
    %v2629 = vsub.s32 %v2626, %v2628
    %v2630 = vrot.slane %v2608, %v2629
    %v2632 = vunpack.c.l.s4 1966171168
    %v2633 = vunpack.c.0.s8 %v2632
    %v2634 = vlaneseq
    %v2635 = vshrl.u32 %v2634, 7
    %v2636 = vsub.s32 %v2633, %v2635
    %v2637 = vrot.slane %v2609, %v2636
    %v2638 = vcombine.low %v2616, %v2623
    %v2639 = vcombine.low %v2630, %v2637
    %v2641 = vunpack.c.l.s4 1966171168
    %v2642 = vunpack.c.0.s8 %v2641
    %v2643 = vlaneseq
    %v2644 = vshrl.u32 %v2643, 7
    %v2645 = vsub.s32 %v2642, %v2644
    %v2646 = vrot.slane %v2638, %v2645
    %v2648 = vunpack.c.l.s4 1966171168
    %v2649 = vunpack.c.0.s8 %v2648
    %v2650 = vlaneseq
    %v2651 = vshrl.u32 %v2650, 7
    %v2652 = vsub.s32 %v2649, %v2651
    %v2653 = vrot.slane %v2639, %v2652
    %v2654 = vcombine.low %v2646, %v2653
    %v2655 = vcombine.low %v421, %v422
    %v2656 = vcombine.low %v423, %v424
    %v2657 = vcombine.low %v425, %v426
    %v2658 = vcombine.low %v427, %v428
    %v2660 = vunpack.c.l.s4 1966171168
    %v2661 = vunpack.c.0.s8 %v2660
    %v2662 = vlaneseq
    %v2663 = vshrl.u32 %v2662, 7
    %v2664 = vsub.s32 %v2661, %v2663
    %v2665 = vrot.slane %v2655, %v2664
    %v2667 = vunpack.c.l.s4 1966171168
    %v2668 = vunpack.c.0.s8 %v2667
    %v2669 = vlaneseq
    %v2670 = vshrl.u32 %v2669, 7
    %v2671 = vsub.s32 %v2668, %v2670
    %v2672 = vrot.slane %v2656, %v2671
    %v2674 = vunpack.c.l.s4 1966171168
    %v2675 = vunpack.c.0.s8 %v2674
    %v2676 = vlaneseq
    %v2677 = vshrl.u32 %v2676, 7
    %v2678 = vsub.s32 %v2675, %v2677
    %v2679 = vrot.slane %v2657, %v2678
    %v2681 = vunpack.c.l.s4 1966171168
    %v2682 = vunpack.c.0.s8 %v2681
    %v2683 = vlaneseq
    %v2684 = vshrl.u32 %v2683, 7
    %v2685 = vsub.s32 %v2682, %v2684
    %v2686 = vrot.slane %v2658, %v2685
    %v2687 = vcombine.low %v2665, %v2672
    %v2688 = vcombine.low %v2679, %v2686
    %v2690 = vunpack.c.l.s4 1966171168
    %v2691 = vunpack.c.0.s8 %v2690
    %v2692 = vlaneseq
    %v2693 = vshrl.u32 %v2692, 7
    %v2694 = vsub.s32 %v2691, %v2693
    %v2695 = vrot.slane %v2687, %v2694
    %v2697 = vunpack.c.l.s4 1966171168
    %v2698 = vunpack.c.0.s8 %v2697
    %v2699 = vlaneseq
    %v2700 = vshrl.u32 %v2699, 7
    %v2701 = vsub.s32 %v2698, %v2700
    %v2702 = vrot.slane %v2688, %v2701
    %v2703 = vcombine.low %v2695, %v2702
    %v2704 = vcombine.low %v429, %v430
    %v2705 = vcombine.low %v431, %v432
    %v2706 = vcombine.low %v433, %v434
    %v2707 = vcombine.low %v435, %v436
    %v2709 = vunpack.c.l.s4 1966171168
    %v2710 = vunpack.c.0.s8 %v2709
    %v2711 = vlaneseq
    %v2712 = vshrl.u32 %v2711, 7
    %v2713 = vsub.s32 %v2710, %v2712
    %v2714 = vrot.slane %v2704, %v2713
    %v2716 = vunpack.c.l.s4 1966171168
    %v2717 = vunpack.c.0.s8 %v2716
    %v2718 = vlaneseq
    %v2719 = vshrl.u32 %v2718, 7
    %v2720 = vsub.s32 %v2717, %v2719
    %v2721 = vrot.slane %v2705, %v2720
    %v2723 = vunpack.c.l.s4 1966171168
    %v2724 = vunpack.c.0.s8 %v2723
    %v2725 = vlaneseq
    %v2726 = vshrl.u32 %v2725, 7
    %v2727 = vsub.s32 %v2724, %v2726
    %v2728 = vrot.slane %v2706, %v2727
    %v2730 = vunpack.c.l.s4 1966171168
    %v2731 = vunpack.c.0.s8 %v2730
    %v2732 = vlaneseq
    %v2733 = vshrl.u32 %v2732, 7
    %v2734 = vsub.s32 %v2731, %v2733
    %v2735 = vrot.slane %v2707, %v2734
    %v2736 = vcombine.low %v2714, %v2721
    %v2737 = vcombine.low %v2728, %v2735
    %v2739 = vunpack.c.l.s4 1966171168
    %v2740 = vunpack.c.0.s8 %v2739
    %v2741 = vlaneseq
    %v2742 = vshrl.u32 %v2741, 7
    %v2743 = vsub.s32 %v2740, %v2742
    %v2744 = vrot.slane %v2736, %v2743
    %v2746 = vunpack.c.l.s4 1966171168
    %v2747 = vunpack.c.0.s8 %v2746
    %v2748 = vlaneseq
    %v2749 = vshrl.u32 %v2748, 7
    %v2750 = vsub.s32 %v2747, %v2749
    %v2751 = vrot.slane %v2737, %v2750
    %v2752 = vcombine.low %v2744, %v2751
    %v2753 = vcombine.low %v437, %v438
    %v2754 = vcombine.low %v439, %v440
    %v2755 = vcombine.low %v441, %v442
    %v2756 = vcombine.low %v443, %v444
    %v2758 = vunpack.c.l.s4 1966171168
    %v2759 = vunpack.c.0.s8 %v2758
    %v2760 = vlaneseq
    %v2761 = vshrl.u32 %v2760, 7
    %v2762 = vsub.s32 %v2759, %v2761
    %v2763 = vrot.slane %v2753, %v2762
    %v2765 = vunpack.c.l.s4 1966171168
    %v2766 = vunpack.c.0.s8 %v2765
    %v2767 = vlaneseq
    %v2768 = vshrl.u32 %v2767, 7
    %v2769 = vsub.s32 %v2766, %v2768
    %v2770 = vrot.slane %v2754, %v2769
    %v2772 = vunpack.c.l.s4 1966171168
    %v2773 = vunpack.c.0.s8 %v2772
    %v2774 = vlaneseq
    %v2775 = vshrl.u32 %v2774, 7
    %v2776 = vsub.s32 %v2773, %v2775
    %v2777 = vrot.slane %v2755, %v2776
    %v2779 = vunpack.c.l.s4 1966171168
    %v2780 = vunpack.c.0.s8 %v2779
    %v2781 = vlaneseq
    %v2782 = vshrl.u32 %v2781, 7
    %v2783 = vsub.s32 %v2780, %v2782
    %v2784 = vrot.slane %v2756, %v2783
    %v2785 = vcombine.low %v2763, %v2770
    %v2786 = vcombine.low %v2777, %v2784
    %v2788 = vunpack.c.l.s4 1966171168
    %v2789 = vunpack.c.0.s8 %v2788
    %v2790 = vlaneseq
    %v2791 = vshrl.u32 %v2790, 7
    %v2792 = vsub.s32 %v2789, %v2791
    %v2793 = vrot.slane %v2785, %v2792
    %v2795 = vunpack.c.l.s4 1966171168
    %v2796 = vunpack.c.0.s8 %v2795
    %v2797 = vlaneseq
    %v2798 = vshrl.u32 %v2797, 7
    %v2799 = vsub.s32 %v2796, %v2798
    %v2800 = vrot.slane %v2786, %v2799
    %v2801 = vcombine.low %v2793, %v2800
    %v2802 = vcombine.low %v445, %v446
    %v2803 = vcombine.low %v447, %v448
    %v2804 = vcombine.low %v449, %v450
    %v2805 = vcombine.low %v451, %v452
    %v2807 = vunpack.c.l.s4 1966171168
    %v2808 = vunpack.c.0.s8 %v2807
    %v2809 = vlaneseq
    %v2810 = vshrl.u32 %v2809, 7
    %v2811 = vsub.s32 %v2808, %v2810
    %v2812 = vrot.slane %v2802, %v2811
    %v2814 = vunpack.c.l.s4 1966171168
    %v2815 = vunpack.c.0.s8 %v2814
    %v2816 = vlaneseq
    %v2817 = vshrl.u32 %v2816, 7
    %v2818 = vsub.s32 %v2815, %v2817
    %v2819 = vrot.slane %v2803, %v2818
    %v2821 = vunpack.c.l.s4 1966171168
    %v2822 = vunpack.c.0.s8 %v2821
    %v2823 = vlaneseq
    %v2824 = vshrl.u32 %v2823, 7
    %v2825 = vsub.s32 %v2822, %v2824
    %v2826 = vrot.slane %v2804, %v2825
    %v2828 = vunpack.c.l.s4 1966171168
    %v2829 = vunpack.c.0.s8 %v2828
    %v2830 = vlaneseq
    %v2831 = vshrl.u32 %v2830, 7
    %v2832 = vsub.s32 %v2829, %v2831
    %v2833 = vrot.slane %v2805, %v2832
    %v2834 = vcombine.low %v2812, %v2819
    %v2835 = vcombine.low %v2826, %v2833
    %v2837 = vunpack.c.l.s4 1966171168
    %v2838 = vunpack.c.0.s8 %v2837
    %v2839 = vlaneseq
    %v2840 = vshrl.u32 %v2839, 7
    %v2841 = vsub.s32 %v2838, %v2840
    %v2842 = vrot.slane %v2834, %v2841
    %v2844 = vunpack.c.l.s4 1966171168
    %v2845 = vunpack.c.0.s8 %v2844
    %v2846 = vlaneseq
    %v2847 = vshrl.u32 %v2846, 7
    %v2848 = vsub.s32 %v2845, %v2847
    %v2849 = vrot.slane %v2835, %v2848
    %v2850 = vcombine.low %v2842, %v2849
    %v2851 = vcombine.low %v453, %v454
    %v2852 = vcombine.low %v455, %v456
    %v2853 = vcombine.low %v457, %v458
    %v2854 = vcombine.low %v459, %v460
    %v2856 = vunpack.c.l.s4 1966171168
    %v2857 = vunpack.c.0.s8 %v2856
    %v2858 = vlaneseq
    %v2859 = vshrl.u32 %v2858, 7
    %v2860 = vsub.s32 %v2857, %v2859
    %v2861 = vrot.slane %v2851, %v2860
    %v2863 = vunpack.c.l.s4 1966171168
    %v2864 = vunpack.c.0.s8 %v2863
    %v2865 = vlaneseq
    %v2866 = vshrl.u32 %v2865, 7
    %v2867 = vsub.s32 %v2864, %v2866
    %v2868 = vrot.slane %v2852, %v2867
    %v2870 = vunpack.c.l.s4 1966171168
    %v2871 = vunpack.c.0.s8 %v2870
    %v2872 = vlaneseq
    %v2873 = vshrl.u32 %v2872, 7
    %v2874 = vsub.s32 %v2871, %v2873
    %v2875 = vrot.slane %v2853, %v2874
    %v2877 = vunpack.c.l.s4 1966171168
    %v2878 = vunpack.c.0.s8 %v2877
    %v2879 = vlaneseq
    %v2880 = vshrl.u32 %v2879, 7
    %v2881 = vsub.s32 %v2878, %v2880
    %v2882 = vrot.slane %v2854, %v2881
    %v2883 = vcombine.low %v2861, %v2868
    %v2884 = vcombine.low %v2875, %v2882
    %v2886 = vunpack.c.l.s4 1966171168
    %v2887 = vunpack.c.0.s8 %v2886
    %v2888 = vlaneseq
    %v2889 = vshrl.u32 %v2888, 7
    %v2890 = vsub.s32 %v2887, %v2889
    %v2891 = vrot.slane %v2883, %v2890
    %v2893 = vunpack.c.l.s4 1966171168
    %v2894 = vunpack.c.0.s8 %v2893
    %v2895 = vlaneseq
    %v2896 = vshrl.u32 %v2895, 7
    %v2897 = vsub.s32 %v2894, %v2896
    %v2898 = vrot.slane %v2884, %v2897
    %v2899 = vcombine.low %v2891, %v2898
    %v2900 = vcombine.low %v461, %v462
    %v2901 = vcombine.low %v463, %v464
    %v2902 = vcombine.low %v465, %v466
    %v2903 = vcombine.low %v467, %v468
    %v2905 = vunpack.c.l.s4 1966171168
    %v2906 = vunpack.c.0.s8 %v2905
    %v2907 = vlaneseq
    %v2908 = vshrl.u32 %v2907, 7
    %v2909 = vsub.s32 %v2906, %v2908
    %v2910 = vrot.slane %v2900, %v2909
    %v2912 = vunpack.c.l.s4 1966171168
    %v2913 = vunpack.c.0.s8 %v2912
    %v2914 = vlaneseq
    %v2915 = vshrl.u32 %v2914, 7
    %v2916 = vsub.s32 %v2913, %v2915
    %v2917 = vrot.slane %v2901, %v2916
    %v2919 = vunpack.c.l.s4 1966171168
    %v2920 = vunpack.c.0.s8 %v2919
    %v2921 = vlaneseq
    %v2922 = vshrl.u32 %v2921, 7
    %v2923 = vsub.s32 %v2920, %v2922
    %v2924 = vrot.slane %v2902, %v2923
    %v2926 = vunpack.c.l.s4 1966171168
    %v2927 = vunpack.c.0.s8 %v2926
    %v2928 = vlaneseq
    %v2929 = vshrl.u32 %v2928, 7
    %v2930 = vsub.s32 %v2927, %v2929
    %v2931 = vrot.slane %v2903, %v2930
    %v2932 = vcombine.low %v2910, %v2917
    %v2933 = vcombine.low %v2924, %v2931
    %v2935 = vunpack.c.l.s4 1966171168
    %v2936 = vunpack.c.0.s8 %v2935
    %v2937 = vlaneseq
    %v2938 = vshrl.u32 %v2937, 7
    %v2939 = vsub.s32 %v2936, %v2938
    %v2940 = vrot.slane %v2932, %v2939
    %v2942 = vunpack.c.l.s4 1966171168
    %v2943 = vunpack.c.0.s8 %v2942
    %v2944 = vlaneseq
    %v2945 = vshrl.u32 %v2944, 7
    %v2946 = vsub.s32 %v2943, %v2945
    %v2947 = vrot.slane %v2933, %v2946
    %v2948 = vcombine.low %v2940, %v2947
    %v2949 = vcombine.low %v469, %v470
    %v2950 = vcombine.low %v471, %v472
    %v2951 = vcombine.low %v473, %v474
    %v2952 = vcombine.low %v475, %v476
    %v2954 = vunpack.c.l.s4 1966171168
    %v2955 = vunpack.c.0.s8 %v2954
    %v2956 = vlaneseq
    %v2957 = vshrl.u32 %v2956, 7
    %v2958 = vsub.s32 %v2955, %v2957
    %v2959 = vrot.slane %v2949, %v2958
    %v2961 = vunpack.c.l.s4 1966171168
    %v2962 = vunpack.c.0.s8 %v2961
    %v2963 = vlaneseq
    %v2964 = vshrl.u32 %v2963, 7
    %v2965 = vsub.s32 %v2962, %v2964
    %v2966 = vrot.slane %v2950, %v2965
    %v2968 = vunpack.c.l.s4 1966171168
    %v2969 = vunpack.c.0.s8 %v2968
    %v2970 = vlaneseq
    %v2971 = vshrl.u32 %v2970, 7
    %v2972 = vsub.s32 %v2969, %v2971
    %v2973 = vrot.slane %v2951, %v2972
    %v2975 = vunpack.c.l.s4 1966171168
    %v2976 = vunpack.c.0.s8 %v2975
    %v2977 = vlaneseq
    %v2978 = vshrl.u32 %v2977, 7
    %v2979 = vsub.s32 %v2976, %v2978
    %v2980 = vrot.slane %v2952, %v2979
    %v2981 = vcombine.low %v2959, %v2966
    %v2982 = vcombine.low %v2973, %v2980
    %v2984 = vunpack.c.l.s4 1966171168
    %v2985 = vunpack.c.0.s8 %v2984
    %v2986 = vlaneseq
    %v2987 = vshrl.u32 %v2986, 7
    %v2988 = vsub.s32 %v2985, %v2987
    %v2989 = vrot.slane %v2981, %v2988
    %v2991 = vunpack.c.l.s4 1966171168
    %v2992 = vunpack.c.0.s8 %v2991
    %v2993 = vlaneseq
    %v2994 = vshrl.u32 %v2993, 7
    %v2995 = vsub.s32 %v2992, %v2994
    %v2996 = vrot.slane %v2982, %v2995
    %v2997 = vcombine.low %v2989, %v2996
    %v2998 = vcombine.low %v477, %v478
    %v2999 = vcombine.low %v479, %v480
    %v3000 = vcombine.low %v481, %v482
    %v3001 = vcombine.low %v483, %v484
    %v3003 = vunpack.c.l.s4 1966171168
    %v3004 = vunpack.c.0.s8 %v3003
    %v3005 = vlaneseq
    %v3006 = vshrl.u32 %v3005, 7
    %v3007 = vsub.s32 %v3004, %v3006
    %v3008 = vrot.slane %v2998, %v3007
    %v3010 = vunpack.c.l.s4 1966171168
    %v3011 = vunpack.c.0.s8 %v3010
    %v3012 = vlaneseq
    %v3013 = vshrl.u32 %v3012, 7
    %v3014 = vsub.s32 %v3011, %v3013
    %v3015 = vrot.slane %v2999, %v3014
    %v3017 = vunpack.c.l.s4 1966171168
    %v3018 = vunpack.c.0.s8 %v3017
    %v3019 = vlaneseq
    %v3020 = vshrl.u32 %v3019, 7
    %v3021 = vsub.s32 %v3018, %v3020
    %v3022 = vrot.slane %v3000, %v3021
    %v3024 = vunpack.c.l.s4 1966171168
    %v3025 = vunpack.c.0.s8 %v3024
    %v3026 = vlaneseq
    %v3027 = vshrl.u32 %v3026, 7
    %v3028 = vsub.s32 %v3025, %v3027
    %v3029 = vrot.slane %v3001, %v3028
    %v3030 = vcombine.low %v3008, %v3015
    %v3031 = vcombine.low %v3022, %v3029
    %v3033 = vunpack.c.l.s4 1966171168
    %v3034 = vunpack.c.0.s8 %v3033
    %v3035 = vlaneseq
    %v3036 = vshrl.u32 %v3035, 7
    %v3037 = vsub.s32 %v3034, %v3036
    %v3038 = vrot.slane %v3030, %v3037
    %v3040 = vunpack.c.l.s4 1966171168
    %v3041 = vunpack.c.0.s8 %v3040
    %v3042 = vlaneseq
    %v3043 = vshrl.u32 %v3042, 7
    %v3044 = vsub.s32 %v3041, %v3043
    %v3045 = vrot.slane %v3031, %v3044
    %v3046 = vcombine.low %v3038, %v3045
    %v3047 = vcombine.low %v485, %v486
    %v3048 = vcombine.low %v487, %v488
    %v3049 = vcombine.low %v489, %v490
    %v3050 = vcombine.low %v491, %v492
    %v3052 = vunpack.c.l.s4 1966171168
    %v3053 = vunpack.c.0.s8 %v3052
    %v3054 = vlaneseq
    %v3055 = vshrl.u32 %v3054, 7
    %v3056 = vsub.s32 %v3053, %v3055
    %v3057 = vrot.slane %v3047, %v3056
    %v3059 = vunpack.c.l.s4 1966171168
    %v3060 = vunpack.c.0.s8 %v3059
    %v3061 = vlaneseq
    %v3062 = vshrl.u32 %v3061, 7
    %v3063 = vsub.s32 %v3060, %v3062
    %v3064 = vrot.slane %v3048, %v3063
    %v3066 = vunpack.c.l.s4 1966171168
    %v3067 = vunpack.c.0.s8 %v3066
    %v3068 = vlaneseq
    %v3069 = vshrl.u32 %v3068, 7
    %v3070 = vsub.s32 %v3067, %v3069
    %v3071 = vrot.slane %v3049, %v3070
    %v3073 = vunpack.c.l.s4 1966171168
    %v3074 = vunpack.c.0.s8 %v3073
    %v3075 = vlaneseq
    %v3076 = vshrl.u32 %v3075, 7
    %v3077 = vsub.s32 %v3074, %v3076
    %v3078 = vrot.slane %v3050, %v3077
    %v3079 = vcombine.low %v3057, %v3064
    %v3080 = vcombine.low %v3071, %v3078
    %v3082 = vunpack.c.l.s4 1966171168
    %v3083 = vunpack.c.0.s8 %v3082
    %v3084 = vlaneseq
    %v3085 = vshrl.u32 %v3084, 7
    %v3086 = vsub.s32 %v3083, %v3085
    %v3087 = vrot.slane %v3079, %v3086
    %v3089 = vunpack.c.l.s4 1966171168
    %v3090 = vunpack.c.0.s8 %v3089
    %v3091 = vlaneseq
    %v3092 = vshrl.u32 %v3091, 7
    %v3093 = vsub.s32 %v3090, %v3092
    %v3094 = vrot.slane %v3080, %v3093
    %v3095 = vcombine.low %v3087, %v3094
    %v3096 = vcombine.low %v493, %v494
    %v3097 = vcombine.low %v495, %v496
    %v3098 = vcombine.low %v497, %v498
    %v3099 = vcombine.low %v499, %v500
    %v3101 = vunpack.c.l.s4 1966171168
    %v3102 = vunpack.c.0.s8 %v3101
    %v3103 = vlaneseq
    %v3104 = vshrl.u32 %v3103, 7
    %v3105 = vsub.s32 %v3102, %v3104
    %v3106 = vrot.slane %v3096, %v3105
    %v3108 = vunpack.c.l.s4 1966171168
    %v3109 = vunpack.c.0.s8 %v3108
    %v3110 = vlaneseq
    %v3111 = vshrl.u32 %v3110, 7
    %v3112 = vsub.s32 %v3109, %v3111
    %v3113 = vrot.slane %v3097, %v3112
    %v3115 = vunpack.c.l.s4 1966171168
    %v3116 = vunpack.c.0.s8 %v3115
    %v3117 = vlaneseq
    %v3118 = vshrl.u32 %v3117, 7
    %v3119 = vsub.s32 %v3116, %v3118
    %v3120 = vrot.slane %v3098, %v3119
    %v3122 = vunpack.c.l.s4 1966171168
    %v3123 = vunpack.c.0.s8 %v3122
    %v3124 = vlaneseq
    %v3125 = vshrl.u32 %v3124, 7
    %v3126 = vsub.s32 %v3123, %v3125
    %v3127 = vrot.slane %v3099, %v3126
    %v3128 = vcombine.low %v3106, %v3113
    %v3129 = vcombine.low %v3120, %v3127
    %v3131 = vunpack.c.l.s4 1966171168
    %v3132 = vunpack.c.0.s8 %v3131
    %v3133 = vlaneseq
    %v3134 = vshrl.u32 %v3133, 7
    %v3135 = vsub.s32 %v3132, %v3134
    %v3136 = vrot.slane %v3128, %v3135
    %v3138 = vunpack.c.l.s4 1966171168
    %v3139 = vunpack.c.0.s8 %v3138
    %v3140 = vlaneseq
    %v3141 = vshrl.u32 %v3140, 7
    %v3142 = vsub.s32 %v3139, %v3141
    %v3143 = vrot.slane %v3129, %v3142
    %v3144 = vcombine.low %v3136, %v3143
    %v3145 = vcombine.low %v501, %v502
    %v3146 = vcombine.low %v503, %v504
    %v3147 = vcombine.low %v505, %v506
    %v3148 = vcombine.low %v507, %v508
    %v3150 = vunpack.c.l.s4 1966171168
    %v3151 = vunpack.c.0.s8 %v3150
    %v3152 = vlaneseq
    %v3153 = vshrl.u32 %v3152, 7
    %v3154 = vsub.s32 %v3151, %v3153
    %v3155 = vrot.slane %v3145, %v3154
    %v3157 = vunpack.c.l.s4 1966171168
    %v3158 = vunpack.c.0.s8 %v3157
    %v3159 = vlaneseq
    %v3160 = vshrl.u32 %v3159, 7
    %v3161 = vsub.s32 %v3158, %v3160
    %v3162 = vrot.slane %v3146, %v3161
    %v3164 = vunpack.c.l.s4 1966171168
    %v3165 = vunpack.c.0.s8 %v3164
    %v3166 = vlaneseq
    %v3167 = vshrl.u32 %v3166, 7
    %v3168 = vsub.s32 %v3165, %v3167
    %v3169 = vrot.slane %v3147, %v3168
    %v3171 = vunpack.c.l.s4 1966171168
    %v3172 = vunpack.c.0.s8 %v3171
    %v3173 = vlaneseq
    %v3174 = vshrl.u32 %v3173, 7
    %v3175 = vsub.s32 %v3172, %v3174
    %v3176 = vrot.slane %v3148, %v3175
    %v3177 = vcombine.low %v3155, %v3162
    %v3178 = vcombine.low %v3169, %v3176
    %v3180 = vunpack.c.l.s4 1966171168
    %v3181 = vunpack.c.0.s8 %v3180
    %v3182 = vlaneseq
    %v3183 = vshrl.u32 %v3182, 7
    %v3184 = vsub.s32 %v3181, %v3183
    %v3185 = vrot.slane %v3177, %v3184
    %v3187 = vunpack.c.l.s4 1966171168
    %v3188 = vunpack.c.0.s8 %v3187
    %v3189 = vlaneseq
    %v3190 = vshrl.u32 %v3189, 7
    %v3191 = vsub.s32 %v3188, %v3190
    %v3192 = vrot.slane %v3178, %v3191
    %v3193 = vcombine.low %v3185, %v3192
    %v3194 = vcombine.low %v509, %v510
    %v3195 = vcombine.low %v511, %v512
    %v3196 = vcombine.low %v513, %v514
    %v3197 = vcombine.low %v515, %v516
    %v3199 = vunpack.c.l.s4 1966171168
    %v3200 = vunpack.c.0.s8 %v3199
    %v3201 = vlaneseq
    %v3202 = vshrl.u32 %v3201, 7
    %v3203 = vsub.s32 %v3200, %v3202
    %v3204 = vrot.slane %v3194, %v3203
    %v3206 = vunpack.c.l.s4 1966171168
    %v3207 = vunpack.c.0.s8 %v3206
    %v3208 = vlaneseq
    %v3209 = vshrl.u32 %v3208, 7
    %v3210 = vsub.s32 %v3207, %v3209
    %v3211 = vrot.slane %v3195, %v3210
    %v3213 = vunpack.c.l.s4 1966171168
    %v3214 = vunpack.c.0.s8 %v3213
    %v3215 = vlaneseq
    %v3216 = vshrl.u32 %v3215, 7
    %v3217 = vsub.s32 %v3214, %v3216
    %v3218 = vrot.slane %v3196, %v3217
    %v3220 = vunpack.c.l.s4 1966171168
    %v3221 = vunpack.c.0.s8 %v3220
    %v3222 = vlaneseq
    %v3223 = vshrl.u32 %v3222, 7
    %v3224 = vsub.s32 %v3221, %v3223
    %v3225 = vrot.slane %v3197, %v3224
    %v3226 = vcombine.low %v3204, %v3211
    %v3227 = vcombine.low %v3218, %v3225
    %v3229 = vunpack.c.l.s4 1966171168
    %v3230 = vunpack.c.0.s8 %v3229
    %v3231 = vlaneseq
    %v3232 = vshrl.u32 %v3231, 7
    %v3233 = vsub.s32 %v3230, %v3232
    %v3234 = vrot.slane %v3226, %v3233
    %v3236 = vunpack.c.l.s4 1966171168
    %v3237 = vunpack.c.0.s8 %v3236
    %v3238 = vlaneseq
    %v3239 = vshrl.u32 %v3238, 7
    %v3240 = vsub.s32 %v3237, %v3239
    %v3241 = vrot.slane %v3227, %v3240
    %v3242 = vcombine.low %v3234, %v3241
    %v3243 = vcombine.low %v517, %v518
    %v3244 = vcombine.low %v519, %v520
    %v3245 = vcombine.low %v521, %v522
    %v3246 = vcombine.low %v523, %v524
    %v3248 = vunpack.c.l.s4 1966171168
    %v3249 = vunpack.c.0.s8 %v3248
    %v3250 = vlaneseq
    %v3251 = vshrl.u32 %v3250, 7
    %v3252 = vsub.s32 %v3249, %v3251
    %v3253 = vrot.slane %v3243, %v3252
    %v3255 = vunpack.c.l.s4 1966171168
    %v3256 = vunpack.c.0.s8 %v3255
    %v3257 = vlaneseq
    %v3258 = vshrl.u32 %v3257, 7
    %v3259 = vsub.s32 %v3256, %v3258
    %v3260 = vrot.slane %v3244, %v3259
    %v3262 = vunpack.c.l.s4 1966171168
    %v3263 = vunpack.c.0.s8 %v3262
    %v3264 = vlaneseq
    %v3265 = vshrl.u32 %v3264, 7
    %v3266 = vsub.s32 %v3263, %v3265
    %v3267 = vrot.slane %v3245, %v3266
    %v3269 = vunpack.c.l.s4 1966171168
    %v3270 = vunpack.c.0.s8 %v3269
    %v3271 = vlaneseq
    %v3272 = vshrl.u32 %v3271, 7
    %v3273 = vsub.s32 %v3270, %v3272
    %v3274 = vrot.slane %v3246, %v3273
    %v3275 = vcombine.low %v3253, %v3260
    %v3276 = vcombine.low %v3267, %v3274
    %v3278 = vunpack.c.l.s4 1966171168
    %v3279 = vunpack.c.0.s8 %v3278
    %v3280 = vlaneseq
    %v3281 = vshrl.u32 %v3280, 7
    %v3282 = vsub.s32 %v3279, %v3281
    %v3283 = vrot.slane %v3275, %v3282
    %v3285 = vunpack.c.l.s4 1966171168
    %v3286 = vunpack.c.0.s8 %v3285
    %v3287 = vlaneseq
    %v3288 = vshrl.u32 %v3287, 7
    %v3289 = vsub.s32 %v3286, %v3288
    %v3290 = vrot.slane %v3276, %v3289
    %v3291 = vcombine.low %v3283, %v3290
    %v3292 = vcombine.low %v525, %v526
    %v3293 = vcombine.low %v527, %v528
    %v3294 = vcombine.low %v529, %v530
    %v3295 = vcombine.low %v531, %v532
    %v3297 = vunpack.c.l.s4 1966171168
    %v3298 = vunpack.c.0.s8 %v3297
    %v3299 = vlaneseq
    %v3300 = vshrl.u32 %v3299, 7
    %v3301 = vsub.s32 %v3298, %v3300
    %v3302 = vrot.slane %v3292, %v3301
    %v3304 = vunpack.c.l.s4 1966171168
    %v3305 = vunpack.c.0.s8 %v3304
    %v3306 = vlaneseq
    %v3307 = vshrl.u32 %v3306, 7
    %v3308 = vsub.s32 %v3305, %v3307
    %v3309 = vrot.slane %v3293, %v3308
    %v3311 = vunpack.c.l.s4 1966171168
    %v3312 = vunpack.c.0.s8 %v3311
    %v3313 = vlaneseq
    %v3314 = vshrl.u32 %v3313, 7
    %v3315 = vsub.s32 %v3312, %v3314
    %v3316 = vrot.slane %v3294, %v3315
    %v3318 = vunpack.c.l.s4 1966171168
    %v3319 = vunpack.c.0.s8 %v3318
    %v3320 = vlaneseq
    %v3321 = vshrl.u32 %v3320, 7
    %v3322 = vsub.s32 %v3319, %v3321
    %v3323 = vrot.slane %v3295, %v3322
    %v3324 = vcombine.low %v3302, %v3309
    %v3325 = vcombine.low %v3316, %v3323
    %v3327 = vunpack.c.l.s4 1966171168
    %v3328 = vunpack.c.0.s8 %v3327
    %v3329 = vlaneseq
    %v3330 = vshrl.u32 %v3329, 7
    %v3331 = vsub.s32 %v3328, %v3330
    %v3332 = vrot.slane %v3324, %v3331
    %v3334 = vunpack.c.l.s4 1966171168
    %v3335 = vunpack.c.0.s8 %v3334
    %v3336 = vlaneseq
    %v3337 = vshrl.u32 %v3336, 7
    %v3338 = vsub.s32 %v3335, %v3337
    %v3339 = vrot.slane %v3325, %v3338
    %v3340 = vcombine.low %v3332, %v3339
    %v3341 = vcombine.low %v533, %v534
    %v3342 = vcombine.low %v535, %v536
    %v3343 = vcombine.low %v537, %v538
    %v3344 = vcombine.low %v539, %v540
    %v3346 = vunpack.c.l.s4 1966171168
    %v3347 = vunpack.c.0.s8 %v3346
    %v3348 = vlaneseq
    %v3349 = vshrl.u32 %v3348, 7
    %v3350 = vsub.s32 %v3347, %v3349
    %v3351 = vrot.slane %v3341, %v3350
    %v3353 = vunpack.c.l.s4 1966171168
    %v3354 = vunpack.c.0.s8 %v3353
    %v3355 = vlaneseq
    %v3356 = vshrl.u32 %v3355, 7
    %v3357 = vsub.s32 %v3354, %v3356
    %v3358 = vrot.slane %v3342, %v3357
    %v3360 = vunpack.c.l.s4 1966171168
    %v3361 = vunpack.c.0.s8 %v3360
    %v3362 = vlaneseq
    %v3363 = vshrl.u32 %v3362, 7
    %v3364 = vsub.s32 %v3361, %v3363
    %v3365 = vrot.slane %v3343, %v3364
    %v3367 = vunpack.c.l.s4 1966171168
    %v3368 = vunpack.c.0.s8 %v3367
    %v3369 = vlaneseq
    %v3370 = vshrl.u32 %v3369, 7
    %v3371 = vsub.s32 %v3368, %v3370
    %v3372 = vrot.slane %v3344, %v3371
    %v3373 = vcombine.low %v3351, %v3358
    %v3374 = vcombine.low %v3365, %v3372
    %v3376 = vunpack.c.l.s4 1966171168
    %v3377 = vunpack.c.0.s8 %v3376
    %v3378 = vlaneseq
    %v3379 = vshrl.u32 %v3378, 7
    %v3380 = vsub.s32 %v3377, %v3379
    %v3381 = vrot.slane %v3373, %v3380
    %v3383 = vunpack.c.l.s4 1966171168
    %v3384 = vunpack.c.0.s8 %v3383
    %v3385 = vlaneseq
    %v3386 = vshrl.u32 %v3385, 7
    %v3387 = vsub.s32 %v3384, %v3386
    %v3388 = vrot.slane %v3374, %v3387
    %v3389 = vcombine.low %v3381, %v3388
    %v3390 = vcombine.low %v541, %v542
    %v3391 = vcombine.low %v543, %v544
    %v3392 = vcombine.low %v545, %v546
    %v3393 = vcombine.low %v547, %v548
    %v3395 = vunpack.c.l.s4 1966171168
    %v3396 = vunpack.c.0.s8 %v3395
    %v3397 = vlaneseq
    %v3398 = vshrl.u32 %v3397, 7
    %v3399 = vsub.s32 %v3396, %v3398
    %v3400 = vrot.slane %v3390, %v3399
    %v3402 = vunpack.c.l.s4 1966171168
    %v3403 = vunpack.c.0.s8 %v3402
    %v3404 = vlaneseq
    %v3405 = vshrl.u32 %v3404, 7
    %v3406 = vsub.s32 %v3403, %v3405
    %v3407 = vrot.slane %v3391, %v3406
    %v3409 = vunpack.c.l.s4 1966171168
    %v3410 = vunpack.c.0.s8 %v3409
    %v3411 = vlaneseq
    %v3412 = vshrl.u32 %v3411, 7
    %v3413 = vsub.s32 %v3410, %v3412
    %v3414 = vrot.slane %v3392, %v3413
    %v3416 = vunpack.c.l.s4 1966171168
    %v3417 = vunpack.c.0.s8 %v3416
    %v3418 = vlaneseq
    %v3419 = vshrl.u32 %v3418, 7
    %v3420 = vsub.s32 %v3417, %v3419
    %v3421 = vrot.slane %v3393, %v3420
    %v3422 = vcombine.low %v3400, %v3407
    %v3423 = vcombine.low %v3414, %v3421
    %v3425 = vunpack.c.l.s4 1966171168
    %v3426 = vunpack.c.0.s8 %v3425
    %v3427 = vlaneseq
    %v3428 = vshrl.u32 %v3427, 7
    %v3429 = vsub.s32 %v3426, %v3428
    %v3430 = vrot.slane %v3422, %v3429
    %v3432 = vunpack.c.l.s4 1966171168
    %v3433 = vunpack.c.0.s8 %v3432
    %v3434 = vlaneseq
    %v3435 = vshrl.u32 %v3434, 7
    %v3436 = vsub.s32 %v3433, %v3435
    %v3437 = vrot.slane %v3423, %v3436
    %v3438 = vcombine.low %v3430, %v3437
    %v3439 = vcombine.low %v549, %v550
    %v3440 = vcombine.low %v551, %v552
    %v3441 = vcombine.low %v553, %v554
    %v3442 = vcombine.low %v555, %v556
    %v3444 = vunpack.c.l.s4 1966171168
    %v3445 = vunpack.c.0.s8 %v3444
    %v3446 = vlaneseq
    %v3447 = vshrl.u32 %v3446, 7
    %v3448 = vsub.s32 %v3445, %v3447
    %v3449 = vrot.slane %v3439, %v3448
    %v3451 = vunpack.c.l.s4 1966171168
    %v3452 = vunpack.c.0.s8 %v3451
    %v3453 = vlaneseq
    %v3454 = vshrl.u32 %v3453, 7
    %v3455 = vsub.s32 %v3452, %v3454
    %v3456 = vrot.slane %v3440, %v3455
    %v3458 = vunpack.c.l.s4 1966171168
    %v3459 = vunpack.c.0.s8 %v3458
    %v3460 = vlaneseq
    %v3461 = vshrl.u32 %v3460, 7
    %v3462 = vsub.s32 %v3459, %v3461
    %v3463 = vrot.slane %v3441, %v3462
    %v3465 = vunpack.c.l.s4 1966171168
    %v3466 = vunpack.c.0.s8 %v3465
    %v3467 = vlaneseq
    %v3468 = vshrl.u32 %v3467, 7
    %v3469 = vsub.s32 %v3466, %v3468
    %v3470 = vrot.slane %v3442, %v3469
    %v3471 = vcombine.low %v3449, %v3456
    %v3472 = vcombine.low %v3463, %v3470
    %v3474 = vunpack.c.l.s4 1966171168
    %v3475 = vunpack.c.0.s8 %v3474
    %v3476 = vlaneseq
    %v3477 = vshrl.u32 %v3476, 7
    %v3478 = vsub.s32 %v3475, %v3477
    %v3479 = vrot.slane %v3471, %v3478
    %v3481 = vunpack.c.l.s4 1966171168
    %v3482 = vunpack.c.0.s8 %v3481
    %v3483 = vlaneseq
    %v3484 = vshrl.u32 %v3483, 7
    %v3485 = vsub.s32 %v3482, %v3484
    %v3486 = vrot.slane %v3472, %v3485
    %v3487 = vcombine.low %v3479, %v3486
    %v3488 = vcombine.low %v557, %v558
    %v3489 = vcombine.low %v559, %v560
    %v3490 = vcombine.low %v561, %v562
    %v3491 = vcombine.low %v563, %v564
    %v3493 = vunpack.c.l.s4 1966171168
    %v3494 = vunpack.c.0.s8 %v3493
    %v3495 = vlaneseq
    %v3496 = vshrl.u32 %v3495, 7
    %v3497 = vsub.s32 %v3494, %v3496
    %v3498 = vrot.slane %v3488, %v3497
    %v3500 = vunpack.c.l.s4 1966171168
    %v3501 = vunpack.c.0.s8 %v3500
    %v3502 = vlaneseq
    %v3503 = vshrl.u32 %v3502, 7
    %v3504 = vsub.s32 %v3501, %v3503
    %v3505 = vrot.slane %v3489, %v3504
    %v3507 = vunpack.c.l.s4 1966171168
    %v3508 = vunpack.c.0.s8 %v3507
    %v3509 = vlaneseq
    %v3510 = vshrl.u32 %v3509, 7
    %v3511 = vsub.s32 %v3508, %v3510
    %v3512 = vrot.slane %v3490, %v3511
    %v3514 = vunpack.c.l.s4 1966171168
    %v3515 = vunpack.c.0.s8 %v3514
    %v3516 = vlaneseq
    %v3517 = vshrl.u32 %v3516, 7
    %v3518 = vsub.s32 %v3515, %v3517
    %v3519 = vrot.slane %v3491, %v3518
    %v3520 = vcombine.low %v3498, %v3505
    %v3521 = vcombine.low %v3512, %v3519
    %v3523 = vunpack.c.l.s4 1966171168
    %v3524 = vunpack.c.0.s8 %v3523
    %v3525 = vlaneseq
    %v3526 = vshrl.u32 %v3525, 7
    %v3527 = vsub.s32 %v3524, %v3526
    %v3528 = vrot.slane %v3520, %v3527
    %v3530 = vunpack.c.l.s4 1966171168
    %v3531 = vunpack.c.0.s8 %v3530
    %v3532 = vlaneseq
    %v3533 = vshrl.u32 %v3532, 7
    %v3534 = vsub.s32 %v3531, %v3533
    %v3535 = vrot.slane %v3521, %v3534
    %v3536 = vcombine.low %v3528, %v3535
    %v3537 = vcombine.low %v565, %v566
    %v3538 = vcombine.low %v567, %v568
    %v3539 = vcombine.low %v569, %v570
    %v3540 = vcombine.low %v571, %v572
    %v3542 = vunpack.c.l.s4 1966171168
    %v3543 = vunpack.c.0.s8 %v3542
    %v3544 = vlaneseq
    %v3545 = vshrl.u32 %v3544, 7
    %v3546 = vsub.s32 %v3543, %v3545
    %v3547 = vrot.slane %v3537, %v3546
    %v3549 = vunpack.c.l.s4 1966171168
    %v3550 = vunpack.c.0.s8 %v3549
    %v3551 = vlaneseq
    %v3552 = vshrl.u32 %v3551, 7
    %v3553 = vsub.s32 %v3550, %v3552
    %v3554 = vrot.slane %v3538, %v3553
    %v3556 = vunpack.c.l.s4 1966171168
    %v3557 = vunpack.c.0.s8 %v3556
    %v3558 = vlaneseq
    %v3559 = vshrl.u32 %v3558, 7
    %v3560 = vsub.s32 %v3557, %v3559
    %v3561 = vrot.slane %v3539, %v3560
    %v3563 = vunpack.c.l.s4 1966171168
    %v3564 = vunpack.c.0.s8 %v3563
    %v3565 = vlaneseq
    %v3566 = vshrl.u32 %v3565, 7
    %v3567 = vsub.s32 %v3564, %v3566
    %v3568 = vrot.slane %v3540, %v3567
    %v3569 = vcombine.low %v3547, %v3554
    %v3570 = vcombine.low %v3561, %v3568
    %v3572 = vunpack.c.l.s4 1966171168
    %v3573 = vunpack.c.0.s8 %v3572
    %v3574 = vlaneseq
    %v3575 = vshrl.u32 %v3574, 7
    %v3576 = vsub.s32 %v3573, %v3575
    %v3577 = vrot.slane %v3569, %v3576
    %v3579 = vunpack.c.l.s4 1966171168
    %v3580 = vunpack.c.0.s8 %v3579
    %v3581 = vlaneseq
    %v3582 = vshrl.u32 %v3581, 7
    %v3583 = vsub.s32 %v3580, %v3582
    %v3584 = vrot.slane %v3570, %v3583
    %v3585 = vcombine.low %v3577, %v3584
    %v3586 = vcombine.low %v573, %v574
    %v3587 = vcombine.low %v575, %v576
    %v3588 = vcombine.low %v577, %v578
    %v3589 = vcombine.low %v579, %v580
    %v3591 = vunpack.c.l.s4 1966171168
    %v3592 = vunpack.c.0.s8 %v3591
    %v3593 = vlaneseq
    %v3594 = vshrl.u32 %v3593, 7
    %v3595 = vsub.s32 %v3592, %v3594
    %v3596 = vrot.slane %v3586, %v3595
    %v3598 = vunpack.c.l.s4 1966171168
    %v3599 = vunpack.c.0.s8 %v3598
    %v3600 = vlaneseq
    %v3601 = vshrl.u32 %v3600, 7
    %v3602 = vsub.s32 %v3599, %v3601
    %v3603 = vrot.slane %v3587, %v3602
    %v3605 = vunpack.c.l.s4 1966171168
    %v3606 = vunpack.c.0.s8 %v3605
    %v3607 = vlaneseq
    %v3608 = vshrl.u32 %v3607, 7
    %v3609 = vsub.s32 %v3606, %v3608
    %v3610 = vrot.slane %v3588, %v3609
    %v3612 = vunpack.c.l.s4 1966171168
    %v3613 = vunpack.c.0.s8 %v3612
    %v3614 = vlaneseq
    %v3615 = vshrl.u32 %v3614, 7
    %v3616 = vsub.s32 %v3613, %v3615
    %v3617 = vrot.slane %v3589, %v3616
    %v3618 = vcombine.low %v3596, %v3603
    %v3619 = vcombine.low %v3610, %v3617
    %v3621 = vunpack.c.l.s4 1966171168
    %v3622 = vunpack.c.0.s8 %v3621
    %v3623 = vlaneseq
    %v3624 = vshrl.u32 %v3623, 7
    %v3625 = vsub.s32 %v3622, %v3624
    %v3626 = vrot.slane %v3618, %v3625
    %v3628 = vunpack.c.l.s4 1966171168
    %v3629 = vunpack.c.0.s8 %v3628
    %v3630 = vlaneseq
    %v3631 = vshrl.u32 %v3630, 7
    %v3632 = vsub.s32 %v3629, %v3631
    %v3633 = vrot.slane %v3619, %v3632
    %v3634 = vcombine.low %v3626, %v3633
    %v3635 = vcombine.low %v581, %v582
    %v3636 = vcombine.low %v583, %v584
    %v3637 = vcombine.low %v585, %v586
    %v3638 = vcombine.low %v587, %v588
    %v3640 = vunpack.c.l.s4 1966171168
    %v3641 = vunpack.c.0.s8 %v3640
    %v3642 = vlaneseq
    %v3643 = vshrl.u32 %v3642, 7
    %v3644 = vsub.s32 %v3641, %v3643
    %v3645 = vrot.slane %v3635, %v3644
    %v3647 = vunpack.c.l.s4 1966171168
    %v3648 = vunpack.c.0.s8 %v3647
    %v3649 = vlaneseq
    %v3650 = vshrl.u32 %v3649, 7
    %v3651 = vsub.s32 %v3648, %v3650
    %v3652 = vrot.slane %v3636, %v3651
    %v3654 = vunpack.c.l.s4 1966171168
    %v3655 = vunpack.c.0.s8 %v3654
    %v3656 = vlaneseq
    %v3657 = vshrl.u32 %v3656, 7
    %v3658 = vsub.s32 %v3655, %v3657
    %v3659 = vrot.slane %v3637, %v3658
    %v3661 = vunpack.c.l.s4 1966171168
    %v3662 = vunpack.c.0.s8 %v3661
    %v3663 = vlaneseq
    %v3664 = vshrl.u32 %v3663, 7
    %v3665 = vsub.s32 %v3662, %v3664
    %v3666 = vrot.slane %v3638, %v3665
    %v3667 = vcombine.low %v3645, %v3652
    %v3668 = vcombine.low %v3659, %v3666
    %v3670 = vunpack.c.l.s4 1966171168
    %v3671 = vunpack.c.0.s8 %v3670
    %v3672 = vlaneseq
    %v3673 = vshrl.u32 %v3672, 7
    %v3674 = vsub.s32 %v3671, %v3673
    %v3675 = vrot.slane %v3667, %v3674
    %v3677 = vunpack.c.l.s4 1966171168
    %v3678 = vunpack.c.0.s8 %v3677
    %v3679 = vlaneseq
    %v3680 = vshrl.u32 %v3679, 7
    %v3681 = vsub.s32 %v3678, %v3680
    %v3682 = vrot.slane %v3668, %v3681
    %v3683 = vcombine.low %v3675, %v3682
    %v3684 = vcombine.low %v589, %v590
    %v3685 = vcombine.low %v591, %v592
    %v3686 = vcombine.low %v593, %v594
    %v3687 = vcombine.low %v595, %v596
    %v3689 = vunpack.c.l.s4 1966171168
    %v3690 = vunpack.c.0.s8 %v3689
    %v3691 = vlaneseq
    %v3692 = vshrl.u32 %v3691, 7
    %v3693 = vsub.s32 %v3690, %v3692
    %v3694 = vrot.slane %v3684, %v3693
    %v3696 = vunpack.c.l.s4 1966171168
    %v3697 = vunpack.c.0.s8 %v3696
    %v3698 = vlaneseq
    %v3699 = vshrl.u32 %v3698, 7
    %v3700 = vsub.s32 %v3697, %v3699
    %v3701 = vrot.slane %v3685, %v3700
    %v3703 = vunpack.c.l.s4 1966171168
    %v3704 = vunpack.c.0.s8 %v3703
    %v3705 = vlaneseq
    %v3706 = vshrl.u32 %v3705, 7
    %v3707 = vsub.s32 %v3704, %v3706
    %v3708 = vrot.slane %v3686, %v3707
    %v3710 = vunpack.c.l.s4 1966171168
    %v3711 = vunpack.c.0.s8 %v3710
    %v3712 = vlaneseq
    %v3713 = vshrl.u32 %v3712, 7
    %v3714 = vsub.s32 %v3711, %v3713
    %v3715 = vrot.slane %v3687, %v3714
    %v3716 = vcombine.low %v3694, %v3701
    %v3717 = vcombine.low %v3708, %v3715
    %v3719 = vunpack.c.l.s4 1966171168
    %v3720 = vunpack.c.0.s8 %v3719
    %v3721 = vlaneseq
    %v3722 = vshrl.u32 %v3721, 7
    %v3723 = vsub.s32 %v3720, %v3722
    %v3724 = vrot.slane %v3716, %v3723
    %v3726 = vunpack.c.l.s4 1966171168
    %v3727 = vunpack.c.0.s8 %v3726
    %v3728 = vlaneseq
    %v3729 = vshrl.u32 %v3728, 7
    %v3730 = vsub.s32 %v3727, %v3729
    %v3731 = vrot.slane %v3717, %v3730
    %v3732 = vcombine.low %v3724, %v3731
    %vm3797 = vcmask 31744
    %v3798 = vsel %vm3797, %v645, -inf
    %3799 = vmax.xlane.f32.xlu0 %v3798
    %v3800 = vpop.xlane.xlu0 %3799
    %v3801 = vsel %vm3797, %v694, -inf
    %3802 = vmax.xlane.f32.xlu0 %v3801
    %v3803 = vpop.xlane.xlu0 %3802
    %v3804 = vsel %vm3797, %v743, -inf
    %3805 = vmax.xlane.f32.xlu0 %v3804
    %v3806 = vpop.xlane.xlu0 %3805
    %v3807 = vsel %vm3797, %v792, -inf
    %3808 = vmax.xlane.f32.xlu0 %v3807
    %v3809 = vpop.xlane.xlu0 %3808
    %v3810 = vsel %vm3797, %v841, -inf
    %3811 = vmax.xlane.f32.xlu0 %v3810
    %v3812 = vpop.xlane.xlu0 %3811
    %v3813 = vsel %vm3797, %v890, -inf
    %3814 = vmax.xlane.f32.xlu0 %v3813
    %v3815 = vpop.xlane.xlu0 %3814
    %v3816 = vsel %vm3797, %v939, -inf
    %3817 = vmax.xlane.f32.xlu0 %v3816
    %v3818 = vpop.xlane.xlu0 %3817
    %v3819 = vsel %vm3797, %v988, -inf
    %3820 = vmax.xlane.f32.xlu0 %v3819
    %v3821 = vpop.xlane.xlu0 %3820
    %v3822 = vsel %vm3797, %v1037, -inf
    %3823 = vmax.xlane.f32.xlu0 %v3822
    %v3824 = vpop.xlane.xlu0 %3823
    %v3825 = vsel %vm3797, %v1086, -inf
    %3826 = vmax.xlane.f32.xlu0 %v3825
    %v3827 = vpop.xlane.xlu0 %3826
    %v3828 = vsel %vm3797, %v1135, -inf
    %3829 = vmax.xlane.f32.xlu0 %v3828
    %v3830 = vpop.xlane.xlu0 %3829
    %v3831 = vsel %vm3797, %v1184, -inf
    %3832 = vmax.xlane.f32.xlu0 %v3831
    %v3833 = vpop.xlane.xlu0 %3832
    %v3834 = vsel %vm3797, %v1233, -inf
    %3835 = vmax.xlane.f32.xlu0 %v3834
    %v3836 = vpop.xlane.xlu0 %3835
    %v3837 = vsel %vm3797, %v1282, -inf
    %3838 = vmax.xlane.f32.xlu0 %v3837
    %v3839 = vpop.xlane.xlu0 %3838
    %v3840 = vsel %vm3797, %v1331, -inf
    %3841 = vmax.xlane.f32.xlu0 %v3840
    %v3842 = vpop.xlane.xlu0 %3841
    %v3843 = vsel %vm3797, %v1380, -inf
    %3844 = vmax.xlane.f32.xlu0 %v3843
    %v3845 = vpop.xlane.xlu0 %3844
    %v3846 = vsel %vm3797, %v1429, -inf
    %3847 = vmax.xlane.f32.xlu0 %v3846
    %v3848 = vpop.xlane.xlu0 %3847
    %v3849 = vsel %vm3797, %v1478, -inf
    %3850 = vmax.xlane.f32.xlu0 %v3849
    %v3851 = vpop.xlane.xlu0 %3850
    %v3852 = vsel %vm3797, %v1527, -inf
    %3853 = vmax.xlane.f32.xlu0 %v3852
    %v3854 = vpop.xlane.xlu0 %3853
    %v3855 = vsel %vm3797, %v1576, -inf
    %3856 = vmax.xlane.f32.xlu0 %v3855
    %v3857 = vpop.xlane.xlu0 %3856
    %v3858 = vsel %vm3797, %v1625, -inf
    %3859 = vmax.xlane.f32.xlu0 %v3858
    %v3860 = vpop.xlane.xlu0 %3859
    %v3861 = vsel %vm3797, %v1674, -inf
    %3862 = vmax.xlane.f32.xlu0 %v3861
    %v3863 = vpop.xlane.xlu0 %3862
    %v3864 = vsel %vm3797, %v1723, -inf
    %3865 = vmax.xlane.f32.xlu0 %v3864
    %v3866 = vpop.xlane.xlu0 %3865
    %v3867 = vsel %vm3797, %v1772, -inf
    %3868 = vmax.xlane.f32.xlu0 %v3867
    %v3869 = vpop.xlane.xlu0 %3868
    %v3870 = vsel %vm3797, %v1821, -inf
    %3871 = vmax.xlane.f32.xlu0 %v3870
    %v3872 = vpop.xlane.xlu0 %3871
    %v3873 = vsel %vm3797, %v1870, -inf
    %3874 = vmax.xlane.f32.xlu0 %v3873
    %v3875 = vpop.xlane.xlu0 %3874
    %v3876 = vsel %vm3797, %v1919, -inf
    %3877 = vmax.xlane.f32.xlu0 %v3876
    %v3878 = vpop.xlane.xlu0 %3877
    %v3879 = vsel %vm3797, %v1968, -inf
    %3880 = vmax.xlane.f32.xlu0 %v3879
    %v3881 = vpop.xlane.xlu0 %3880
    %v3882 = vsel %vm3797, %v2017, -inf
    %3883 = vmax.xlane.f32.xlu0 %v3882
    %v3884 = vpop.xlane.xlu0 %3883
    %v3885 = vsel %vm3797, %v2066, -inf
    %3886 = vmax.xlane.f32.xlu0 %v3885
    %v3887 = vpop.xlane.xlu0 %3886
    %v3888 = vsel %vm3797, %v2115, -inf
    %3889 = vmax.xlane.f32.xlu0 %v3888
    %v3890 = vpop.xlane.xlu0 %3889
    %v3891 = vsel %vm3797, %v2164, -inf
    %3892 = vmax.xlane.f32.xlu0 %v3891
    %v3893 = vpop.xlane.xlu0 %3892
    %v3894 = vsel %vm3797, %v2213, -inf
    %3895 = vmax.xlane.f32.xlu0 %v3894
    %v3896 = vpop.xlane.xlu0 %3895
    %v3897 = vsel %vm3797, %v2262, -inf
    %3898 = vmax.xlane.f32.xlu0 %v3897
    %v3899 = vpop.xlane.xlu0 %3898
    %v3900 = vsel %vm3797, %v2311, -inf
    %3901 = vmax.xlane.f32.xlu0 %v3900
    %v3902 = vpop.xlane.xlu0 %3901
    %v3903 = vsel %vm3797, %v2360, -inf
    %3904 = vmax.xlane.f32.xlu0 %v3903
    %v3905 = vpop.xlane.xlu0 %3904
    %v3906 = vsel %vm3797, %v2409, -inf
    %3907 = vmax.xlane.f32.xlu0 %v3906
    %v3908 = vpop.xlane.xlu0 %3907
    %v3909 = vsel %vm3797, %v2458, -inf
    %3910 = vmax.xlane.f32.xlu0 %v3909
    %v3911 = vpop.xlane.xlu0 %3910
    %v3912 = vsel %vm3797, %v2507, -inf
    %3913 = vmax.xlane.f32.xlu0 %v3912
    %v3914 = vpop.xlane.xlu0 %3913
    %v3915 = vsel %vm3797, %v2556, -inf
    %3916 = vmax.xlane.f32.xlu0 %v3915
    %v3917 = vpop.xlane.xlu0 %3916
    %v3918 = vsel %vm3797, %v2605, -inf
    %3919 = vmax.xlane.f32.xlu0 %v3918
    %v3920 = vpop.xlane.xlu0 %3919
    %v3921 = vsel %vm3797, %v2654, -inf
    %3922 = vmax.xlane.f32.xlu0 %v3921
    %v3923 = vpop.xlane.xlu0 %3922
    %v3924 = vsel %vm3797, %v2703, -inf
    %3925 = vmax.xlane.f32.xlu0 %v3924
    %v3926 = vpop.xlane.xlu0 %3925
    %v3927 = vsel %vm3797, %v2752, -inf
    %3928 = vmax.xlane.f32.xlu0 %v3927
    %v3929 = vpop.xlane.xlu0 %3928
    %v3930 = vsel %vm3797, %v2801, -inf
    %3931 = vmax.xlane.f32.xlu0 %v3930
    %v3932 = vpop.xlane.xlu0 %3931
    %v3933 = vsel %vm3797, %v2850, -inf
    %3934 = vmax.xlane.f32.xlu0 %v3933
    %v3935 = vpop.xlane.xlu0 %3934
    %v3936 = vsel %vm3797, %v2899, -inf
    %3937 = vmax.xlane.f32.xlu0 %v3936
    %v3938 = vpop.xlane.xlu0 %3937
    %v3939 = vsel %vm3797, %v2948, -inf
    %3940 = vmax.xlane.f32.xlu0 %v3939
    %v3941 = vpop.xlane.xlu0 %3940
    %v3942 = vsel %vm3797, %v2997, -inf
    %3943 = vmax.xlane.f32.xlu0 %v3942
    %v3944 = vpop.xlane.xlu0 %3943
    %v3945 = vsel %vm3797, %v3046, -inf
    %3946 = vmax.xlane.f32.xlu0 %v3945
    %v3947 = vpop.xlane.xlu0 %3946
    %v3948 = vsel %vm3797, %v3095, -inf
    %3949 = vmax.xlane.f32.xlu0 %v3948
    %v3950 = vpop.xlane.xlu0 %3949
    %v3951 = vsel %vm3797, %v3144, -inf
    %3952 = vmax.xlane.f32.xlu0 %v3951
    %v3953 = vpop.xlane.xlu0 %3952
    %v3954 = vsel %vm3797, %v3193, -inf
    %3955 = vmax.xlane.f32.xlu0 %v3954
    %v3956 = vpop.xlane.xlu0 %3955
    %v3957 = vsel %vm3797, %v3242, -inf
    %3958 = vmax.xlane.f32.xlu0 %v3957
    %v3959 = vpop.xlane.xlu0 %3958
    %v3960 = vsel %vm3797, %v3291, -inf
    %3961 = vmax.xlane.f32.xlu0 %v3960
    %v3962 = vpop.xlane.xlu0 %3961
    %v3963 = vsel %vm3797, %v3340, -inf
    %3964 = vmax.xlane.f32.xlu0 %v3963
    %v3965 = vpop.xlane.xlu0 %3964
    %v3966 = vsel %vm3797, %v3389, -inf
    %3967 = vmax.xlane.f32.xlu0 %v3966
    %v3968 = vpop.xlane.xlu0 %3967
    %v3969 = vsel %vm3797, %v3438, -inf
    %3970 = vmax.xlane.f32.xlu0 %v3969
    %v3971 = vpop.xlane.xlu0 %3970
    %v3972 = vsel %vm3797, %v3487, -inf
    %3973 = vmax.xlane.f32.xlu0 %v3972
    %v3974 = vpop.xlane.xlu0 %3973
    %v3975 = vsel %vm3797, %v3536, -inf
    %3976 = vmax.xlane.f32.xlu0 %v3975
    %v3977 = vpop.xlane.xlu0 %3976
    %v3978 = vsel %vm3797, %v3585, -inf
    %3979 = vmax.xlane.f32.xlu0 %v3978
    %v3980 = vpop.xlane.xlu0 %3979
    %v3981 = vsel %vm3797, %v3634, -inf
    %3982 = vmax.xlane.f32.xlu0 %v3981
    %v3983 = vpop.xlane.xlu0 %3982
    %v3984 = vsel %vm3797, %v3683, -inf
    %3985 = vmax.xlane.f32.xlu0 %v3984
    %v3986 = vpop.xlane.xlu0 %3985
    %v3987 = vsel %vm3797, %v3732, -inf
    %3988 = vmax.xlane.f32.xlu0 %v3987
    %v3989 = vpop.xlane.xlu0 %3988
    %v4054 = vlaneseq
    %v4055 = vshrl.u32 %v4054, 7
    %v4056 = vsub.s32 0, %v4055
    %v4057 = vrot.slane %v3800, %v4056
    %v4058 = vlaneseq
    %v4059 = vshrl.u32 %v4058, 7
    %v4060 = vsub.s32 1, %v4059
    %v4061 = vrot.slane %v3800, %v4060
    %v4062 = vlaneseq
    %v4063 = vshrl.u32 %v4062, 7
    %v4064 = vsub.s32 2, %v4063
    %v4065 = vrot.slane %v3800, %v4064
    %v4066 = vlaneseq
    %v4067 = vshrl.u32 %v4066, 7
    %v4068 = vsub.s32 3, %v4067
    %v4069 = vrot.slane %v3800, %v4068
    %v4070 = vlaneseq
    %v4071 = vshrl.u32 %v4070, 7
    %v4072 = vsub.s32 4, %v4071
    %v4073 = vrot.slane %v3800, %v4072
    %v4074 = vlaneseq
    %v4075 = vshrl.u32 %v4074, 7
    %v4076 = vsub.s32 5, %v4075
    %v4077 = vrot.slane %v3800, %v4076
    %v4078 = vlaneseq
    %v4079 = vshrl.u32 %v4078, 7
    %v4080 = vsub.s32 6, %v4079
    %v4081 = vrot.slane %v3800, %v4080
    %v4082 = vlaneseq
    %v4083 = vshrl.u32 %v4082, 7
    %v4084 = vsub.s32 7, %v4083
    %v4085 = vrot.slane %v3800, %v4084
    %v4086 = vlaneseq
    %v4087 = vshrl.u32 %v4086, 7
    %v4088 = vsub.s32 0, %v4087
    %v4089 = vrot.slane %v3803, %v4088
    %v4090 = vlaneseq
    %v4091 = vshrl.u32 %v4090, 7
    %v4092 = vsub.s32 1, %v4091
    %v4093 = vrot.slane %v3803, %v4092
    %v4094 = vlaneseq
    %v4095 = vshrl.u32 %v4094, 7
    %v4096 = vsub.s32 2, %v4095
    %v4097 = vrot.slane %v3803, %v4096
    %v4098 = vlaneseq
    %v4099 = vshrl.u32 %v4098, 7
    %v4100 = vsub.s32 3, %v4099
    %v4101 = vrot.slane %v3803, %v4100
    %v4102 = vlaneseq
    %v4103 = vshrl.u32 %v4102, 7
    %v4104 = vsub.s32 4, %v4103
    %v4105 = vrot.slane %v3803, %v4104
    %v4106 = vlaneseq
    %v4107 = vshrl.u32 %v4106, 7
    %v4108 = vsub.s32 5, %v4107
    %v4109 = vrot.slane %v3803, %v4108
    %v4110 = vlaneseq
    %v4111 = vshrl.u32 %v4110, 7
    %v4112 = vsub.s32 6, %v4111
    %v4113 = vrot.slane %v3803, %v4112
    %v4114 = vlaneseq
    %v4115 = vshrl.u32 %v4114, 7
    %v4116 = vsub.s32 7, %v4115
    %v4117 = vrot.slane %v3803, %v4116
    %v4118 = vlaneseq
    %v4119 = vshrl.u32 %v4118, 7
    %v4120 = vsub.s32 0, %v4119
    %v4121 = vrot.slane %v3806, %v4120
    %v4122 = vlaneseq
    %v4123 = vshrl.u32 %v4122, 7
    %v4124 = vsub.s32 1, %v4123
    %v4125 = vrot.slane %v3806, %v4124
    %v4126 = vlaneseq
    %v4127 = vshrl.u32 %v4126, 7
    %v4128 = vsub.s32 2, %v4127
    %v4129 = vrot.slane %v3806, %v4128
    %v4130 = vlaneseq
    %v4131 = vshrl.u32 %v4130, 7
    %v4132 = vsub.s32 3, %v4131
    %v4133 = vrot.slane %v3806, %v4132
    %v4134 = vlaneseq
    %v4135 = vshrl.u32 %v4134, 7
    %v4136 = vsub.s32 4, %v4135
    %v4137 = vrot.slane %v3806, %v4136
    %v4138 = vlaneseq
    %v4139 = vshrl.u32 %v4138, 7
    %v4140 = vsub.s32 5, %v4139
    %v4141 = vrot.slane %v3806, %v4140
    %v4142 = vlaneseq
    %v4143 = vshrl.u32 %v4142, 7
    %v4144 = vsub.s32 6, %v4143
    %v4145 = vrot.slane %v3806, %v4144
    %v4146 = vlaneseq
    %v4147 = vshrl.u32 %v4146, 7
    %v4148 = vsub.s32 7, %v4147
    %v4149 = vrot.slane %v3806, %v4148
    %v4150 = vlaneseq
    %v4151 = vshrl.u32 %v4150, 7
    %v4152 = vsub.s32 0, %v4151
    %v4153 = vrot.slane %v3809, %v4152
    %v4154 = vlaneseq
    %v4155 = vshrl.u32 %v4154, 7
    %v4156 = vsub.s32 1, %v4155
    %v4157 = vrot.slane %v3809, %v4156
    %v4158 = vlaneseq
    %v4159 = vshrl.u32 %v4158, 7
    %v4160 = vsub.s32 2, %v4159
    %v4161 = vrot.slane %v3809, %v4160
    %v4162 = vlaneseq
    %v4163 = vshrl.u32 %v4162, 7
    %v4164 = vsub.s32 3, %v4163
    %v4165 = vrot.slane %v3809, %v4164
    %v4166 = vlaneseq
    %v4167 = vshrl.u32 %v4166, 7
    %v4168 = vsub.s32 4, %v4167
    %v4169 = vrot.slane %v3809, %v4168
    %v4170 = vlaneseq
    %v4171 = vshrl.u32 %v4170, 7
    %v4172 = vsub.s32 5, %v4171
    %v4173 = vrot.slane %v3809, %v4172
    %v4174 = vlaneseq
    %v4175 = vshrl.u32 %v4174, 7
    %v4176 = vsub.s32 6, %v4175
    %v4177 = vrot.slane %v3809, %v4176
    %v4178 = vlaneseq
    %v4179 = vshrl.u32 %v4178, 7
    %v4180 = vsub.s32 7, %v4179
    %v4181 = vrot.slane %v3809, %v4180
    %v4182 = vlaneseq
    %v4183 = vshrl.u32 %v4182, 7
    %v4184 = vsub.s32 0, %v4183
    %v4185 = vrot.slane %v3812, %v4184
    %v4186 = vlaneseq
    %v4187 = vshrl.u32 %v4186, 7
    %v4188 = vsub.s32 1, %v4187
    %v4189 = vrot.slane %v3812, %v4188
    %v4190 = vlaneseq
    %v4191 = vshrl.u32 %v4190, 7
    %v4192 = vsub.s32 2, %v4191
    %v4193 = vrot.slane %v3812, %v4192
    %v4194 = vlaneseq
    %v4195 = vshrl.u32 %v4194, 7
    %v4196 = vsub.s32 3, %v4195
    %v4197 = vrot.slane %v3812, %v4196
    %v4198 = vlaneseq
    %v4199 = vshrl.u32 %v4198, 7
    %v4200 = vsub.s32 4, %v4199
    %v4201 = vrot.slane %v3812, %v4200
    %v4202 = vlaneseq
    %v4203 = vshrl.u32 %v4202, 7
    %v4204 = vsub.s32 5, %v4203
    %v4205 = vrot.slane %v3812, %v4204
    %v4206 = vlaneseq
    %v4207 = vshrl.u32 %v4206, 7
    %v4208 = vsub.s32 6, %v4207
    %v4209 = vrot.slane %v3812, %v4208
    %v4210 = vlaneseq
    %v4211 = vshrl.u32 %v4210, 7
    %v4212 = vsub.s32 7, %v4211
    %v4213 = vrot.slane %v3812, %v4212
    %v4214 = vlaneseq
    %v4215 = vshrl.u32 %v4214, 7
    %v4216 = vsub.s32 0, %v4215
    %v4217 = vrot.slane %v3815, %v4216
    %v4218 = vlaneseq
    %v4219 = vshrl.u32 %v4218, 7
    %v4220 = vsub.s32 1, %v4219
    %v4221 = vrot.slane %v3815, %v4220
    %v4222 = vlaneseq
    %v4223 = vshrl.u32 %v4222, 7
    %v4224 = vsub.s32 2, %v4223
    %v4225 = vrot.slane %v3815, %v4224
    %v4226 = vlaneseq
    %v4227 = vshrl.u32 %v4226, 7
    %v4228 = vsub.s32 3, %v4227
    %v4229 = vrot.slane %v3815, %v4228
    %v4230 = vlaneseq
    %v4231 = vshrl.u32 %v4230, 7
    %v4232 = vsub.s32 4, %v4231
    %v4233 = vrot.slane %v3815, %v4232
    %v4234 = vlaneseq
    %v4235 = vshrl.u32 %v4234, 7
    %v4236 = vsub.s32 5, %v4235
    %v4237 = vrot.slane %v3815, %v4236
    %v4238 = vlaneseq
    %v4239 = vshrl.u32 %v4238, 7
    %v4240 = vsub.s32 6, %v4239
    %v4241 = vrot.slane %v3815, %v4240
    %v4242 = vlaneseq
    %v4243 = vshrl.u32 %v4242, 7
    %v4244 = vsub.s32 7, %v4243
    %v4245 = vrot.slane %v3815, %v4244
    %v4246 = vlaneseq
    %v4247 = vshrl.u32 %v4246, 7
    %v4248 = vsub.s32 0, %v4247
    %v4249 = vrot.slane %v3818, %v4248
    %v4250 = vlaneseq
    %v4251 = vshrl.u32 %v4250, 7
    %v4252 = vsub.s32 1, %v4251
    %v4253 = vrot.slane %v3818, %v4252
    %v4254 = vlaneseq
    %v4255 = vshrl.u32 %v4254, 7
    %v4256 = vsub.s32 2, %v4255
    %v4257 = vrot.slane %v3818, %v4256
    %v4258 = vlaneseq
    %v4259 = vshrl.u32 %v4258, 7
    %v4260 = vsub.s32 3, %v4259
    %v4261 = vrot.slane %v3818, %v4260
    %v4262 = vlaneseq
    %v4263 = vshrl.u32 %v4262, 7
    %v4264 = vsub.s32 4, %v4263
    %v4265 = vrot.slane %v3818, %v4264
    %v4266 = vlaneseq
    %v4267 = vshrl.u32 %v4266, 7
    %v4268 = vsub.s32 5, %v4267
    %v4269 = vrot.slane %v3818, %v4268
    %v4270 = vlaneseq
    %v4271 = vshrl.u32 %v4270, 7
    %v4272 = vsub.s32 6, %v4271
    %v4273 = vrot.slane %v3818, %v4272
    %v4274 = vlaneseq
    %v4275 = vshrl.u32 %v4274, 7
    %v4276 = vsub.s32 7, %v4275
    %v4277 = vrot.slane %v3818, %v4276
    %v4278 = vlaneseq
    %v4279 = vshrl.u32 %v4278, 7
    %v4280 = vsub.s32 0, %v4279
    %v4281 = vrot.slane %v3821, %v4280
    %v4282 = vlaneseq
    %v4283 = vshrl.u32 %v4282, 7
    %v4284 = vsub.s32 1, %v4283
    %v4285 = vrot.slane %v3821, %v4284
    %v4286 = vlaneseq
    %v4287 = vshrl.u32 %v4286, 7
    %v4288 = vsub.s32 2, %v4287
    %v4289 = vrot.slane %v3821, %v4288
    %v4290 = vlaneseq
    %v4291 = vshrl.u32 %v4290, 7
    %v4292 = vsub.s32 3, %v4291
    %v4293 = vrot.slane %v3821, %v4292
    %v4294 = vlaneseq
    %v4295 = vshrl.u32 %v4294, 7
    %v4296 = vsub.s32 4, %v4295
    %v4297 = vrot.slane %v3821, %v4296
    %v4298 = vlaneseq
    %v4299 = vshrl.u32 %v4298, 7
    %v4300 = vsub.s32 5, %v4299
    %v4301 = vrot.slane %v3821, %v4300
    %v4302 = vlaneseq
    %v4303 = vshrl.u32 %v4302, 7
    %v4304 = vsub.s32 6, %v4303
    %v4305 = vrot.slane %v3821, %v4304
    %v4306 = vlaneseq
    %v4307 = vshrl.u32 %v4306, 7
    %v4308 = vsub.s32 7, %v4307
    %v4309 = vrot.slane %v3821, %v4308
    %v4310 = vlaneseq
    %v4311 = vshrl.u32 %v4310, 7
    %v4312 = vsub.s32 0, %v4311
    %v4313 = vrot.slane %v3824, %v4312
    %v4314 = vlaneseq
    %v4315 = vshrl.u32 %v4314, 7
    %v4316 = vsub.s32 1, %v4315
    %v4317 = vrot.slane %v3824, %v4316
    %v4318 = vlaneseq
    %v4319 = vshrl.u32 %v4318, 7
    %v4320 = vsub.s32 2, %v4319
    %v4321 = vrot.slane %v3824, %v4320
    %v4322 = vlaneseq
    %v4323 = vshrl.u32 %v4322, 7
    %v4324 = vsub.s32 3, %v4323
    %v4325 = vrot.slane %v3824, %v4324
    %v4326 = vlaneseq
    %v4327 = vshrl.u32 %v4326, 7
    %v4328 = vsub.s32 4, %v4327
    %v4329 = vrot.slane %v3824, %v4328
    %v4330 = vlaneseq
    %v4331 = vshrl.u32 %v4330, 7
    %v4332 = vsub.s32 5, %v4331
    %v4333 = vrot.slane %v3824, %v4332
    %v4334 = vlaneseq
    %v4335 = vshrl.u32 %v4334, 7
    %v4336 = vsub.s32 6, %v4335
    %v4337 = vrot.slane %v3824, %v4336
    %v4338 = vlaneseq
    %v4339 = vshrl.u32 %v4338, 7
    %v4340 = vsub.s32 7, %v4339
    %v4341 = vrot.slane %v3824, %v4340
    %v4342 = vlaneseq
    %v4343 = vshrl.u32 %v4342, 7
    %v4344 = vsub.s32 0, %v4343
    %v4345 = vrot.slane %v3827, %v4344
    %v4346 = vlaneseq
    %v4347 = vshrl.u32 %v4346, 7
    %v4348 = vsub.s32 1, %v4347
    %v4349 = vrot.slane %v3827, %v4348
    %v4350 = vlaneseq
    %v4351 = vshrl.u32 %v4350, 7
    %v4352 = vsub.s32 2, %v4351
    %v4353 = vrot.slane %v3827, %v4352
    %v4354 = vlaneseq
    %v4355 = vshrl.u32 %v4354, 7
    %v4356 = vsub.s32 3, %v4355
    %v4357 = vrot.slane %v3827, %v4356
    %v4358 = vlaneseq
    %v4359 = vshrl.u32 %v4358, 7
    %v4360 = vsub.s32 4, %v4359
    %v4361 = vrot.slane %v3827, %v4360
    %v4362 = vlaneseq
    %v4363 = vshrl.u32 %v4362, 7
    %v4364 = vsub.s32 5, %v4363
    %v4365 = vrot.slane %v3827, %v4364
    %v4366 = vlaneseq
    %v4367 = vshrl.u32 %v4366, 7
    %v4368 = vsub.s32 6, %v4367
    %v4369 = vrot.slane %v3827, %v4368
    %v4370 = vlaneseq
    %v4371 = vshrl.u32 %v4370, 7
    %v4372 = vsub.s32 7, %v4371
    %v4373 = vrot.slane %v3827, %v4372
    %v4374 = vlaneseq
    %v4375 = vshrl.u32 %v4374, 7
    %v4376 = vsub.s32 0, %v4375
    %v4377 = vrot.slane %v3830, %v4376
    %v4378 = vlaneseq
    %v4379 = vshrl.u32 %v4378, 7
    %v4380 = vsub.s32 1, %v4379
    %v4381 = vrot.slane %v3830, %v4380
    %v4382 = vlaneseq
    %v4383 = vshrl.u32 %v4382, 7
    %v4384 = vsub.s32 2, %v4383
    %v4385 = vrot.slane %v3830, %v4384
    %v4386 = vlaneseq
    %v4387 = vshrl.u32 %v4386, 7
    %v4388 = vsub.s32 3, %v4387
    %v4389 = vrot.slane %v3830, %v4388
    %v4390 = vlaneseq
    %v4391 = vshrl.u32 %v4390, 7
    %v4392 = vsub.s32 4, %v4391
    %v4393 = vrot.slane %v3830, %v4392
    %v4394 = vlaneseq
    %v4395 = vshrl.u32 %v4394, 7
    %v4396 = vsub.s32 5, %v4395
    %v4397 = vrot.slane %v3830, %v4396
    %v4398 = vlaneseq
    %v4399 = vshrl.u32 %v4398, 7
    %v4400 = vsub.s32 6, %v4399
    %v4401 = vrot.slane %v3830, %v4400
    %v4402 = vlaneseq
    %v4403 = vshrl.u32 %v4402, 7
    %v4404 = vsub.s32 7, %v4403
    %v4405 = vrot.slane %v3830, %v4404
    %v4406 = vlaneseq
    %v4407 = vshrl.u32 %v4406, 7
    %v4408 = vsub.s32 0, %v4407
    %v4409 = vrot.slane %v3833, %v4408
    %v4410 = vlaneseq
    %v4411 = vshrl.u32 %v4410, 7
    %v4412 = vsub.s32 1, %v4411
    %v4413 = vrot.slane %v3833, %v4412
    %v4414 = vlaneseq
    %v4415 = vshrl.u32 %v4414, 7
    %v4416 = vsub.s32 2, %v4415
    %v4417 = vrot.slane %v3833, %v4416
    %v4418 = vlaneseq
    %v4419 = vshrl.u32 %v4418, 7
    %v4420 = vsub.s32 3, %v4419
    %v4421 = vrot.slane %v3833, %v4420
    %v4422 = vlaneseq
    %v4423 = vshrl.u32 %v4422, 7
    %v4424 = vsub.s32 4, %v4423
    %v4425 = vrot.slane %v3833, %v4424
    %v4426 = vlaneseq
    %v4427 = vshrl.u32 %v4426, 7
    %v4428 = vsub.s32 5, %v4427
    %v4429 = vrot.slane %v3833, %v4428
    %v4430 = vlaneseq
    %v4431 = vshrl.u32 %v4430, 7
    %v4432 = vsub.s32 6, %v4431
    %v4433 = vrot.slane %v3833, %v4432
    %v4434 = vlaneseq
    %v4435 = vshrl.u32 %v4434, 7
    %v4436 = vsub.s32 7, %v4435
    %v4437 = vrot.slane %v3833, %v4436
    %v4438 = vlaneseq
    %v4439 = vshrl.u32 %v4438, 7
    %v4440 = vsub.s32 0, %v4439
    %v4441 = vrot.slane %v3836, %v4440
    %v4442 = vlaneseq
    %v4443 = vshrl.u32 %v4442, 7
    %v4444 = vsub.s32 1, %v4443
    %v4445 = vrot.slane %v3836, %v4444
    %v4446 = vlaneseq
    %v4447 = vshrl.u32 %v4446, 7
    %v4448 = vsub.s32 2, %v4447
    %v4449 = vrot.slane %v3836, %v4448
    %v4450 = vlaneseq
    %v4451 = vshrl.u32 %v4450, 7
    %v4452 = vsub.s32 3, %v4451
    %v4453 = vrot.slane %v3836, %v4452
    %v4454 = vlaneseq
    %v4455 = vshrl.u32 %v4454, 7
    %v4456 = vsub.s32 4, %v4455
    %v4457 = vrot.slane %v3836, %v4456
    %v4458 = vlaneseq
    %v4459 = vshrl.u32 %v4458, 7
    %v4460 = vsub.s32 5, %v4459
    %v4461 = vrot.slane %v3836, %v4460
    %v4462 = vlaneseq
    %v4463 = vshrl.u32 %v4462, 7
    %v4464 = vsub.s32 6, %v4463
    %v4465 = vrot.slane %v3836, %v4464
    %v4466 = vlaneseq
    %v4467 = vshrl.u32 %v4466, 7
    %v4468 = vsub.s32 7, %v4467
    %v4469 = vrot.slane %v3836, %v4468
    %v4470 = vlaneseq
    %v4471 = vshrl.u32 %v4470, 7
    %v4472 = vsub.s32 0, %v4471
    %v4473 = vrot.slane %v3839, %v4472
    %v4474 = vlaneseq
    %v4475 = vshrl.u32 %v4474, 7
    %v4476 = vsub.s32 1, %v4475
    %v4477 = vrot.slane %v3839, %v4476
    %v4478 = vlaneseq
    %v4479 = vshrl.u32 %v4478, 7
    %v4480 = vsub.s32 2, %v4479
    %v4481 = vrot.slane %v3839, %v4480
    %v4482 = vlaneseq
    %v4483 = vshrl.u32 %v4482, 7
    %v4484 = vsub.s32 3, %v4483
    %v4485 = vrot.slane %v3839, %v4484
    %v4486 = vlaneseq
    %v4487 = vshrl.u32 %v4486, 7
    %v4488 = vsub.s32 4, %v4487
    %v4489 = vrot.slane %v3839, %v4488
    %v4490 = vlaneseq
    %v4491 = vshrl.u32 %v4490, 7
    %v4492 = vsub.s32 5, %v4491
    %v4493 = vrot.slane %v3839, %v4492
    %v4494 = vlaneseq
    %v4495 = vshrl.u32 %v4494, 7
    %v4496 = vsub.s32 6, %v4495
    %v4497 = vrot.slane %v3839, %v4496
    %v4498 = vlaneseq
    %v4499 = vshrl.u32 %v4498, 7
    %v4500 = vsub.s32 7, %v4499
    %v4501 = vrot.slane %v3839, %v4500
    %v4502 = vlaneseq
    %v4503 = vshrl.u32 %v4502, 7
    %v4504 = vsub.s32 0, %v4503
    %v4505 = vrot.slane %v3842, %v4504
    %v4506 = vlaneseq
    %v4507 = vshrl.u32 %v4506, 7
    %v4508 = vsub.s32 1, %v4507
    %v4509 = vrot.slane %v3842, %v4508
    %v4510 = vlaneseq
    %v4511 = vshrl.u32 %v4510, 7
    %v4512 = vsub.s32 2, %v4511
    %v4513 = vrot.slane %v3842, %v4512
    %v4514 = vlaneseq
    %v4515 = vshrl.u32 %v4514, 7
    %v4516 = vsub.s32 3, %v4515
    %v4517 = vrot.slane %v3842, %v4516
    %v4518 = vlaneseq
    %v4519 = vshrl.u32 %v4518, 7
    %v4520 = vsub.s32 4, %v4519
    %v4521 = vrot.slane %v3842, %v4520
    %v4522 = vlaneseq
    %v4523 = vshrl.u32 %v4522, 7
    %v4524 = vsub.s32 5, %v4523
    %v4525 = vrot.slane %v3842, %v4524
    %v4526 = vlaneseq
    %v4527 = vshrl.u32 %v4526, 7
    %v4528 = vsub.s32 6, %v4527
    %v4529 = vrot.slane %v3842, %v4528
    %v4530 = vlaneseq
    %v4531 = vshrl.u32 %v4530, 7
    %v4532 = vsub.s32 7, %v4531
    %v4533 = vrot.slane %v3842, %v4532
    %v4534 = vlaneseq
    %v4535 = vshrl.u32 %v4534, 7
    %v4536 = vsub.s32 0, %v4535
    %v4537 = vrot.slane %v3845, %v4536
    %v4538 = vlaneseq
    %v4539 = vshrl.u32 %v4538, 7
    %v4540 = vsub.s32 1, %v4539
    %v4541 = vrot.slane %v3845, %v4540
    %v4542 = vlaneseq
    %v4543 = vshrl.u32 %v4542, 7
    %v4544 = vsub.s32 2, %v4543
    %v4545 = vrot.slane %v3845, %v4544
    %v4546 = vlaneseq
    %v4547 = vshrl.u32 %v4546, 7
    %v4548 = vsub.s32 3, %v4547
    %v4549 = vrot.slane %v3845, %v4548
    %v4550 = vlaneseq
    %v4551 = vshrl.u32 %v4550, 7
    %v4552 = vsub.s32 4, %v4551
    %v4553 = vrot.slane %v3845, %v4552
    %v4554 = vlaneseq
    %v4555 = vshrl.u32 %v4554, 7
    %v4556 = vsub.s32 5, %v4555
    %v4557 = vrot.slane %v3845, %v4556
    %v4558 = vlaneseq
    %v4559 = vshrl.u32 %v4558, 7
    %v4560 = vsub.s32 6, %v4559
    %v4561 = vrot.slane %v3845, %v4560
    %v4562 = vlaneseq
    %v4563 = vshrl.u32 %v4562, 7
    %v4564 = vsub.s32 7, %v4563
    %v4565 = vrot.slane %v3845, %v4564
    %v4566 = vlaneseq
    %v4567 = vshrl.u32 %v4566, 7
    %v4568 = vsub.s32 0, %v4567
    %v4569 = vrot.slane %v3848, %v4568
    %v4570 = vlaneseq
    %v4571 = vshrl.u32 %v4570, 7
    %v4572 = vsub.s32 1, %v4571
    %v4573 = vrot.slane %v3848, %v4572
    %v4574 = vlaneseq
    %v4575 = vshrl.u32 %v4574, 7
    %v4576 = vsub.s32 2, %v4575
    %v4577 = vrot.slane %v3848, %v4576
    %v4578 = vlaneseq
    %v4579 = vshrl.u32 %v4578, 7
    %v4580 = vsub.s32 3, %v4579
    %v4581 = vrot.slane %v3848, %v4580
    %v4582 = vlaneseq
    %v4583 = vshrl.u32 %v4582, 7
    %v4584 = vsub.s32 4, %v4583
    %v4585 = vrot.slane %v3848, %v4584
    %v4586 = vlaneseq
    %v4587 = vshrl.u32 %v4586, 7
    %v4588 = vsub.s32 5, %v4587
    %v4589 = vrot.slane %v3848, %v4588
    %v4590 = vlaneseq
    %v4591 = vshrl.u32 %v4590, 7
    %v4592 = vsub.s32 6, %v4591
    %v4593 = vrot.slane %v3848, %v4592
    %v4594 = vlaneseq
    %v4595 = vshrl.u32 %v4594, 7
    %v4596 = vsub.s32 7, %v4595
    %v4597 = vrot.slane %v3848, %v4596
    %v4598 = vlaneseq
    %v4599 = vshrl.u32 %v4598, 7
    %v4600 = vsub.s32 0, %v4599
    %v4601 = vrot.slane %v3851, %v4600
    %v4602 = vlaneseq
    %v4603 = vshrl.u32 %v4602, 7
    %v4604 = vsub.s32 1, %v4603
    %v4605 = vrot.slane %v3851, %v4604
    %v4606 = vlaneseq
    %v4607 = vshrl.u32 %v4606, 7
    %v4608 = vsub.s32 2, %v4607
    %v4609 = vrot.slane %v3851, %v4608
    %v4610 = vlaneseq
    %v4611 = vshrl.u32 %v4610, 7
    %v4612 = vsub.s32 3, %v4611
    %v4613 = vrot.slane %v3851, %v4612
    %v4614 = vlaneseq
    %v4615 = vshrl.u32 %v4614, 7
    %v4616 = vsub.s32 4, %v4615
    %v4617 = vrot.slane %v3851, %v4616
    %v4618 = vlaneseq
    %v4619 = vshrl.u32 %v4618, 7
    %v4620 = vsub.s32 5, %v4619
    %v4621 = vrot.slane %v3851, %v4620
    %v4622 = vlaneseq
    %v4623 = vshrl.u32 %v4622, 7
    %v4624 = vsub.s32 6, %v4623
    %v4625 = vrot.slane %v3851, %v4624
    %v4626 = vlaneseq
    %v4627 = vshrl.u32 %v4626, 7
    %v4628 = vsub.s32 7, %v4627
    %v4629 = vrot.slane %v3851, %v4628
    %v4630 = vlaneseq
    %v4631 = vshrl.u32 %v4630, 7
    %v4632 = vsub.s32 0, %v4631
    %v4633 = vrot.slane %v3854, %v4632
    %v4634 = vlaneseq
    %v4635 = vshrl.u32 %v4634, 7
    %v4636 = vsub.s32 1, %v4635
    %v4637 = vrot.slane %v3854, %v4636
    %v4638 = vlaneseq
    %v4639 = vshrl.u32 %v4638, 7
    %v4640 = vsub.s32 2, %v4639
    %v4641 = vrot.slane %v3854, %v4640
    %v4642 = vlaneseq
    %v4643 = vshrl.u32 %v4642, 7
    %v4644 = vsub.s32 3, %v4643
    %v4645 = vrot.slane %v3854, %v4644
    %v4646 = vlaneseq
    %v4647 = vshrl.u32 %v4646, 7
    %v4648 = vsub.s32 4, %v4647
    %v4649 = vrot.slane %v3854, %v4648
    %v4650 = vlaneseq
    %v4651 = vshrl.u32 %v4650, 7
    %v4652 = vsub.s32 5, %v4651
    %v4653 = vrot.slane %v3854, %v4652
    %v4654 = vlaneseq
    %v4655 = vshrl.u32 %v4654, 7
    %v4656 = vsub.s32 6, %v4655
    %v4657 = vrot.slane %v3854, %v4656
    %v4658 = vlaneseq
    %v4659 = vshrl.u32 %v4658, 7
    %v4660 = vsub.s32 7, %v4659
    %v4661 = vrot.slane %v3854, %v4660
    %v4662 = vlaneseq
    %v4663 = vshrl.u32 %v4662, 7
    %v4664 = vsub.s32 0, %v4663
    %v4665 = vrot.slane %v3857, %v4664
    %v4666 = vlaneseq
    %v4667 = vshrl.u32 %v4666, 7
    %v4668 = vsub.s32 1, %v4667
    %v4669 = vrot.slane %v3857, %v4668
    %v4670 = vlaneseq
    %v4671 = vshrl.u32 %v4670, 7
    %v4672 = vsub.s32 2, %v4671
    %v4673 = vrot.slane %v3857, %v4672
    %v4674 = vlaneseq
    %v4675 = vshrl.u32 %v4674, 7
    %v4676 = vsub.s32 3, %v4675
    %v4677 = vrot.slane %v3857, %v4676
    %v4678 = vlaneseq
    %v4679 = vshrl.u32 %v4678, 7
    %v4680 = vsub.s32 4, %v4679
    %v4681 = vrot.slane %v3857, %v4680
    %v4682 = vlaneseq
    %v4683 = vshrl.u32 %v4682, 7
    %v4684 = vsub.s32 5, %v4683
    %v4685 = vrot.slane %v3857, %v4684
    %v4686 = vlaneseq
    %v4687 = vshrl.u32 %v4686, 7
    %v4688 = vsub.s32 6, %v4687
    %v4689 = vrot.slane %v3857, %v4688
    %v4690 = vlaneseq
    %v4691 = vshrl.u32 %v4690, 7
    %v4692 = vsub.s32 7, %v4691
    %v4693 = vrot.slane %v3857, %v4692
    %v4694 = vlaneseq
    %v4695 = vshrl.u32 %v4694, 7
    %v4696 = vsub.s32 0, %v4695
    %v4697 = vrot.slane %v3860, %v4696
    %v4698 = vlaneseq
    %v4699 = vshrl.u32 %v4698, 7
    %v4700 = vsub.s32 1, %v4699
    %v4701 = vrot.slane %v3860, %v4700
    %v4702 = vlaneseq
    %v4703 = vshrl.u32 %v4702, 7
    %v4704 = vsub.s32 2, %v4703
    %v4705 = vrot.slane %v3860, %v4704
    %v4706 = vlaneseq
    %v4707 = vshrl.u32 %v4706, 7
    %v4708 = vsub.s32 3, %v4707
    %v4709 = vrot.slane %v3860, %v4708
    %v4710 = vlaneseq
    %v4711 = vshrl.u32 %v4710, 7
    %v4712 = vsub.s32 4, %v4711
    %v4713 = vrot.slane %v3860, %v4712
    %v4714 = vlaneseq
    %v4715 = vshrl.u32 %v4714, 7
    %v4716 = vsub.s32 5, %v4715
    %v4717 = vrot.slane %v3860, %v4716
    %v4718 = vlaneseq
    %v4719 = vshrl.u32 %v4718, 7
    %v4720 = vsub.s32 6, %v4719
    %v4721 = vrot.slane %v3860, %v4720
    %v4722 = vlaneseq
    %v4723 = vshrl.u32 %v4722, 7
    %v4724 = vsub.s32 7, %v4723
    %v4725 = vrot.slane %v3860, %v4724
    %v4726 = vlaneseq
    %v4727 = vshrl.u32 %v4726, 7
    %v4728 = vsub.s32 0, %v4727
    %v4729 = vrot.slane %v3863, %v4728
    %v4730 = vlaneseq
    %v4731 = vshrl.u32 %v4730, 7
    %v4732 = vsub.s32 1, %v4731
    %v4733 = vrot.slane %v3863, %v4732
    %v4734 = vlaneseq
    %v4735 = vshrl.u32 %v4734, 7
    %v4736 = vsub.s32 2, %v4735
    %v4737 = vrot.slane %v3863, %v4736
    %v4738 = vlaneseq
    %v4739 = vshrl.u32 %v4738, 7
    %v4740 = vsub.s32 3, %v4739
    %v4741 = vrot.slane %v3863, %v4740
    %v4742 = vlaneseq
    %v4743 = vshrl.u32 %v4742, 7
    %v4744 = vsub.s32 4, %v4743
    %v4745 = vrot.slane %v3863, %v4744
    %v4746 = vlaneseq
    %v4747 = vshrl.u32 %v4746, 7
    %v4748 = vsub.s32 5, %v4747
    %v4749 = vrot.slane %v3863, %v4748
    %v4750 = vlaneseq
    %v4751 = vshrl.u32 %v4750, 7
    %v4752 = vsub.s32 6, %v4751
    %v4753 = vrot.slane %v3863, %v4752
    %v4754 = vlaneseq
    %v4755 = vshrl.u32 %v4754, 7
    %v4756 = vsub.s32 7, %v4755
    %v4757 = vrot.slane %v3863, %v4756
    %v4758 = vlaneseq
    %v4759 = vshrl.u32 %v4758, 7
    %v4760 = vsub.s32 0, %v4759
    %v4761 = vrot.slane %v3866, %v4760
    %v4762 = vlaneseq
    %v4763 = vshrl.u32 %v4762, 7
    %v4764 = vsub.s32 1, %v4763
    %v4765 = vrot.slane %v3866, %v4764
    %v4766 = vlaneseq
    %v4767 = vshrl.u32 %v4766, 7
    %v4768 = vsub.s32 2, %v4767
    %v4769 = vrot.slane %v3866, %v4768
    %v4770 = vlaneseq
    %v4771 = vshrl.u32 %v4770, 7
    %v4772 = vsub.s32 3, %v4771
    %v4773 = vrot.slane %v3866, %v4772
    %v4774 = vlaneseq
    %v4775 = vshrl.u32 %v4774, 7
    %v4776 = vsub.s32 4, %v4775
    %v4777 = vrot.slane %v3866, %v4776
    %v4778 = vlaneseq
    %v4779 = vshrl.u32 %v4778, 7
    %v4780 = vsub.s32 5, %v4779
    %v4781 = vrot.slane %v3866, %v4780
    %v4782 = vlaneseq
    %v4783 = vshrl.u32 %v4782, 7
    %v4784 = vsub.s32 6, %v4783
    %v4785 = vrot.slane %v3866, %v4784
    %v4786 = vlaneseq
    %v4787 = vshrl.u32 %v4786, 7
    %v4788 = vsub.s32 7, %v4787
    %v4789 = vrot.slane %v3866, %v4788
    %v4790 = vlaneseq
    %v4791 = vshrl.u32 %v4790, 7
    %v4792 = vsub.s32 0, %v4791
    %v4793 = vrot.slane %v3869, %v4792
    %v4794 = vlaneseq
    %v4795 = vshrl.u32 %v4794, 7
    %v4796 = vsub.s32 1, %v4795
    %v4797 = vrot.slane %v3869, %v4796
    %v4798 = vlaneseq
    %v4799 = vshrl.u32 %v4798, 7
    %v4800 = vsub.s32 2, %v4799
    %v4801 = vrot.slane %v3869, %v4800
    %v4802 = vlaneseq
    %v4803 = vshrl.u32 %v4802, 7
    %v4804 = vsub.s32 3, %v4803
    %v4805 = vrot.slane %v3869, %v4804
    %v4806 = vlaneseq
    %v4807 = vshrl.u32 %v4806, 7
    %v4808 = vsub.s32 4, %v4807
    %v4809 = vrot.slane %v3869, %v4808
    %v4810 = vlaneseq
    %v4811 = vshrl.u32 %v4810, 7
    %v4812 = vsub.s32 5, %v4811
    %v4813 = vrot.slane %v3869, %v4812
    %v4814 = vlaneseq
    %v4815 = vshrl.u32 %v4814, 7
    %v4816 = vsub.s32 6, %v4815
    %v4817 = vrot.slane %v3869, %v4816
    %v4818 = vlaneseq
    %v4819 = vshrl.u32 %v4818, 7
    %v4820 = vsub.s32 7, %v4819
    %v4821 = vrot.slane %v3869, %v4820
    %v4822 = vlaneseq
    %v4823 = vshrl.u32 %v4822, 7
    %v4824 = vsub.s32 0, %v4823
    %v4825 = vrot.slane %v3872, %v4824
    %v4826 = vlaneseq
    %v4827 = vshrl.u32 %v4826, 7
    %v4828 = vsub.s32 1, %v4827
    %v4829 = vrot.slane %v3872, %v4828
    %v4830 = vlaneseq
    %v4831 = vshrl.u32 %v4830, 7
    %v4832 = vsub.s32 2, %v4831
    %v4833 = vrot.slane %v3872, %v4832
    %v4834 = vlaneseq
    %v4835 = vshrl.u32 %v4834, 7
    %v4836 = vsub.s32 3, %v4835
    %v4837 = vrot.slane %v3872, %v4836
    %v4838 = vlaneseq
    %v4839 = vshrl.u32 %v4838, 7
    %v4840 = vsub.s32 4, %v4839
    %v4841 = vrot.slane %v3872, %v4840
    %v4842 = vlaneseq
    %v4843 = vshrl.u32 %v4842, 7
    %v4844 = vsub.s32 5, %v4843
    %v4845 = vrot.slane %v3872, %v4844
    %v4846 = vlaneseq
    %v4847 = vshrl.u32 %v4846, 7
    %v4848 = vsub.s32 6, %v4847
    %v4849 = vrot.slane %v3872, %v4848
    %v4850 = vlaneseq
    %v4851 = vshrl.u32 %v4850, 7
    %v4852 = vsub.s32 7, %v4851
    %v4853 = vrot.slane %v3872, %v4852
    %v4854 = vlaneseq
    %v4855 = vshrl.u32 %v4854, 7
    %v4856 = vsub.s32 0, %v4855
    %v4857 = vrot.slane %v3875, %v4856
    %v4858 = vlaneseq
    %v4859 = vshrl.u32 %v4858, 7
    %v4860 = vsub.s32 1, %v4859
    %v4861 = vrot.slane %v3875, %v4860
    %v4862 = vlaneseq
    %v4863 = vshrl.u32 %v4862, 7
    %v4864 = vsub.s32 2, %v4863
    %v4865 = vrot.slane %v3875, %v4864
    %v4866 = vlaneseq
    %v4867 = vshrl.u32 %v4866, 7
    %v4868 = vsub.s32 3, %v4867
    %v4869 = vrot.slane %v3875, %v4868
    %v4870 = vlaneseq
    %v4871 = vshrl.u32 %v4870, 7
    %v4872 = vsub.s32 4, %v4871
    %v4873 = vrot.slane %v3875, %v4872
    %v4874 = vlaneseq
    %v4875 = vshrl.u32 %v4874, 7
    %v4876 = vsub.s32 5, %v4875
    %v4877 = vrot.slane %v3875, %v4876
    %v4878 = vlaneseq
    %v4879 = vshrl.u32 %v4878, 7
    %v4880 = vsub.s32 6, %v4879
    %v4881 = vrot.slane %v3875, %v4880
    %v4882 = vlaneseq
    %v4883 = vshrl.u32 %v4882, 7
    %v4884 = vsub.s32 7, %v4883
    %v4885 = vrot.slane %v3875, %v4884
    %v4886 = vlaneseq
    %v4887 = vshrl.u32 %v4886, 7
    %v4888 = vsub.s32 0, %v4887
    %v4889 = vrot.slane %v3878, %v4888
    %v4890 = vlaneseq
    %v4891 = vshrl.u32 %v4890, 7
    %v4892 = vsub.s32 1, %v4891
    %v4893 = vrot.slane %v3878, %v4892
    %v4894 = vlaneseq
    %v4895 = vshrl.u32 %v4894, 7
    %v4896 = vsub.s32 2, %v4895
    %v4897 = vrot.slane %v3878, %v4896
    %v4898 = vlaneseq
    %v4899 = vshrl.u32 %v4898, 7
    %v4900 = vsub.s32 3, %v4899
    %v4901 = vrot.slane %v3878, %v4900
    %v4902 = vlaneseq
    %v4903 = vshrl.u32 %v4902, 7
    %v4904 = vsub.s32 4, %v4903
    %v4905 = vrot.slane %v3878, %v4904
    %v4906 = vlaneseq
    %v4907 = vshrl.u32 %v4906, 7
    %v4908 = vsub.s32 5, %v4907
    %v4909 = vrot.slane %v3878, %v4908
    %v4910 = vlaneseq
    %v4911 = vshrl.u32 %v4910, 7
    %v4912 = vsub.s32 6, %v4911
    %v4913 = vrot.slane %v3878, %v4912
    %v4914 = vlaneseq
    %v4915 = vshrl.u32 %v4914, 7
    %v4916 = vsub.s32 7, %v4915
    %v4917 = vrot.slane %v3878, %v4916
    %v4918 = vlaneseq
    %v4919 = vshrl.u32 %v4918, 7
    %v4920 = vsub.s32 0, %v4919
    %v4921 = vrot.slane %v3881, %v4920
    %v4922 = vlaneseq
    %v4923 = vshrl.u32 %v4922, 7
    %v4924 = vsub.s32 1, %v4923
    %v4925 = vrot.slane %v3881, %v4924
    %v4926 = vlaneseq
    %v4927 = vshrl.u32 %v4926, 7
    %v4928 = vsub.s32 2, %v4927
    %v4929 = vrot.slane %v3881, %v4928
    %v4930 = vlaneseq
    %v4931 = vshrl.u32 %v4930, 7
    %v4932 = vsub.s32 3, %v4931
    %v4933 = vrot.slane %v3881, %v4932
    %v4934 = vlaneseq
    %v4935 = vshrl.u32 %v4934, 7
    %v4936 = vsub.s32 4, %v4935
    %v4937 = vrot.slane %v3881, %v4936
    %v4938 = vlaneseq
    %v4939 = vshrl.u32 %v4938, 7
    %v4940 = vsub.s32 5, %v4939
    %v4941 = vrot.slane %v3881, %v4940
    %v4942 = vlaneseq
    %v4943 = vshrl.u32 %v4942, 7
    %v4944 = vsub.s32 6, %v4943
    %v4945 = vrot.slane %v3881, %v4944
    %v4946 = vlaneseq
    %v4947 = vshrl.u32 %v4946, 7
    %v4948 = vsub.s32 7, %v4947
    %v4949 = vrot.slane %v3881, %v4948
    %v4950 = vlaneseq
    %v4951 = vshrl.u32 %v4950, 7
    %v4952 = vsub.s32 0, %v4951
    %v4953 = vrot.slane %v3884, %v4952
    %v4954 = vlaneseq
    %v4955 = vshrl.u32 %v4954, 7
    %v4956 = vsub.s32 1, %v4955
    %v4957 = vrot.slane %v3884, %v4956
    %v4958 = vlaneseq
    %v4959 = vshrl.u32 %v4958, 7
    %v4960 = vsub.s32 2, %v4959
    %v4961 = vrot.slane %v3884, %v4960
    %v4962 = vlaneseq
    %v4963 = vshrl.u32 %v4962, 7
    %v4964 = vsub.s32 3, %v4963
    %v4965 = vrot.slane %v3884, %v4964
    %v4966 = vlaneseq
    %v4967 = vshrl.u32 %v4966, 7
    %v4968 = vsub.s32 4, %v4967
    %v4969 = vrot.slane %v3884, %v4968
    %v4970 = vlaneseq
    %v4971 = vshrl.u32 %v4970, 7
    %v4972 = vsub.s32 5, %v4971
    %v4973 = vrot.slane %v3884, %v4972
    %v4974 = vlaneseq
    %v4975 = vshrl.u32 %v4974, 7
    %v4976 = vsub.s32 6, %v4975
    %v4977 = vrot.slane %v3884, %v4976
    %v4978 = vlaneseq
    %v4979 = vshrl.u32 %v4978, 7
    %v4980 = vsub.s32 7, %v4979
    %v4981 = vrot.slane %v3884, %v4980
    %v4982 = vlaneseq
    %v4983 = vshrl.u32 %v4982, 7
    %v4984 = vsub.s32 0, %v4983
    %v4985 = vrot.slane %v3887, %v4984
    %v4986 = vlaneseq
    %v4987 = vshrl.u32 %v4986, 7
    %v4988 = vsub.s32 1, %v4987
    %v4989 = vrot.slane %v3887, %v4988
    %v4990 = vlaneseq
    %v4991 = vshrl.u32 %v4990, 7
    %v4992 = vsub.s32 2, %v4991
    %v4993 = vrot.slane %v3887, %v4992
    %v4994 = vlaneseq
    %v4995 = vshrl.u32 %v4994, 7
    %v4996 = vsub.s32 3, %v4995
    %v4997 = vrot.slane %v3887, %v4996
    %v4998 = vlaneseq
    %v4999 = vshrl.u32 %v4998, 7
    %v5000 = vsub.s32 4, %v4999
    %v5001 = vrot.slane %v3887, %v5000
    %v5002 = vlaneseq
    %v5003 = vshrl.u32 %v5002, 7
    %v5004 = vsub.s32 5, %v5003
    %v5005 = vrot.slane %v3887, %v5004
    %v5006 = vlaneseq
    %v5007 = vshrl.u32 %v5006, 7
    %v5008 = vsub.s32 6, %v5007
    %v5009 = vrot.slane %v3887, %v5008
    %v5010 = vlaneseq
    %v5011 = vshrl.u32 %v5010, 7
    %v5012 = vsub.s32 7, %v5011
    %v5013 = vrot.slane %v3887, %v5012
    %v5014 = vlaneseq
    %v5015 = vshrl.u32 %v5014, 7
    %v5016 = vsub.s32 0, %v5015
    %v5017 = vrot.slane %v3890, %v5016
    %v5018 = vlaneseq
    %v5019 = vshrl.u32 %v5018, 7
    %v5020 = vsub.s32 1, %v5019
    %v5021 = vrot.slane %v3890, %v5020
    %v5022 = vlaneseq
    %v5023 = vshrl.u32 %v5022, 7
    %v5024 = vsub.s32 2, %v5023
    %v5025 = vrot.slane %v3890, %v5024
    %v5026 = vlaneseq
    %v5027 = vshrl.u32 %v5026, 7
    %v5028 = vsub.s32 3, %v5027
    %v5029 = vrot.slane %v3890, %v5028
    %v5030 = vlaneseq
    %v5031 = vshrl.u32 %v5030, 7
    %v5032 = vsub.s32 4, %v5031
    %v5033 = vrot.slane %v3890, %v5032
    %v5034 = vlaneseq
    %v5035 = vshrl.u32 %v5034, 7
    %v5036 = vsub.s32 5, %v5035
    %v5037 = vrot.slane %v3890, %v5036
    %v5038 = vlaneseq
    %v5039 = vshrl.u32 %v5038, 7
    %v5040 = vsub.s32 6, %v5039
    %v5041 = vrot.slane %v3890, %v5040
    %v5042 = vlaneseq
    %v5043 = vshrl.u32 %v5042, 7
    %v5044 = vsub.s32 7, %v5043
    %v5045 = vrot.slane %v3890, %v5044
    %v5046 = vlaneseq
    %v5047 = vshrl.u32 %v5046, 7
    %v5048 = vsub.s32 0, %v5047
    %v5049 = vrot.slane %v3893, %v5048
    %v5050 = vlaneseq
    %v5051 = vshrl.u32 %v5050, 7
    %v5052 = vsub.s32 1, %v5051
    %v5053 = vrot.slane %v3893, %v5052
    %v5054 = vlaneseq
    %v5055 = vshrl.u32 %v5054, 7
    %v5056 = vsub.s32 2, %v5055
    %v5057 = vrot.slane %v3893, %v5056
    %v5058 = vlaneseq
    %v5059 = vshrl.u32 %v5058, 7
    %v5060 = vsub.s32 3, %v5059
    %v5061 = vrot.slane %v3893, %v5060
    %v5062 = vlaneseq
    %v5063 = vshrl.u32 %v5062, 7
    %v5064 = vsub.s32 4, %v5063
    %v5065 = vrot.slane %v3893, %v5064
    %v5066 = vlaneseq
    %v5067 = vshrl.u32 %v5066, 7
    %v5068 = vsub.s32 5, %v5067
    %v5069 = vrot.slane %v3893, %v5068
    %v5070 = vlaneseq
    %v5071 = vshrl.u32 %v5070, 7
    %v5072 = vsub.s32 6, %v5071
    %v5073 = vrot.slane %v3893, %v5072
    %v5074 = vlaneseq
    %v5075 = vshrl.u32 %v5074, 7
    %v5076 = vsub.s32 7, %v5075
    %v5077 = vrot.slane %v3893, %v5076
    %v5078 = vlaneseq
    %v5079 = vshrl.u32 %v5078, 7
    %v5080 = vsub.s32 0, %v5079
    %v5081 = vrot.slane %v3896, %v5080
    %v5082 = vlaneseq
    %v5083 = vshrl.u32 %v5082, 7
    %v5084 = vsub.s32 1, %v5083
    %v5085 = vrot.slane %v3896, %v5084
    %v5086 = vlaneseq
    %v5087 = vshrl.u32 %v5086, 7
    %v5088 = vsub.s32 2, %v5087
    %v5089 = vrot.slane %v3896, %v5088
    %v5090 = vlaneseq
    %v5091 = vshrl.u32 %v5090, 7
    %v5092 = vsub.s32 3, %v5091
    %v5093 = vrot.slane %v3896, %v5092
    %v5094 = vlaneseq
    %v5095 = vshrl.u32 %v5094, 7
    %v5096 = vsub.s32 4, %v5095
    %v5097 = vrot.slane %v3896, %v5096
    %v5098 = vlaneseq
    %v5099 = vshrl.u32 %v5098, 7
    %v5100 = vsub.s32 5, %v5099
    %v5101 = vrot.slane %v3896, %v5100
    %v5102 = vlaneseq
    %v5103 = vshrl.u32 %v5102, 7
    %v5104 = vsub.s32 6, %v5103
    %v5105 = vrot.slane %v3896, %v5104
    %v5106 = vlaneseq
    %v5107 = vshrl.u32 %v5106, 7
    %v5108 = vsub.s32 7, %v5107
    %v5109 = vrot.slane %v3896, %v5108
    %v5110 = vlaneseq
    %v5111 = vshrl.u32 %v5110, 7
    %v5112 = vsub.s32 0, %v5111
    %v5113 = vrot.slane %v3899, %v5112
    %v5114 = vlaneseq
    %v5115 = vshrl.u32 %v5114, 7
    %v5116 = vsub.s32 1, %v5115
    %v5117 = vrot.slane %v3899, %v5116
    %v5118 = vlaneseq
    %v5119 = vshrl.u32 %v5118, 7
    %v5120 = vsub.s32 2, %v5119
    %v5121 = vrot.slane %v3899, %v5120
    %v5122 = vlaneseq
    %v5123 = vshrl.u32 %v5122, 7
    %v5124 = vsub.s32 3, %v5123
    %v5125 = vrot.slane %v3899, %v5124
    %v5126 = vlaneseq
    %v5127 = vshrl.u32 %v5126, 7
    %v5128 = vsub.s32 4, %v5127
    %v5129 = vrot.slane %v3899, %v5128
    %v5130 = vlaneseq
    %v5131 = vshrl.u32 %v5130, 7
    %v5132 = vsub.s32 5, %v5131
    %v5133 = vrot.slane %v3899, %v5132
    %v5134 = vlaneseq
    %v5135 = vshrl.u32 %v5134, 7
    %v5136 = vsub.s32 6, %v5135
    %v5137 = vrot.slane %v3899, %v5136
    %v5138 = vlaneseq
    %v5139 = vshrl.u32 %v5138, 7
    %v5140 = vsub.s32 7, %v5139
    %v5141 = vrot.slane %v3899, %v5140
    %v5142 = vlaneseq
    %v5143 = vshrl.u32 %v5142, 7
    %v5144 = vsub.s32 0, %v5143
    %v5145 = vrot.slane %v3902, %v5144
    %v5146 = vlaneseq
    %v5147 = vshrl.u32 %v5146, 7
    %v5148 = vsub.s32 1, %v5147
    %v5149 = vrot.slane %v3902, %v5148
    %v5150 = vlaneseq
    %v5151 = vshrl.u32 %v5150, 7
    %v5152 = vsub.s32 2, %v5151
    %v5153 = vrot.slane %v3902, %v5152
    %v5154 = vlaneseq
    %v5155 = vshrl.u32 %v5154, 7
    %v5156 = vsub.s32 3, %v5155
    %v5157 = vrot.slane %v3902, %v5156
    %v5158 = vlaneseq
    %v5159 = vshrl.u32 %v5158, 7
    %v5160 = vsub.s32 4, %v5159
    %v5161 = vrot.slane %v3902, %v5160
    %v5162 = vlaneseq
    %v5163 = vshrl.u32 %v5162, 7
    %v5164 = vsub.s32 5, %v5163
    %v5165 = vrot.slane %v3902, %v5164
    %v5166 = vlaneseq
    %v5167 = vshrl.u32 %v5166, 7
    %v5168 = vsub.s32 6, %v5167
    %v5169 = vrot.slane %v3902, %v5168
    %v5170 = vlaneseq
    %v5171 = vshrl.u32 %v5170, 7
    %v5172 = vsub.s32 7, %v5171
    %v5173 = vrot.slane %v3902, %v5172
    %v5174 = vlaneseq
    %v5175 = vshrl.u32 %v5174, 7
    %v5176 = vsub.s32 0, %v5175
    %v5177 = vrot.slane %v3905, %v5176
    %v5178 = vlaneseq
    %v5179 = vshrl.u32 %v5178, 7
    %v5180 = vsub.s32 1, %v5179
    %v5181 = vrot.slane %v3905, %v5180
    %v5182 = vlaneseq
    %v5183 = vshrl.u32 %v5182, 7
    %v5184 = vsub.s32 2, %v5183
    %v5185 = vrot.slane %v3905, %v5184
    %v5186 = vlaneseq
    %v5187 = vshrl.u32 %v5186, 7
    %v5188 = vsub.s32 3, %v5187
    %v5189 = vrot.slane %v3905, %v5188
    %v5190 = vlaneseq
    %v5191 = vshrl.u32 %v5190, 7
    %v5192 = vsub.s32 4, %v5191
    %v5193 = vrot.slane %v3905, %v5192
    %v5194 = vlaneseq
    %v5195 = vshrl.u32 %v5194, 7
    %v5196 = vsub.s32 5, %v5195
    %v5197 = vrot.slane %v3905, %v5196
    %v5198 = vlaneseq
    %v5199 = vshrl.u32 %v5198, 7
    %v5200 = vsub.s32 6, %v5199
    %v5201 = vrot.slane %v3905, %v5200
    %v5202 = vlaneseq
    %v5203 = vshrl.u32 %v5202, 7
    %v5204 = vsub.s32 7, %v5203
    %v5205 = vrot.slane %v3905, %v5204
    %v5206 = vlaneseq
    %v5207 = vshrl.u32 %v5206, 7
    %v5208 = vsub.s32 0, %v5207
    %v5209 = vrot.slane %v3908, %v5208
    %v5210 = vlaneseq
    %v5211 = vshrl.u32 %v5210, 7
    %v5212 = vsub.s32 1, %v5211
    %v5213 = vrot.slane %v3908, %v5212
    %v5214 = vlaneseq
    %v5215 = vshrl.u32 %v5214, 7
    %v5216 = vsub.s32 2, %v5215
    %v5217 = vrot.slane %v3908, %v5216
    %v5218 = vlaneseq
    %v5219 = vshrl.u32 %v5218, 7
    %v5220 = vsub.s32 3, %v5219
    %v5221 = vrot.slane %v3908, %v5220
    %v5222 = vlaneseq
    %v5223 = vshrl.u32 %v5222, 7
    %v5224 = vsub.s32 4, %v5223
    %v5225 = vrot.slane %v3908, %v5224
    %v5226 = vlaneseq
    %v5227 = vshrl.u32 %v5226, 7
    %v5228 = vsub.s32 5, %v5227
    %v5229 = vrot.slane %v3908, %v5228
    %v5230 = vlaneseq
    %v5231 = vshrl.u32 %v5230, 7
    %v5232 = vsub.s32 6, %v5231
    %v5233 = vrot.slane %v3908, %v5232
    %v5234 = vlaneseq
    %v5235 = vshrl.u32 %v5234, 7
    %v5236 = vsub.s32 7, %v5235
    %v5237 = vrot.slane %v3908, %v5236
    %v5238 = vlaneseq
    %v5239 = vshrl.u32 %v5238, 7
    %v5240 = vsub.s32 0, %v5239
    %v5241 = vrot.slane %v3911, %v5240
    %v5242 = vlaneseq
    %v5243 = vshrl.u32 %v5242, 7
    %v5244 = vsub.s32 1, %v5243
    %v5245 = vrot.slane %v3911, %v5244
    %v5246 = vlaneseq
    %v5247 = vshrl.u32 %v5246, 7
    %v5248 = vsub.s32 2, %v5247
    %v5249 = vrot.slane %v3911, %v5248
    %v5250 = vlaneseq
    %v5251 = vshrl.u32 %v5250, 7
    %v5252 = vsub.s32 3, %v5251
    %v5253 = vrot.slane %v3911, %v5252
    %v5254 = vlaneseq
    %v5255 = vshrl.u32 %v5254, 7
    %v5256 = vsub.s32 4, %v5255
    %v5257 = vrot.slane %v3911, %v5256
    %v5258 = vlaneseq
    %v5259 = vshrl.u32 %v5258, 7
    %v5260 = vsub.s32 5, %v5259
    %v5261 = vrot.slane %v3911, %v5260
    %v5262 = vlaneseq
    %v5263 = vshrl.u32 %v5262, 7
    %v5264 = vsub.s32 6, %v5263
    %v5265 = vrot.slane %v3911, %v5264
    %v5266 = vlaneseq
    %v5267 = vshrl.u32 %v5266, 7
    %v5268 = vsub.s32 7, %v5267
    %v5269 = vrot.slane %v3911, %v5268
    %v5270 = vlaneseq
    %v5271 = vshrl.u32 %v5270, 7
    %v5272 = vsub.s32 0, %v5271
    %v5273 = vrot.slane %v3914, %v5272
    %v5274 = vlaneseq
    %v5275 = vshrl.u32 %v5274, 7
    %v5276 = vsub.s32 1, %v5275
    %v5277 = vrot.slane %v3914, %v5276
    %v5278 = vlaneseq
    %v5279 = vshrl.u32 %v5278, 7
    %v5280 = vsub.s32 2, %v5279
    %v5281 = vrot.slane %v3914, %v5280
    %v5282 = vlaneseq
    %v5283 = vshrl.u32 %v5282, 7
    %v5284 = vsub.s32 3, %v5283
    %v5285 = vrot.slane %v3914, %v5284
    %v5286 = vlaneseq
    %v5287 = vshrl.u32 %v5286, 7
    %v5288 = vsub.s32 4, %v5287
    %v5289 = vrot.slane %v3914, %v5288
    %v5290 = vlaneseq
    %v5291 = vshrl.u32 %v5290, 7
    %v5292 = vsub.s32 5, %v5291
    %v5293 = vrot.slane %v3914, %v5292
    %v5294 = vlaneseq
    %v5295 = vshrl.u32 %v5294, 7
    %v5296 = vsub.s32 6, %v5295
    %v5297 = vrot.slane %v3914, %v5296
    %v5298 = vlaneseq
    %v5299 = vshrl.u32 %v5298, 7
    %v5300 = vsub.s32 7, %v5299
    %v5301 = vrot.slane %v3914, %v5300
    %v5302 = vlaneseq
    %v5303 = vshrl.u32 %v5302, 7
    %v5304 = vsub.s32 0, %v5303
    %v5305 = vrot.slane %v3917, %v5304
    %v5306 = vlaneseq
    %v5307 = vshrl.u32 %v5306, 7
    %v5308 = vsub.s32 1, %v5307
    %v5309 = vrot.slane %v3917, %v5308
    %v5310 = vlaneseq
    %v5311 = vshrl.u32 %v5310, 7
    %v5312 = vsub.s32 2, %v5311
    %v5313 = vrot.slane %v3917, %v5312
    %v5314 = vlaneseq
    %v5315 = vshrl.u32 %v5314, 7
    %v5316 = vsub.s32 3, %v5315
    %v5317 = vrot.slane %v3917, %v5316
    %v5318 = vlaneseq
    %v5319 = vshrl.u32 %v5318, 7
    %v5320 = vsub.s32 4, %v5319
    %v5321 = vrot.slane %v3917, %v5320
    %v5322 = vlaneseq
    %v5323 = vshrl.u32 %v5322, 7
    %v5324 = vsub.s32 5, %v5323
    %v5325 = vrot.slane %v3917, %v5324
    %v5326 = vlaneseq
    %v5327 = vshrl.u32 %v5326, 7
    %v5328 = vsub.s32 6, %v5327
    %v5329 = vrot.slane %v3917, %v5328
    %v5330 = vlaneseq
    %v5331 = vshrl.u32 %v5330, 7
    %v5332 = vsub.s32 7, %v5331
    %v5333 = vrot.slane %v3917, %v5332
    %v5334 = vlaneseq
    %v5335 = vshrl.u32 %v5334, 7
    %v5336 = vsub.s32 0, %v5335
    %v5337 = vrot.slane %v3920, %v5336
    %v5338 = vlaneseq
    %v5339 = vshrl.u32 %v5338, 7
    %v5340 = vsub.s32 1, %v5339
    %v5341 = vrot.slane %v3920, %v5340
    %v5342 = vlaneseq
    %v5343 = vshrl.u32 %v5342, 7
    %v5344 = vsub.s32 2, %v5343
    %v5345 = vrot.slane %v3920, %v5344
    %v5346 = vlaneseq
    %v5347 = vshrl.u32 %v5346, 7
    %v5348 = vsub.s32 3, %v5347
    %v5349 = vrot.slane %v3920, %v5348
    %v5350 = vlaneseq
    %v5351 = vshrl.u32 %v5350, 7
    %v5352 = vsub.s32 4, %v5351
    %v5353 = vrot.slane %v3920, %v5352
    %v5354 = vlaneseq
    %v5355 = vshrl.u32 %v5354, 7
    %v5356 = vsub.s32 5, %v5355
    %v5357 = vrot.slane %v3920, %v5356
    %v5358 = vlaneseq
    %v5359 = vshrl.u32 %v5358, 7
    %v5360 = vsub.s32 6, %v5359
    %v5361 = vrot.slane %v3920, %v5360
    %v5362 = vlaneseq
    %v5363 = vshrl.u32 %v5362, 7
    %v5364 = vsub.s32 7, %v5363
    %v5365 = vrot.slane %v3920, %v5364
    %v5366 = vlaneseq
    %v5367 = vshrl.u32 %v5366, 7
    %v5368 = vsub.s32 0, %v5367
    %v5369 = vrot.slane %v3923, %v5368
    %v5370 = vlaneseq
    %v5371 = vshrl.u32 %v5370, 7
    %v5372 = vsub.s32 1, %v5371
    %v5373 = vrot.slane %v3923, %v5372
    %v5374 = vlaneseq
    %v5375 = vshrl.u32 %v5374, 7
    %v5376 = vsub.s32 2, %v5375
    %v5377 = vrot.slane %v3923, %v5376
    %v5378 = vlaneseq
    %v5379 = vshrl.u32 %v5378, 7
    %v5380 = vsub.s32 3, %v5379
    %v5381 = vrot.slane %v3923, %v5380
    %v5382 = vlaneseq
    %v5383 = vshrl.u32 %v5382, 7
    %v5384 = vsub.s32 4, %v5383
    %v5385 = vrot.slane %v3923, %v5384
    %v5386 = vlaneseq
    %v5387 = vshrl.u32 %v5386, 7
    %v5388 = vsub.s32 5, %v5387
    %v5389 = vrot.slane %v3923, %v5388
    %v5390 = vlaneseq
    %v5391 = vshrl.u32 %v5390, 7
    %v5392 = vsub.s32 6, %v5391
    %v5393 = vrot.slane %v3923, %v5392
    %v5394 = vlaneseq
    %v5395 = vshrl.u32 %v5394, 7
    %v5396 = vsub.s32 7, %v5395
    %v5397 = vrot.slane %v3923, %v5396
    %v5398 = vlaneseq
    %v5399 = vshrl.u32 %v5398, 7
    %v5400 = vsub.s32 0, %v5399
    %v5401 = vrot.slane %v3926, %v5400
    %v5402 = vlaneseq
    %v5403 = vshrl.u32 %v5402, 7
    %v5404 = vsub.s32 1, %v5403
    %v5405 = vrot.slane %v3926, %v5404
    %v5406 = vlaneseq
    %v5407 = vshrl.u32 %v5406, 7
    %v5408 = vsub.s32 2, %v5407
    %v5409 = vrot.slane %v3926, %v5408
    %v5410 = vlaneseq
    %v5411 = vshrl.u32 %v5410, 7
    %v5412 = vsub.s32 3, %v5411
    %v5413 = vrot.slane %v3926, %v5412
    %v5414 = vlaneseq
    %v5415 = vshrl.u32 %v5414, 7
    %v5416 = vsub.s32 4, %v5415
    %v5417 = vrot.slane %v3926, %v5416
    %v5418 = vlaneseq
    %v5419 = vshrl.u32 %v5418, 7
    %v5420 = vsub.s32 5, %v5419
    %v5421 = vrot.slane %v3926, %v5420
    %v5422 = vlaneseq
    %v5423 = vshrl.u32 %v5422, 7
    %v5424 = vsub.s32 6, %v5423
    %v5425 = vrot.slane %v3926, %v5424
    %v5426 = vlaneseq
    %v5427 = vshrl.u32 %v5426, 7
    %v5428 = vsub.s32 7, %v5427
    %v5429 = vrot.slane %v3926, %v5428
    %v5430 = vlaneseq
    %v5431 = vshrl.u32 %v5430, 7
    %v5432 = vsub.s32 0, %v5431
    %v5433 = vrot.slane %v3929, %v5432
    %v5434 = vlaneseq
    %v5435 = vshrl.u32 %v5434, 7
    %v5436 = vsub.s32 1, %v5435
    %v5437 = vrot.slane %v3929, %v5436
    %v5438 = vlaneseq
    %v5439 = vshrl.u32 %v5438, 7
    %v5440 = vsub.s32 2, %v5439
    %v5441 = vrot.slane %v3929, %v5440
    %v5442 = vlaneseq
    %v5443 = vshrl.u32 %v5442, 7
    %v5444 = vsub.s32 3, %v5443
    %v5445 = vrot.slane %v3929, %v5444
    %v5446 = vlaneseq
    %v5447 = vshrl.u32 %v5446, 7
    %v5448 = vsub.s32 4, %v5447
    %v5449 = vrot.slane %v3929, %v5448
    %v5450 = vlaneseq
    %v5451 = vshrl.u32 %v5450, 7
    %v5452 = vsub.s32 5, %v5451
    %v5453 = vrot.slane %v3929, %v5452
    %v5454 = vlaneseq
    %v5455 = vshrl.u32 %v5454, 7
    %v5456 = vsub.s32 6, %v5455
    %v5457 = vrot.slane %v3929, %v5456
    %v5458 = vlaneseq
    %v5459 = vshrl.u32 %v5458, 7
    %v5460 = vsub.s32 7, %v5459
    %v5461 = vrot.slane %v3929, %v5460
    %v5462 = vlaneseq
    %v5463 = vshrl.u32 %v5462, 7
    %v5464 = vsub.s32 0, %v5463
    %v5465 = vrot.slane %v3932, %v5464
    %v5466 = vlaneseq
    %v5467 = vshrl.u32 %v5466, 7
    %v5468 = vsub.s32 1, %v5467
    %v5469 = vrot.slane %v3932, %v5468
    %v5470 = vlaneseq
    %v5471 = vshrl.u32 %v5470, 7
    %v5472 = vsub.s32 2, %v5471
    %v5473 = vrot.slane %v3932, %v5472
    %v5474 = vlaneseq
    %v5475 = vshrl.u32 %v5474, 7
    %v5476 = vsub.s32 3, %v5475
    %v5477 = vrot.slane %v3932, %v5476
    %v5478 = vlaneseq
    %v5479 = vshrl.u32 %v5478, 7
    %v5480 = vsub.s32 4, %v5479
    %v5481 = vrot.slane %v3932, %v5480
    %v5482 = vlaneseq
    %v5483 = vshrl.u32 %v5482, 7
    %v5484 = vsub.s32 5, %v5483
    %v5485 = vrot.slane %v3932, %v5484
    %v5486 = vlaneseq
    %v5487 = vshrl.u32 %v5486, 7
    %v5488 = vsub.s32 6, %v5487
    %v5489 = vrot.slane %v3932, %v5488
    %v5490 = vlaneseq
    %v5491 = vshrl.u32 %v5490, 7
    %v5492 = vsub.s32 7, %v5491
    %v5493 = vrot.slane %v3932, %v5492
    %v5494 = vlaneseq
    %v5495 = vshrl.u32 %v5494, 7
    %v5496 = vsub.s32 0, %v5495
    %v5497 = vrot.slane %v3935, %v5496
    %v5498 = vlaneseq
    %v5499 = vshrl.u32 %v5498, 7
    %v5500 = vsub.s32 1, %v5499
    %v5501 = vrot.slane %v3935, %v5500
    %v5502 = vlaneseq
    %v5503 = vshrl.u32 %v5502, 7
    %v5504 = vsub.s32 2, %v5503
    %v5505 = vrot.slane %v3935, %v5504
    %v5506 = vlaneseq
    %v5507 = vshrl.u32 %v5506, 7
    %v5508 = vsub.s32 3, %v5507
    %v5509 = vrot.slane %v3935, %v5508
    %v5510 = vlaneseq
    %v5511 = vshrl.u32 %v5510, 7
    %v5512 = vsub.s32 4, %v5511
    %v5513 = vrot.slane %v3935, %v5512
    %v5514 = vlaneseq
    %v5515 = vshrl.u32 %v5514, 7
    %v5516 = vsub.s32 5, %v5515
    %v5517 = vrot.slane %v3935, %v5516
    %v5518 = vlaneseq
    %v5519 = vshrl.u32 %v5518, 7
    %v5520 = vsub.s32 6, %v5519
    %v5521 = vrot.slane %v3935, %v5520
    %v5522 = vlaneseq
    %v5523 = vshrl.u32 %v5522, 7
    %v5524 = vsub.s32 7, %v5523
    %v5525 = vrot.slane %v3935, %v5524
    %v5526 = vlaneseq
    %v5527 = vshrl.u32 %v5526, 7
    %v5528 = vsub.s32 0, %v5527
    %v5529 = vrot.slane %v3938, %v5528
    %v5530 = vlaneseq
    %v5531 = vshrl.u32 %v5530, 7
    %v5532 = vsub.s32 1, %v5531
    %v5533 = vrot.slane %v3938, %v5532
    %v5534 = vlaneseq
    %v5535 = vshrl.u32 %v5534, 7
    %v5536 = vsub.s32 2, %v5535
    %v5537 = vrot.slane %v3938, %v5536
    %v5538 = vlaneseq
    %v5539 = vshrl.u32 %v5538, 7
    %v5540 = vsub.s32 3, %v5539
    %v5541 = vrot.slane %v3938, %v5540
    %v5542 = vlaneseq
    %v5543 = vshrl.u32 %v5542, 7
    %v5544 = vsub.s32 4, %v5543
    %v5545 = vrot.slane %v3938, %v5544
    %v5546 = vlaneseq
    %v5547 = vshrl.u32 %v5546, 7
    %v5548 = vsub.s32 5, %v5547
    %v5549 = vrot.slane %v3938, %v5548
    %v5550 = vlaneseq
    %v5551 = vshrl.u32 %v5550, 7
    %v5552 = vsub.s32 6, %v5551
    %v5553 = vrot.slane %v3938, %v5552
    %v5554 = vlaneseq
    %v5555 = vshrl.u32 %v5554, 7
    %v5556 = vsub.s32 7, %v5555
    %v5557 = vrot.slane %v3938, %v5556
    %v5558 = vlaneseq
    %v5559 = vshrl.u32 %v5558, 7
    %v5560 = vsub.s32 0, %v5559
    %v5561 = vrot.slane %v3941, %v5560
    %v5562 = vlaneseq
    %v5563 = vshrl.u32 %v5562, 7
    %v5564 = vsub.s32 1, %v5563
    %v5565 = vrot.slane %v3941, %v5564
    %v5566 = vlaneseq
    %v5567 = vshrl.u32 %v5566, 7
    %v5568 = vsub.s32 2, %v5567
    %v5569 = vrot.slane %v3941, %v5568
    %v5570 = vlaneseq
    %v5571 = vshrl.u32 %v5570, 7
    %v5572 = vsub.s32 3, %v5571
    %v5573 = vrot.slane %v3941, %v5572
    %v5574 = vlaneseq
    %v5575 = vshrl.u32 %v5574, 7
    %v5576 = vsub.s32 4, %v5575
    %v5577 = vrot.slane %v3941, %v5576
    %v5578 = vlaneseq
    %v5579 = vshrl.u32 %v5578, 7
    %v5580 = vsub.s32 5, %v5579
    %v5581 = vrot.slane %v3941, %v5580
    %v5582 = vlaneseq
    %v5583 = vshrl.u32 %v5582, 7
    %v5584 = vsub.s32 6, %v5583
    %v5585 = vrot.slane %v3941, %v5584
    %v5586 = vlaneseq
    %v5587 = vshrl.u32 %v5586, 7
    %v5588 = vsub.s32 7, %v5587
    %v5589 = vrot.slane %v3941, %v5588
    %v5590 = vlaneseq
    %v5591 = vshrl.u32 %v5590, 7
    %v5592 = vsub.s32 0, %v5591
    %v5593 = vrot.slane %v3944, %v5592
    %v5594 = vlaneseq
    %v5595 = vshrl.u32 %v5594, 7
    %v5596 = vsub.s32 1, %v5595
    %v5597 = vrot.slane %v3944, %v5596
    %v5598 = vlaneseq
    %v5599 = vshrl.u32 %v5598, 7
    %v5600 = vsub.s32 2, %v5599
    %v5601 = vrot.slane %v3944, %v5600
    %v5602 = vlaneseq
    %v5603 = vshrl.u32 %v5602, 7
    %v5604 = vsub.s32 3, %v5603
    %v5605 = vrot.slane %v3944, %v5604
    %v5606 = vlaneseq
    %v5607 = vshrl.u32 %v5606, 7
    %v5608 = vsub.s32 4, %v5607
    %v5609 = vrot.slane %v3944, %v5608
    %v5610 = vlaneseq
    %v5611 = vshrl.u32 %v5610, 7
    %v5612 = vsub.s32 5, %v5611
    %v5613 = vrot.slane %v3944, %v5612
    %v5614 = vlaneseq
    %v5615 = vshrl.u32 %v5614, 7
    %v5616 = vsub.s32 6, %v5615
    %v5617 = vrot.slane %v3944, %v5616
    %v5618 = vlaneseq
    %v5619 = vshrl.u32 %v5618, 7
    %v5620 = vsub.s32 7, %v5619
    %v5621 = vrot.slane %v3944, %v5620
    %v5622 = vlaneseq
    %v5623 = vshrl.u32 %v5622, 7
    %v5624 = vsub.s32 0, %v5623
    %v5625 = vrot.slane %v3947, %v5624
    %v5626 = vlaneseq
    %v5627 = vshrl.u32 %v5626, 7
    %v5628 = vsub.s32 1, %v5627
    %v5629 = vrot.slane %v3947, %v5628
    %v5630 = vlaneseq
    %v5631 = vshrl.u32 %v5630, 7
    %v5632 = vsub.s32 2, %v5631
    %v5633 = vrot.slane %v3947, %v5632
    %v5634 = vlaneseq
    %v5635 = vshrl.u32 %v5634, 7
    %v5636 = vsub.s32 3, %v5635
    %v5637 = vrot.slane %v3947, %v5636
    %v5638 = vlaneseq
    %v5639 = vshrl.u32 %v5638, 7
    %v5640 = vsub.s32 4, %v5639
    %v5641 = vrot.slane %v3947, %v5640
    %v5642 = vlaneseq
    %v5643 = vshrl.u32 %v5642, 7
    %v5644 = vsub.s32 5, %v5643
    %v5645 = vrot.slane %v3947, %v5644
    %v5646 = vlaneseq
    %v5647 = vshrl.u32 %v5646, 7
    %v5648 = vsub.s32 6, %v5647
    %v5649 = vrot.slane %v3947, %v5648
    %v5650 = vlaneseq
    %v5651 = vshrl.u32 %v5650, 7
    %v5652 = vsub.s32 7, %v5651
    %v5653 = vrot.slane %v3947, %v5652
    %v5654 = vlaneseq
    %v5655 = vshrl.u32 %v5654, 7
    %v5656 = vsub.s32 0, %v5655
    %v5657 = vrot.slane %v3950, %v5656
    %v5658 = vlaneseq
    %v5659 = vshrl.u32 %v5658, 7
    %v5660 = vsub.s32 1, %v5659
    %v5661 = vrot.slane %v3950, %v5660
    %v5662 = vlaneseq
    %v5663 = vshrl.u32 %v5662, 7
    %v5664 = vsub.s32 2, %v5663
    %v5665 = vrot.slane %v3950, %v5664
    %v5666 = vlaneseq
    %v5667 = vshrl.u32 %v5666, 7
    %v5668 = vsub.s32 3, %v5667
    %v5669 = vrot.slane %v3950, %v5668
    %v5670 = vlaneseq
    %v5671 = vshrl.u32 %v5670, 7
    %v5672 = vsub.s32 4, %v5671
    %v5673 = vrot.slane %v3950, %v5672
    %v5674 = vlaneseq
    %v5675 = vshrl.u32 %v5674, 7
    %v5676 = vsub.s32 5, %v5675
    %v5677 = vrot.slane %v3950, %v5676
    %v5678 = vlaneseq
    %v5679 = vshrl.u32 %v5678, 7
    %v5680 = vsub.s32 6, %v5679
    %v5681 = vrot.slane %v3950, %v5680
    %v5682 = vlaneseq
    %v5683 = vshrl.u32 %v5682, 7
    %v5684 = vsub.s32 7, %v5683
    %v5685 = vrot.slane %v3950, %v5684
    %v5686 = vlaneseq
    %v5687 = vshrl.u32 %v5686, 7
    %v5688 = vsub.s32 0, %v5687
    %v5689 = vrot.slane %v3953, %v5688
    %v5690 = vlaneseq
    %v5691 = vshrl.u32 %v5690, 7
    %v5692 = vsub.s32 1, %v5691
    %v5693 = vrot.slane %v3953, %v5692
    %v5694 = vlaneseq
    %v5695 = vshrl.u32 %v5694, 7
    %v5696 = vsub.s32 2, %v5695
    %v5697 = vrot.slane %v3953, %v5696
    %v5698 = vlaneseq
    %v5699 = vshrl.u32 %v5698, 7
    %v5700 = vsub.s32 3, %v5699
    %v5701 = vrot.slane %v3953, %v5700
    %v5702 = vlaneseq
    %v5703 = vshrl.u32 %v5702, 7
    %v5704 = vsub.s32 4, %v5703
    %v5705 = vrot.slane %v3953, %v5704
    %v5706 = vlaneseq
    %v5707 = vshrl.u32 %v5706, 7
    %v5708 = vsub.s32 5, %v5707
    %v5709 = vrot.slane %v3953, %v5708
    %v5710 = vlaneseq
    %v5711 = vshrl.u32 %v5710, 7
    %v5712 = vsub.s32 6, %v5711
    %v5713 = vrot.slane %v3953, %v5712
    %v5714 = vlaneseq
    %v5715 = vshrl.u32 %v5714, 7
    %v5716 = vsub.s32 7, %v5715
    %v5717 = vrot.slane %v3953, %v5716
    %v5718 = vlaneseq
    %v5719 = vshrl.u32 %v5718, 7
    %v5720 = vsub.s32 0, %v5719
    %v5721 = vrot.slane %v3956, %v5720
    %v5722 = vlaneseq
    %v5723 = vshrl.u32 %v5722, 7
    %v5724 = vsub.s32 1, %v5723
    %v5725 = vrot.slane %v3956, %v5724
    %v5726 = vlaneseq
    %v5727 = vshrl.u32 %v5726, 7
    %v5728 = vsub.s32 2, %v5727
    %v5729 = vrot.slane %v3956, %v5728
    %v5730 = vlaneseq
    %v5731 = vshrl.u32 %v5730, 7
    %v5732 = vsub.s32 3, %v5731
    %v5733 = vrot.slane %v3956, %v5732
    %v5734 = vlaneseq
    %v5735 = vshrl.u32 %v5734, 7
    %v5736 = vsub.s32 4, %v5735
    %v5737 = vrot.slane %v3956, %v5736
    %v5738 = vlaneseq
    %v5739 = vshrl.u32 %v5738, 7
    %v5740 = vsub.s32 5, %v5739
    %v5741 = vrot.slane %v3956, %v5740
    %v5742 = vlaneseq
    %v5743 = vshrl.u32 %v5742, 7
    %v5744 = vsub.s32 6, %v5743
    %v5745 = vrot.slane %v3956, %v5744
    %v5746 = vlaneseq
    %v5747 = vshrl.u32 %v5746, 7
    %v5748 = vsub.s32 7, %v5747
    %v5749 = vrot.slane %v3956, %v5748
    %v5750 = vlaneseq
    %v5751 = vshrl.u32 %v5750, 7
    %v5752 = vsub.s32 0, %v5751
    %v5753 = vrot.slane %v3959, %v5752
    %v5754 = vlaneseq
    %v5755 = vshrl.u32 %v5754, 7
    %v5756 = vsub.s32 1, %v5755
    %v5757 = vrot.slane %v3959, %v5756
    %v5758 = vlaneseq
    %v5759 = vshrl.u32 %v5758, 7
    %v5760 = vsub.s32 2, %v5759
    %v5761 = vrot.slane %v3959, %v5760
    %v5762 = vlaneseq
    %v5763 = vshrl.u32 %v5762, 7
    %v5764 = vsub.s32 3, %v5763
    %v5765 = vrot.slane %v3959, %v5764
    %v5766 = vlaneseq
    %v5767 = vshrl.u32 %v5766, 7
    %v5768 = vsub.s32 4, %v5767
    %v5769 = vrot.slane %v3959, %v5768
    %v5770 = vlaneseq
    %v5771 = vshrl.u32 %v5770, 7
    %v5772 = vsub.s32 5, %v5771
    %v5773 = vrot.slane %v3959, %v5772
    %v5774 = vlaneseq
    %v5775 = vshrl.u32 %v5774, 7
    %v5776 = vsub.s32 6, %v5775
    %v5777 = vrot.slane %v3959, %v5776
    %v5778 = vlaneseq
    %v5779 = vshrl.u32 %v5778, 7
    %v5780 = vsub.s32 7, %v5779
    %v5781 = vrot.slane %v3959, %v5780
    %v5782 = vlaneseq
    %v5783 = vshrl.u32 %v5782, 7
    %v5784 = vsub.s32 0, %v5783
    %v5785 = vrot.slane %v3962, %v5784
    %v5786 = vlaneseq
    %v5787 = vshrl.u32 %v5786, 7
    %v5788 = vsub.s32 1, %v5787
    %v5789 = vrot.slane %v3962, %v5788
    %v5790 = vlaneseq
    %v5791 = vshrl.u32 %v5790, 7
    %v5792 = vsub.s32 2, %v5791
    %v5793 = vrot.slane %v3962, %v5792
    %v5794 = vlaneseq
    %v5795 = vshrl.u32 %v5794, 7
    %v5796 = vsub.s32 3, %v5795
    %v5797 = vrot.slane %v3962, %v5796
    %v5798 = vlaneseq
    %v5799 = vshrl.u32 %v5798, 7
    %v5800 = vsub.s32 4, %v5799
    %v5801 = vrot.slane %v3962, %v5800
    %v5802 = vlaneseq
    %v5803 = vshrl.u32 %v5802, 7
    %v5804 = vsub.s32 5, %v5803
    %v5805 = vrot.slane %v3962, %v5804
    %v5806 = vlaneseq
    %v5807 = vshrl.u32 %v5806, 7
    %v5808 = vsub.s32 6, %v5807
    %v5809 = vrot.slane %v3962, %v5808
    %v5810 = vlaneseq
    %v5811 = vshrl.u32 %v5810, 7
    %v5812 = vsub.s32 7, %v5811
    %v5813 = vrot.slane %v3962, %v5812
    %v5814 = vlaneseq
    %v5815 = vshrl.u32 %v5814, 7
    %v5816 = vsub.s32 0, %v5815
    %v5817 = vrot.slane %v3965, %v5816
    %v5818 = vlaneseq
    %v5819 = vshrl.u32 %v5818, 7
    %v5820 = vsub.s32 1, %v5819
    %v5821 = vrot.slane %v3965, %v5820
    %v5822 = vlaneseq
    %v5823 = vshrl.u32 %v5822, 7
    %v5824 = vsub.s32 2, %v5823
    %v5825 = vrot.slane %v3965, %v5824
    %v5826 = vlaneseq
    %v5827 = vshrl.u32 %v5826, 7
    %v5828 = vsub.s32 3, %v5827
    %v5829 = vrot.slane %v3965, %v5828
    %v5830 = vlaneseq
    %v5831 = vshrl.u32 %v5830, 7
    %v5832 = vsub.s32 4, %v5831
    %v5833 = vrot.slane %v3965, %v5832
    %v5834 = vlaneseq
    %v5835 = vshrl.u32 %v5834, 7
    %v5836 = vsub.s32 5, %v5835
    %v5837 = vrot.slane %v3965, %v5836
    %v5838 = vlaneseq
    %v5839 = vshrl.u32 %v5838, 7
    %v5840 = vsub.s32 6, %v5839
    %v5841 = vrot.slane %v3965, %v5840
    %v5842 = vlaneseq
    %v5843 = vshrl.u32 %v5842, 7
    %v5844 = vsub.s32 7, %v5843
    %v5845 = vrot.slane %v3965, %v5844
    %v5846 = vlaneseq
    %v5847 = vshrl.u32 %v5846, 7
    %v5848 = vsub.s32 0, %v5847
    %v5849 = vrot.slane %v3968, %v5848
    %v5850 = vlaneseq
    %v5851 = vshrl.u32 %v5850, 7
    %v5852 = vsub.s32 1, %v5851
    %v5853 = vrot.slane %v3968, %v5852
    %v5854 = vlaneseq
    %v5855 = vshrl.u32 %v5854, 7
    %v5856 = vsub.s32 2, %v5855
    %v5857 = vrot.slane %v3968, %v5856
    %v5858 = vlaneseq
    %v5859 = vshrl.u32 %v5858, 7
    %v5860 = vsub.s32 3, %v5859
    %v5861 = vrot.slane %v3968, %v5860
    %v5862 = vlaneseq
    %v5863 = vshrl.u32 %v5862, 7
    %v5864 = vsub.s32 4, %v5863
    %v5865 = vrot.slane %v3968, %v5864
    %v5866 = vlaneseq
    %v5867 = vshrl.u32 %v5866, 7
    %v5868 = vsub.s32 5, %v5867
    %v5869 = vrot.slane %v3968, %v5868
    %v5870 = vlaneseq
    %v5871 = vshrl.u32 %v5870, 7
    %v5872 = vsub.s32 6, %v5871
    %v5873 = vrot.slane %v3968, %v5872
    %v5874 = vlaneseq
    %v5875 = vshrl.u32 %v5874, 7
    %v5876 = vsub.s32 7, %v5875
    %v5877 = vrot.slane %v3968, %v5876
    %v5878 = vlaneseq
    %v5879 = vshrl.u32 %v5878, 7
    %v5880 = vsub.s32 0, %v5879
    %v5881 = vrot.slane %v3971, %v5880
    %v5882 = vlaneseq
    %v5883 = vshrl.u32 %v5882, 7
    %v5884 = vsub.s32 1, %v5883
    %v5885 = vrot.slane %v3971, %v5884
    %v5886 = vlaneseq
    %v5887 = vshrl.u32 %v5886, 7
    %v5888 = vsub.s32 2, %v5887
    %v5889 = vrot.slane %v3971, %v5888
    %v5890 = vlaneseq
    %v5891 = vshrl.u32 %v5890, 7
    %v5892 = vsub.s32 3, %v5891
    %v5893 = vrot.slane %v3971, %v5892
    %v5894 = vlaneseq
    %v5895 = vshrl.u32 %v5894, 7
    %v5896 = vsub.s32 4, %v5895
    %v5897 = vrot.slane %v3971, %v5896
    %v5898 = vlaneseq
    %v5899 = vshrl.u32 %v5898, 7
    %v5900 = vsub.s32 5, %v5899
    %v5901 = vrot.slane %v3971, %v5900
    %v5902 = vlaneseq
    %v5903 = vshrl.u32 %v5902, 7
    %v5904 = vsub.s32 6, %v5903
    %v5905 = vrot.slane %v3971, %v5904
    %v5906 = vlaneseq
    %v5907 = vshrl.u32 %v5906, 7
    %v5908 = vsub.s32 7, %v5907
    %v5909 = vrot.slane %v3971, %v5908
    %v5910 = vlaneseq
    %v5911 = vshrl.u32 %v5910, 7
    %v5912 = vsub.s32 0, %v5911
    %v5913 = vrot.slane %v3974, %v5912
    %v5914 = vlaneseq
    %v5915 = vshrl.u32 %v5914, 7
    %v5916 = vsub.s32 1, %v5915
    %v5917 = vrot.slane %v3974, %v5916
    %v5918 = vlaneseq
    %v5919 = vshrl.u32 %v5918, 7
    %v5920 = vsub.s32 2, %v5919
    %v5921 = vrot.slane %v3974, %v5920
    %v5922 = vlaneseq
    %v5923 = vshrl.u32 %v5922, 7
    %v5924 = vsub.s32 3, %v5923
    %v5925 = vrot.slane %v3974, %v5924
    %v5926 = vlaneseq
    %v5927 = vshrl.u32 %v5926, 7
    %v5928 = vsub.s32 4, %v5927
    %v5929 = vrot.slane %v3974, %v5928
    %v5930 = vlaneseq
    %v5931 = vshrl.u32 %v5930, 7
    %v5932 = vsub.s32 5, %v5931
    %v5933 = vrot.slane %v3974, %v5932
    %v5934 = vlaneseq
    %v5935 = vshrl.u32 %v5934, 7
    %v5936 = vsub.s32 6, %v5935
    %v5937 = vrot.slane %v3974, %v5936
    %v5938 = vlaneseq
    %v5939 = vshrl.u32 %v5938, 7
    %v5940 = vsub.s32 7, %v5939
    %v5941 = vrot.slane %v3974, %v5940
    %v5942 = vlaneseq
    %v5943 = vshrl.u32 %v5942, 7
    %v5944 = vsub.s32 0, %v5943
    %v5945 = vrot.slane %v3977, %v5944
    %v5946 = vlaneseq
    %v5947 = vshrl.u32 %v5946, 7
    %v5948 = vsub.s32 1, %v5947
    %v5949 = vrot.slane %v3977, %v5948
    %v5950 = vlaneseq
    %v5951 = vshrl.u32 %v5950, 7
    %v5952 = vsub.s32 2, %v5951
    %v5953 = vrot.slane %v3977, %v5952
    %v5954 = vlaneseq
    %v5955 = vshrl.u32 %v5954, 7
    %v5956 = vsub.s32 3, %v5955
    %v5957 = vrot.slane %v3977, %v5956
    %v5958 = vlaneseq
    %v5959 = vshrl.u32 %v5958, 7
    %v5960 = vsub.s32 4, %v5959
    %v5961 = vrot.slane %v3977, %v5960
    %v5962 = vlaneseq
    %v5963 = vshrl.u32 %v5962, 7
    %v5964 = vsub.s32 5, %v5963
    %v5965 = vrot.slane %v3977, %v5964
    %v5966 = vlaneseq
    %v5967 = vshrl.u32 %v5966, 7
    %v5968 = vsub.s32 6, %v5967
    %v5969 = vrot.slane %v3977, %v5968
    %v5970 = vlaneseq
    %v5971 = vshrl.u32 %v5970, 7
    %v5972 = vsub.s32 7, %v5971
    %v5973 = vrot.slane %v3977, %v5972
    %v5974 = vlaneseq
    %v5975 = vshrl.u32 %v5974, 7
    %v5976 = vsub.s32 0, %v5975
    %v5977 = vrot.slane %v3980, %v5976
    %v5978 = vlaneseq
    %v5979 = vshrl.u32 %v5978, 7
    %v5980 = vsub.s32 1, %v5979
    %v5981 = vrot.slane %v3980, %v5980
    %v5982 = vlaneseq
    %v5983 = vshrl.u32 %v5982, 7
    %v5984 = vsub.s32 2, %v5983
    %v5985 = vrot.slane %v3980, %v5984
    %v5986 = vlaneseq
    %v5987 = vshrl.u32 %v5986, 7
    %v5988 = vsub.s32 3, %v5987
    %v5989 = vrot.slane %v3980, %v5988
    %v5990 = vlaneseq
    %v5991 = vshrl.u32 %v5990, 7
    %v5992 = vsub.s32 4, %v5991
    %v5993 = vrot.slane %v3980, %v5992
    %v5994 = vlaneseq
    %v5995 = vshrl.u32 %v5994, 7
    %v5996 = vsub.s32 5, %v5995
    %v5997 = vrot.slane %v3980, %v5996
    %v5998 = vlaneseq
    %v5999 = vshrl.u32 %v5998, 7
    %v6000 = vsub.s32 6, %v5999
    %v6001 = vrot.slane %v3980, %v6000
    %v6002 = vlaneseq
    %v6003 = vshrl.u32 %v6002, 7
    %v6004 = vsub.s32 7, %v6003
    %v6005 = vrot.slane %v3980, %v6004
    %v6006 = vlaneseq
    %v6007 = vshrl.u32 %v6006, 7
    %v6008 = vsub.s32 0, %v6007
    %v6009 = vrot.slane %v3983, %v6008
    %v6010 = vlaneseq
    %v6011 = vshrl.u32 %v6010, 7
    %v6012 = vsub.s32 1, %v6011
    %v6013 = vrot.slane %v3983, %v6012
    %v6014 = vlaneseq
    %v6015 = vshrl.u32 %v6014, 7
    %v6016 = vsub.s32 2, %v6015
    %v6017 = vrot.slane %v3983, %v6016
    %v6018 = vlaneseq
    %v6019 = vshrl.u32 %v6018, 7
    %v6020 = vsub.s32 3, %v6019
    %v6021 = vrot.slane %v3983, %v6020
    %v6022 = vlaneseq
    %v6023 = vshrl.u32 %v6022, 7
    %v6024 = vsub.s32 4, %v6023
    %v6025 = vrot.slane %v3983, %v6024
    %v6026 = vlaneseq
    %v6027 = vshrl.u32 %v6026, 7
    %v6028 = vsub.s32 5, %v6027
    %v6029 = vrot.slane %v3983, %v6028
    %v6030 = vlaneseq
    %v6031 = vshrl.u32 %v6030, 7
    %v6032 = vsub.s32 6, %v6031
    %v6033 = vrot.slane %v3983, %v6032
    %v6034 = vlaneseq
    %v6035 = vshrl.u32 %v6034, 7
    %v6036 = vsub.s32 7, %v6035
    %v6037 = vrot.slane %v3983, %v6036
    %v6038 = vlaneseq
    %v6039 = vshrl.u32 %v6038, 7
    %v6040 = vsub.s32 0, %v6039
    %v6041 = vrot.slane %v3986, %v6040
    %v6042 = vlaneseq
    %v6043 = vshrl.u32 %v6042, 7
    %v6044 = vsub.s32 1, %v6043
    %v6045 = vrot.slane %v3986, %v6044
    %v6046 = vlaneseq
    %v6047 = vshrl.u32 %v6046, 7
    %v6048 = vsub.s32 2, %v6047
    %v6049 = vrot.slane %v3986, %v6048
    %v6050 = vlaneseq
    %v6051 = vshrl.u32 %v6050, 7
    %v6052 = vsub.s32 3, %v6051
    %v6053 = vrot.slane %v3986, %v6052
    %v6054 = vlaneseq
    %v6055 = vshrl.u32 %v6054, 7
    %v6056 = vsub.s32 4, %v6055
    %v6057 = vrot.slane %v3986, %v6056
    %v6058 = vlaneseq
    %v6059 = vshrl.u32 %v6058, 7
    %v6060 = vsub.s32 5, %v6059
    %v6061 = vrot.slane %v3986, %v6060
    %v6062 = vlaneseq
    %v6063 = vshrl.u32 %v6062, 7
    %v6064 = vsub.s32 6, %v6063
    %v6065 = vrot.slane %v3986, %v6064
    %v6066 = vlaneseq
    %v6067 = vshrl.u32 %v6066, 7
    %v6068 = vsub.s32 7, %v6067
    %v6069 = vrot.slane %v3986, %v6068
    %v6070 = vlaneseq
    %v6071 = vshrl.u32 %v6070, 7
    %v6072 = vsub.s32 0, %v6071
    %v6073 = vrot.slane %v3989, %v6072
    %v6074 = vlaneseq
    %v6075 = vshrl.u32 %v6074, 7
    %v6076 = vsub.s32 1, %v6075
    %v6077 = vrot.slane %v3989, %v6076
    %v6078 = vlaneseq
    %v6079 = vshrl.u32 %v6078, 7
    %v6080 = vsub.s32 2, %v6079
    %v6081 = vrot.slane %v3989, %v6080
    %v6082 = vlaneseq
    %v6083 = vshrl.u32 %v6082, 7
    %v6084 = vsub.s32 3, %v6083
    %v6085 = vrot.slane %v3989, %v6084
    %v6086 = vlaneseq
    %v6087 = vshrl.u32 %v6086, 7
    %v6088 = vsub.s32 4, %v6087
    %v6089 = vrot.slane %v3989, %v6088
    %v6090 = vlaneseq
    %v6091 = vshrl.u32 %v6090, 7
    %v6092 = vsub.s32 5, %v6091
    %v6093 = vrot.slane %v3989, %v6092
    %v6094 = vlaneseq
    %v6095 = vshrl.u32 %v6094, 7
    %v6096 = vsub.s32 6, %v6095
    %v6097 = vrot.slane %v3989, %v6096
    %v6098 = vlaneseq
    %v6099 = vshrl.u32 %v6098, 7
    %v6100 = vsub.s32 7, %v6099
    %v6101 = vrot.slane %v3989, %v6100
    %v6102 = vcombine.low %v4057, %v4061
    %v6103 = vcombine.low %v4065, %v4069
    %v6104 = vcombine.low %v4073, %v4077
    %v6105 = vcombine.low %v4081, %v4085
    %v6107 = vunpack.c.l.s4 1966171168
    %v6108 = vunpack.c.0.s8 %v6107
    %v6109 = vlaneseq
    %v6110 = vshrl.u32 %v6109, 7
    %v6111 = vsub.s32 %v6108, %v6110
    %v6112 = vrot.slane %v6102, %v6111
    %v6114 = vunpack.c.l.s4 1966171168
    %v6115 = vunpack.c.0.s8 %v6114
    %v6116 = vlaneseq
    %v6117 = vshrl.u32 %v6116, 7
    %v6118 = vsub.s32 %v6115, %v6117
    %v6119 = vrot.slane %v6103, %v6118
    %v6121 = vunpack.c.l.s4 1966171168
    %v6122 = vunpack.c.0.s8 %v6121
    %v6123 = vlaneseq
    %v6124 = vshrl.u32 %v6123, 7
    %v6125 = vsub.s32 %v6122, %v6124
    %v6126 = vrot.slane %v6104, %v6125
    %v6128 = vunpack.c.l.s4 1966171168
    %v6129 = vunpack.c.0.s8 %v6128
    %v6130 = vlaneseq
    %v6131 = vshrl.u32 %v6130, 7
    %v6132 = vsub.s32 %v6129, %v6131
    %v6133 = vrot.slane %v6105, %v6132
    %v6134 = vcombine.low %v6112, %v6119
    %v6135 = vcombine.low %v6126, %v6133
    %v6137 = vunpack.c.l.s4 1966171168
    %v6138 = vunpack.c.0.s8 %v6137
    %v6139 = vlaneseq
    %v6140 = vshrl.u32 %v6139, 7
    %v6141 = vsub.s32 %v6138, %v6140
    %v6142 = vrot.slane %v6134, %v6141
    %v6144 = vunpack.c.l.s4 1966171168
    %v6145 = vunpack.c.0.s8 %v6144
    %v6146 = vlaneseq
    %v6147 = vshrl.u32 %v6146, 7
    %v6148 = vsub.s32 %v6145, %v6147
    %v6149 = vrot.slane %v6135, %v6148
    %v6150 = vcombine.low %v6142, %v6149
    %v6151 = vcombine.low %v4089, %v4093
    %v6152 = vcombine.low %v4097, %v4101
    %v6153 = vcombine.low %v4105, %v4109
    %v6154 = vcombine.low %v4113, %v4117
    %v6156 = vunpack.c.l.s4 1966171168
    %v6157 = vunpack.c.0.s8 %v6156
    %v6158 = vlaneseq
    %v6159 = vshrl.u32 %v6158, 7
    %v6160 = vsub.s32 %v6157, %v6159
    %v6161 = vrot.slane %v6151, %v6160
    %v6163 = vunpack.c.l.s4 1966171168
    %v6164 = vunpack.c.0.s8 %v6163
    %v6165 = vlaneseq
    %v6166 = vshrl.u32 %v6165, 7
    %v6167 = vsub.s32 %v6164, %v6166
    %v6168 = vrot.slane %v6152, %v6167
    %v6170 = vunpack.c.l.s4 1966171168
    %v6171 = vunpack.c.0.s8 %v6170
    %v6172 = vlaneseq
    %v6173 = vshrl.u32 %v6172, 7
    %v6174 = vsub.s32 %v6171, %v6173
    %v6175 = vrot.slane %v6153, %v6174
    %v6177 = vunpack.c.l.s4 1966171168
    %v6178 = vunpack.c.0.s8 %v6177
    %v6179 = vlaneseq
    %v6180 = vshrl.u32 %v6179, 7
    %v6181 = vsub.s32 %v6178, %v6180
    %v6182 = vrot.slane %v6154, %v6181
    %v6183 = vcombine.low %v6161, %v6168
    %v6184 = vcombine.low %v6175, %v6182
    %v6186 = vunpack.c.l.s4 1966171168
    %v6187 = vunpack.c.0.s8 %v6186
    %v6188 = vlaneseq
    %v6189 = vshrl.u32 %v6188, 7
    %v6190 = vsub.s32 %v6187, %v6189
    %v6191 = vrot.slane %v6183, %v6190
    %v6193 = vunpack.c.l.s4 1966171168
    %v6194 = vunpack.c.0.s8 %v6193
    %v6195 = vlaneseq
    %v6196 = vshrl.u32 %v6195, 7
    %v6197 = vsub.s32 %v6194, %v6196
    %v6198 = vrot.slane %v6184, %v6197
    %v6199 = vcombine.low %v6191, %v6198
    %v6200 = vcombine.low %v4121, %v4125
    %v6201 = vcombine.low %v4129, %v4133
    %v6202 = vcombine.low %v4137, %v4141
    %v6203 = vcombine.low %v4145, %v4149
    %v6205 = vunpack.c.l.s4 1966171168
    %v6206 = vunpack.c.0.s8 %v6205
    %v6207 = vlaneseq
    %v6208 = vshrl.u32 %v6207, 7
    %v6209 = vsub.s32 %v6206, %v6208
    %v6210 = vrot.slane %v6200, %v6209
    %v6212 = vunpack.c.l.s4 1966171168
    %v6213 = vunpack.c.0.s8 %v6212
    %v6214 = vlaneseq
    %v6215 = vshrl.u32 %v6214, 7
    %v6216 = vsub.s32 %v6213, %v6215
    %v6217 = vrot.slane %v6201, %v6216
    %v6219 = vunpack.c.l.s4 1966171168
    %v6220 = vunpack.c.0.s8 %v6219
    %v6221 = vlaneseq
    %v6222 = vshrl.u32 %v6221, 7
    %v6223 = vsub.s32 %v6220, %v6222
    %v6224 = vrot.slane %v6202, %v6223
    %v6226 = vunpack.c.l.s4 1966171168
    %v6227 = vunpack.c.0.s8 %v6226
    %v6228 = vlaneseq
    %v6229 = vshrl.u32 %v6228, 7
    %v6230 = vsub.s32 %v6227, %v6229
    %v6231 = vrot.slane %v6203, %v6230
    %v6232 = vcombine.low %v6210, %v6217
    %v6233 = vcombine.low %v6224, %v6231
    %v6235 = vunpack.c.l.s4 1966171168
    %v6236 = vunpack.c.0.s8 %v6235
    %v6237 = vlaneseq
    %v6238 = vshrl.u32 %v6237, 7
    %v6239 = vsub.s32 %v6236, %v6238
    %v6240 = vrot.slane %v6232, %v6239
    %v6242 = vunpack.c.l.s4 1966171168
    %v6243 = vunpack.c.0.s8 %v6242
    %v6244 = vlaneseq
    %v6245 = vshrl.u32 %v6244, 7
    %v6246 = vsub.s32 %v6243, %v6245
    %v6247 = vrot.slane %v6233, %v6246
    %v6248 = vcombine.low %v6240, %v6247
    %v6249 = vcombine.low %v4153, %v4157
    %v6250 = vcombine.low %v4161, %v4165
    %v6251 = vcombine.low %v4169, %v4173
    %v6252 = vcombine.low %v4177, %v4181
    %v6254 = vunpack.c.l.s4 1966171168
    %v6255 = vunpack.c.0.s8 %v6254
    %v6256 = vlaneseq
    %v6257 = vshrl.u32 %v6256, 7
    %v6258 = vsub.s32 %v6255, %v6257
    %v6259 = vrot.slane %v6249, %v6258
    %v6261 = vunpack.c.l.s4 1966171168
    %v6262 = vunpack.c.0.s8 %v6261
    %v6263 = vlaneseq
    %v6264 = vshrl.u32 %v6263, 7
    %v6265 = vsub.s32 %v6262, %v6264
    %v6266 = vrot.slane %v6250, %v6265
    %v6268 = vunpack.c.l.s4 1966171168
    %v6269 = vunpack.c.0.s8 %v6268
    %v6270 = vlaneseq
    %v6271 = vshrl.u32 %v6270, 7
    %v6272 = vsub.s32 %v6269, %v6271
    %v6273 = vrot.slane %v6251, %v6272
    %v6275 = vunpack.c.l.s4 1966171168
    %v6276 = vunpack.c.0.s8 %v6275
    %v6277 = vlaneseq
    %v6278 = vshrl.u32 %v6277, 7
    %v6279 = vsub.s32 %v6276, %v6278
    %v6280 = vrot.slane %v6252, %v6279
    %v6281 = vcombine.low %v6259, %v6266
    %v6282 = vcombine.low %v6273, %v6280
    %v6284 = vunpack.c.l.s4 1966171168
    %v6285 = vunpack.c.0.s8 %v6284
    %v6286 = vlaneseq
    %v6287 = vshrl.u32 %v6286, 7
    %v6288 = vsub.s32 %v6285, %v6287
    %v6289 = vrot.slane %v6281, %v6288
    %v6291 = vunpack.c.l.s4 1966171168
    %v6292 = vunpack.c.0.s8 %v6291
    %v6293 = vlaneseq
    %v6294 = vshrl.u32 %v6293, 7
    %v6295 = vsub.s32 %v6292, %v6294
    %v6296 = vrot.slane %v6282, %v6295
    %v6297 = vcombine.low %v6289, %v6296
    %v6298 = vcombine.low %v4185, %v4189
    %v6299 = vcombine.low %v4193, %v4197
    %v6300 = vcombine.low %v4201, %v4205
    %v6301 = vcombine.low %v4209, %v4213
    %v6303 = vunpack.c.l.s4 1966171168
    %v6304 = vunpack.c.0.s8 %v6303
    %v6305 = vlaneseq
    %v6306 = vshrl.u32 %v6305, 7
    %v6307 = vsub.s32 %v6304, %v6306
    %v6308 = vrot.slane %v6298, %v6307
    %v6310 = vunpack.c.l.s4 1966171168
    %v6311 = vunpack.c.0.s8 %v6310
    %v6312 = vlaneseq
    %v6313 = vshrl.u32 %v6312, 7
    %v6314 = vsub.s32 %v6311, %v6313
    %v6315 = vrot.slane %v6299, %v6314
    %v6317 = vunpack.c.l.s4 1966171168
    %v6318 = vunpack.c.0.s8 %v6317
    %v6319 = vlaneseq
    %v6320 = vshrl.u32 %v6319, 7
    %v6321 = vsub.s32 %v6318, %v6320
    %v6322 = vrot.slane %v6300, %v6321
    %v6324 = vunpack.c.l.s4 1966171168
    %v6325 = vunpack.c.0.s8 %v6324
    %v6326 = vlaneseq
    %v6327 = vshrl.u32 %v6326, 7
    %v6328 = vsub.s32 %v6325, %v6327
    %v6329 = vrot.slane %v6301, %v6328
    %v6330 = vcombine.low %v6308, %v6315
    %v6331 = vcombine.low %v6322, %v6329
    %v6333 = vunpack.c.l.s4 1966171168
    %v6334 = vunpack.c.0.s8 %v6333
    %v6335 = vlaneseq
    %v6336 = vshrl.u32 %v6335, 7
    %v6337 = vsub.s32 %v6334, %v6336
    %v6338 = vrot.slane %v6330, %v6337
    %v6340 = vunpack.c.l.s4 1966171168
    %v6341 = vunpack.c.0.s8 %v6340
    %v6342 = vlaneseq
    %v6343 = vshrl.u32 %v6342, 7
    %v6344 = vsub.s32 %v6341, %v6343
    %v6345 = vrot.slane %v6331, %v6344
    %v6346 = vcombine.low %v6338, %v6345
    %v6347 = vcombine.low %v4217, %v4221
    %v6348 = vcombine.low %v4225, %v4229
    %v6349 = vcombine.low %v4233, %v4237
    %v6350 = vcombine.low %v4241, %v4245
    %v6352 = vunpack.c.l.s4 1966171168
    %v6353 = vunpack.c.0.s8 %v6352
    %v6354 = vlaneseq
    %v6355 = vshrl.u32 %v6354, 7
    %v6356 = vsub.s32 %v6353, %v6355
    %v6357 = vrot.slane %v6347, %v6356
    %v6359 = vunpack.c.l.s4 1966171168
    %v6360 = vunpack.c.0.s8 %v6359
    %v6361 = vlaneseq
    %v6362 = vshrl.u32 %v6361, 7
    %v6363 = vsub.s32 %v6360, %v6362
    %v6364 = vrot.slane %v6348, %v6363
    %v6366 = vunpack.c.l.s4 1966171168
    %v6367 = vunpack.c.0.s8 %v6366
    %v6368 = vlaneseq
    %v6369 = vshrl.u32 %v6368, 7
    %v6370 = vsub.s32 %v6367, %v6369
    %v6371 = vrot.slane %v6349, %v6370
    %v6373 = vunpack.c.l.s4 1966171168
    %v6374 = vunpack.c.0.s8 %v6373
    %v6375 = vlaneseq
    %v6376 = vshrl.u32 %v6375, 7
    %v6377 = vsub.s32 %v6374, %v6376
    %v6378 = vrot.slane %v6350, %v6377
    %v6379 = vcombine.low %v6357, %v6364
    %v6380 = vcombine.low %v6371, %v6378
    %v6382 = vunpack.c.l.s4 1966171168
    %v6383 = vunpack.c.0.s8 %v6382
    %v6384 = vlaneseq
    %v6385 = vshrl.u32 %v6384, 7
    %v6386 = vsub.s32 %v6383, %v6385
    %v6387 = vrot.slane %v6379, %v6386
    %v6389 = vunpack.c.l.s4 1966171168
    %v6390 = vunpack.c.0.s8 %v6389
    %v6391 = vlaneseq
    %v6392 = vshrl.u32 %v6391, 7
    %v6393 = vsub.s32 %v6390, %v6392
    %v6394 = vrot.slane %v6380, %v6393
    %v6395 = vcombine.low %v6387, %v6394
    %v6396 = vcombine.low %v4249, %v4253
    %v6397 = vcombine.low %v4257, %v4261
    %v6398 = vcombine.low %v4265, %v4269
    %v6399 = vcombine.low %v4273, %v4277
    %v6401 = vunpack.c.l.s4 1966171168
    %v6402 = vunpack.c.0.s8 %v6401
    %v6403 = vlaneseq
    %v6404 = vshrl.u32 %v6403, 7
    %v6405 = vsub.s32 %v6402, %v6404
    %v6406 = vrot.slane %v6396, %v6405
    %v6408 = vunpack.c.l.s4 1966171168
    %v6409 = vunpack.c.0.s8 %v6408
    %v6410 = vlaneseq
    %v6411 = vshrl.u32 %v6410, 7
    %v6412 = vsub.s32 %v6409, %v6411
    %v6413 = vrot.slane %v6397, %v6412
    %v6415 = vunpack.c.l.s4 1966171168
    %v6416 = vunpack.c.0.s8 %v6415
    %v6417 = vlaneseq
    %v6418 = vshrl.u32 %v6417, 7
    %v6419 = vsub.s32 %v6416, %v6418
    %v6420 = vrot.slane %v6398, %v6419
    %v6422 = vunpack.c.l.s4 1966171168
    %v6423 = vunpack.c.0.s8 %v6422
    %v6424 = vlaneseq
    %v6425 = vshrl.u32 %v6424, 7
    %v6426 = vsub.s32 %v6423, %v6425
    %v6427 = vrot.slane %v6399, %v6426
    %v6428 = vcombine.low %v6406, %v6413
    %v6429 = vcombine.low %v6420, %v6427
    %v6431 = vunpack.c.l.s4 1966171168
    %v6432 = vunpack.c.0.s8 %v6431
    %v6433 = vlaneseq
    %v6434 = vshrl.u32 %v6433, 7
    %v6435 = vsub.s32 %v6432, %v6434
    %v6436 = vrot.slane %v6428, %v6435
    %v6438 = vunpack.c.l.s4 1966171168
    %v6439 = vunpack.c.0.s8 %v6438
    %v6440 = vlaneseq
    %v6441 = vshrl.u32 %v6440, 7
    %v6442 = vsub.s32 %v6439, %v6441
    %v6443 = vrot.slane %v6429, %v6442
    %v6444 = vcombine.low %v6436, %v6443
    %v6445 = vcombine.low %v4281, %v4285
    %v6446 = vcombine.low %v4289, %v4293
    %v6447 = vcombine.low %v4297, %v4301
    %v6448 = vcombine.low %v4305, %v4309
    %v6450 = vunpack.c.l.s4 1966171168
    %v6451 = vunpack.c.0.s8 %v6450
    %v6452 = vlaneseq
    %v6453 = vshrl.u32 %v6452, 7
    %v6454 = vsub.s32 %v6451, %v6453
    %v6455 = vrot.slane %v6445, %v6454
    %v6457 = vunpack.c.l.s4 1966171168
    %v6458 = vunpack.c.0.s8 %v6457
    %v6459 = vlaneseq
    %v6460 = vshrl.u32 %v6459, 7
    %v6461 = vsub.s32 %v6458, %v6460
    %v6462 = vrot.slane %v6446, %v6461
    %v6464 = vunpack.c.l.s4 1966171168
    %v6465 = vunpack.c.0.s8 %v6464
    %v6466 = vlaneseq
    %v6467 = vshrl.u32 %v6466, 7
    %v6468 = vsub.s32 %v6465, %v6467
    %v6469 = vrot.slane %v6447, %v6468
    %v6471 = vunpack.c.l.s4 1966171168
    %v6472 = vunpack.c.0.s8 %v6471
    %v6473 = vlaneseq
    %v6474 = vshrl.u32 %v6473, 7
    %v6475 = vsub.s32 %v6472, %v6474
    %v6476 = vrot.slane %v6448, %v6475
    %v6477 = vcombine.low %v6455, %v6462
    %v6478 = vcombine.low %v6469, %v6476
    %v6480 = vunpack.c.l.s4 1966171168
    %v6481 = vunpack.c.0.s8 %v6480
    %v6482 = vlaneseq
    %v6483 = vshrl.u32 %v6482, 7
    %v6484 = vsub.s32 %v6481, %v6483
    %v6485 = vrot.slane %v6477, %v6484
    %v6487 = vunpack.c.l.s4 1966171168
    %v6488 = vunpack.c.0.s8 %v6487
    %v6489 = vlaneseq
    %v6490 = vshrl.u32 %v6489, 7
    %v6491 = vsub.s32 %v6488, %v6490
    %v6492 = vrot.slane %v6478, %v6491
    %v6493 = vcombine.low %v6485, %v6492
    %v6494 = vcombine.low %v4313, %v4317
    %v6495 = vcombine.low %v4321, %v4325
    %v6496 = vcombine.low %v4329, %v4333
    %v6497 = vcombine.low %v4337, %v4341
    %v6499 = vunpack.c.l.s4 1966171168
    %v6500 = vunpack.c.0.s8 %v6499
    %v6501 = vlaneseq
    %v6502 = vshrl.u32 %v6501, 7
    %v6503 = vsub.s32 %v6500, %v6502
    %v6504 = vrot.slane %v6494, %v6503
    %v6506 = vunpack.c.l.s4 1966171168
    %v6507 = vunpack.c.0.s8 %v6506
    %v6508 = vlaneseq
    %v6509 = vshrl.u32 %v6508, 7
    %v6510 = vsub.s32 %v6507, %v6509
    %v6511 = vrot.slane %v6495, %v6510
    %v6513 = vunpack.c.l.s4 1966171168
    %v6514 = vunpack.c.0.s8 %v6513
    %v6515 = vlaneseq
    %v6516 = vshrl.u32 %v6515, 7
    %v6517 = vsub.s32 %v6514, %v6516
    %v6518 = vrot.slane %v6496, %v6517
    %v6520 = vunpack.c.l.s4 1966171168
    %v6521 = vunpack.c.0.s8 %v6520
    %v6522 = vlaneseq
    %v6523 = vshrl.u32 %v6522, 7
    %v6524 = vsub.s32 %v6521, %v6523
    %v6525 = vrot.slane %v6497, %v6524
    %v6526 = vcombine.low %v6504, %v6511
    %v6527 = vcombine.low %v6518, %v6525
    %v6529 = vunpack.c.l.s4 1966171168
    %v6530 = vunpack.c.0.s8 %v6529
    %v6531 = vlaneseq
    %v6532 = vshrl.u32 %v6531, 7
    %v6533 = vsub.s32 %v6530, %v6532
    %v6534 = vrot.slane %v6526, %v6533
    %v6536 = vunpack.c.l.s4 1966171168
    %v6537 = vunpack.c.0.s8 %v6536
    %v6538 = vlaneseq
    %v6539 = vshrl.u32 %v6538, 7
    %v6540 = vsub.s32 %v6537, %v6539
    %v6541 = vrot.slane %v6527, %v6540
    %v6542 = vcombine.low %v6534, %v6541
    %v6543 = vcombine.low %v4345, %v4349
    %v6544 = vcombine.low %v4353, %v4357
    %v6545 = vcombine.low %v4361, %v4365
    %v6546 = vcombine.low %v4369, %v4373
    %v6548 = vunpack.c.l.s4 1966171168
    %v6549 = vunpack.c.0.s8 %v6548
    %v6550 = vlaneseq
    %v6551 = vshrl.u32 %v6550, 7
    %v6552 = vsub.s32 %v6549, %v6551
    %v6553 = vrot.slane %v6543, %v6552
    %v6555 = vunpack.c.l.s4 1966171168
    %v6556 = vunpack.c.0.s8 %v6555
    %v6557 = vlaneseq
    %v6558 = vshrl.u32 %v6557, 7
    %v6559 = vsub.s32 %v6556, %v6558
    %v6560 = vrot.slane %v6544, %v6559
    %v6562 = vunpack.c.l.s4 1966171168
    %v6563 = vunpack.c.0.s8 %v6562
    %v6564 = vlaneseq
    %v6565 = vshrl.u32 %v6564, 7
    %v6566 = vsub.s32 %v6563, %v6565
    %v6567 = vrot.slane %v6545, %v6566
    %v6569 = vunpack.c.l.s4 1966171168
    %v6570 = vunpack.c.0.s8 %v6569
    %v6571 = vlaneseq
    %v6572 = vshrl.u32 %v6571, 7
    %v6573 = vsub.s32 %v6570, %v6572
    %v6574 = vrot.slane %v6546, %v6573
    %v6575 = vcombine.low %v6553, %v6560
    %v6576 = vcombine.low %v6567, %v6574
    %v6578 = vunpack.c.l.s4 1966171168
    %v6579 = vunpack.c.0.s8 %v6578
    %v6580 = vlaneseq
    %v6581 = vshrl.u32 %v6580, 7
    %v6582 = vsub.s32 %v6579, %v6581
    %v6583 = vrot.slane %v6575, %v6582
    %v6585 = vunpack.c.l.s4 1966171168
    %v6586 = vunpack.c.0.s8 %v6585
    %v6587 = vlaneseq
    %v6588 = vshrl.u32 %v6587, 7
    %v6589 = vsub.s32 %v6586, %v6588
    %v6590 = vrot.slane %v6576, %v6589
    %v6591 = vcombine.low %v6583, %v6590
    %v6592 = vcombine.low %v4377, %v4381
    %v6593 = vcombine.low %v4385, %v4389
    %v6594 = vcombine.low %v4393, %v4397
    %v6595 = vcombine.low %v4401, %v4405
    %v6597 = vunpack.c.l.s4 1966171168
    %v6598 = vunpack.c.0.s8 %v6597
    %v6599 = vlaneseq
    %v6600 = vshrl.u32 %v6599, 7
    %v6601 = vsub.s32 %v6598, %v6600
    %v6602 = vrot.slane %v6592, %v6601
    %v6604 = vunpack.c.l.s4 1966171168
    %v6605 = vunpack.c.0.s8 %v6604
    %v6606 = vlaneseq
    %v6607 = vshrl.u32 %v6606, 7
    %v6608 = vsub.s32 %v6605, %v6607
    %v6609 = vrot.slane %v6593, %v6608
    %v6611 = vunpack.c.l.s4 1966171168
    %v6612 = vunpack.c.0.s8 %v6611
    %v6613 = vlaneseq
    %v6614 = vshrl.u32 %v6613, 7
    %v6615 = vsub.s32 %v6612, %v6614
    %v6616 = vrot.slane %v6594, %v6615
    %v6618 = vunpack.c.l.s4 1966171168
    %v6619 = vunpack.c.0.s8 %v6618
    %v6620 = vlaneseq
    %v6621 = vshrl.u32 %v6620, 7
    %v6622 = vsub.s32 %v6619, %v6621
    %v6623 = vrot.slane %v6595, %v6622
    %v6624 = vcombine.low %v6602, %v6609
    %v6625 = vcombine.low %v6616, %v6623
    %v6627 = vunpack.c.l.s4 1966171168
    %v6628 = vunpack.c.0.s8 %v6627
    %v6629 = vlaneseq
    %v6630 = vshrl.u32 %v6629, 7
    %v6631 = vsub.s32 %v6628, %v6630
    %v6632 = vrot.slane %v6624, %v6631
    %v6634 = vunpack.c.l.s4 1966171168
    %v6635 = vunpack.c.0.s8 %v6634
    %v6636 = vlaneseq
    %v6637 = vshrl.u32 %v6636, 7
    %v6638 = vsub.s32 %v6635, %v6637
    %v6639 = vrot.slane %v6625, %v6638
    %v6640 = vcombine.low %v6632, %v6639
    %v6641 = vcombine.low %v4409, %v4413
    %v6642 = vcombine.low %v4417, %v4421
    %v6643 = vcombine.low %v4425, %v4429
    %v6644 = vcombine.low %v4433, %v4437
    %v6646 = vunpack.c.l.s4 1966171168
    %v6647 = vunpack.c.0.s8 %v6646
    %v6648 = vlaneseq
    %v6649 = vshrl.u32 %v6648, 7
    %v6650 = vsub.s32 %v6647, %v6649
    %v6651 = vrot.slane %v6641, %v6650
    %v6653 = vunpack.c.l.s4 1966171168
    %v6654 = vunpack.c.0.s8 %v6653
    %v6655 = vlaneseq
    %v6656 = vshrl.u32 %v6655, 7
    %v6657 = vsub.s32 %v6654, %v6656
    %v6658 = vrot.slane %v6642, %v6657
    %v6660 = vunpack.c.l.s4 1966171168
    %v6661 = vunpack.c.0.s8 %v6660
    %v6662 = vlaneseq
    %v6663 = vshrl.u32 %v6662, 7
    %v6664 = vsub.s32 %v6661, %v6663
    %v6665 = vrot.slane %v6643, %v6664
    %v6667 = vunpack.c.l.s4 1966171168
    %v6668 = vunpack.c.0.s8 %v6667
    %v6669 = vlaneseq
    %v6670 = vshrl.u32 %v6669, 7
    %v6671 = vsub.s32 %v6668, %v6670
    %v6672 = vrot.slane %v6644, %v6671
    %v6673 = vcombine.low %v6651, %v6658
    %v6674 = vcombine.low %v6665, %v6672
    %v6676 = vunpack.c.l.s4 1966171168
    %v6677 = vunpack.c.0.s8 %v6676
    %v6678 = vlaneseq
    %v6679 = vshrl.u32 %v6678, 7
    %v6680 = vsub.s32 %v6677, %v6679
    %v6681 = vrot.slane %v6673, %v6680
    %v6683 = vunpack.c.l.s4 1966171168
    %v6684 = vunpack.c.0.s8 %v6683
    %v6685 = vlaneseq
    %v6686 = vshrl.u32 %v6685, 7
    %v6687 = vsub.s32 %v6684, %v6686
    %v6688 = vrot.slane %v6674, %v6687
    %v6689 = vcombine.low %v6681, %v6688
    %v6690 = vcombine.low %v4441, %v4445
    %v6691 = vcombine.low %v4449, %v4453
    %v6692 = vcombine.low %v4457, %v4461
    %v6693 = vcombine.low %v4465, %v4469
    %v6695 = vunpack.c.l.s4 1966171168
    %v6696 = vunpack.c.0.s8 %v6695
    %v6697 = vlaneseq
    %v6698 = vshrl.u32 %v6697, 7
    %v6699 = vsub.s32 %v6696, %v6698
    %v6700 = vrot.slane %v6690, %v6699
    %v6702 = vunpack.c.l.s4 1966171168
    %v6703 = vunpack.c.0.s8 %v6702
    %v6704 = vlaneseq
    %v6705 = vshrl.u32 %v6704, 7
    %v6706 = vsub.s32 %v6703, %v6705
    %v6707 = vrot.slane %v6691, %v6706
    %v6709 = vunpack.c.l.s4 1966171168
    %v6710 = vunpack.c.0.s8 %v6709
    %v6711 = vlaneseq
    %v6712 = vshrl.u32 %v6711, 7
    %v6713 = vsub.s32 %v6710, %v6712
    %v6714 = vrot.slane %v6692, %v6713
    %v6716 = vunpack.c.l.s4 1966171168
    %v6717 = vunpack.c.0.s8 %v6716
    %v6718 = vlaneseq
    %v6719 = vshrl.u32 %v6718, 7
    %v6720 = vsub.s32 %v6717, %v6719
    %v6721 = vrot.slane %v6693, %v6720
    %v6722 = vcombine.low %v6700, %v6707
    %v6723 = vcombine.low %v6714, %v6721
    %v6725 = vunpack.c.l.s4 1966171168
    %v6726 = vunpack.c.0.s8 %v6725
    %v6727 = vlaneseq
    %v6728 = vshrl.u32 %v6727, 7
    %v6729 = vsub.s32 %v6726, %v6728
    %v6730 = vrot.slane %v6722, %v6729
    %v6732 = vunpack.c.l.s4 1966171168
    %v6733 = vunpack.c.0.s8 %v6732
    %v6734 = vlaneseq
    %v6735 = vshrl.u32 %v6734, 7
    %v6736 = vsub.s32 %v6733, %v6735
    %v6737 = vrot.slane %v6723, %v6736
    %v6738 = vcombine.low %v6730, %v6737
    %v6739 = vcombine.low %v4473, %v4477
    %v6740 = vcombine.low %v4481, %v4485
    %v6741 = vcombine.low %v4489, %v4493
    %v6742 = vcombine.low %v4497, %v4501
    %v6744 = vunpack.c.l.s4 1966171168
    %v6745 = vunpack.c.0.s8 %v6744
    %v6746 = vlaneseq
    %v6747 = vshrl.u32 %v6746, 7
    %v6748 = vsub.s32 %v6745, %v6747
    %v6749 = vrot.slane %v6739, %v6748
    %v6751 = vunpack.c.l.s4 1966171168
    %v6752 = vunpack.c.0.s8 %v6751
    %v6753 = vlaneseq
    %v6754 = vshrl.u32 %v6753, 7
    %v6755 = vsub.s32 %v6752, %v6754
    %v6756 = vrot.slane %v6740, %v6755
    %v6758 = vunpack.c.l.s4 1966171168
    %v6759 = vunpack.c.0.s8 %v6758
    %v6760 = vlaneseq
    %v6761 = vshrl.u32 %v6760, 7
    %v6762 = vsub.s32 %v6759, %v6761
    %v6763 = vrot.slane %v6741, %v6762
    %v6765 = vunpack.c.l.s4 1966171168
    %v6766 = vunpack.c.0.s8 %v6765
    %v6767 = vlaneseq
    %v6768 = vshrl.u32 %v6767, 7
    %v6769 = vsub.s32 %v6766, %v6768
    %v6770 = vrot.slane %v6742, %v6769
    %v6771 = vcombine.low %v6749, %v6756
    %v6772 = vcombine.low %v6763, %v6770
    %v6774 = vunpack.c.l.s4 1966171168
    %v6775 = vunpack.c.0.s8 %v6774
    %v6776 = vlaneseq
    %v6777 = vshrl.u32 %v6776, 7
    %v6778 = vsub.s32 %v6775, %v6777
    %v6779 = vrot.slane %v6771, %v6778
    %v6781 = vunpack.c.l.s4 1966171168
    %v6782 = vunpack.c.0.s8 %v6781
    %v6783 = vlaneseq
    %v6784 = vshrl.u32 %v6783, 7
    %v6785 = vsub.s32 %v6782, %v6784
    %v6786 = vrot.slane %v6772, %v6785
    %v6787 = vcombine.low %v6779, %v6786
    %v6788 = vcombine.low %v4505, %v4509
    %v6789 = vcombine.low %v4513, %v4517
    %v6790 = vcombine.low %v4521, %v4525
    %v6791 = vcombine.low %v4529, %v4533
    %v6793 = vunpack.c.l.s4 1966171168
    %v6794 = vunpack.c.0.s8 %v6793
    %v6795 = vlaneseq
    %v6796 = vshrl.u32 %v6795, 7
    %v6797 = vsub.s32 %v6794, %v6796
    %v6798 = vrot.slane %v6788, %v6797
    %v6800 = vunpack.c.l.s4 1966171168
    %v6801 = vunpack.c.0.s8 %v6800
    %v6802 = vlaneseq
    %v6803 = vshrl.u32 %v6802, 7
    %v6804 = vsub.s32 %v6801, %v6803
    %v6805 = vrot.slane %v6789, %v6804
    %v6807 = vunpack.c.l.s4 1966171168
    %v6808 = vunpack.c.0.s8 %v6807
    %v6809 = vlaneseq
    %v6810 = vshrl.u32 %v6809, 7
    %v6811 = vsub.s32 %v6808, %v6810
    %v6812 = vrot.slane %v6790, %v6811
    %v6814 = vunpack.c.l.s4 1966171168
    %v6815 = vunpack.c.0.s8 %v6814
    %v6816 = vlaneseq
    %v6817 = vshrl.u32 %v6816, 7
    %v6818 = vsub.s32 %v6815, %v6817
    %v6819 = vrot.slane %v6791, %v6818
    %v6820 = vcombine.low %v6798, %v6805
    %v6821 = vcombine.low %v6812, %v6819
    %v6823 = vunpack.c.l.s4 1966171168
    %v6824 = vunpack.c.0.s8 %v6823
    %v6825 = vlaneseq
    %v6826 = vshrl.u32 %v6825, 7
    %v6827 = vsub.s32 %v6824, %v6826
    %v6828 = vrot.slane %v6820, %v6827
    %v6830 = vunpack.c.l.s4 1966171168
    %v6831 = vunpack.c.0.s8 %v6830
    %v6832 = vlaneseq
    %v6833 = vshrl.u32 %v6832, 7
    %v6834 = vsub.s32 %v6831, %v6833
    %v6835 = vrot.slane %v6821, %v6834
    %v6836 = vcombine.low %v6828, %v6835
    %v6837 = vcombine.low %v4537, %v4541
    %v6838 = vcombine.low %v4545, %v4549
    %v6839 = vcombine.low %v4553, %v4557
    %v6840 = vcombine.low %v4561, %v4565
    %v6842 = vunpack.c.l.s4 1966171168
    %v6843 = vunpack.c.0.s8 %v6842
    %v6844 = vlaneseq
    %v6845 = vshrl.u32 %v6844, 7
    %v6846 = vsub.s32 %v6843, %v6845
    %v6847 = vrot.slane %v6837, %v6846
    %v6849 = vunpack.c.l.s4 1966171168
    %v6850 = vunpack.c.0.s8 %v6849
    %v6851 = vlaneseq
    %v6852 = vshrl.u32 %v6851, 7
    %v6853 = vsub.s32 %v6850, %v6852
    %v6854 = vrot.slane %v6838, %v6853
    %v6856 = vunpack.c.l.s4 1966171168
    %v6857 = vunpack.c.0.s8 %v6856
    %v6858 = vlaneseq
    %v6859 = vshrl.u32 %v6858, 7
    %v6860 = vsub.s32 %v6857, %v6859
    %v6861 = vrot.slane %v6839, %v6860
    %v6863 = vunpack.c.l.s4 1966171168
    %v6864 = vunpack.c.0.s8 %v6863
    %v6865 = vlaneseq
    %v6866 = vshrl.u32 %v6865, 7
    %v6867 = vsub.s32 %v6864, %v6866
    %v6868 = vrot.slane %v6840, %v6867
    %v6869 = vcombine.low %v6847, %v6854
    %v6870 = vcombine.low %v6861, %v6868
    %v6872 = vunpack.c.l.s4 1966171168
    %v6873 = vunpack.c.0.s8 %v6872
    %v6874 = vlaneseq
    %v6875 = vshrl.u32 %v6874, 7
    %v6876 = vsub.s32 %v6873, %v6875
    %v6877 = vrot.slane %v6869, %v6876
    %v6879 = vunpack.c.l.s4 1966171168
    %v6880 = vunpack.c.0.s8 %v6879
    %v6881 = vlaneseq
    %v6882 = vshrl.u32 %v6881, 7
    %v6883 = vsub.s32 %v6880, %v6882
    %v6884 = vrot.slane %v6870, %v6883
    %v6885 = vcombine.low %v6877, %v6884
    %v6886 = vcombine.low %v4569, %v4573
    %v6887 = vcombine.low %v4577, %v4581
    %v6888 = vcombine.low %v4585, %v4589
    %v6889 = vcombine.low %v4593, %v4597
    %v6891 = vunpack.c.l.s4 1966171168
    %v6892 = vunpack.c.0.s8 %v6891
    %v6893 = vlaneseq
    %v6894 = vshrl.u32 %v6893, 7
    %v6895 = vsub.s32 %v6892, %v6894
    %v6896 = vrot.slane %v6886, %v6895
    %v6898 = vunpack.c.l.s4 1966171168
    %v6899 = vunpack.c.0.s8 %v6898
    %v6900 = vlaneseq
    %v6901 = vshrl.u32 %v6900, 7
    %v6902 = vsub.s32 %v6899, %v6901
    %v6903 = vrot.slane %v6887, %v6902
    %v6905 = vunpack.c.l.s4 1966171168
    %v6906 = vunpack.c.0.s8 %v6905
    %v6907 = vlaneseq
    %v6908 = vshrl.u32 %v6907, 7
    %v6909 = vsub.s32 %v6906, %v6908
    %v6910 = vrot.slane %v6888, %v6909
    %v6912 = vunpack.c.l.s4 1966171168
    %v6913 = vunpack.c.0.s8 %v6912
    %v6914 = vlaneseq
    %v6915 = vshrl.u32 %v6914, 7
    %v6916 = vsub.s32 %v6913, %v6915
    %v6917 = vrot.slane %v6889, %v6916
    %v6918 = vcombine.low %v6896, %v6903
    %v6919 = vcombine.low %v6910, %v6917
    %v6921 = vunpack.c.l.s4 1966171168
    %v6922 = vunpack.c.0.s8 %v6921
    %v6923 = vlaneseq
    %v6924 = vshrl.u32 %v6923, 7
    %v6925 = vsub.s32 %v6922, %v6924
    %v6926 = vrot.slane %v6918, %v6925
    %v6928 = vunpack.c.l.s4 1966171168
    %v6929 = vunpack.c.0.s8 %v6928
    %v6930 = vlaneseq
    %v6931 = vshrl.u32 %v6930, 7
    %v6932 = vsub.s32 %v6929, %v6931
    %v6933 = vrot.slane %v6919, %v6932
    %v6934 = vcombine.low %v6926, %v6933
    %v6935 = vcombine.low %v4601, %v4605
    %v6936 = vcombine.low %v4609, %v4613
    %v6937 = vcombine.low %v4617, %v4621
    %v6938 = vcombine.low %v4625, %v4629
    %v6940 = vunpack.c.l.s4 1966171168
    %v6941 = vunpack.c.0.s8 %v6940
    %v6942 = vlaneseq
    %v6943 = vshrl.u32 %v6942, 7
    %v6944 = vsub.s32 %v6941, %v6943
    %v6945 = vrot.slane %v6935, %v6944
    %v6947 = vunpack.c.l.s4 1966171168
    %v6948 = vunpack.c.0.s8 %v6947
    %v6949 = vlaneseq
    %v6950 = vshrl.u32 %v6949, 7
    %v6951 = vsub.s32 %v6948, %v6950
    %v6952 = vrot.slane %v6936, %v6951
    %v6954 = vunpack.c.l.s4 1966171168
    %v6955 = vunpack.c.0.s8 %v6954
    %v6956 = vlaneseq
    %v6957 = vshrl.u32 %v6956, 7
    %v6958 = vsub.s32 %v6955, %v6957
    %v6959 = vrot.slane %v6937, %v6958
    %v6961 = vunpack.c.l.s4 1966171168
    %v6962 = vunpack.c.0.s8 %v6961
    %v6963 = vlaneseq
    %v6964 = vshrl.u32 %v6963, 7
    %v6965 = vsub.s32 %v6962, %v6964
    %v6966 = vrot.slane %v6938, %v6965
    %v6967 = vcombine.low %v6945, %v6952
    %v6968 = vcombine.low %v6959, %v6966
    %v6970 = vunpack.c.l.s4 1966171168
    %v6971 = vunpack.c.0.s8 %v6970
    %v6972 = vlaneseq
    %v6973 = vshrl.u32 %v6972, 7
    %v6974 = vsub.s32 %v6971, %v6973
    %v6975 = vrot.slane %v6967, %v6974
    %v6977 = vunpack.c.l.s4 1966171168
    %v6978 = vunpack.c.0.s8 %v6977
    %v6979 = vlaneseq
    %v6980 = vshrl.u32 %v6979, 7
    %v6981 = vsub.s32 %v6978, %v6980
    %v6982 = vrot.slane %v6968, %v6981
    %v6983 = vcombine.low %v6975, %v6982
    %v6984 = vcombine.low %v4633, %v4637
    %v6985 = vcombine.low %v4641, %v4645
    %v6986 = vcombine.low %v4649, %v4653
    %v6987 = vcombine.low %v4657, %v4661
    %v6989 = vunpack.c.l.s4 1966171168
    %v6990 = vunpack.c.0.s8 %v6989
    %v6991 = vlaneseq
    %v6992 = vshrl.u32 %v6991, 7
    %v6993 = vsub.s32 %v6990, %v6992
    %v6994 = vrot.slane %v6984, %v6993
    %v6996 = vunpack.c.l.s4 1966171168
    %v6997 = vunpack.c.0.s8 %v6996
    %v6998 = vlaneseq
    %v6999 = vshrl.u32 %v6998, 7
    %v7000 = vsub.s32 %v6997, %v6999
    %v7001 = vrot.slane %v6985, %v7000
    %v7003 = vunpack.c.l.s4 1966171168
    %v7004 = vunpack.c.0.s8 %v7003
    %v7005 = vlaneseq
    %v7006 = vshrl.u32 %v7005, 7
    %v7007 = vsub.s32 %v7004, %v7006
    %v7008 = vrot.slane %v6986, %v7007
    %v7010 = vunpack.c.l.s4 1966171168
    %v7011 = vunpack.c.0.s8 %v7010
    %v7012 = vlaneseq
    %v7013 = vshrl.u32 %v7012, 7
    %v7014 = vsub.s32 %v7011, %v7013
    %v7015 = vrot.slane %v6987, %v7014
    %v7016 = vcombine.low %v6994, %v7001
    %v7017 = vcombine.low %v7008, %v7015
    %v7019 = vunpack.c.l.s4 1966171168
    %v7020 = vunpack.c.0.s8 %v7019
    %v7021 = vlaneseq
    %v7022 = vshrl.u32 %v7021, 7
    %v7023 = vsub.s32 %v7020, %v7022
    %v7024 = vrot.slane %v7016, %v7023
    %v7026 = vunpack.c.l.s4 1966171168
    %v7027 = vunpack.c.0.s8 %v7026
    %v7028 = vlaneseq
    %v7029 = vshrl.u32 %v7028, 7
    %v7030 = vsub.s32 %v7027, %v7029
    %v7031 = vrot.slane %v7017, %v7030
    %v7032 = vcombine.low %v7024, %v7031
    %v7033 = vcombine.low %v4665, %v4669
    %v7034 = vcombine.low %v4673, %v4677
    %v7035 = vcombine.low %v4681, %v4685
    %v7036 = vcombine.low %v4689, %v4693
    %v7038 = vunpack.c.l.s4 1966171168
    %v7039 = vunpack.c.0.s8 %v7038
    %v7040 = vlaneseq
    %v7041 = vshrl.u32 %v7040, 7
    %v7042 = vsub.s32 %v7039, %v7041
    %v7043 = vrot.slane %v7033, %v7042
    %v7045 = vunpack.c.l.s4 1966171168
    %v7046 = vunpack.c.0.s8 %v7045
    %v7047 = vlaneseq
    %v7048 = vshrl.u32 %v7047, 7
    %v7049 = vsub.s32 %v7046, %v7048
    %v7050 = vrot.slane %v7034, %v7049
    %v7052 = vunpack.c.l.s4 1966171168
    %v7053 = vunpack.c.0.s8 %v7052
    %v7054 = vlaneseq
    %v7055 = vshrl.u32 %v7054, 7
    %v7056 = vsub.s32 %v7053, %v7055
    %v7057 = vrot.slane %v7035, %v7056
    %v7059 = vunpack.c.l.s4 1966171168
    %v7060 = vunpack.c.0.s8 %v7059
    %v7061 = vlaneseq
    %v7062 = vshrl.u32 %v7061, 7
    %v7063 = vsub.s32 %v7060, %v7062
    %v7064 = vrot.slane %v7036, %v7063
    %v7065 = vcombine.low %v7043, %v7050
    %v7066 = vcombine.low %v7057, %v7064
    %v7068 = vunpack.c.l.s4 1966171168
    %v7069 = vunpack.c.0.s8 %v7068
    %v7070 = vlaneseq
    %v7071 = vshrl.u32 %v7070, 7
    %v7072 = vsub.s32 %v7069, %v7071
    %v7073 = vrot.slane %v7065, %v7072
    %v7075 = vunpack.c.l.s4 1966171168
    %v7076 = vunpack.c.0.s8 %v7075
    %v7077 = vlaneseq
    %v7078 = vshrl.u32 %v7077, 7
    %v7079 = vsub.s32 %v7076, %v7078
    %v7080 = vrot.slane %v7066, %v7079
    %v7081 = vcombine.low %v7073, %v7080
    %v7082 = vcombine.low %v4697, %v4701
    %v7083 = vcombine.low %v4705, %v4709
    %v7084 = vcombine.low %v4713, %v4717
    %v7085 = vcombine.low %v4721, %v4725
    %v7087 = vunpack.c.l.s4 1966171168
    %v7088 = vunpack.c.0.s8 %v7087
    %v7089 = vlaneseq
    %v7090 = vshrl.u32 %v7089, 7
    %v7091 = vsub.s32 %v7088, %v7090
    %v7092 = vrot.slane %v7082, %v7091
    %v7094 = vunpack.c.l.s4 1966171168
    %v7095 = vunpack.c.0.s8 %v7094
    %v7096 = vlaneseq
    %v7097 = vshrl.u32 %v7096, 7
    %v7098 = vsub.s32 %v7095, %v7097
    %v7099 = vrot.slane %v7083, %v7098
    %v7101 = vunpack.c.l.s4 1966171168
    %v7102 = vunpack.c.0.s8 %v7101
    %v7103 = vlaneseq
    %v7104 = vshrl.u32 %v7103, 7
    %v7105 = vsub.s32 %v7102, %v7104
    %v7106 = vrot.slane %v7084, %v7105
    %v7108 = vunpack.c.l.s4 1966171168
    %v7109 = vunpack.c.0.s8 %v7108
    %v7110 = vlaneseq
    %v7111 = vshrl.u32 %v7110, 7
    %v7112 = vsub.s32 %v7109, %v7111
    %v7113 = vrot.slane %v7085, %v7112
    %v7114 = vcombine.low %v7092, %v7099
    %v7115 = vcombine.low %v7106, %v7113
    %v7117 = vunpack.c.l.s4 1966171168
    %v7118 = vunpack.c.0.s8 %v7117
    %v7119 = vlaneseq
    %v7120 = vshrl.u32 %v7119, 7
    %v7121 = vsub.s32 %v7118, %v7120
    %v7122 = vrot.slane %v7114, %v7121
    %v7124 = vunpack.c.l.s4 1966171168
    %v7125 = vunpack.c.0.s8 %v7124
    %v7126 = vlaneseq
    %v7127 = vshrl.u32 %v7126, 7
    %v7128 = vsub.s32 %v7125, %v7127
    %v7129 = vrot.slane %v7115, %v7128
    %v7130 = vcombine.low %v7122, %v7129
    %v7131 = vcombine.low %v4729, %v4733
    %v7132 = vcombine.low %v4737, %v4741
    %v7133 = vcombine.low %v4745, %v4749
    %v7134 = vcombine.low %v4753, %v4757
    %v7136 = vunpack.c.l.s4 1966171168
    %v7137 = vunpack.c.0.s8 %v7136
    %v7138 = vlaneseq
    %v7139 = vshrl.u32 %v7138, 7
    %v7140 = vsub.s32 %v7137, %v7139
    %v7141 = vrot.slane %v7131, %v7140
    %v7143 = vunpack.c.l.s4 1966171168
    %v7144 = vunpack.c.0.s8 %v7143
    %v7145 = vlaneseq
    %v7146 = vshrl.u32 %v7145, 7
    %v7147 = vsub.s32 %v7144, %v7146
    %v7148 = vrot.slane %v7132, %v7147
    %v7150 = vunpack.c.l.s4 1966171168
    %v7151 = vunpack.c.0.s8 %v7150
    %v7152 = vlaneseq
    %v7153 = vshrl.u32 %v7152, 7
    %v7154 = vsub.s32 %v7151, %v7153
    %v7155 = vrot.slane %v7133, %v7154
    %v7157 = vunpack.c.l.s4 1966171168
    %v7158 = vunpack.c.0.s8 %v7157
    %v7159 = vlaneseq
    %v7160 = vshrl.u32 %v7159, 7
    %v7161 = vsub.s32 %v7158, %v7160
    %v7162 = vrot.slane %v7134, %v7161
    %v7163 = vcombine.low %v7141, %v7148
    %v7164 = vcombine.low %v7155, %v7162
    %v7166 = vunpack.c.l.s4 1966171168
    %v7167 = vunpack.c.0.s8 %v7166
    %v7168 = vlaneseq
    %v7169 = vshrl.u32 %v7168, 7
    %v7170 = vsub.s32 %v7167, %v7169
    %v7171 = vrot.slane %v7163, %v7170
    %v7173 = vunpack.c.l.s4 1966171168
    %v7174 = vunpack.c.0.s8 %v7173
    %v7175 = vlaneseq
    %v7176 = vshrl.u32 %v7175, 7
    %v7177 = vsub.s32 %v7174, %v7176
    %v7178 = vrot.slane %v7164, %v7177
    %v7179 = vcombine.low %v7171, %v7178
    %v7180 = vcombine.low %v4761, %v4765
    %v7181 = vcombine.low %v4769, %v4773
    %v7182 = vcombine.low %v4777, %v4781
    %v7183 = vcombine.low %v4785, %v4789
    %v7185 = vunpack.c.l.s4 1966171168
    %v7186 = vunpack.c.0.s8 %v7185
    %v7187 = vlaneseq
    %v7188 = vshrl.u32 %v7187, 7
    %v7189 = vsub.s32 %v7186, %v7188
    %v7190 = vrot.slane %v7180, %v7189
    %v7192 = vunpack.c.l.s4 1966171168
    %v7193 = vunpack.c.0.s8 %v7192
    %v7194 = vlaneseq
    %v7195 = vshrl.u32 %v7194, 7
    %v7196 = vsub.s32 %v7193, %v7195
    %v7197 = vrot.slane %v7181, %v7196
    %v7199 = vunpack.c.l.s4 1966171168
    %v7200 = vunpack.c.0.s8 %v7199
    %v7201 = vlaneseq
    %v7202 = vshrl.u32 %v7201, 7
    %v7203 = vsub.s32 %v7200, %v7202
    %v7204 = vrot.slane %v7182, %v7203
    %v7206 = vunpack.c.l.s4 1966171168
    %v7207 = vunpack.c.0.s8 %v7206
    %v7208 = vlaneseq
    %v7209 = vshrl.u32 %v7208, 7
    %v7210 = vsub.s32 %v7207, %v7209
    %v7211 = vrot.slane %v7183, %v7210
    %v7212 = vcombine.low %v7190, %v7197
    %v7213 = vcombine.low %v7204, %v7211
    %v7215 = vunpack.c.l.s4 1966171168
    %v7216 = vunpack.c.0.s8 %v7215
    %v7217 = vlaneseq
    %v7218 = vshrl.u32 %v7217, 7
    %v7219 = vsub.s32 %v7216, %v7218
    %v7220 = vrot.slane %v7212, %v7219
    %v7222 = vunpack.c.l.s4 1966171168
    %v7223 = vunpack.c.0.s8 %v7222
    %v7224 = vlaneseq
    %v7225 = vshrl.u32 %v7224, 7
    %v7226 = vsub.s32 %v7223, %v7225
    %v7227 = vrot.slane %v7213, %v7226
    %v7228 = vcombine.low %v7220, %v7227
    %v7229 = vcombine.low %v4793, %v4797
    %v7230 = vcombine.low %v4801, %v4805
    %v7231 = vcombine.low %v4809, %v4813
    %v7232 = vcombine.low %v4817, %v4821
    %v7234 = vunpack.c.l.s4 1966171168
    %v7235 = vunpack.c.0.s8 %v7234
    %v7236 = vlaneseq
    %v7237 = vshrl.u32 %v7236, 7
    %v7238 = vsub.s32 %v7235, %v7237
    %v7239 = vrot.slane %v7229, %v7238
    %v7241 = vunpack.c.l.s4 1966171168
    %v7242 = vunpack.c.0.s8 %v7241
    %v7243 = vlaneseq
    %v7244 = vshrl.u32 %v7243, 7
    %v7245 = vsub.s32 %v7242, %v7244
    %v7246 = vrot.slane %v7230, %v7245
    %v7248 = vunpack.c.l.s4 1966171168
    %v7249 = vunpack.c.0.s8 %v7248
    %v7250 = vlaneseq
    %v7251 = vshrl.u32 %v7250, 7
    %v7252 = vsub.s32 %v7249, %v7251
    %v7253 = vrot.slane %v7231, %v7252
    %v7255 = vunpack.c.l.s4 1966171168
    %v7256 = vunpack.c.0.s8 %v7255
    %v7257 = vlaneseq
    %v7258 = vshrl.u32 %v7257, 7
    %v7259 = vsub.s32 %v7256, %v7258
    %v7260 = vrot.slane %v7232, %v7259
    %v7261 = vcombine.low %v7239, %v7246
    %v7262 = vcombine.low %v7253, %v7260
    %v7264 = vunpack.c.l.s4 1966171168
    %v7265 = vunpack.c.0.s8 %v7264
    %v7266 = vlaneseq
    %v7267 = vshrl.u32 %v7266, 7
    %v7268 = vsub.s32 %v7265, %v7267
    %v7269 = vrot.slane %v7261, %v7268
    %v7271 = vunpack.c.l.s4 1966171168
    %v7272 = vunpack.c.0.s8 %v7271
    %v7273 = vlaneseq
    %v7274 = vshrl.u32 %v7273, 7
    %v7275 = vsub.s32 %v7272, %v7274
    %v7276 = vrot.slane %v7262, %v7275
    %v7277 = vcombine.low %v7269, %v7276
    %v7278 = vcombine.low %v4825, %v4829
    %v7279 = vcombine.low %v4833, %v4837
    %v7280 = vcombine.low %v4841, %v4845
    %v7281 = vcombine.low %v4849, %v4853
    %v7283 = vunpack.c.l.s4 1966171168
    %v7284 = vunpack.c.0.s8 %v7283
    %v7285 = vlaneseq
    %v7286 = vshrl.u32 %v7285, 7
    %v7287 = vsub.s32 %v7284, %v7286
    %v7288 = vrot.slane %v7278, %v7287
    %v7290 = vunpack.c.l.s4 1966171168
    %v7291 = vunpack.c.0.s8 %v7290
    %v7292 = vlaneseq
    %v7293 = vshrl.u32 %v7292, 7
    %v7294 = vsub.s32 %v7291, %v7293
    %v7295 = vrot.slane %v7279, %v7294
    %v7297 = vunpack.c.l.s4 1966171168
    %v7298 = vunpack.c.0.s8 %v7297
    %v7299 = vlaneseq
    %v7300 = vshrl.u32 %v7299, 7
    %v7301 = vsub.s32 %v7298, %v7300
    %v7302 = vrot.slane %v7280, %v7301
    %v7304 = vunpack.c.l.s4 1966171168
    %v7305 = vunpack.c.0.s8 %v7304
    %v7306 = vlaneseq
    %v7307 = vshrl.u32 %v7306, 7
    %v7308 = vsub.s32 %v7305, %v7307
    %v7309 = vrot.slane %v7281, %v7308
    %v7310 = vcombine.low %v7288, %v7295
    %v7311 = vcombine.low %v7302, %v7309
    %v7313 = vunpack.c.l.s4 1966171168
    %v7314 = vunpack.c.0.s8 %v7313
    %v7315 = vlaneseq
    %v7316 = vshrl.u32 %v7315, 7
    %v7317 = vsub.s32 %v7314, %v7316
    %v7318 = vrot.slane %v7310, %v7317
    %v7320 = vunpack.c.l.s4 1966171168
    %v7321 = vunpack.c.0.s8 %v7320
    %v7322 = vlaneseq
    %v7323 = vshrl.u32 %v7322, 7
    %v7324 = vsub.s32 %v7321, %v7323
    %v7325 = vrot.slane %v7311, %v7324
    %v7326 = vcombine.low %v7318, %v7325
    %v7327 = vcombine.low %v4857, %v4861
    %v7328 = vcombine.low %v4865, %v4869
    %v7329 = vcombine.low %v4873, %v4877
    %v7330 = vcombine.low %v4881, %v4885
    %v7332 = vunpack.c.l.s4 1966171168
    %v7333 = vunpack.c.0.s8 %v7332
    %v7334 = vlaneseq
    %v7335 = vshrl.u32 %v7334, 7
    %v7336 = vsub.s32 %v7333, %v7335
    %v7337 = vrot.slane %v7327, %v7336
    %v7339 = vunpack.c.l.s4 1966171168
    %v7340 = vunpack.c.0.s8 %v7339
    %v7341 = vlaneseq
    %v7342 = vshrl.u32 %v7341, 7
    %v7343 = vsub.s32 %v7340, %v7342
    %v7344 = vrot.slane %v7328, %v7343
    %v7346 = vunpack.c.l.s4 1966171168
    %v7347 = vunpack.c.0.s8 %v7346
    %v7348 = vlaneseq
    %v7349 = vshrl.u32 %v7348, 7
    %v7350 = vsub.s32 %v7347, %v7349
    %v7351 = vrot.slane %v7329, %v7350
    %v7353 = vunpack.c.l.s4 1966171168
    %v7354 = vunpack.c.0.s8 %v7353
    %v7355 = vlaneseq
    %v7356 = vshrl.u32 %v7355, 7
    %v7357 = vsub.s32 %v7354, %v7356
    %v7358 = vrot.slane %v7330, %v7357
    %v7359 = vcombine.low %v7337, %v7344
    %v7360 = vcombine.low %v7351, %v7358
    %v7362 = vunpack.c.l.s4 1966171168
    %v7363 = vunpack.c.0.s8 %v7362
    %v7364 = vlaneseq
    %v7365 = vshrl.u32 %v7364, 7
    %v7366 = vsub.s32 %v7363, %v7365
    %v7367 = vrot.slane %v7359, %v7366
    %v7369 = vunpack.c.l.s4 1966171168
    %v7370 = vunpack.c.0.s8 %v7369
    %v7371 = vlaneseq
    %v7372 = vshrl.u32 %v7371, 7
    %v7373 = vsub.s32 %v7370, %v7372
    %v7374 = vrot.slane %v7360, %v7373
    %v7375 = vcombine.low %v7367, %v7374
    %v7376 = vcombine.low %v4889, %v4893
    %v7377 = vcombine.low %v4897, %v4901
    %v7378 = vcombine.low %v4905, %v4909
    %v7379 = vcombine.low %v4913, %v4917
    %v7381 = vunpack.c.l.s4 1966171168
    %v7382 = vunpack.c.0.s8 %v7381
    %v7383 = vlaneseq
    %v7384 = vshrl.u32 %v7383, 7
    %v7385 = vsub.s32 %v7382, %v7384
    %v7386 = vrot.slane %v7376, %v7385
    %v7388 = vunpack.c.l.s4 1966171168
    %v7389 = vunpack.c.0.s8 %v7388
    %v7390 = vlaneseq
    %v7391 = vshrl.u32 %v7390, 7
    %v7392 = vsub.s32 %v7389, %v7391
    %v7393 = vrot.slane %v7377, %v7392
    %v7395 = vunpack.c.l.s4 1966171168
    %v7396 = vunpack.c.0.s8 %v7395
    %v7397 = vlaneseq
    %v7398 = vshrl.u32 %v7397, 7
    %v7399 = vsub.s32 %v7396, %v7398
    %v7400 = vrot.slane %v7378, %v7399
    %v7402 = vunpack.c.l.s4 1966171168
    %v7403 = vunpack.c.0.s8 %v7402
    %v7404 = vlaneseq
    %v7405 = vshrl.u32 %v7404, 7
    %v7406 = vsub.s32 %v7403, %v7405
    %v7407 = vrot.slane %v7379, %v7406
    %v7408 = vcombine.low %v7386, %v7393
    %v7409 = vcombine.low %v7400, %v7407
    %v7411 = vunpack.c.l.s4 1966171168
    %v7412 = vunpack.c.0.s8 %v7411
    %v7413 = vlaneseq
    %v7414 = vshrl.u32 %v7413, 7
    %v7415 = vsub.s32 %v7412, %v7414
    %v7416 = vrot.slane %v7408, %v7415
    %v7418 = vunpack.c.l.s4 1966171168
    %v7419 = vunpack.c.0.s8 %v7418
    %v7420 = vlaneseq
    %v7421 = vshrl.u32 %v7420, 7
    %v7422 = vsub.s32 %v7419, %v7421
    %v7423 = vrot.slane %v7409, %v7422
    %v7424 = vcombine.low %v7416, %v7423
    %v7425 = vcombine.low %v4921, %v4925
    %v7426 = vcombine.low %v4929, %v4933
    %v7427 = vcombine.low %v4937, %v4941
    %v7428 = vcombine.low %v4945, %v4949
    %v7430 = vunpack.c.l.s4 1966171168
    %v7431 = vunpack.c.0.s8 %v7430
    %v7432 = vlaneseq
    %v7433 = vshrl.u32 %v7432, 7
    %v7434 = vsub.s32 %v7431, %v7433
    %v7435 = vrot.slane %v7425, %v7434
    %v7437 = vunpack.c.l.s4 1966171168
    %v7438 = vunpack.c.0.s8 %v7437
    %v7439 = vlaneseq
    %v7440 = vshrl.u32 %v7439, 7
    %v7441 = vsub.s32 %v7438, %v7440
    %v7442 = vrot.slane %v7426, %v7441
    %v7444 = vunpack.c.l.s4 1966171168
    %v7445 = vunpack.c.0.s8 %v7444
    %v7446 = vlaneseq
    %v7447 = vshrl.u32 %v7446, 7
    %v7448 = vsub.s32 %v7445, %v7447
    %v7449 = vrot.slane %v7427, %v7448
    %v7451 = vunpack.c.l.s4 1966171168
    %v7452 = vunpack.c.0.s8 %v7451
    %v7453 = vlaneseq
    %v7454 = vshrl.u32 %v7453, 7
    %v7455 = vsub.s32 %v7452, %v7454
    %v7456 = vrot.slane %v7428, %v7455
    %v7457 = vcombine.low %v7435, %v7442
    %v7458 = vcombine.low %v7449, %v7456
    %v7460 = vunpack.c.l.s4 1966171168
    %v7461 = vunpack.c.0.s8 %v7460
    %v7462 = vlaneseq
    %v7463 = vshrl.u32 %v7462, 7
    %v7464 = vsub.s32 %v7461, %v7463
    %v7465 = vrot.slane %v7457, %v7464
    %v7467 = vunpack.c.l.s4 1966171168
    %v7468 = vunpack.c.0.s8 %v7467
    %v7469 = vlaneseq
    %v7470 = vshrl.u32 %v7469, 7
    %v7471 = vsub.s32 %v7468, %v7470
    %v7472 = vrot.slane %v7458, %v7471
    %v7473 = vcombine.low %v7465, %v7472
    %v7474 = vcombine.low %v4953, %v4957
    %v7475 = vcombine.low %v4961, %v4965
    %v7476 = vcombine.low %v4969, %v4973
    %v7477 = vcombine.low %v4977, %v4981
    %v7479 = vunpack.c.l.s4 1966171168
    %v7480 = vunpack.c.0.s8 %v7479
    %v7481 = vlaneseq
    %v7482 = vshrl.u32 %v7481, 7
    %v7483 = vsub.s32 %v7480, %v7482
    %v7484 = vrot.slane %v7474, %v7483
    %v7486 = vunpack.c.l.s4 1966171168
    %v7487 = vunpack.c.0.s8 %v7486
    %v7488 = vlaneseq
    %v7489 = vshrl.u32 %v7488, 7
    %v7490 = vsub.s32 %v7487, %v7489
    %v7491 = vrot.slane %v7475, %v7490
    %v7493 = vunpack.c.l.s4 1966171168
    %v7494 = vunpack.c.0.s8 %v7493
    %v7495 = vlaneseq
    %v7496 = vshrl.u32 %v7495, 7
    %v7497 = vsub.s32 %v7494, %v7496
    %v7498 = vrot.slane %v7476, %v7497
    %v7500 = vunpack.c.l.s4 1966171168
    %v7501 = vunpack.c.0.s8 %v7500
    %v7502 = vlaneseq
    %v7503 = vshrl.u32 %v7502, 7
    %v7504 = vsub.s32 %v7501, %v7503
    %v7505 = vrot.slane %v7477, %v7504
    %v7506 = vcombine.low %v7484, %v7491
    %v7507 = vcombine.low %v7498, %v7505
    %v7509 = vunpack.c.l.s4 1966171168
    %v7510 = vunpack.c.0.s8 %v7509
    %v7511 = vlaneseq
    %v7512 = vshrl.u32 %v7511, 7
    %v7513 = vsub.s32 %v7510, %v7512
    %v7514 = vrot.slane %v7506, %v7513
    %v7516 = vunpack.c.l.s4 1966171168
    %v7517 = vunpack.c.0.s8 %v7516
    %v7518 = vlaneseq
    %v7519 = vshrl.u32 %v7518, 7
    %v7520 = vsub.s32 %v7517, %v7519
    %v7521 = vrot.slane %v7507, %v7520
    %v7522 = vcombine.low %v7514, %v7521
    %v7523 = vcombine.low %v4985, %v4989
    %v7524 = vcombine.low %v4993, %v4997
    %v7525 = vcombine.low %v5001, %v5005
    %v7526 = vcombine.low %v5009, %v5013
    %v7528 = vunpack.c.l.s4 1966171168
    %v7529 = vunpack.c.0.s8 %v7528
    %v7530 = vlaneseq
    %v7531 = vshrl.u32 %v7530, 7
    %v7532 = vsub.s32 %v7529, %v7531
    %v7533 = vrot.slane %v7523, %v7532
    %v7535 = vunpack.c.l.s4 1966171168
    %v7536 = vunpack.c.0.s8 %v7535
    %v7537 = vlaneseq
    %v7538 = vshrl.u32 %v7537, 7
    %v7539 = vsub.s32 %v7536, %v7538
    %v7540 = vrot.slane %v7524, %v7539
    %v7542 = vunpack.c.l.s4 1966171168
    %v7543 = vunpack.c.0.s8 %v7542
    %v7544 = vlaneseq
    %v7545 = vshrl.u32 %v7544, 7
    %v7546 = vsub.s32 %v7543, %v7545
    %v7547 = vrot.slane %v7525, %v7546
    %v7549 = vunpack.c.l.s4 1966171168
    %v7550 = vunpack.c.0.s8 %v7549
    %v7551 = vlaneseq
    %v7552 = vshrl.u32 %v7551, 7
    %v7553 = vsub.s32 %v7550, %v7552
    %v7554 = vrot.slane %v7526, %v7553
    %v7555 = vcombine.low %v7533, %v7540
    %v7556 = vcombine.low %v7547, %v7554
    %v7558 = vunpack.c.l.s4 1966171168
    %v7559 = vunpack.c.0.s8 %v7558
    %v7560 = vlaneseq
    %v7561 = vshrl.u32 %v7560, 7
    %v7562 = vsub.s32 %v7559, %v7561
    %v7563 = vrot.slane %v7555, %v7562
    %v7565 = vunpack.c.l.s4 1966171168
    %v7566 = vunpack.c.0.s8 %v7565
    %v7567 = vlaneseq
    %v7568 = vshrl.u32 %v7567, 7
    %v7569 = vsub.s32 %v7566, %v7568
    %v7570 = vrot.slane %v7556, %v7569
    %v7571 = vcombine.low %v7563, %v7570
    %v7572 = vcombine.low %v5017, %v5021
    %v7573 = vcombine.low %v5025, %v5029
    %v7574 = vcombine.low %v5033, %v5037
    %v7575 = vcombine.low %v5041, %v5045
    %v7577 = vunpack.c.l.s4 1966171168
    %v7578 = vunpack.c.0.s8 %v7577
    %v7579 = vlaneseq
    %v7580 = vshrl.u32 %v7579, 7
    %v7581 = vsub.s32 %v7578, %v7580
    %v7582 = vrot.slane %v7572, %v7581
    %v7584 = vunpack.c.l.s4 1966171168
    %v7585 = vunpack.c.0.s8 %v7584
    %v7586 = vlaneseq
    %v7587 = vshrl.u32 %v7586, 7
    %v7588 = vsub.s32 %v7585, %v7587
    %v7589 = vrot.slane %v7573, %v7588
    %v7591 = vunpack.c.l.s4 1966171168
    %v7592 = vunpack.c.0.s8 %v7591
    %v7593 = vlaneseq
    %v7594 = vshrl.u32 %v7593, 7
    %v7595 = vsub.s32 %v7592, %v7594
    %v7596 = vrot.slane %v7574, %v7595
    %v7598 = vunpack.c.l.s4 1966171168
    %v7599 = vunpack.c.0.s8 %v7598
    %v7600 = vlaneseq
    %v7601 = vshrl.u32 %v7600, 7
    %v7602 = vsub.s32 %v7599, %v7601
    %v7603 = vrot.slane %v7575, %v7602
    %v7604 = vcombine.low %v7582, %v7589
    %v7605 = vcombine.low %v7596, %v7603
    %v7607 = vunpack.c.l.s4 1966171168
    %v7608 = vunpack.c.0.s8 %v7607
    %v7609 = vlaneseq
    %v7610 = vshrl.u32 %v7609, 7
    %v7611 = vsub.s32 %v7608, %v7610
    %v7612 = vrot.slane %v7604, %v7611
    %v7614 = vunpack.c.l.s4 1966171168
    %v7615 = vunpack.c.0.s8 %v7614
    %v7616 = vlaneseq
    %v7617 = vshrl.u32 %v7616, 7
    %v7618 = vsub.s32 %v7615, %v7617
    %v7619 = vrot.slane %v7605, %v7618
    %v7620 = vcombine.low %v7612, %v7619
    %v7621 = vcombine.low %v5049, %v5053
    %v7622 = vcombine.low %v5057, %v5061
    %v7623 = vcombine.low %v5065, %v5069
    %v7624 = vcombine.low %v5073, %v5077
    %v7626 = vunpack.c.l.s4 1966171168
    %v7627 = vunpack.c.0.s8 %v7626
    %v7628 = vlaneseq
    %v7629 = vshrl.u32 %v7628, 7
    %v7630 = vsub.s32 %v7627, %v7629
    %v7631 = vrot.slane %v7621, %v7630
    %v7633 = vunpack.c.l.s4 1966171168
    %v7634 = vunpack.c.0.s8 %v7633
    %v7635 = vlaneseq
    %v7636 = vshrl.u32 %v7635, 7
    %v7637 = vsub.s32 %v7634, %v7636
    %v7638 = vrot.slane %v7622, %v7637
    %v7640 = vunpack.c.l.s4 1966171168
    %v7641 = vunpack.c.0.s8 %v7640
    %v7642 = vlaneseq
    %v7643 = vshrl.u32 %v7642, 7
    %v7644 = vsub.s32 %v7641, %v7643
    %v7645 = vrot.slane %v7623, %v7644
    %v7647 = vunpack.c.l.s4 1966171168
    %v7648 = vunpack.c.0.s8 %v7647
    %v7649 = vlaneseq
    %v7650 = vshrl.u32 %v7649, 7
    %v7651 = vsub.s32 %v7648, %v7650
    %v7652 = vrot.slane %v7624, %v7651
    %v7653 = vcombine.low %v7631, %v7638
    %v7654 = vcombine.low %v7645, %v7652
    %v7656 = vunpack.c.l.s4 1966171168
    %v7657 = vunpack.c.0.s8 %v7656
    %v7658 = vlaneseq
    %v7659 = vshrl.u32 %v7658, 7
    %v7660 = vsub.s32 %v7657, %v7659
    %v7661 = vrot.slane %v7653, %v7660
    %v7663 = vunpack.c.l.s4 1966171168
    %v7664 = vunpack.c.0.s8 %v7663
    %v7665 = vlaneseq
    %v7666 = vshrl.u32 %v7665, 7
    %v7667 = vsub.s32 %v7664, %v7666
    %v7668 = vrot.slane %v7654, %v7667
    %v7669 = vcombine.low %v7661, %v7668
    %v7670 = vcombine.low %v5081, %v5085
    %v7671 = vcombine.low %v5089, %v5093
    %v7672 = vcombine.low %v5097, %v5101
    %v7673 = vcombine.low %v5105, %v5109
    %v7675 = vunpack.c.l.s4 1966171168
    %v7676 = vunpack.c.0.s8 %v7675
    %v7677 = vlaneseq
    %v7678 = vshrl.u32 %v7677, 7
    %v7679 = vsub.s32 %v7676, %v7678
    %v7680 = vrot.slane %v7670, %v7679
    %v7682 = vunpack.c.l.s4 1966171168
    %v7683 = vunpack.c.0.s8 %v7682
    %v7684 = vlaneseq
    %v7685 = vshrl.u32 %v7684, 7
    %v7686 = vsub.s32 %v7683, %v7685
    %v7687 = vrot.slane %v7671, %v7686
    %v7689 = vunpack.c.l.s4 1966171168
    %v7690 = vunpack.c.0.s8 %v7689
    %v7691 = vlaneseq
    %v7692 = vshrl.u32 %v7691, 7
    %v7693 = vsub.s32 %v7690, %v7692
    %v7694 = vrot.slane %v7672, %v7693
    %v7696 = vunpack.c.l.s4 1966171168
    %v7697 = vunpack.c.0.s8 %v7696
    %v7698 = vlaneseq
    %v7699 = vshrl.u32 %v7698, 7
    %v7700 = vsub.s32 %v7697, %v7699
    %v7701 = vrot.slane %v7673, %v7700
    %v7702 = vcombine.low %v7680, %v7687
    %v7703 = vcombine.low %v7694, %v7701
    %v7705 = vunpack.c.l.s4 1966171168
    %v7706 = vunpack.c.0.s8 %v7705
    %v7707 = vlaneseq
    %v7708 = vshrl.u32 %v7707, 7
    %v7709 = vsub.s32 %v7706, %v7708
    %v7710 = vrot.slane %v7702, %v7709
    %v7712 = vunpack.c.l.s4 1966171168
    %v7713 = vunpack.c.0.s8 %v7712
    %v7714 = vlaneseq
    %v7715 = vshrl.u32 %v7714, 7
    %v7716 = vsub.s32 %v7713, %v7715
    %v7717 = vrot.slane %v7703, %v7716
    %v7718 = vcombine.low %v7710, %v7717
    %v7719 = vcombine.low %v5113, %v5117
    %v7720 = vcombine.low %v5121, %v5125
    %v7721 = vcombine.low %v5129, %v5133
    %v7722 = vcombine.low %v5137, %v5141
    %v7724 = vunpack.c.l.s4 1966171168
    %v7725 = vunpack.c.0.s8 %v7724
    %v7726 = vlaneseq
    %v7727 = vshrl.u32 %v7726, 7
    %v7728 = vsub.s32 %v7725, %v7727
    %v7729 = vrot.slane %v7719, %v7728
    %v7731 = vunpack.c.l.s4 1966171168
    %v7732 = vunpack.c.0.s8 %v7731
    %v7733 = vlaneseq
    %v7734 = vshrl.u32 %v7733, 7
    %v7735 = vsub.s32 %v7732, %v7734
    %v7736 = vrot.slane %v7720, %v7735
    %v7738 = vunpack.c.l.s4 1966171168
    %v7739 = vunpack.c.0.s8 %v7738
    %v7740 = vlaneseq
    %v7741 = vshrl.u32 %v7740, 7
    %v7742 = vsub.s32 %v7739, %v7741
    %v7743 = vrot.slane %v7721, %v7742
    %v7745 = vunpack.c.l.s4 1966171168
    %v7746 = vunpack.c.0.s8 %v7745
    %v7747 = vlaneseq
    %v7748 = vshrl.u32 %v7747, 7
    %v7749 = vsub.s32 %v7746, %v7748
    %v7750 = vrot.slane %v7722, %v7749
    %v7751 = vcombine.low %v7729, %v7736
    %v7752 = vcombine.low %v7743, %v7750
    %v7754 = vunpack.c.l.s4 1966171168
    %v7755 = vunpack.c.0.s8 %v7754
    %v7756 = vlaneseq
    %v7757 = vshrl.u32 %v7756, 7
    %v7758 = vsub.s32 %v7755, %v7757
    %v7759 = vrot.slane %v7751, %v7758
    %v7761 = vunpack.c.l.s4 1966171168
    %v7762 = vunpack.c.0.s8 %v7761
    %v7763 = vlaneseq
    %v7764 = vshrl.u32 %v7763, 7
    %v7765 = vsub.s32 %v7762, %v7764
    %v7766 = vrot.slane %v7752, %v7765
    %v7767 = vcombine.low %v7759, %v7766
    %v7768 = vcombine.low %v5145, %v5149
    %v7769 = vcombine.low %v5153, %v5157
    %v7770 = vcombine.low %v5161, %v5165
    %v7771 = vcombine.low %v5169, %v5173
    %v7773 = vunpack.c.l.s4 1966171168
    %v7774 = vunpack.c.0.s8 %v7773
    %v7775 = vlaneseq
    %v7776 = vshrl.u32 %v7775, 7
    %v7777 = vsub.s32 %v7774, %v7776
    %v7778 = vrot.slane %v7768, %v7777
    %v7780 = vunpack.c.l.s4 1966171168
    %v7781 = vunpack.c.0.s8 %v7780
    %v7782 = vlaneseq
    %v7783 = vshrl.u32 %v7782, 7
    %v7784 = vsub.s32 %v7781, %v7783
    %v7785 = vrot.slane %v7769, %v7784
    %v7787 = vunpack.c.l.s4 1966171168
    %v7788 = vunpack.c.0.s8 %v7787
    %v7789 = vlaneseq
    %v7790 = vshrl.u32 %v7789, 7
    %v7791 = vsub.s32 %v7788, %v7790
    %v7792 = vrot.slane %v7770, %v7791
    %v7794 = vunpack.c.l.s4 1966171168
    %v7795 = vunpack.c.0.s8 %v7794
    %v7796 = vlaneseq
    %v7797 = vshrl.u32 %v7796, 7
    %v7798 = vsub.s32 %v7795, %v7797
    %v7799 = vrot.slane %v7771, %v7798
    %v7800 = vcombine.low %v7778, %v7785
    %v7801 = vcombine.low %v7792, %v7799
    %v7803 = vunpack.c.l.s4 1966171168
    %v7804 = vunpack.c.0.s8 %v7803
    %v7805 = vlaneseq
    %v7806 = vshrl.u32 %v7805, 7
    %v7807 = vsub.s32 %v7804, %v7806
    %v7808 = vrot.slane %v7800, %v7807
    %v7810 = vunpack.c.l.s4 1966171168
    %v7811 = vunpack.c.0.s8 %v7810
    %v7812 = vlaneseq
    %v7813 = vshrl.u32 %v7812, 7
    %v7814 = vsub.s32 %v7811, %v7813
    %v7815 = vrot.slane %v7801, %v7814
    %v7816 = vcombine.low %v7808, %v7815
    %v7817 = vcombine.low %v5177, %v5181
    %v7818 = vcombine.low %v5185, %v5189
    %v7819 = vcombine.low %v5193, %v5197
    %v7820 = vcombine.low %v5201, %v5205
    %v7822 = vunpack.c.l.s4 1966171168
    %v7823 = vunpack.c.0.s8 %v7822
    %v7824 = vlaneseq
    %v7825 = vshrl.u32 %v7824, 7
    %v7826 = vsub.s32 %v7823, %v7825
    %v7827 = vrot.slane %v7817, %v7826
    %v7829 = vunpack.c.l.s4 1966171168
    %v7830 = vunpack.c.0.s8 %v7829
    %v7831 = vlaneseq
    %v7832 = vshrl.u32 %v7831, 7
    %v7833 = vsub.s32 %v7830, %v7832
    %v7834 = vrot.slane %v7818, %v7833
    %v7836 = vunpack.c.l.s4 1966171168
    %v7837 = vunpack.c.0.s8 %v7836
    %v7838 = vlaneseq
    %v7839 = vshrl.u32 %v7838, 7
    %v7840 = vsub.s32 %v7837, %v7839
    %v7841 = vrot.slane %v7819, %v7840
    %v7843 = vunpack.c.l.s4 1966171168
    %v7844 = vunpack.c.0.s8 %v7843
    %v7845 = vlaneseq
    %v7846 = vshrl.u32 %v7845, 7
    %v7847 = vsub.s32 %v7844, %v7846
    %v7848 = vrot.slane %v7820, %v7847
    %v7849 = vcombine.low %v7827, %v7834
    %v7850 = vcombine.low %v7841, %v7848
    %v7852 = vunpack.c.l.s4 1966171168
    %v7853 = vunpack.c.0.s8 %v7852
    %v7854 = vlaneseq
    %v7855 = vshrl.u32 %v7854, 7
    %v7856 = vsub.s32 %v7853, %v7855
    %v7857 = vrot.slane %v7849, %v7856
    %v7859 = vunpack.c.l.s4 1966171168
    %v7860 = vunpack.c.0.s8 %v7859
    %v7861 = vlaneseq
    %v7862 = vshrl.u32 %v7861, 7
    %v7863 = vsub.s32 %v7860, %v7862
    %v7864 = vrot.slane %v7850, %v7863
    %v7865 = vcombine.low %v7857, %v7864
    %v7866 = vcombine.low %v5209, %v5213
    %v7867 = vcombine.low %v5217, %v5221
    %v7868 = vcombine.low %v5225, %v5229
    %v7869 = vcombine.low %v5233, %v5237
    %v7871 = vunpack.c.l.s4 1966171168
    %v7872 = vunpack.c.0.s8 %v7871
    %v7873 = vlaneseq
    %v7874 = vshrl.u32 %v7873, 7
    %v7875 = vsub.s32 %v7872, %v7874
    %v7876 = vrot.slane %v7866, %v7875
    %v7878 = vunpack.c.l.s4 1966171168
    %v7879 = vunpack.c.0.s8 %v7878
    %v7880 = vlaneseq
    %v7881 = vshrl.u32 %v7880, 7
    %v7882 = vsub.s32 %v7879, %v7881
    %v7883 = vrot.slane %v7867, %v7882
    %v7885 = vunpack.c.l.s4 1966171168
    %v7886 = vunpack.c.0.s8 %v7885
    %v7887 = vlaneseq
    %v7888 = vshrl.u32 %v7887, 7
    %v7889 = vsub.s32 %v7886, %v7888
    %v7890 = vrot.slane %v7868, %v7889
    %v7892 = vunpack.c.l.s4 1966171168
    %v7893 = vunpack.c.0.s8 %v7892
    %v7894 = vlaneseq
    %v7895 = vshrl.u32 %v7894, 7
    %v7896 = vsub.s32 %v7893, %v7895
    %v7897 = vrot.slane %v7869, %v7896
    %v7898 = vcombine.low %v7876, %v7883
    %v7899 = vcombine.low %v7890, %v7897
    %v7901 = vunpack.c.l.s4 1966171168
    %v7902 = vunpack.c.0.s8 %v7901
    %v7903 = vlaneseq
    %v7904 = vshrl.u32 %v7903, 7
    %v7905 = vsub.s32 %v7902, %v7904
    %v7906 = vrot.slane %v7898, %v7905
    %v7908 = vunpack.c.l.s4 1966171168
    %v7909 = vunpack.c.0.s8 %v7908
    %v7910 = vlaneseq
    %v7911 = vshrl.u32 %v7910, 7
    %v7912 = vsub.s32 %v7909, %v7911
    %v7913 = vrot.slane %v7899, %v7912
    %v7914 = vcombine.low %v7906, %v7913
    %v7915 = vcombine.low %v5241, %v5245
    %v7916 = vcombine.low %v5249, %v5253
    %v7917 = vcombine.low %v5257, %v5261
    %v7918 = vcombine.low %v5265, %v5269
    %v7920 = vunpack.c.l.s4 1966171168
    %v7921 = vunpack.c.0.s8 %v7920
    %v7922 = vlaneseq
    %v7923 = vshrl.u32 %v7922, 7
    %v7924 = vsub.s32 %v7921, %v7923
    %v7925 = vrot.slane %v7915, %v7924
    %v7927 = vunpack.c.l.s4 1966171168
    %v7928 = vunpack.c.0.s8 %v7927
    %v7929 = vlaneseq
    %v7930 = vshrl.u32 %v7929, 7
    %v7931 = vsub.s32 %v7928, %v7930
    %v7932 = vrot.slane %v7916, %v7931
    %v7934 = vunpack.c.l.s4 1966171168
    %v7935 = vunpack.c.0.s8 %v7934
    %v7936 = vlaneseq
    %v7937 = vshrl.u32 %v7936, 7
    %v7938 = vsub.s32 %v7935, %v7937
    %v7939 = vrot.slane %v7917, %v7938
    %v7941 = vunpack.c.l.s4 1966171168
    %v7942 = vunpack.c.0.s8 %v7941
    %v7943 = vlaneseq
    %v7944 = vshrl.u32 %v7943, 7
    %v7945 = vsub.s32 %v7942, %v7944
    %v7946 = vrot.slane %v7918, %v7945
    %v7947 = vcombine.low %v7925, %v7932
    %v7948 = vcombine.low %v7939, %v7946
    %v7950 = vunpack.c.l.s4 1966171168
    %v7951 = vunpack.c.0.s8 %v7950
    %v7952 = vlaneseq
    %v7953 = vshrl.u32 %v7952, 7
    %v7954 = vsub.s32 %v7951, %v7953
    %v7955 = vrot.slane %v7947, %v7954
    %v7957 = vunpack.c.l.s4 1966171168
    %v7958 = vunpack.c.0.s8 %v7957
    %v7959 = vlaneseq
    %v7960 = vshrl.u32 %v7959, 7
    %v7961 = vsub.s32 %v7958, %v7960
    %v7962 = vrot.slane %v7948, %v7961
    %v7963 = vcombine.low %v7955, %v7962
    %v7964 = vcombine.low %v5273, %v5277
    %v7965 = vcombine.low %v5281, %v5285
    %v7966 = vcombine.low %v5289, %v5293
    %v7967 = vcombine.low %v5297, %v5301
    %v7969 = vunpack.c.l.s4 1966171168
    %v7970 = vunpack.c.0.s8 %v7969
    %v7971 = vlaneseq
    %v7972 = vshrl.u32 %v7971, 7
    %v7973 = vsub.s32 %v7970, %v7972
    %v7974 = vrot.slane %v7964, %v7973
    %v7976 = vunpack.c.l.s4 1966171168
    %v7977 = vunpack.c.0.s8 %v7976
    %v7978 = vlaneseq
    %v7979 = vshrl.u32 %v7978, 7
    %v7980 = vsub.s32 %v7977, %v7979
    %v7981 = vrot.slane %v7965, %v7980
    %v7983 = vunpack.c.l.s4 1966171168
    %v7984 = vunpack.c.0.s8 %v7983
    %v7985 = vlaneseq
    %v7986 = vshrl.u32 %v7985, 7
    %v7987 = vsub.s32 %v7984, %v7986
    %v7988 = vrot.slane %v7966, %v7987
    %v7990 = vunpack.c.l.s4 1966171168
    %v7991 = vunpack.c.0.s8 %v7990
    %v7992 = vlaneseq
    %v7993 = vshrl.u32 %v7992, 7
    %v7994 = vsub.s32 %v7991, %v7993
    %v7995 = vrot.slane %v7967, %v7994
    %v7996 = vcombine.low %v7974, %v7981
    %v7997 = vcombine.low %v7988, %v7995
    %v7999 = vunpack.c.l.s4 1966171168
    %v8000 = vunpack.c.0.s8 %v7999
    %v8001 = vlaneseq
    %v8002 = vshrl.u32 %v8001, 7
    %v8003 = vsub.s32 %v8000, %v8002
    %v8004 = vrot.slane %v7996, %v8003
    %v8006 = vunpack.c.l.s4 1966171168
    %v8007 = vunpack.c.0.s8 %v8006
    %v8008 = vlaneseq
    %v8009 = vshrl.u32 %v8008, 7
    %v8010 = vsub.s32 %v8007, %v8009
    %v8011 = vrot.slane %v7997, %v8010
    %v8012 = vcombine.low %v8004, %v8011
    %v8013 = vcombine.low %v5305, %v5309
    %v8014 = vcombine.low %v5313, %v5317
    %v8015 = vcombine.low %v5321, %v5325
    %v8016 = vcombine.low %v5329, %v5333
    %v8018 = vunpack.c.l.s4 1966171168
    %v8019 = vunpack.c.0.s8 %v8018
    %v8020 = vlaneseq
    %v8021 = vshrl.u32 %v8020, 7
    %v8022 = vsub.s32 %v8019, %v8021
    %v8023 = vrot.slane %v8013, %v8022
    %v8025 = vunpack.c.l.s4 1966171168
    %v8026 = vunpack.c.0.s8 %v8025
    %v8027 = vlaneseq
    %v8028 = vshrl.u32 %v8027, 7
    %v8029 = vsub.s32 %v8026, %v8028
    %v8030 = vrot.slane %v8014, %v8029
    %v8032 = vunpack.c.l.s4 1966171168
    %v8033 = vunpack.c.0.s8 %v8032
    %v8034 = vlaneseq
    %v8035 = vshrl.u32 %v8034, 7
    %v8036 = vsub.s32 %v8033, %v8035
    %v8037 = vrot.slane %v8015, %v8036
    %v8039 = vunpack.c.l.s4 1966171168
    %v8040 = vunpack.c.0.s8 %v8039
    %v8041 = vlaneseq
    %v8042 = vshrl.u32 %v8041, 7
    %v8043 = vsub.s32 %v8040, %v8042
    %v8044 = vrot.slane %v8016, %v8043
    %v8045 = vcombine.low %v8023, %v8030
    %v8046 = vcombine.low %v8037, %v8044
    %v8048 = vunpack.c.l.s4 1966171168
    %v8049 = vunpack.c.0.s8 %v8048
    %v8050 = vlaneseq
    %v8051 = vshrl.u32 %v8050, 7
    %v8052 = vsub.s32 %v8049, %v8051
    %v8053 = vrot.slane %v8045, %v8052
    %v8055 = vunpack.c.l.s4 1966171168
    %v8056 = vunpack.c.0.s8 %v8055
    %v8057 = vlaneseq
    %v8058 = vshrl.u32 %v8057, 7
    %v8059 = vsub.s32 %v8056, %v8058
    %v8060 = vrot.slane %v8046, %v8059
    %v8061 = vcombine.low %v8053, %v8060
    %v8062 = vcombine.low %v5337, %v5341
    %v8063 = vcombine.low %v5345, %v5349
    %v8064 = vcombine.low %v5353, %v5357
    %v8065 = vcombine.low %v5361, %v5365
    %v8067 = vunpack.c.l.s4 1966171168
    %v8068 = vunpack.c.0.s8 %v8067
    %v8069 = vlaneseq
    %v8070 = vshrl.u32 %v8069, 7
    %v8071 = vsub.s32 %v8068, %v8070
    %v8072 = vrot.slane %v8062, %v8071
    %v8074 = vunpack.c.l.s4 1966171168
    %v8075 = vunpack.c.0.s8 %v8074
    %v8076 = vlaneseq
    %v8077 = vshrl.u32 %v8076, 7
    %v8078 = vsub.s32 %v8075, %v8077
    %v8079 = vrot.slane %v8063, %v8078
    %v8081 = vunpack.c.l.s4 1966171168
    %v8082 = vunpack.c.0.s8 %v8081
    %v8083 = vlaneseq
    %v8084 = vshrl.u32 %v8083, 7
    %v8085 = vsub.s32 %v8082, %v8084
    %v8086 = vrot.slane %v8064, %v8085
    %v8088 = vunpack.c.l.s4 1966171168
    %v8089 = vunpack.c.0.s8 %v8088
    %v8090 = vlaneseq
    %v8091 = vshrl.u32 %v8090, 7
    %v8092 = vsub.s32 %v8089, %v8091
    %v8093 = vrot.slane %v8065, %v8092
    %v8094 = vcombine.low %v8072, %v8079
    %v8095 = vcombine.low %v8086, %v8093
    %v8097 = vunpack.c.l.s4 1966171168
    %v8098 = vunpack.c.0.s8 %v8097
    %v8099 = vlaneseq
    %v8100 = vshrl.u32 %v8099, 7
    %v8101 = vsub.s32 %v8098, %v8100
    %v8102 = vrot.slane %v8094, %v8101
    %v8104 = vunpack.c.l.s4 1966171168
    %v8105 = vunpack.c.0.s8 %v8104
    %v8106 = vlaneseq
    %v8107 = vshrl.u32 %v8106, 7
    %v8108 = vsub.s32 %v8105, %v8107
    %v8109 = vrot.slane %v8095, %v8108
    %v8110 = vcombine.low %v8102, %v8109
    %v8111 = vcombine.low %v5369, %v5373
    %v8112 = vcombine.low %v5377, %v5381
    %v8113 = vcombine.low %v5385, %v5389
    %v8114 = vcombine.low %v5393, %v5397
    %v8116 = vunpack.c.l.s4 1966171168
    %v8117 = vunpack.c.0.s8 %v8116
    %v8118 = vlaneseq
    %v8119 = vshrl.u32 %v8118, 7
    %v8120 = vsub.s32 %v8117, %v8119
    %v8121 = vrot.slane %v8111, %v8120
    %v8123 = vunpack.c.l.s4 1966171168
    %v8124 = vunpack.c.0.s8 %v8123
    %v8125 = vlaneseq
    %v8126 = vshrl.u32 %v8125, 7
    %v8127 = vsub.s32 %v8124, %v8126
    %v8128 = vrot.slane %v8112, %v8127
    %v8130 = vunpack.c.l.s4 1966171168
    %v8131 = vunpack.c.0.s8 %v8130
    %v8132 = vlaneseq
    %v8133 = vshrl.u32 %v8132, 7
    %v8134 = vsub.s32 %v8131, %v8133
    %v8135 = vrot.slane %v8113, %v8134
    %v8137 = vunpack.c.l.s4 1966171168
    %v8138 = vunpack.c.0.s8 %v8137
    %v8139 = vlaneseq
    %v8140 = vshrl.u32 %v8139, 7
    %v8141 = vsub.s32 %v8138, %v8140
    %v8142 = vrot.slane %v8114, %v8141
    %v8143 = vcombine.low %v8121, %v8128
    %v8144 = vcombine.low %v8135, %v8142
    %v8146 = vunpack.c.l.s4 1966171168
    %v8147 = vunpack.c.0.s8 %v8146
    %v8148 = vlaneseq
    %v8149 = vshrl.u32 %v8148, 7
    %v8150 = vsub.s32 %v8147, %v8149
    %v8151 = vrot.slane %v8143, %v8150
    %v8153 = vunpack.c.l.s4 1966171168
    %v8154 = vunpack.c.0.s8 %v8153
    %v8155 = vlaneseq
    %v8156 = vshrl.u32 %v8155, 7
    %v8157 = vsub.s32 %v8154, %v8156
    %v8158 = vrot.slane %v8144, %v8157
    %v8159 = vcombine.low %v8151, %v8158
    %v8160 = vcombine.low %v5401, %v5405
    %v8161 = vcombine.low %v5409, %v5413
    %v8162 = vcombine.low %v5417, %v5421
    %v8163 = vcombine.low %v5425, %v5429
    %v8165 = vunpack.c.l.s4 1966171168
    %v8166 = vunpack.c.0.s8 %v8165
    %v8167 = vlaneseq
    %v8168 = vshrl.u32 %v8167, 7
    %v8169 = vsub.s32 %v8166, %v8168
    %v8170 = vrot.slane %v8160, %v8169
    %v8172 = vunpack.c.l.s4 1966171168
    %v8173 = vunpack.c.0.s8 %v8172
    %v8174 = vlaneseq
    %v8175 = vshrl.u32 %v8174, 7
    %v8176 = vsub.s32 %v8173, %v8175
    %v8177 = vrot.slane %v8161, %v8176
    %v8179 = vunpack.c.l.s4 1966171168
    %v8180 = vunpack.c.0.s8 %v8179
    %v8181 = vlaneseq
    %v8182 = vshrl.u32 %v8181, 7
    %v8183 = vsub.s32 %v8180, %v8182
    %v8184 = vrot.slane %v8162, %v8183
    %v8186 = vunpack.c.l.s4 1966171168
    %v8187 = vunpack.c.0.s8 %v8186
    %v8188 = vlaneseq
    %v8189 = vshrl.u32 %v8188, 7
    %v8190 = vsub.s32 %v8187, %v8189
    %v8191 = vrot.slane %v8163, %v8190
    %v8192 = vcombine.low %v8170, %v8177
    %v8193 = vcombine.low %v8184, %v8191
    %v8195 = vunpack.c.l.s4 1966171168
    %v8196 = vunpack.c.0.s8 %v8195
    %v8197 = vlaneseq
    %v8198 = vshrl.u32 %v8197, 7
    %v8199 = vsub.s32 %v8196, %v8198
    %v8200 = vrot.slane %v8192, %v8199
    %v8202 = vunpack.c.l.s4 1966171168
    %v8203 = vunpack.c.0.s8 %v8202
    %v8204 = vlaneseq
    %v8205 = vshrl.u32 %v8204, 7
    %v8206 = vsub.s32 %v8203, %v8205
    %v8207 = vrot.slane %v8193, %v8206
    %v8208 = vcombine.low %v8200, %v8207
    %v8209 = vcombine.low %v5433, %v5437
    %v8210 = vcombine.low %v5441, %v5445
    %v8211 = vcombine.low %v5449, %v5453
    %v8212 = vcombine.low %v5457, %v5461
    %v8214 = vunpack.c.l.s4 1966171168
    %v8215 = vunpack.c.0.s8 %v8214
    %v8216 = vlaneseq
    %v8217 = vshrl.u32 %v8216, 7
    %v8218 = vsub.s32 %v8215, %v8217
    %v8219 = vrot.slane %v8209, %v8218
    %v8221 = vunpack.c.l.s4 1966171168
    %v8222 = vunpack.c.0.s8 %v8221
    %v8223 = vlaneseq
    %v8224 = vshrl.u32 %v8223, 7
    %v8225 = vsub.s32 %v8222, %v8224
    %v8226 = vrot.slane %v8210, %v8225
    %v8228 = vunpack.c.l.s4 1966171168
    %v8229 = vunpack.c.0.s8 %v8228
    %v8230 = vlaneseq
    %v8231 = vshrl.u32 %v8230, 7
    %v8232 = vsub.s32 %v8229, %v8231
    %v8233 = vrot.slane %v8211, %v8232
    %v8235 = vunpack.c.l.s4 1966171168
    %v8236 = vunpack.c.0.s8 %v8235
    %v8237 = vlaneseq
    %v8238 = vshrl.u32 %v8237, 7
    %v8239 = vsub.s32 %v8236, %v8238
    %v8240 = vrot.slane %v8212, %v8239
    %v8241 = vcombine.low %v8219, %v8226
    %v8242 = vcombine.low %v8233, %v8240
    %v8244 = vunpack.c.l.s4 1966171168
    %v8245 = vunpack.c.0.s8 %v8244
    %v8246 = vlaneseq
    %v8247 = vshrl.u32 %v8246, 7
    %v8248 = vsub.s32 %v8245, %v8247
    %v8249 = vrot.slane %v8241, %v8248
    %v8251 = vunpack.c.l.s4 1966171168
    %v8252 = vunpack.c.0.s8 %v8251
    %v8253 = vlaneseq
    %v8254 = vshrl.u32 %v8253, 7
    %v8255 = vsub.s32 %v8252, %v8254
    %v8256 = vrot.slane %v8242, %v8255
    %v8257 = vcombine.low %v8249, %v8256
    %v8258 = vcombine.low %v5465, %v5469
    %v8259 = vcombine.low %v5473, %v5477
    %v8260 = vcombine.low %v5481, %v5485
    %v8261 = vcombine.low %v5489, %v5493
    %v8263 = vunpack.c.l.s4 1966171168
    %v8264 = vunpack.c.0.s8 %v8263
    %v8265 = vlaneseq
    %v8266 = vshrl.u32 %v8265, 7
    %v8267 = vsub.s32 %v8264, %v8266
    %v8268 = vrot.slane %v8258, %v8267
    %v8270 = vunpack.c.l.s4 1966171168
    %v8271 = vunpack.c.0.s8 %v8270
    %v8272 = vlaneseq
    %v8273 = vshrl.u32 %v8272, 7
    %v8274 = vsub.s32 %v8271, %v8273
    %v8275 = vrot.slane %v8259, %v8274
    %v8277 = vunpack.c.l.s4 1966171168
    %v8278 = vunpack.c.0.s8 %v8277
    %v8279 = vlaneseq
    %v8280 = vshrl.u32 %v8279, 7
    %v8281 = vsub.s32 %v8278, %v8280
    %v8282 = vrot.slane %v8260, %v8281
    %v8284 = vunpack.c.l.s4 1966171168
    %v8285 = vunpack.c.0.s8 %v8284
    %v8286 = vlaneseq
    %v8287 = vshrl.u32 %v8286, 7
    %v8288 = vsub.s32 %v8285, %v8287
    %v8289 = vrot.slane %v8261, %v8288
    %v8290 = vcombine.low %v8268, %v8275
    %v8291 = vcombine.low %v8282, %v8289
    %v8293 = vunpack.c.l.s4 1966171168
    %v8294 = vunpack.c.0.s8 %v8293
    %v8295 = vlaneseq
    %v8296 = vshrl.u32 %v8295, 7
    %v8297 = vsub.s32 %v8294, %v8296
    %v8298 = vrot.slane %v8290, %v8297
    %v8300 = vunpack.c.l.s4 1966171168
    %v8301 = vunpack.c.0.s8 %v8300
    %v8302 = vlaneseq
    %v8303 = vshrl.u32 %v8302, 7
    %v8304 = vsub.s32 %v8301, %v8303
    %v8305 = vrot.slane %v8291, %v8304
    %v8306 = vcombine.low %v8298, %v8305
    %v8307 = vcombine.low %v5497, %v5501
    %v8308 = vcombine.low %v5505, %v5509
    %v8309 = vcombine.low %v5513, %v5517
    %v8310 = vcombine.low %v5521, %v5525
    %v8312 = vunpack.c.l.s4 1966171168
    %v8313 = vunpack.c.0.s8 %v8312
    %v8314 = vlaneseq
    %v8315 = vshrl.u32 %v8314, 7
    %v8316 = vsub.s32 %v8313, %v8315
    %v8317 = vrot.slane %v8307, %v8316
    %v8319 = vunpack.c.l.s4 1966171168
    %v8320 = vunpack.c.0.s8 %v8319
    %v8321 = vlaneseq
    %v8322 = vshrl.u32 %v8321, 7
    %v8323 = vsub.s32 %v8320, %v8322
    %v8324 = vrot.slane %v8308, %v8323
    %v8326 = vunpack.c.l.s4 1966171168
    %v8327 = vunpack.c.0.s8 %v8326
    %v8328 = vlaneseq
    %v8329 = vshrl.u32 %v8328, 7
    %v8330 = vsub.s32 %v8327, %v8329
    %v8331 = vrot.slane %v8309, %v8330
    %v8333 = vunpack.c.l.s4 1966171168
    %v8334 = vunpack.c.0.s8 %v8333
    %v8335 = vlaneseq
    %v8336 = vshrl.u32 %v8335, 7
    %v8337 = vsub.s32 %v8334, %v8336
    %v8338 = vrot.slane %v8310, %v8337
    %v8339 = vcombine.low %v8317, %v8324
    %v8340 = vcombine.low %v8331, %v8338
    %v8342 = vunpack.c.l.s4 1966171168
    %v8343 = vunpack.c.0.s8 %v8342
    %v8344 = vlaneseq
    %v8345 = vshrl.u32 %v8344, 7
    %v8346 = vsub.s32 %v8343, %v8345
    %v8347 = vrot.slane %v8339, %v8346
    %v8349 = vunpack.c.l.s4 1966171168
    %v8350 = vunpack.c.0.s8 %v8349
    %v8351 = vlaneseq
    %v8352 = vshrl.u32 %v8351, 7
    %v8353 = vsub.s32 %v8350, %v8352
    %v8354 = vrot.slane %v8340, %v8353
    %v8355 = vcombine.low %v8347, %v8354
    %v8356 = vcombine.low %v5529, %v5533
    %v8357 = vcombine.low %v5537, %v5541
    %v8358 = vcombine.low %v5545, %v5549
    %v8359 = vcombine.low %v5553, %v5557
    %v8361 = vunpack.c.l.s4 1966171168
    %v8362 = vunpack.c.0.s8 %v8361
    %v8363 = vlaneseq
    %v8364 = vshrl.u32 %v8363, 7
    %v8365 = vsub.s32 %v8362, %v8364
    %v8366 = vrot.slane %v8356, %v8365
    %v8368 = vunpack.c.l.s4 1966171168
    %v8369 = vunpack.c.0.s8 %v8368
    %v8370 = vlaneseq
    %v8371 = vshrl.u32 %v8370, 7
    %v8372 = vsub.s32 %v8369, %v8371
    %v8373 = vrot.slane %v8357, %v8372
    %v8375 = vunpack.c.l.s4 1966171168
    %v8376 = vunpack.c.0.s8 %v8375
    %v8377 = vlaneseq
    %v8378 = vshrl.u32 %v8377, 7
    %v8379 = vsub.s32 %v8376, %v8378
    %v8380 = vrot.slane %v8358, %v8379
    %v8382 = vunpack.c.l.s4 1966171168
    %v8383 = vunpack.c.0.s8 %v8382
    %v8384 = vlaneseq
    %v8385 = vshrl.u32 %v8384, 7
    %v8386 = vsub.s32 %v8383, %v8385
    %v8387 = vrot.slane %v8359, %v8386
    %v8388 = vcombine.low %v8366, %v8373
    %v8389 = vcombine.low %v8380, %v8387
    %v8391 = vunpack.c.l.s4 1966171168
    %v8392 = vunpack.c.0.s8 %v8391
    %v8393 = vlaneseq
    %v8394 = vshrl.u32 %v8393, 7
    %v8395 = vsub.s32 %v8392, %v8394
    %v8396 = vrot.slane %v8388, %v8395
    %v8398 = vunpack.c.l.s4 1966171168
    %v8399 = vunpack.c.0.s8 %v8398
    %v8400 = vlaneseq
    %v8401 = vshrl.u32 %v8400, 7
    %v8402 = vsub.s32 %v8399, %v8401
    %v8403 = vrot.slane %v8389, %v8402
    %v8404 = vcombine.low %v8396, %v8403
    %v8405 = vcombine.low %v5561, %v5565
    %v8406 = vcombine.low %v5569, %v5573
    %v8407 = vcombine.low %v5577, %v5581
    %v8408 = vcombine.low %v5585, %v5589
    %v8410 = vunpack.c.l.s4 1966171168
    %v8411 = vunpack.c.0.s8 %v8410
    %v8412 = vlaneseq
    %v8413 = vshrl.u32 %v8412, 7
    %v8414 = vsub.s32 %v8411, %v8413
    %v8415 = vrot.slane %v8405, %v8414
    %v8417 = vunpack.c.l.s4 1966171168
    %v8418 = vunpack.c.0.s8 %v8417
    %v8419 = vlaneseq
    %v8420 = vshrl.u32 %v8419, 7
    %v8421 = vsub.s32 %v8418, %v8420
    %v8422 = vrot.slane %v8406, %v8421
    %v8424 = vunpack.c.l.s4 1966171168
    %v8425 = vunpack.c.0.s8 %v8424
    %v8426 = vlaneseq
    %v8427 = vshrl.u32 %v8426, 7
    %v8428 = vsub.s32 %v8425, %v8427
    %v8429 = vrot.slane %v8407, %v8428
    %v8431 = vunpack.c.l.s4 1966171168
    %v8432 = vunpack.c.0.s8 %v8431
    %v8433 = vlaneseq
    %v8434 = vshrl.u32 %v8433, 7
    %v8435 = vsub.s32 %v8432, %v8434
    %v8436 = vrot.slane %v8408, %v8435
    %v8437 = vcombine.low %v8415, %v8422
    %v8438 = vcombine.low %v8429, %v8436
    %v8440 = vunpack.c.l.s4 1966171168
    %v8441 = vunpack.c.0.s8 %v8440
    %v8442 = vlaneseq
    %v8443 = vshrl.u32 %v8442, 7
    %v8444 = vsub.s32 %v8441, %v8443
    %v8445 = vrot.slane %v8437, %v8444
    %v8447 = vunpack.c.l.s4 1966171168
    %v8448 = vunpack.c.0.s8 %v8447
    %v8449 = vlaneseq
    %v8450 = vshrl.u32 %v8449, 7
    %v8451 = vsub.s32 %v8448, %v8450
    %v8452 = vrot.slane %v8438, %v8451
    %v8453 = vcombine.low %v8445, %v8452
    %v8454 = vcombine.low %v5593, %v5597
    %v8455 = vcombine.low %v5601, %v5605
    %v8456 = vcombine.low %v5609, %v5613
    %v8457 = vcombine.low %v5617, %v5621
    %v8459 = vunpack.c.l.s4 1966171168
    %v8460 = vunpack.c.0.s8 %v8459
    %v8461 = vlaneseq
    %v8462 = vshrl.u32 %v8461, 7
    %v8463 = vsub.s32 %v8460, %v8462
    %v8464 = vrot.slane %v8454, %v8463
    %v8466 = vunpack.c.l.s4 1966171168
    %v8467 = vunpack.c.0.s8 %v8466
    %v8468 = vlaneseq
    %v8469 = vshrl.u32 %v8468, 7
    %v8470 = vsub.s32 %v8467, %v8469
    %v8471 = vrot.slane %v8455, %v8470
    %v8473 = vunpack.c.l.s4 1966171168
    %v8474 = vunpack.c.0.s8 %v8473
    %v8475 = vlaneseq
    %v8476 = vshrl.u32 %v8475, 7
    %v8477 = vsub.s32 %v8474, %v8476
    %v8478 = vrot.slane %v8456, %v8477
    %v8480 = vunpack.c.l.s4 1966171168
    %v8481 = vunpack.c.0.s8 %v8480
    %v8482 = vlaneseq
    %v8483 = vshrl.u32 %v8482, 7
    %v8484 = vsub.s32 %v8481, %v8483
    %v8485 = vrot.slane %v8457, %v8484
    %v8486 = vcombine.low %v8464, %v8471
    %v8487 = vcombine.low %v8478, %v8485
    %v8489 = vunpack.c.l.s4 1966171168
    %v8490 = vunpack.c.0.s8 %v8489
    %v8491 = vlaneseq
    %v8492 = vshrl.u32 %v8491, 7
    %v8493 = vsub.s32 %v8490, %v8492
    %v8494 = vrot.slane %v8486, %v8493
    %v8496 = vunpack.c.l.s4 1966171168
    %v8497 = vunpack.c.0.s8 %v8496
    %v8498 = vlaneseq
    %v8499 = vshrl.u32 %v8498, 7
    %v8500 = vsub.s32 %v8497, %v8499
    %v8501 = vrot.slane %v8487, %v8500
    %v8502 = vcombine.low %v8494, %v8501
    %v8503 = vcombine.low %v5625, %v5629
    %v8504 = vcombine.low %v5633, %v5637
    %v8505 = vcombine.low %v5641, %v5645
    %v8506 = vcombine.low %v5649, %v5653
    %v8508 = vunpack.c.l.s4 1966171168
    %v8509 = vunpack.c.0.s8 %v8508
    %v8510 = vlaneseq
    %v8511 = vshrl.u32 %v8510, 7
    %v8512 = vsub.s32 %v8509, %v8511
    %v8513 = vrot.slane %v8503, %v8512
    %v8515 = vunpack.c.l.s4 1966171168
    %v8516 = vunpack.c.0.s8 %v8515
    %v8517 = vlaneseq
    %v8518 = vshrl.u32 %v8517, 7
    %v8519 = vsub.s32 %v8516, %v8518
    %v8520 = vrot.slane %v8504, %v8519
    %v8522 = vunpack.c.l.s4 1966171168
    %v8523 = vunpack.c.0.s8 %v8522
    %v8524 = vlaneseq
    %v8525 = vshrl.u32 %v8524, 7
    %v8526 = vsub.s32 %v8523, %v8525
    %v8527 = vrot.slane %v8505, %v8526
    %v8529 = vunpack.c.l.s4 1966171168
    %v8530 = vunpack.c.0.s8 %v8529
    %v8531 = vlaneseq
    %v8532 = vshrl.u32 %v8531, 7
    %v8533 = vsub.s32 %v8530, %v8532
    %v8534 = vrot.slane %v8506, %v8533
    %v8535 = vcombine.low %v8513, %v8520
    %v8536 = vcombine.low %v8527, %v8534
    %v8538 = vunpack.c.l.s4 1966171168
    %v8539 = vunpack.c.0.s8 %v8538
    %v8540 = vlaneseq
    %v8541 = vshrl.u32 %v8540, 7
    %v8542 = vsub.s32 %v8539, %v8541
    %v8543 = vrot.slane %v8535, %v8542
    %v8545 = vunpack.c.l.s4 1966171168
    %v8546 = vunpack.c.0.s8 %v8545
    %v8547 = vlaneseq
    %v8548 = vshrl.u32 %v8547, 7
    %v8549 = vsub.s32 %v8546, %v8548
    %v8550 = vrot.slane %v8536, %v8549
    %v8551 = vcombine.low %v8543, %v8550
    %v8552 = vcombine.low %v5657, %v5661
    %v8553 = vcombine.low %v5665, %v5669
    %v8554 = vcombine.low %v5673, %v5677
    %v8555 = vcombine.low %v5681, %v5685
    %v8557 = vunpack.c.l.s4 1966171168
    %v8558 = vunpack.c.0.s8 %v8557
    %v8559 = vlaneseq
    %v8560 = vshrl.u32 %v8559, 7
    %v8561 = vsub.s32 %v8558, %v8560
    %v8562 = vrot.slane %v8552, %v8561
    %v8564 = vunpack.c.l.s4 1966171168
    %v8565 = vunpack.c.0.s8 %v8564
    %v8566 = vlaneseq
    %v8567 = vshrl.u32 %v8566, 7
    %v8568 = vsub.s32 %v8565, %v8567
    %v8569 = vrot.slane %v8553, %v8568
    %v8571 = vunpack.c.l.s4 1966171168
    %v8572 = vunpack.c.0.s8 %v8571
    %v8573 = vlaneseq
    %v8574 = vshrl.u32 %v8573, 7
    %v8575 = vsub.s32 %v8572, %v8574
    %v8576 = vrot.slane %v8554, %v8575
    %v8578 = vunpack.c.l.s4 1966171168
    %v8579 = vunpack.c.0.s8 %v8578
    %v8580 = vlaneseq
    %v8581 = vshrl.u32 %v8580, 7
    %v8582 = vsub.s32 %v8579, %v8581
    %v8583 = vrot.slane %v8555, %v8582
    %v8584 = vcombine.low %v8562, %v8569
    %v8585 = vcombine.low %v8576, %v8583
    %v8587 = vunpack.c.l.s4 1966171168
    %v8588 = vunpack.c.0.s8 %v8587
    %v8589 = vlaneseq
    %v8590 = vshrl.u32 %v8589, 7
    %v8591 = vsub.s32 %v8588, %v8590
    %v8592 = vrot.slane %v8584, %v8591
    %v8594 = vunpack.c.l.s4 1966171168
    %v8595 = vunpack.c.0.s8 %v8594
    %v8596 = vlaneseq
    %v8597 = vshrl.u32 %v8596, 7
    %v8598 = vsub.s32 %v8595, %v8597
    %v8599 = vrot.slane %v8585, %v8598
    %v8600 = vcombine.low %v8592, %v8599
    %v8601 = vcombine.low %v5689, %v5693
    %v8602 = vcombine.low %v5697, %v5701
    %v8603 = vcombine.low %v5705, %v5709
    %v8604 = vcombine.low %v5713, %v5717
    %v8606 = vunpack.c.l.s4 1966171168
    %v8607 = vunpack.c.0.s8 %v8606
    %v8608 = vlaneseq
    %v8609 = vshrl.u32 %v8608, 7
    %v8610 = vsub.s32 %v8607, %v8609
    %v8611 = vrot.slane %v8601, %v8610
    %v8613 = vunpack.c.l.s4 1966171168
    %v8614 = vunpack.c.0.s8 %v8613
    %v8615 = vlaneseq
    %v8616 = vshrl.u32 %v8615, 7
    %v8617 = vsub.s32 %v8614, %v8616
    %v8618 = vrot.slane %v8602, %v8617
    %v8620 = vunpack.c.l.s4 1966171168
    %v8621 = vunpack.c.0.s8 %v8620
    %v8622 = vlaneseq
    %v8623 = vshrl.u32 %v8622, 7
    %v8624 = vsub.s32 %v8621, %v8623
    %v8625 = vrot.slane %v8603, %v8624
    %v8627 = vunpack.c.l.s4 1966171168
    %v8628 = vunpack.c.0.s8 %v8627
    %v8629 = vlaneseq
    %v8630 = vshrl.u32 %v8629, 7
    %v8631 = vsub.s32 %v8628, %v8630
    %v8632 = vrot.slane %v8604, %v8631
    %v8633 = vcombine.low %v8611, %v8618
    %v8634 = vcombine.low %v8625, %v8632
    %v8636 = vunpack.c.l.s4 1966171168
    %v8637 = vunpack.c.0.s8 %v8636
    %v8638 = vlaneseq
    %v8639 = vshrl.u32 %v8638, 7
    %v8640 = vsub.s32 %v8637, %v8639
    %v8641 = vrot.slane %v8633, %v8640
    %v8643 = vunpack.c.l.s4 1966171168
    %v8644 = vunpack.c.0.s8 %v8643
    %v8645 = vlaneseq
    %v8646 = vshrl.u32 %v8645, 7
    %v8647 = vsub.s32 %v8644, %v8646
    %v8648 = vrot.slane %v8634, %v8647
    %v8649 = vcombine.low %v8641, %v8648
    %v8650 = vcombine.low %v5721, %v5725
    %v8651 = vcombine.low %v5729, %v5733
    %v8652 = vcombine.low %v5737, %v5741
    %v8653 = vcombine.low %v5745, %v5749
    %v8655 = vunpack.c.l.s4 1966171168
    %v8656 = vunpack.c.0.s8 %v8655
    %v8657 = vlaneseq
    %v8658 = vshrl.u32 %v8657, 7
    %v8659 = vsub.s32 %v8656, %v8658
    %v8660 = vrot.slane %v8650, %v8659
    %v8662 = vunpack.c.l.s4 1966171168
    %v8663 = vunpack.c.0.s8 %v8662
    %v8664 = vlaneseq
    %v8665 = vshrl.u32 %v8664, 7
    %v8666 = vsub.s32 %v8663, %v8665
    %v8667 = vrot.slane %v8651, %v8666
    %v8669 = vunpack.c.l.s4 1966171168
    %v8670 = vunpack.c.0.s8 %v8669
    %v8671 = vlaneseq
    %v8672 = vshrl.u32 %v8671, 7
    %v8673 = vsub.s32 %v8670, %v8672
    %v8674 = vrot.slane %v8652, %v8673
    %v8676 = vunpack.c.l.s4 1966171168
    %v8677 = vunpack.c.0.s8 %v8676
    %v8678 = vlaneseq
    %v8679 = vshrl.u32 %v8678, 7
    %v8680 = vsub.s32 %v8677, %v8679
    %v8681 = vrot.slane %v8653, %v8680
    %v8682 = vcombine.low %v8660, %v8667
    %v8683 = vcombine.low %v8674, %v8681
    %v8685 = vunpack.c.l.s4 1966171168
    %v8686 = vunpack.c.0.s8 %v8685
    %v8687 = vlaneseq
    %v8688 = vshrl.u32 %v8687, 7
    %v8689 = vsub.s32 %v8686, %v8688
    %v8690 = vrot.slane %v8682, %v8689
    %v8692 = vunpack.c.l.s4 1966171168
    %v8693 = vunpack.c.0.s8 %v8692
    %v8694 = vlaneseq
    %v8695 = vshrl.u32 %v8694, 7
    %v8696 = vsub.s32 %v8693, %v8695
    %v8697 = vrot.slane %v8683, %v8696
    %v8698 = vcombine.low %v8690, %v8697
    %v8699 = vcombine.low %v5753, %v5757
    %v8700 = vcombine.low %v5761, %v5765
    %v8701 = vcombine.low %v5769, %v5773
    %v8702 = vcombine.low %v5777, %v5781
    %v8704 = vunpack.c.l.s4 1966171168
    %v8705 = vunpack.c.0.s8 %v8704
    %v8706 = vlaneseq
    %v8707 = vshrl.u32 %v8706, 7
    %v8708 = vsub.s32 %v8705, %v8707
    %v8709 = vrot.slane %v8699, %v8708
    %v8711 = vunpack.c.l.s4 1966171168
    %v8712 = vunpack.c.0.s8 %v8711
    %v8713 = vlaneseq
    %v8714 = vshrl.u32 %v8713, 7
    %v8715 = vsub.s32 %v8712, %v8714
    %v8716 = vrot.slane %v8700, %v8715
    %v8718 = vunpack.c.l.s4 1966171168
    %v8719 = vunpack.c.0.s8 %v8718
    %v8720 = vlaneseq
    %v8721 = vshrl.u32 %v8720, 7
    %v8722 = vsub.s32 %v8719, %v8721
    %v8723 = vrot.slane %v8701, %v8722
    %v8725 = vunpack.c.l.s4 1966171168
    %v8726 = vunpack.c.0.s8 %v8725
    %v8727 = vlaneseq
    %v8728 = vshrl.u32 %v8727, 7
    %v8729 = vsub.s32 %v8726, %v8728
    %v8730 = vrot.slane %v8702, %v8729
    %v8731 = vcombine.low %v8709, %v8716
    %v8732 = vcombine.low %v8723, %v8730
    %v8734 = vunpack.c.l.s4 1966171168
    %v8735 = vunpack.c.0.s8 %v8734
    %v8736 = vlaneseq
    %v8737 = vshrl.u32 %v8736, 7
    %v8738 = vsub.s32 %v8735, %v8737
    %v8739 = vrot.slane %v8731, %v8738
    %v8741 = vunpack.c.l.s4 1966171168
    %v8742 = vunpack.c.0.s8 %v8741
    %v8743 = vlaneseq
    %v8744 = vshrl.u32 %v8743, 7
    %v8745 = vsub.s32 %v8742, %v8744
    %v8746 = vrot.slane %v8732, %v8745
    %v8747 = vcombine.low %v8739, %v8746
    %v8748 = vcombine.low %v5785, %v5789
    %v8749 = vcombine.low %v5793, %v5797
    %v8750 = vcombine.low %v5801, %v5805
    %v8751 = vcombine.low %v5809, %v5813
    %v8753 = vunpack.c.l.s4 1966171168
    %v8754 = vunpack.c.0.s8 %v8753
    %v8755 = vlaneseq
    %v8756 = vshrl.u32 %v8755, 7
    %v8757 = vsub.s32 %v8754, %v8756
    %v8758 = vrot.slane %v8748, %v8757
    %v8760 = vunpack.c.l.s4 1966171168
    %v8761 = vunpack.c.0.s8 %v8760
    %v8762 = vlaneseq
    %v8763 = vshrl.u32 %v8762, 7
    %v8764 = vsub.s32 %v8761, %v8763
    %v8765 = vrot.slane %v8749, %v8764
    %v8767 = vunpack.c.l.s4 1966171168
    %v8768 = vunpack.c.0.s8 %v8767
    %v8769 = vlaneseq
    %v8770 = vshrl.u32 %v8769, 7
    %v8771 = vsub.s32 %v8768, %v8770
    %v8772 = vrot.slane %v8750, %v8771
    %v8774 = vunpack.c.l.s4 1966171168
    %v8775 = vunpack.c.0.s8 %v8774
    %v8776 = vlaneseq
    %v8777 = vshrl.u32 %v8776, 7
    %v8778 = vsub.s32 %v8775, %v8777
    %v8779 = vrot.slane %v8751, %v8778
    %v8780 = vcombine.low %v8758, %v8765
    %v8781 = vcombine.low %v8772, %v8779
    %v8783 = vunpack.c.l.s4 1966171168
    %v8784 = vunpack.c.0.s8 %v8783
    %v8785 = vlaneseq
    %v8786 = vshrl.u32 %v8785, 7
    %v8787 = vsub.s32 %v8784, %v8786
    %v8788 = vrot.slane %v8780, %v8787
    %v8790 = vunpack.c.l.s4 1966171168
    %v8791 = vunpack.c.0.s8 %v8790
    %v8792 = vlaneseq
    %v8793 = vshrl.u32 %v8792, 7
    %v8794 = vsub.s32 %v8791, %v8793
    %v8795 = vrot.slane %v8781, %v8794
    %v8796 = vcombine.low %v8788, %v8795
    %v8797 = vcombine.low %v5817, %v5821
    %v8798 = vcombine.low %v5825, %v5829
    %v8799 = vcombine.low %v5833, %v5837
    %v8800 = vcombine.low %v5841, %v5845
    %v8802 = vunpack.c.l.s4 1966171168
    %v8803 = vunpack.c.0.s8 %v8802
    %v8804 = vlaneseq
    %v8805 = vshrl.u32 %v8804, 7
    %v8806 = vsub.s32 %v8803, %v8805
    %v8807 = vrot.slane %v8797, %v8806
    %v8809 = vunpack.c.l.s4 1966171168
    %v8810 = vunpack.c.0.s8 %v8809
    %v8811 = vlaneseq
    %v8812 = vshrl.u32 %v8811, 7
    %v8813 = vsub.s32 %v8810, %v8812
    %v8814 = vrot.slane %v8798, %v8813
    %v8816 = vunpack.c.l.s4 1966171168
    %v8817 = vunpack.c.0.s8 %v8816
    %v8818 = vlaneseq
    %v8819 = vshrl.u32 %v8818, 7
    %v8820 = vsub.s32 %v8817, %v8819
    %v8821 = vrot.slane %v8799, %v8820
    %v8823 = vunpack.c.l.s4 1966171168
    %v8824 = vunpack.c.0.s8 %v8823
    %v8825 = vlaneseq
    %v8826 = vshrl.u32 %v8825, 7
    %v8827 = vsub.s32 %v8824, %v8826
    %v8828 = vrot.slane %v8800, %v8827
    %v8829 = vcombine.low %v8807, %v8814
    %v8830 = vcombine.low %v8821, %v8828
    %v8832 = vunpack.c.l.s4 1966171168
    %v8833 = vunpack.c.0.s8 %v8832
    %v8834 = vlaneseq
    %v8835 = vshrl.u32 %v8834, 7
    %v8836 = vsub.s32 %v8833, %v8835
    %v8837 = vrot.slane %v8829, %v8836
    %v8839 = vunpack.c.l.s4 1966171168
    %v8840 = vunpack.c.0.s8 %v8839
    %v8841 = vlaneseq
    %v8842 = vshrl.u32 %v8841, 7
    %v8843 = vsub.s32 %v8840, %v8842
    %v8844 = vrot.slane %v8830, %v8843
    %v8845 = vcombine.low %v8837, %v8844
    %v8846 = vcombine.low %v5849, %v5853
    %v8847 = vcombine.low %v5857, %v5861
    %v8848 = vcombine.low %v5865, %v5869
    %v8849 = vcombine.low %v5873, %v5877
    %v8851 = vunpack.c.l.s4 1966171168
    %v8852 = vunpack.c.0.s8 %v8851
    %v8853 = vlaneseq
    %v8854 = vshrl.u32 %v8853, 7
    %v8855 = vsub.s32 %v8852, %v8854
    %v8856 = vrot.slane %v8846, %v8855
    %v8858 = vunpack.c.l.s4 1966171168
    %v8859 = vunpack.c.0.s8 %v8858
    %v8860 = vlaneseq
    %v8861 = vshrl.u32 %v8860, 7
    %v8862 = vsub.s32 %v8859, %v8861
    %v8863 = vrot.slane %v8847, %v8862
    %v8865 = vunpack.c.l.s4 1966171168
    %v8866 = vunpack.c.0.s8 %v8865
    %v8867 = vlaneseq
    %v8868 = vshrl.u32 %v8867, 7
    %v8869 = vsub.s32 %v8866, %v8868
    %v8870 = vrot.slane %v8848, %v8869
    %v8872 = vunpack.c.l.s4 1966171168
    %v8873 = vunpack.c.0.s8 %v8872
    %v8874 = vlaneseq
    %v8875 = vshrl.u32 %v8874, 7
    %v8876 = vsub.s32 %v8873, %v8875
    %v8877 = vrot.slane %v8849, %v8876
    %v8878 = vcombine.low %v8856, %v8863
    %v8879 = vcombine.low %v8870, %v8877
    %v8881 = vunpack.c.l.s4 1966171168
    %v8882 = vunpack.c.0.s8 %v8881
    %v8883 = vlaneseq
    %v8884 = vshrl.u32 %v8883, 7
    %v8885 = vsub.s32 %v8882, %v8884
    %v8886 = vrot.slane %v8878, %v8885
    %v8888 = vunpack.c.l.s4 1966171168
    %v8889 = vunpack.c.0.s8 %v8888
    %v8890 = vlaneseq
    %v8891 = vshrl.u32 %v8890, 7
    %v8892 = vsub.s32 %v8889, %v8891
    %v8893 = vrot.slane %v8879, %v8892
    %v8894 = vcombine.low %v8886, %v8893
    %v8895 = vcombine.low %v5881, %v5885
    %v8896 = vcombine.low %v5889, %v5893
    %v8897 = vcombine.low %v5897, %v5901
    %v8898 = vcombine.low %v5905, %v5909
    %v8900 = vunpack.c.l.s4 1966171168
    %v8901 = vunpack.c.0.s8 %v8900
    %v8902 = vlaneseq
    %v8903 = vshrl.u32 %v8902, 7
    %v8904 = vsub.s32 %v8901, %v8903
    %v8905 = vrot.slane %v8895, %v8904
    %v8907 = vunpack.c.l.s4 1966171168
    %v8908 = vunpack.c.0.s8 %v8907
    %v8909 = vlaneseq
    %v8910 = vshrl.u32 %v8909, 7
    %v8911 = vsub.s32 %v8908, %v8910
    %v8912 = vrot.slane %v8896, %v8911
    %v8914 = vunpack.c.l.s4 1966171168
    %v8915 = vunpack.c.0.s8 %v8914
    %v8916 = vlaneseq
    %v8917 = vshrl.u32 %v8916, 7
    %v8918 = vsub.s32 %v8915, %v8917
    %v8919 = vrot.slane %v8897, %v8918
    %v8921 = vunpack.c.l.s4 1966171168
    %v8922 = vunpack.c.0.s8 %v8921
    %v8923 = vlaneseq
    %v8924 = vshrl.u32 %v8923, 7
    %v8925 = vsub.s32 %v8922, %v8924
    %v8926 = vrot.slane %v8898, %v8925
    %v8927 = vcombine.low %v8905, %v8912
    %v8928 = vcombine.low %v8919, %v8926
    %v8930 = vunpack.c.l.s4 1966171168
    %v8931 = vunpack.c.0.s8 %v8930
    %v8932 = vlaneseq
    %v8933 = vshrl.u32 %v8932, 7
    %v8934 = vsub.s32 %v8931, %v8933
    %v8935 = vrot.slane %v8927, %v8934
    %v8937 = vunpack.c.l.s4 1966171168
    %v8938 = vunpack.c.0.s8 %v8937
    %v8939 = vlaneseq
    %v8940 = vshrl.u32 %v8939, 7
    %v8941 = vsub.s32 %v8938, %v8940
    %v8942 = vrot.slane %v8928, %v8941
    %v8943 = vcombine.low %v8935, %v8942
    %v8944 = vcombine.low %v5913, %v5917
    %v8945 = vcombine.low %v5921, %v5925
    %v8946 = vcombine.low %v5929, %v5933
    %v8947 = vcombine.low %v5937, %v5941
    %v8949 = vunpack.c.l.s4 1966171168
    %v8950 = vunpack.c.0.s8 %v8949
    %v8951 = vlaneseq
    %v8952 = vshrl.u32 %v8951, 7
    %v8953 = vsub.s32 %v8950, %v8952
    %v8954 = vrot.slane %v8944, %v8953
    %v8956 = vunpack.c.l.s4 1966171168
    %v8957 = vunpack.c.0.s8 %v8956
    %v8958 = vlaneseq
    %v8959 = vshrl.u32 %v8958, 7
    %v8960 = vsub.s32 %v8957, %v8959
    %v8961 = vrot.slane %v8945, %v8960
    %v8963 = vunpack.c.l.s4 1966171168
    %v8964 = vunpack.c.0.s8 %v8963
    %v8965 = vlaneseq
    %v8966 = vshrl.u32 %v8965, 7
    %v8967 = vsub.s32 %v8964, %v8966
    %v8968 = vrot.slane %v8946, %v8967
    %v8970 = vunpack.c.l.s4 1966171168
    %v8971 = vunpack.c.0.s8 %v8970
    %v8972 = vlaneseq
    %v8973 = vshrl.u32 %v8972, 7
    %v8974 = vsub.s32 %v8971, %v8973
    %v8975 = vrot.slane %v8947, %v8974
    %v8976 = vcombine.low %v8954, %v8961
    %v8977 = vcombine.low %v8968, %v8975
    %v8979 = vunpack.c.l.s4 1966171168
    %v8980 = vunpack.c.0.s8 %v8979
    %v8981 = vlaneseq
    %v8982 = vshrl.u32 %v8981, 7
    %v8983 = vsub.s32 %v8980, %v8982
    %v8984 = vrot.slane %v8976, %v8983
    %v8986 = vunpack.c.l.s4 1966171168
    %v8987 = vunpack.c.0.s8 %v8986
    %v8988 = vlaneseq
    %v8989 = vshrl.u32 %v8988, 7
    %v8990 = vsub.s32 %v8987, %v8989
    %v8991 = vrot.slane %v8977, %v8990
    %v8992 = vcombine.low %v8984, %v8991
    %v8993 = vcombine.low %v5945, %v5949
    %v8994 = vcombine.low %v5953, %v5957
    %v8995 = vcombine.low %v5961, %v5965
    %v8996 = vcombine.low %v5969, %v5973
    %v8998 = vunpack.c.l.s4 1966171168
    %v8999 = vunpack.c.0.s8 %v8998
    %v9000 = vlaneseq
    %v9001 = vshrl.u32 %v9000, 7
    %v9002 = vsub.s32 %v8999, %v9001
    %v9003 = vrot.slane %v8993, %v9002
    %v9005 = vunpack.c.l.s4 1966171168
    %v9006 = vunpack.c.0.s8 %v9005
    %v9007 = vlaneseq
    %v9008 = vshrl.u32 %v9007, 7
    %v9009 = vsub.s32 %v9006, %v9008
    %v9010 = vrot.slane %v8994, %v9009
    %v9012 = vunpack.c.l.s4 1966171168
    %v9013 = vunpack.c.0.s8 %v9012
    %v9014 = vlaneseq
    %v9015 = vshrl.u32 %v9014, 7
    %v9016 = vsub.s32 %v9013, %v9015
    %v9017 = vrot.slane %v8995, %v9016
    %v9019 = vunpack.c.l.s4 1966171168
    %v9020 = vunpack.c.0.s8 %v9019
    %v9021 = vlaneseq
    %v9022 = vshrl.u32 %v9021, 7
    %v9023 = vsub.s32 %v9020, %v9022
    %v9024 = vrot.slane %v8996, %v9023
    %v9025 = vcombine.low %v9003, %v9010
    %v9026 = vcombine.low %v9017, %v9024
    %v9028 = vunpack.c.l.s4 1966171168
    %v9029 = vunpack.c.0.s8 %v9028
    %v9030 = vlaneseq
    %v9031 = vshrl.u32 %v9030, 7
    %v9032 = vsub.s32 %v9029, %v9031
    %v9033 = vrot.slane %v9025, %v9032
    %v9035 = vunpack.c.l.s4 1966171168
    %v9036 = vunpack.c.0.s8 %v9035
    %v9037 = vlaneseq
    %v9038 = vshrl.u32 %v9037, 7
    %v9039 = vsub.s32 %v9036, %v9038
    %v9040 = vrot.slane %v9026, %v9039
    %v9041 = vcombine.low %v9033, %v9040
    %v9042 = vcombine.low %v5977, %v5981
    %v9043 = vcombine.low %v5985, %v5989
    %v9044 = vcombine.low %v5993, %v5997
    %v9045 = vcombine.low %v6001, %v6005
    %v9047 = vunpack.c.l.s4 1966171168
    %v9048 = vunpack.c.0.s8 %v9047
    %v9049 = vlaneseq
    %v9050 = vshrl.u32 %v9049, 7
    %v9051 = vsub.s32 %v9048, %v9050
    %v9052 = vrot.slane %v9042, %v9051
    %v9054 = vunpack.c.l.s4 1966171168
    %v9055 = vunpack.c.0.s8 %v9054
    %v9056 = vlaneseq
    %v9057 = vshrl.u32 %v9056, 7
    %v9058 = vsub.s32 %v9055, %v9057
    %v9059 = vrot.slane %v9043, %v9058
    %v9061 = vunpack.c.l.s4 1966171168
    %v9062 = vunpack.c.0.s8 %v9061
    %v9063 = vlaneseq
    %v9064 = vshrl.u32 %v9063, 7
    %v9065 = vsub.s32 %v9062, %v9064
    %v9066 = vrot.slane %v9044, %v9065
    %v9068 = vunpack.c.l.s4 1966171168
    %v9069 = vunpack.c.0.s8 %v9068
    %v9070 = vlaneseq
    %v9071 = vshrl.u32 %v9070, 7
    %v9072 = vsub.s32 %v9069, %v9071
    %v9073 = vrot.slane %v9045, %v9072
    %v9074 = vcombine.low %v9052, %v9059
    %v9075 = vcombine.low %v9066, %v9073
    %v9077 = vunpack.c.l.s4 1966171168
    %v9078 = vunpack.c.0.s8 %v9077
    %v9079 = vlaneseq
    %v9080 = vshrl.u32 %v9079, 7
    %v9081 = vsub.s32 %v9078, %v9080
    %v9082 = vrot.slane %v9074, %v9081
    %v9084 = vunpack.c.l.s4 1966171168
    %v9085 = vunpack.c.0.s8 %v9084
    %v9086 = vlaneseq
    %v9087 = vshrl.u32 %v9086, 7
    %v9088 = vsub.s32 %v9085, %v9087
    %v9089 = vrot.slane %v9075, %v9088
    %v9090 = vcombine.low %v9082, %v9089
    %v9091 = vcombine.low %v6009, %v6013
    %v9092 = vcombine.low %v6017, %v6021
    %v9093 = vcombine.low %v6025, %v6029
    %v9094 = vcombine.low %v6033, %v6037
    %v9096 = vunpack.c.l.s4 1966171168
    %v9097 = vunpack.c.0.s8 %v9096
    %v9098 = vlaneseq
    %v9099 = vshrl.u32 %v9098, 7
    %v9100 = vsub.s32 %v9097, %v9099
    %v9101 = vrot.slane %v9091, %v9100
    %v9103 = vunpack.c.l.s4 1966171168
    %v9104 = vunpack.c.0.s8 %v9103
    %v9105 = vlaneseq
    %v9106 = vshrl.u32 %v9105, 7
    %v9107 = vsub.s32 %v9104, %v9106
    %v9108 = vrot.slane %v9092, %v9107
    %v9110 = vunpack.c.l.s4 1966171168
    %v9111 = vunpack.c.0.s8 %v9110
    %v9112 = vlaneseq
    %v9113 = vshrl.u32 %v9112, 7
    %v9114 = vsub.s32 %v9111, %v9113
    %v9115 = vrot.slane %v9093, %v9114
    %v9117 = vunpack.c.l.s4 1966171168
    %v9118 = vunpack.c.0.s8 %v9117
    %v9119 = vlaneseq
    %v9120 = vshrl.u32 %v9119, 7
    %v9121 = vsub.s32 %v9118, %v9120
    %v9122 = vrot.slane %v9094, %v9121
    %v9123 = vcombine.low %v9101, %v9108
    %v9124 = vcombine.low %v9115, %v9122
    %v9126 = vunpack.c.l.s4 1966171168
    %v9127 = vunpack.c.0.s8 %v9126
    %v9128 = vlaneseq
    %v9129 = vshrl.u32 %v9128, 7
    %v9130 = vsub.s32 %v9127, %v9129
    %v9131 = vrot.slane %v9123, %v9130
    %v9133 = vunpack.c.l.s4 1966171168
    %v9134 = vunpack.c.0.s8 %v9133
    %v9135 = vlaneseq
    %v9136 = vshrl.u32 %v9135, 7
    %v9137 = vsub.s32 %v9134, %v9136
    %v9138 = vrot.slane %v9124, %v9137
    %v9139 = vcombine.low %v9131, %v9138
    %v9140 = vcombine.low %v6041, %v6045
    %v9141 = vcombine.low %v6049, %v6053
    %v9142 = vcombine.low %v6057, %v6061
    %v9143 = vcombine.low %v6065, %v6069
    %v9145 = vunpack.c.l.s4 1966171168
    %v9146 = vunpack.c.0.s8 %v9145
    %v9147 = vlaneseq
    %v9148 = vshrl.u32 %v9147, 7
    %v9149 = vsub.s32 %v9146, %v9148
    %v9150 = vrot.slane %v9140, %v9149
    %v9152 = vunpack.c.l.s4 1966171168
    %v9153 = vunpack.c.0.s8 %v9152
    %v9154 = vlaneseq
    %v9155 = vshrl.u32 %v9154, 7
    %v9156 = vsub.s32 %v9153, %v9155
    %v9157 = vrot.slane %v9141, %v9156
    %v9159 = vunpack.c.l.s4 1966171168
    %v9160 = vunpack.c.0.s8 %v9159
    %v9161 = vlaneseq
    %v9162 = vshrl.u32 %v9161, 7
    %v9163 = vsub.s32 %v9160, %v9162
    %v9164 = vrot.slane %v9142, %v9163
    %v9166 = vunpack.c.l.s4 1966171168
    %v9167 = vunpack.c.0.s8 %v9166
    %v9168 = vlaneseq
    %v9169 = vshrl.u32 %v9168, 7
    %v9170 = vsub.s32 %v9167, %v9169
    %v9171 = vrot.slane %v9143, %v9170
    %v9172 = vcombine.low %v9150, %v9157
    %v9173 = vcombine.low %v9164, %v9171
    %v9175 = vunpack.c.l.s4 1966171168
    %v9176 = vunpack.c.0.s8 %v9175
    %v9177 = vlaneseq
    %v9178 = vshrl.u32 %v9177, 7
    %v9179 = vsub.s32 %v9176, %v9178
    %v9180 = vrot.slane %v9172, %v9179
    %v9182 = vunpack.c.l.s4 1966171168
    %v9183 = vunpack.c.0.s8 %v9182
    %v9184 = vlaneseq
    %v9185 = vshrl.u32 %v9184, 7
    %v9186 = vsub.s32 %v9183, %v9185
    %v9187 = vrot.slane %v9173, %v9186
    %v9188 = vcombine.low %v9180, %v9187
    %v9189 = vcombine.low %v6073, %v6077
    %v9190 = vcombine.low %v6081, %v6085
    %v9191 = vcombine.low %v6089, %v6093
    %v9192 = vcombine.low %v6097, %v6101
    %v9194 = vunpack.c.l.s4 1966171168
    %v9195 = vunpack.c.0.s8 %v9194
    %v9196 = vlaneseq
    %v9197 = vshrl.u32 %v9196, 7
    %v9198 = vsub.s32 %v9195, %v9197
    %v9199 = vrot.slane %v9189, %v9198
    %v9201 = vunpack.c.l.s4 1966171168
    %v9202 = vunpack.c.0.s8 %v9201
    %v9203 = vlaneseq
    %v9204 = vshrl.u32 %v9203, 7
    %v9205 = vsub.s32 %v9202, %v9204
    %v9206 = vrot.slane %v9190, %v9205
    %v9208 = vunpack.c.l.s4 1966171168
    %v9209 = vunpack.c.0.s8 %v9208
    %v9210 = vlaneseq
    %v9211 = vshrl.u32 %v9210, 7
    %v9212 = vsub.s32 %v9209, %v9211
    %v9213 = vrot.slane %v9191, %v9212
    %v9215 = vunpack.c.l.s4 1966171168
    %v9216 = vunpack.c.0.s8 %v9215
    %v9217 = vlaneseq
    %v9218 = vshrl.u32 %v9217, 7
    %v9219 = vsub.s32 %v9216, %v9218
    %v9220 = vrot.slane %v9192, %v9219
    %v9221 = vcombine.low %v9199, %v9206
    %v9222 = vcombine.low %v9213, %v9220
    %v9224 = vunpack.c.l.s4 1966171168
    %v9225 = vunpack.c.0.s8 %v9224
    %v9226 = vlaneseq
    %v9227 = vshrl.u32 %v9226, 7
    %v9228 = vsub.s32 %v9225, %v9227
    %v9229 = vrot.slane %v9221, %v9228
    %v9231 = vunpack.c.l.s4 1966171168
    %v9232 = vunpack.c.0.s8 %v9231
    %v9233 = vlaneseq
    %v9234 = vshrl.u32 %v9233, 7
    %v9235 = vsub.s32 %v9232, %v9234
    %v9236 = vrot.slane %v9222, %v9235
    %v9237 = vcombine.low %v9229, %v9236
    %9238 = vset.pattern.permute.xlu0 0
    %9239 = vperm.xlu0 %9238, %v6150
    %v9240 = vpop.permute.xlu0 %9239
    %9241 = vset.pattern.permute.xlu0 0
    %9242 = vperm.xlu0 %9241, %v6199
    %v9243 = vpop.permute.xlu0 %9242
    %9244 = vset.pattern.permute.xlu0 0
    %9245 = vperm.xlu0 %9244, %v6248
    %v9246 = vpop.permute.xlu0 %9245
    %9247 = vset.pattern.permute.xlu0 0
    %9248 = vperm.xlu0 %9247, %v6297
    %v9249 = vpop.permute.xlu0 %9248
    %9250 = vset.pattern.permute.xlu0 0
    %9251 = vperm.xlu0 %9250, %v6346
    %v9252 = vpop.permute.xlu0 %9251
    %9253 = vset.pattern.permute.xlu0 0
    %9254 = vperm.xlu0 %9253, %v6395
    %v9255 = vpop.permute.xlu0 %9254
    %9256 = vset.pattern.permute.xlu0 0
    %9257 = vperm.xlu0 %9256, %v6444
    %v9258 = vpop.permute.xlu0 %9257
    %9259 = vset.pattern.permute.xlu0 0
    %9260 = vperm.xlu0 %9259, %v6493
    %v9261 = vpop.permute.xlu0 %9260
    %9262 = vset.pattern.permute.xlu0 0
    %9263 = vperm.xlu0 %9262, %v6542
    %v9264 = vpop.permute.xlu0 %9263
    %9265 = vset.pattern.permute.xlu0 0
    %9266 = vperm.xlu0 %9265, %v6591
    %v9267 = vpop.permute.xlu0 %9266
    %9268 = vset.pattern.permute.xlu0 0
    %9269 = vperm.xlu0 %9268, %v6640
    %v9270 = vpop.permute.xlu0 %9269
    %9271 = vset.pattern.permute.xlu0 0
    %9272 = vperm.xlu0 %9271, %v6689
    %v9273 = vpop.permute.xlu0 %9272
    %9274 = vset.pattern.permute.xlu0 0
    %9275 = vperm.xlu0 %9274, %v6738
    %v9276 = vpop.permute.xlu0 %9275
    %9277 = vset.pattern.permute.xlu0 0
    %9278 = vperm.xlu0 %9277, %v6787
    %v9279 = vpop.permute.xlu0 %9278
    %9280 = vset.pattern.permute.xlu0 0
    %9281 = vperm.xlu0 %9280, %v6836
    %v9282 = vpop.permute.xlu0 %9281
    %9283 = vset.pattern.permute.xlu0 0
    %9284 = vperm.xlu0 %9283, %v6885
    %v9285 = vpop.permute.xlu0 %9284
    %9286 = vset.pattern.permute.xlu0 0
    %9287 = vperm.xlu0 %9286, %v6934
    %v9288 = vpop.permute.xlu0 %9287
    %9289 = vset.pattern.permute.xlu0 0
    %9290 = vperm.xlu0 %9289, %v6983
    %v9291 = vpop.permute.xlu0 %9290
    %9292 = vset.pattern.permute.xlu0 0
    %9293 = vperm.xlu0 %9292, %v7032
    %v9294 = vpop.permute.xlu0 %9293
    %9295 = vset.pattern.permute.xlu0 0
    %9296 = vperm.xlu0 %9295, %v7081
    %v9297 = vpop.permute.xlu0 %9296
    %9298 = vset.pattern.permute.xlu0 0
    %9299 = vperm.xlu0 %9298, %v7130
    %v9300 = vpop.permute.xlu0 %9299
    %9301 = vset.pattern.permute.xlu0 0
    %9302 = vperm.xlu0 %9301, %v7179
    %v9303 = vpop.permute.xlu0 %9302
    %9304 = vset.pattern.permute.xlu0 0
    %9305 = vperm.xlu0 %9304, %v7228
    %v9306 = vpop.permute.xlu0 %9305
    %9307 = vset.pattern.permute.xlu0 0
    %9308 = vperm.xlu0 %9307, %v7277
    %v9309 = vpop.permute.xlu0 %9308
    %9310 = vset.pattern.permute.xlu0 0
    %9311 = vperm.xlu0 %9310, %v7326
    %v9312 = vpop.permute.xlu0 %9311
    %9313 = vset.pattern.permute.xlu0 0
    %9314 = vperm.xlu0 %9313, %v7375
    %v9315 = vpop.permute.xlu0 %9314
    %9316 = vset.pattern.permute.xlu0 0
    %9317 = vperm.xlu0 %9316, %v7424
    %v9318 = vpop.permute.xlu0 %9317
    %9319 = vset.pattern.permute.xlu0 0
    %9320 = vperm.xlu0 %9319, %v7473
    %v9321 = vpop.permute.xlu0 %9320
    %9322 = vset.pattern.permute.xlu0 0
    %9323 = vperm.xlu0 %9322, %v7522
    %v9324 = vpop.permute.xlu0 %9323
    %9325 = vset.pattern.permute.xlu0 0
    %9326 = vperm.xlu0 %9325, %v7571
    %v9327 = vpop.permute.xlu0 %9326
    %9328 = vset.pattern.permute.xlu0 0
    %9329 = vperm.xlu0 %9328, %v7620
    %v9330 = vpop.permute.xlu0 %9329
    %9331 = vset.pattern.permute.xlu0 0
    %9332 = vperm.xlu0 %9331, %v7669
    %v9333 = vpop.permute.xlu0 %9332
    %9334 = vset.pattern.permute.xlu0 0
    %9335 = vperm.xlu0 %9334, %v7718
    %v9336 = vpop.permute.xlu0 %9335
    %9337 = vset.pattern.permute.xlu0 0
    %9338 = vperm.xlu0 %9337, %v7767
    %v9339 = vpop.permute.xlu0 %9338
    %9340 = vset.pattern.permute.xlu0 0
    %9341 = vperm.xlu0 %9340, %v7816
    %v9342 = vpop.permute.xlu0 %9341
    %9343 = vset.pattern.permute.xlu0 0
    %9344 = vperm.xlu0 %9343, %v7865
    %v9345 = vpop.permute.xlu0 %9344
    %9346 = vset.pattern.permute.xlu0 0
    %9347 = vperm.xlu0 %9346, %v7914
    %v9348 = vpop.permute.xlu0 %9347
    %9349 = vset.pattern.permute.xlu0 0
    %9350 = vperm.xlu0 %9349, %v7963
    %v9351 = vpop.permute.xlu0 %9350
    %9352 = vset.pattern.permute.xlu0 0
    %9353 = vperm.xlu0 %9352, %v8012
    %v9354 = vpop.permute.xlu0 %9353
    %9355 = vset.pattern.permute.xlu0 0
    %9356 = vperm.xlu0 %9355, %v8061
    %v9357 = vpop.permute.xlu0 %9356
    %9358 = vset.pattern.permute.xlu0 0
    %9359 = vperm.xlu0 %9358, %v8110
    %v9360 = vpop.permute.xlu0 %9359
    %9361 = vset.pattern.permute.xlu0 0
    %9362 = vperm.xlu0 %9361, %v8159
    %v9363 = vpop.permute.xlu0 %9362
    %9364 = vset.pattern.permute.xlu0 0
    %9365 = vperm.xlu0 %9364, %v8208
    %v9366 = vpop.permute.xlu0 %9365
    %9367 = vset.pattern.permute.xlu0 0
    %9368 = vperm.xlu0 %9367, %v8257
    %v9369 = vpop.permute.xlu0 %9368
    %9370 = vset.pattern.permute.xlu0 0
    %9371 = vperm.xlu0 %9370, %v8306
    %v9372 = vpop.permute.xlu0 %9371
    %9373 = vset.pattern.permute.xlu0 0
    %9374 = vperm.xlu0 %9373, %v8355
    %v9375 = vpop.permute.xlu0 %9374
    %9376 = vset.pattern.permute.xlu0 0
    %9377 = vperm.xlu0 %9376, %v8404
    %v9378 = vpop.permute.xlu0 %9377
    %9379 = vset.pattern.permute.xlu0 0
    %9380 = vperm.xlu0 %9379, %v8453
    %v9381 = vpop.permute.xlu0 %9380
    %9382 = vset.pattern.permute.xlu0 0
    %9383 = vperm.xlu0 %9382, %v8502
    %v9384 = vpop.permute.xlu0 %9383
    %9385 = vset.pattern.permute.xlu0 0
    %9386 = vperm.xlu0 %9385, %v8551
    %v9387 = vpop.permute.xlu0 %9386
    %9388 = vset.pattern.permute.xlu0 0
    %9389 = vperm.xlu0 %9388, %v8600
    %v9390 = vpop.permute.xlu0 %9389
    %9391 = vset.pattern.permute.xlu0 0
    %9392 = vperm.xlu0 %9391, %v8649
    %v9393 = vpop.permute.xlu0 %9392
    %9394 = vset.pattern.permute.xlu0 0
    %9395 = vperm.xlu0 %9394, %v8698
    %v9396 = vpop.permute.xlu0 %9395
    %9397 = vset.pattern.permute.xlu0 0
    %9398 = vperm.xlu0 %9397, %v8747
    %v9399 = vpop.permute.xlu0 %9398
    %9400 = vset.pattern.permute.xlu0 0
    %9401 = vperm.xlu0 %9400, %v8796
    %v9402 = vpop.permute.xlu0 %9401
    %9403 = vset.pattern.permute.xlu0 0
    %9404 = vperm.xlu0 %9403, %v8845
    %v9405 = vpop.permute.xlu0 %9404
    %9406 = vset.pattern.permute.xlu0 0
    %9407 = vperm.xlu0 %9406, %v8894
    %v9408 = vpop.permute.xlu0 %9407
    %9409 = vset.pattern.permute.xlu0 0
    %9410 = vperm.xlu0 %9409, %v8943
    %v9411 = vpop.permute.xlu0 %9410
    %9412 = vset.pattern.permute.xlu0 0
    %9413 = vperm.xlu0 %9412, %v8992
    %v9414 = vpop.permute.xlu0 %9413
    %9415 = vset.pattern.permute.xlu0 0
    %9416 = vperm.xlu0 %9415, %v9041
    %v9417 = vpop.permute.xlu0 %9416
    %9418 = vset.pattern.permute.xlu0 0
    %9419 = vperm.xlu0 %9418, %v9090
    %v9420 = vpop.permute.xlu0 %9419
    %9421 = vset.pattern.permute.xlu0 0
    %9422 = vperm.xlu0 %9421, %v9139
    %v9423 = vpop.permute.xlu0 %9422
    %9424 = vset.pattern.permute.xlu0 0
    %9425 = vperm.xlu0 %9424, %v9188
    %v9426 = vpop.permute.xlu0 %9425
    %9427 = vset.pattern.permute.xlu0 0
    %9428 = vperm.xlu0 %9427, %v9237
    %v9429 = vpop.permute.xlu0 %9428
    %v9430 = vlaneseq
    %v9431 = vand.u32 %v9430, 127
    %v9432 = vlaneseq
    %v9433 = vshrl.u32 %v9432, 7
    %v9434 = vsub.s32 %v9431, %v9433
    %v9435 = vrot.slane %v9240, %v9434
    %v9436 = vadd.s32 %v9431, 4294967288
    %v9437 = vlaneseq
    %v9438 = vshrl.u32 %v9437, 7
    %v9439 = vsub.s32 %v9436, %v9438
    %v9440 = vrot.slane %v9243, %v9439
    %vm9441 = vcmask 130112
    %v9442 = vsel %vm9441, %v9440, %v9435
    %v9443 = vadd.s32 %v9431, 4294967280
    %v9444 = vlaneseq
    %v9445 = vshrl.u32 %v9444, 7
    %v9446 = vsub.s32 %v9443, %v9445
    %v9447 = vrot.slane %v9246, %v9446
    %vm9448 = vcmask 195712
    %v9449 = vsel %vm9448, %v9447, %v9442
    %v9450 = vadd.s32 %v9431, 4294967272
    %v9451 = vlaneseq
    %v9452 = vshrl.u32 %v9451, 7
    %v9453 = vsub.s32 %v9450, %v9452
    %v9454 = vrot.slane %v9249, %v9453
    %vm9455 = vcmask 261312
    %v9456 = vsel %vm9455, %v9454, %v9449
    %v9457 = vadd.s32 %v9431, 4294967264
    %v9458 = vlaneseq
    %v9459 = vshrl.u32 %v9458, 7
    %v9460 = vsub.s32 %v9457, %v9459
    %v9461 = vrot.slane %v9252, %v9460
    %vm9462 = vcmask 326912
    %v9463 = vsel %vm9462, %v9461, %v9456
    %v9464 = vadd.s32 %v9431, 4294967256
    %v9465 = vlaneseq
    %v9466 = vshrl.u32 %v9465, 7
    %v9467 = vsub.s32 %v9464, %v9466
    %v9468 = vrot.slane %v9255, %v9467
    %vm9469 = vcmask 392512
    %v9470 = vsel %vm9469, %v9468, %v9463
    %v9471 = vadd.s32 %v9431, 4294967248
    %v9472 = vlaneseq
    %v9473 = vshrl.u32 %v9472, 7
    %v9474 = vsub.s32 %v9471, %v9473
    %v9475 = vrot.slane %v9258, %v9474
    %vm9476 = vcmask 458112
    %v9477 = vsel %vm9476, %v9475, %v9470
    %v9478 = vadd.s32 %v9431, 4294967240
    %v9479 = vlaneseq
    %v9480 = vshrl.u32 %v9479, 7
    %v9481 = vsub.s32 %v9478, %v9480
    %v9482 = vrot.slane %v9261, %v9481
    %vm9483 = vcmask 523712
    %v9484 = vsel %vm9483, %v9482, %v9477
    %v9485 = vadd.s32 %v9431, 4294967232
    %v9486 = vlaneseq
    %v9487 = vshrl.u32 %v9486, 7
    %v9488 = vsub.s32 %v9485, %v9487
    %v9489 = vrot.slane %v9264, %v9488
    %vm9490 = vcmask 589312
    %v9491 = vsel %vm9490, %v9489, %v9484
    %v9492 = vadd.s32 %v9431, 4294967224
    %v9493 = vlaneseq
    %v9494 = vshrl.u32 %v9493, 7
    %v9495 = vsub.s32 %v9492, %v9494
    %v9496 = vrot.slane %v9267, %v9495
    %vm9497 = vcmask 654912
    %v9498 = vsel %vm9497, %v9496, %v9491
    %v9499 = vadd.s32 %v9431, 4294967216
    %v9500 = vlaneseq
    %v9501 = vshrl.u32 %v9500, 7
    %v9502 = vsub.s32 %v9499, %v9501
    %v9503 = vrot.slane %v9270, %v9502
    %vm9504 = vcmask 720512
    %v9505 = vsel %vm9504, %v9503, %v9498
    %v9506 = vadd.s32 %v9431, 4294967208
    %v9507 = vlaneseq
    %v9508 = vshrl.u32 %v9507, 7
    %v9509 = vsub.s32 %v9506, %v9508
    %v9510 = vrot.slane %v9273, %v9509
    %vm9511 = vcmask 786112
    %v9512 = vsel %vm9511, %v9510, %v9505
    %v9513 = vadd.s32 %v9431, 4294967200
    %v9514 = vlaneseq
    %v9515 = vshrl.u32 %v9514, 7
    %v9516 = vsub.s32 %v9513, %v9515
    %v9517 = vrot.slane %v9276, %v9516
    %vm9518 = vcmask 851712
    %v9519 = vsel %vm9518, %v9517, %v9512
    %v9520 = vadd.s32 %v9431, 4294967192
    %v9521 = vlaneseq
    %v9522 = vshrl.u32 %v9521, 7
    %v9523 = vsub.s32 %v9520, %v9522
    %v9524 = vrot.slane %v9279, %v9523
    %vm9525 = vcmask 917312
    %v9526 = vsel %vm9525, %v9524, %v9519
    %v9527 = vadd.s32 %v9431, 4294967184
    %v9528 = vlaneseq
    %v9529 = vshrl.u32 %v9528, 7
    %v9530 = vsub.s32 %v9527, %v9529
    %v9531 = vrot.slane %v9282, %v9530
    %vm9532 = vcmask 982912
    %v9533 = vsel %vm9532, %v9531, %v9526
    %v9534 = vadd.s32 %v9431, 4294967176
    %v9535 = vlaneseq
    %v9536 = vshrl.u32 %v9535, 7
    %v9537 = vsub.s32 %v9534, %v9536
    %v9538 = vrot.slane %v9285, %v9537
    %vm9539 = vcmask 1048512
    %v9540 = vsel %vm9539, %v9538, %v9533
    %v9541 = vlaneseq
    %v9542 = vshrl.u32 %v9541, 7
    %v9543 = vsub.s32 %v9431, %v9542
    %v9544 = vrot.slane %v9288, %v9543
    %v9545 = vlaneseq
    %v9546 = vshrl.u32 %v9545, 7
    %v9547 = vsub.s32 %v9436, %v9546
    %v9548 = vrot.slane %v9291, %v9547
    %v9549 = vsel %vm9441, %v9548, %v9544
    %v9550 = vlaneseq
    %v9551 = vshrl.u32 %v9550, 7
    %v9552 = vsub.s32 %v9443, %v9551
    %v9553 = vrot.slane %v9294, %v9552
    %v9554 = vsel %vm9448, %v9553, %v9549
    %v9555 = vlaneseq
    %v9556 = vshrl.u32 %v9555, 7
    %v9557 = vsub.s32 %v9450, %v9556
    %v9558 = vrot.slane %v9297, %v9557
    %v9559 = vsel %vm9455, %v9558, %v9554
    %v9560 = vlaneseq
    %v9561 = vshrl.u32 %v9560, 7
    %v9562 = vsub.s32 %v9457, %v9561
    %v9563 = vrot.slane %v9300, %v9562
    %v9564 = vsel %vm9462, %v9563, %v9559
    %v9565 = vlaneseq
    %v9566 = vshrl.u32 %v9565, 7
    %v9567 = vsub.s32 %v9464, %v9566
    %v9568 = vrot.slane %v9303, %v9567
    %v9569 = vsel %vm9469, %v9568, %v9564
    %v9570 = vlaneseq
    %v9571 = vshrl.u32 %v9570, 7
    %v9572 = vsub.s32 %v9471, %v9571
    %v9573 = vrot.slane %v9306, %v9572
    %v9574 = vsel %vm9476, %v9573, %v9569
    %v9575 = vlaneseq
    %v9576 = vshrl.u32 %v9575, 7
    %v9577 = vsub.s32 %v9478, %v9576
    %v9578 = vrot.slane %v9309, %v9577
    %v9579 = vsel %vm9483, %v9578, %v9574
    %v9580 = vlaneseq
    %v9581 = vshrl.u32 %v9580, 7
    %v9582 = vsub.s32 %v9485, %v9581
    %v9583 = vrot.slane %v9312, %v9582
    %v9584 = vsel %vm9490, %v9583, %v9579
    %v9585 = vlaneseq
    %v9586 = vshrl.u32 %v9585, 7
    %v9587 = vsub.s32 %v9492, %v9586
    %v9588 = vrot.slane %v9315, %v9587
    %v9589 = vsel %vm9497, %v9588, %v9584
    %v9590 = vlaneseq
    %v9591 = vshrl.u32 %v9590, 7
    %v9592 = vsub.s32 %v9499, %v9591
    %v9593 = vrot.slane %v9318, %v9592
    %v9594 = vsel %vm9504, %v9593, %v9589
    %v9595 = vlaneseq
    %v9596 = vshrl.u32 %v9595, 7
    %v9597 = vsub.s32 %v9506, %v9596
    %v9598 = vrot.slane %v9321, %v9597
    %v9599 = vsel %vm9511, %v9598, %v9594
    %v9600 = vlaneseq
    %v9601 = vshrl.u32 %v9600, 7
    %v9602 = vsub.s32 %v9513, %v9601
    %v9603 = vrot.slane %v9324, %v9602
    %v9604 = vsel %vm9518, %v9603, %v9599
    %v9605 = vlaneseq
    %v9606 = vshrl.u32 %v9605, 7
    %v9607 = vsub.s32 %v9520, %v9606
    %v9608 = vrot.slane %v9327, %v9607
    %v9609 = vsel %vm9525, %v9608, %v9604
    %v9610 = vlaneseq
    %v9611 = vshrl.u32 %v9610, 7
    %v9612 = vsub.s32 %v9527, %v9611
    %v9613 = vrot.slane %v9330, %v9612
    %v9614 = vsel %vm9532, %v9613, %v9609
    %v9615 = vlaneseq
    %v9616 = vshrl.u32 %v9615, 7
    %v9617 = vsub.s32 %v9534, %v9616
    %v9618 = vrot.slane %v9333, %v9617
    %v9619 = vsel %vm9539, %v9618, %v9614
    %v9620 = vlaneseq
    %v9621 = vshrl.u32 %v9620, 7
    %v9622 = vsub.s32 %v9431, %v9621
    %v9623 = vrot.slane %v9336, %v9622
    %v9624 = vlaneseq
    %v9625 = vshrl.u32 %v9624, 7
    %v9626 = vsub.s32 %v9436, %v9625
    %v9627 = vrot.slane %v9339, %v9626
    %v9628 = vsel %vm9441, %v9627, %v9623
    %v9629 = vlaneseq
    %v9630 = vshrl.u32 %v9629, 7
    %v9631 = vsub.s32 %v9443, %v9630
    %v9632 = vrot.slane %v9342, %v9631
    %v9633 = vsel %vm9448, %v9632, %v9628
    %v9634 = vlaneseq
    %v9635 = vshrl.u32 %v9634, 7
    %v9636 = vsub.s32 %v9450, %v9635
    %v9637 = vrot.slane %v9345, %v9636
    %v9638 = vsel %vm9455, %v9637, %v9633
    %v9639 = vlaneseq
    %v9640 = vshrl.u32 %v9639, 7
    %v9641 = vsub.s32 %v9457, %v9640
    %v9642 = vrot.slane %v9348, %v9641
    %v9643 = vsel %vm9462, %v9642, %v9638
    %v9644 = vlaneseq
    %v9645 = vshrl.u32 %v9644, 7
    %v9646 = vsub.s32 %v9464, %v9645
    %v9647 = vrot.slane %v9351, %v9646
    %v9648 = vsel %vm9469, %v9647, %v9643
    %v9649 = vlaneseq
    %v9650 = vshrl.u32 %v9649, 7
    %v9651 = vsub.s32 %v9471, %v9650
    %v9652 = vrot.slane %v9354, %v9651
    %v9653 = vsel %vm9476, %v9652, %v9648
    %v9654 = vlaneseq
    %v9655 = vshrl.u32 %v9654, 7
    %v9656 = vsub.s32 %v9478, %v9655
    %v9657 = vrot.slane %v9357, %v9656
    %v9658 = vsel %vm9483, %v9657, %v9653
    %v9659 = vlaneseq
    %v9660 = vshrl.u32 %v9659, 7
    %v9661 = vsub.s32 %v9485, %v9660
    %v9662 = vrot.slane %v9360, %v9661
    %v9663 = vsel %vm9490, %v9662, %v9658
    %v9664 = vlaneseq
    %v9665 = vshrl.u32 %v9664, 7
    %v9666 = vsub.s32 %v9492, %v9665
    %v9667 = vrot.slane %v9363, %v9666
    %v9668 = vsel %vm9497, %v9667, %v9663
    %v9669 = vlaneseq
    %v9670 = vshrl.u32 %v9669, 7
    %v9671 = vsub.s32 %v9499, %v9670
    %v9672 = vrot.slane %v9366, %v9671
    %v9673 = vsel %vm9504, %v9672, %v9668
    %v9674 = vlaneseq
    %v9675 = vshrl.u32 %v9674, 7
    %v9676 = vsub.s32 %v9506, %v9675
    %v9677 = vrot.slane %v9369, %v9676
    %v9678 = vsel %vm9511, %v9677, %v9673
    %v9679 = vlaneseq
    %v9680 = vshrl.u32 %v9679, 7
    %v9681 = vsub.s32 %v9513, %v9680
    %v9682 = vrot.slane %v9372, %v9681
    %v9683 = vsel %vm9518, %v9682, %v9678
    %v9684 = vlaneseq
    %v9685 = vshrl.u32 %v9684, 7
    %v9686 = vsub.s32 %v9520, %v9685
    %v9687 = vrot.slane %v9375, %v9686
    %v9688 = vsel %vm9525, %v9687, %v9683
    %v9689 = vlaneseq
    %v9690 = vshrl.u32 %v9689, 7
    %v9691 = vsub.s32 %v9527, %v9690
    %v9692 = vrot.slane %v9378, %v9691
    %v9693 = vsel %vm9532, %v9692, %v9688
    %v9694 = vlaneseq
    %v9695 = vshrl.u32 %v9694, 7
    %v9696 = vsub.s32 %v9534, %v9695
    %v9697 = vrot.slane %v9381, %v9696
    %v9698 = vsel %vm9539, %v9697, %v9693
    %v9699 = vlaneseq
    %v9700 = vshrl.u32 %v9699, 7
    %v9701 = vsub.s32 %v9431, %v9700
    %v9702 = vrot.slane %v9384, %v9701
    %v9703 = vlaneseq
    %v9704 = vshrl.u32 %v9703, 7
    %v9705 = vsub.s32 %v9436, %v9704
    %v9706 = vrot.slane %v9387, %v9705
    %v9707 = vsel %vm9441, %v9706, %v9702
    %v9708 = vlaneseq
    %v9709 = vshrl.u32 %v9708, 7
    %v9710 = vsub.s32 %v9443, %v9709
    %v9711 = vrot.slane %v9390, %v9710
    %v9712 = vsel %vm9448, %v9711, %v9707
    %v9713 = vlaneseq
    %v9714 = vshrl.u32 %v9713, 7
    %v9715 = vsub.s32 %v9450, %v9714
    %v9716 = vrot.slane %v9393, %v9715
    %v9717 = vsel %vm9455, %v9716, %v9712
    %v9718 = vlaneseq
    %v9719 = vshrl.u32 %v9718, 7
    %v9720 = vsub.s32 %v9457, %v9719
    %v9721 = vrot.slane %v9396, %v9720
    %v9722 = vsel %vm9462, %v9721, %v9717
    %v9723 = vlaneseq
    %v9724 = vshrl.u32 %v9723, 7
    %v9725 = vsub.s32 %v9464, %v9724
    %v9726 = vrot.slane %v9399, %v9725
    %v9727 = vsel %vm9469, %v9726, %v9722
    %v9728 = vlaneseq
    %v9729 = vshrl.u32 %v9728, 7
    %v9730 = vsub.s32 %v9471, %v9729
    %v9731 = vrot.slane %v9402, %v9730
    %v9732 = vsel %vm9476, %v9731, %v9727
    %v9733 = vlaneseq
    %v9734 = vshrl.u32 %v9733, 7
    %v9735 = vsub.s32 %v9478, %v9734
    %v9736 = vrot.slane %v9405, %v9735
    %v9737 = vsel %vm9483, %v9736, %v9732
    %v9738 = vlaneseq
    %v9739 = vshrl.u32 %v9738, 7
    %v9740 = vsub.s32 %v9485, %v9739
    %v9741 = vrot.slane %v9408, %v9740
    %v9742 = vsel %vm9490, %v9741, %v9737
    %v9743 = vlaneseq
    %v9744 = vshrl.u32 %v9743, 7
    %v9745 = vsub.s32 %v9492, %v9744
    %v9746 = vrot.slane %v9411, %v9745
    %v9747 = vsel %vm9497, %v9746, %v9742
    %v9748 = vlaneseq
    %v9749 = vshrl.u32 %v9748, 7
    %v9750 = vsub.s32 %v9499, %v9749
    %v9751 = vrot.slane %v9414, %v9750
    %v9752 = vsel %vm9504, %v9751, %v9747
    %v9753 = vlaneseq
    %v9754 = vshrl.u32 %v9753, 7
    %v9755 = vsub.s32 %v9506, %v9754
    %v9756 = vrot.slane %v9417, %v9755
    %v9757 = vsel %vm9511, %v9756, %v9752
    %v9758 = vlaneseq
    %v9759 = vshrl.u32 %v9758, 7
    %v9760 = vsub.s32 %v9513, %v9759
    %v9761 = vrot.slane %v9420, %v9760
    %v9762 = vsel %vm9518, %v9761, %v9757
    %v9763 = vlaneseq
    %v9764 = vshrl.u32 %v9763, 7
    %v9765 = vsub.s32 %v9520, %v9764
    %v9766 = vrot.slane %v9423, %v9765
    %v9767 = vsel %vm9525, %v9766, %v9762
    %v9768 = vlaneseq
    %v9769 = vshrl.u32 %v9768, 7
    %v9770 = vsub.s32 %v9527, %v9769
    %v9771 = vrot.slane %v9426, %v9770
    %v9772 = vsel %vm9532, %v9771, %v9767
    %v9773 = vlaneseq
    %v9774 = vshrl.u32 %v9773, 7
    %v9775 = vsub.s32 %v9534, %v9774
    %v9776 = vrot.slane %v9429, %v9775
    %v9777 = vsel %vm9539, %v9776, %v9772
    %v9778 = vcombine.low %v9540, %v9619
    %v9779 = vcombine.low %v9698, %v9777
    %v9781 = vunpack.c.l.s4 1966171168
    %v9782 = vunpack.c.0.s8 %v9781
    %v9783 = vlaneseq
    %v9784 = vshrl.u32 %v9783, 7
    %v9785 = vsub.s32 %v9782, %v9784
    %v9786 = vrot.slane %v9778, %v9785
    %v9788 = vunpack.c.l.s4 1966171168
    %v9789 = vunpack.c.0.s8 %v9788
    %v9790 = vlaneseq
    %v9791 = vshrl.u32 %v9790, 7
    %v9792 = vsub.s32 %v9789, %v9791
    %v9793 = vrot.slane %v9779, %v9792
    %v9794 = vcombine.low %v9786, %v9793
    %v9796 = vunpack.c.l.s4 1966171168
    %v9797 = vunpack.c.0.s8 %v9796
    %v9798 = vlaneseq
    %v9799 = vshrl.u32 %v9798, 7
    %v9800 = vsub.s32 %v9797, %v9799
    %v9801 = vrot.slane %v9794, %v9800
    %v9803 = vlaneseq
    %vm9804 = vcmp.ge.s32.totalorder %v9803, 0
    %vm9805 = vcmp.lt.s32.totalorder %v9803, 512
    %vm9806 = vmand %vm9804, %vm9805
    %9807 = vst.msk [vmem:[#allocation5] sm:$0xf] %vm9806, %v9801
    // Predicated region
    $region10: #{tpu_custom_call.1} parent=1 // pred_check
      _
    $region11: #{tpu_custom_call.1} parent=1 // pred_check_branch
      %9809 = sbr.rel (0) target = $region13
    $region12: #{tpu_custom_call.1} parent=1 // pred_region
      %s9811 = ssub.s32 64, 64
      %9812 = vsyncadd [#allocation4], %s9811
      %s9814 = sshll.u32 [#allocation5], 4
      %s9815 = int_to_ptr.vmem [resolvable:$true] %s9814
      %9817 = dma.vmem_to_hbm [thread:$0]  %s9815, 64, %s1, [#allocation4]
    $region13: #{tpu_custom_call.1} parent=1 // pred_fallthru
      _
    // Predicated region
    $region14: #{tpu_custom_call.1} parent=1 // pred_check
      _
    $region15: #{tpu_custom_call.1} parent=1 // pred_check_branch
      %9819 = sbr.rel (0) target = $region17
    $region16: #{tpu_custom_call.1} parent=1 // pred_region
      %9820 = dma.done [#allocation4], 64
    $region17: #{tpu_custom_call.1} parent=1 // pred_fallthru
      _
    %9821 = vsyncpa [#allocation3], 1
    %9822 = vsyncpa [#allocation4], 1

</llo_original>
